<compile_context>
chip_gen: v5e
topology: v5e:2x2
jax: 0.10.0
libtpu: 0.0.40
codegen_flags: <defaults>
</compile_context>

<pallas_src>
import jax
import jax.numpy as jnp
from jax.experimental import pallas as pl
from jax.experimental.pallas import tpu as pltpu


LRELU_SLOPE = 0.2
BN_EPS = 1e-5


# ---------------------------------------------------------------------------
# Tiling helper
# ---------------------------------------------------------------------------
def _pick_tile_m(m, cap=1024):
    """Row tile for the M axis: whole extent when small, else a large divisor."""
    if m <= cap:
        return m
    for t in (1024, 512, 256, 128, 64, 32, 16, 8):
        if t <= cap and m % t == 0:
            return t
    return m  # fallback: single whole-M block


# ---------------------------------------------------------------------------
# Kernel 1: layer-1 conv as one long-K matmul + fused bias + LeakyReLU.
# ---------------------------------------------------------------------------
def _conv_bias_lrelu_kernel(x_ref, w_ref, b_ref, o_ref):
    acc = jnp.dot(x_ref[...], w_ref[...], preferred_element_type=jnp.float32)
    acc = acc + b_ref[...]
    o_ref[...] = jnp.where(acc >= 0, acc, LRELU_SLOPE * acc).astype(o_ref.dtype)


# ---------------------------------------------------------------------------
# Kernel 2: layers 2-4 conv (no bias: cancelled by batch-stat BN) with fused
#           BN partial statistics accumulated across M tiles (P3).
# ---------------------------------------------------------------------------
def _conv_stats_kernel(x_ref, w_ref, o_ref, sum_ref, ssq_ref):
    @pl.when(pl.program_id(0) == 0)
    def _():
        sum_ref[...] = jnp.zeros_like(sum_ref)
        ssq_ref[...] = jnp.zeros_like(ssq_ref)

    acc = jnp.dot(x_ref[...], w_ref[...], preferred_element_type=jnp.float32)
    o_ref[...] = acc.astype(o_ref.dtype)
    # Stats from the f32 accumulator (free VPU filler under the MXU).
    sum_ref[...] += jnp.sum(acc, axis=0, keepdims=True)
    ssq_ref[...] += jnp.sum(acc * acc, axis=0, keepdims=True)


# ---------------------------------------------------------------------------
# Kernel 3: BN apply (precomputed scale/shift) + LeakyReLU, tiled elementwise.
# ---------------------------------------------------------------------------
def _bn_apply_lrelu_kernel(x_ref, scale_ref, shift_ref, o_ref):
    y = x_ref[...].astype(jnp.float32) * scale_ref[...] + shift_ref[...]
    o_ref[...] = jnp.where(y >= 0, y, LRELU_SLOPE * y).astype(o_ref.dtype)


# ---------------------------------------------------------------------------
# Kernel 4: adaptive avg-pool(1) + Linear(512 -> 1) + sigmoid (tiny head).
# VPU multiply + lane reduction (no lane-padded MXU matmul).
# ---------------------------------------------------------------------------
def _head_kernel(x_ref, w_ref, b_ref, o_ref):
    x = x_ref[...].astype(jnp.float32)            # (N, S, C)
    pooled = jnp.mean(x, axis=1)                  # (N, C) global avg pool
    logits = jnp.sum(pooled * w_ref[...], axis=-1, keepdims=True) + b_ref[...]
    o_ref[...] = jax.nn.sigmoid(logits)


# ---------------------------------------------------------------------------
# XLA glue: im2col for Conv2d(k=4, s=2, p=1) and torch-weight repacking.
# ---------------------------------------------------------------------------
def _im2col_4x4_s2(x_nhwc):
    """(N,H,W,Ci) -> patch matrix (N*OH*OW, 16*Ci), K ordered (kh, kw, ci)."""
    N, H, W, Ci = x_nhwc.shape
    assert H % 2 == 0 and W % 2 == 0, "spatial dims must be even"
    OH, OW = H // 2, W // 2
    xp = jnp.pad(x_nhwc, ((0, 0), (1, 1), (1, 1), (0, 0)))
    cols = [xp[:, kh:kh + 2 * OH:2, kw:kw + 2 * OW:2, :]
            for kh in range(4) for kw in range(4)]
    patches = jnp.stack(cols, axis=3)             # (N, OH, OW, 16, Ci)
    return patches.reshape(N * OH * OW, 16 * Ci), (N, OH, OW)


def _pack_weight(w):
    """torch (Co, Ci, 4, 4) -> (16*Ci, Co) matching im2col (kh, kw, ci) order."""
    Co, Ci = w.shape[0], w.shape[1]
    return jnp.transpose(w, (2, 3, 1, 0)).reshape(16 * Ci, Co)


# ---------------------------------------------------------------------------
# Layer wrappers
# ---------------------------------------------------------------------------
def conv1_lrelu(x_nhwc, w, b):
    """Conv2d(k=4,s=2,p=1) + bias + LeakyReLU, output channels lane-padded."""
    patches, (N, OH, OW) = _im2col_4x4_s2(x_nhwc.astype(jnp.bfloat16))
    M, K = patches.shape
    Co = w.shape[0]
    Cpad = ((Co + 127) // 128) * 128             # lane-dense stores
    wk = jnp.zeros((K, Cpad), jnp.bfloat16).at[:, :Co].set(
        _pack_weight(w).astype(jnp.bfloat16))
    bk = jnp.zeros((1, Cpad), jnp.float32).at[0, :Co].set(b.astype(jnp.float32))
    tm = _pick_tile_m(M)

    out = pl.pallas_call(
        _conv_bias_lrelu_kernel,
        out_shape=jax.ShapeDtypeStruct((M, Cpad), jnp.bfloat16),
        grid=(M // tm,),
        in_specs=[pl.BlockSpec((tm, K), lambda i: (i, 0)),
                  pl.BlockSpec((K, Cpad), lambda i: (0, 0)),
                  pl.BlockSpec((1, Cpad), lambda i: (0, 0))],
        out_specs=pl.BlockSpec((tm, Cpad), lambda i: (i, 0)),
        compiler_params=pltpu.CompilerParams(dimension_semantics=("parallel",)),
    )(patches, wk, bk)

    # Drop the zero-weight padding columns (fuses into the next layer's im2col).
    return out[:, :Co].reshape(N, OH, OW, Co)


def conv_bn_lrelu(x_nhwc, w, gamma, beta):
    """Conv2d(k=4,s=2,p=1, bias dropped) -> BatchNorm(batch stats) -> LeakyReLU.

    Conv bias is mathematically cancelled by the BN batch-mean subtraction, so
    it is omitted (numerically identical forward output)."""
    patches, (N, OH, OW) = _im2col_4x4_s2(x_nhwc)
    M, K = patches.shape
    Co = w.shape[0]
    wk = _pack_weight(w).astype(jnp.bfloat16)
    tm = _pick_tile_m(M)

    conv, s, ss = pl.pallas_call(
        _conv_stats_kernel,
        out_shape=(jax.ShapeDtypeStruct((M, Co), jnp.bfloat16),
                   jax.ShapeDtypeStruct((1, Co), jnp.float32),
                   jax.ShapeDtypeStruct((1, Co), jnp.float32)),
        grid=(M // tm,),
        in_specs=[pl.BlockSpec((tm, K), lambda i: (i, 0)),
                  pl.BlockSpec((K, Co), lambda i: (0, 0))],
        out_specs=(pl.BlockSpec((tm, Co), lambda i: (i, 0)),
                   pl.BlockSpec((1, Co), lambda i: (0, 0)),
                   pl.BlockSpec((1, Co), lambda i: (0, 0))),
        compiler_params=pltpu.CompilerParams(dimension_semantics=("arbitrary",)),
    )(patches, wk)

    mean = s / M
    var = jnp.maximum(ss / M - mean * mean, 0.0)  # biased var (PyTorch normalization)
    scale = gamma.reshape(1, Co).astype(jnp.float32) * jax.lax.rsqrt(var + BN_EPS)
    shift = beta.reshape(1, Co).astype(jnp.float32) - mean * scale
    # TODO(synk): PyTorch train-mode BN also updates running_mean / running_var
    # module buffers (a stateful side effect); that update is not reproduced.

    out = pl.pallas_call(
        _bn_apply_lrelu_kernel,
        out_shape=jax.ShapeDtypeStruct((M, Co), jnp.bfloat16),
        grid=(M // tm,),
        in_specs=[pl.BlockSpec((tm, Co), lambda i: (i, 0)),
                  pl.BlockSpec((1, Co), lambda i: (0, 0)),
                  pl.BlockSpec((1, Co), lambda i: (0, 0))],
        out_specs=pl.BlockSpec((tm, Co), lambda i: (i, 0)),
        compiler_params=pltpu.CompilerParams(dimension_semantics=("parallel",)),
    )(conv, scale, shift)

    return out.reshape(N, OH, OW, Co)


def head(x_nhwc, fc_w, fc_b):
    N, H, W, C = x_nhwc.shape
    x3 = x_nhwc.reshape(N, H * W, C)
    w = fc_w.reshape(1, C).astype(jnp.float32)
    b = fc_b.reshape(1, 1).astype(jnp.float32)
    vmem = pl.BlockSpec(memory_space=pltpu.MemorySpace.VMEM)
    return pl.pallas_call(
        _head_kernel,
        out_shape=jax.ShapeDtypeStruct((N, 1), jnp.float32),
        in_specs=[vmem, vmem, vmem],
        out_specs=vmem,
    )(x3, w, b)


# ---------------------------------------------------------------------------
# Full discriminator forward (matches the PyTorch module's forward()).
# ---------------------------------------------------------------------------
def discriminator_forward(x_nchw, params):
    # Single layout change at the boundary: NCHW -> NHWC, then stay NHWC.
    x = jnp.transpose(x_nchw, (0, 2, 3, 1)).astype(jnp.bfloat16)

    # conv1 + LeakyReLU (no BN)
    x = conv1_lrelu(x, params["w1"], params["b1"])

    # conv2..conv4: conv -> BatchNorm(batch stats) + LeakyReLU
    for i in (2, 3, 4):
        x = conv_bn_lrelu(x, params[f"w{i}"], params[f"g{i}"], params[f"be{i}"])

    # adaptive avg pool (1x1) + flatten + fc + sigmoid
    return head(x, params["fc_w"], params["fc_b"])


def init_params(key, in_channels):
    widths = [(in_channels, 64), (64, 128), (128, 256), (256, 512)]
    params = {}
    for i, (ci, co) in enumerate(widths, start=1):
        key, kw, kb = jax.random.split(key, 3)
        params[f"w{i}"] = jax.random.normal(kw, (co, ci, 4, 4), jnp.float32) / jnp.sqrt(ci * 16.0)
        # Conv biases exist in the PyTorch module; b2..b4 are kept as parameters
        # but are unused in the forward because batch-stat BN cancels them.
        params[f"b{i}"] = 0.01 * jax.random.normal(kb, (co,), jnp.float32)
        if i >= 2:  # BatchNorm default init
            params[f"g{i}"] = jnp.ones((co,), jnp.float32)
            params[f"be{i}"] = jnp.zeros((co,), jnp.float32)
    key, kfw, kfb = jax.random.split(key, 3)
    params["fc_w"] = jax.random.normal(kfw, (1, 512), jnp.float32) / jnp.sqrt(512.0)
    params["fc_b"] = 0.01 * jax.random.normal(kfb, (1,), jnp.float32)
    return params


if __name__ == "__main__":
    batch, in_channels, hw = 2, 4, 16   # 16 -> 8 -> 4 -> 2 -> 1 through the 4 convs

    key = jax.random.PRNGKey(0)
    kx, kp = jax.random.split(key)
    x = jax.random.normal(kx, (batch, in_channels, hw, hw), jnp.float32)  # NCHW
    params = init_params(kp, in_channels)

    fwd = jax.jit(discriminator_forward)
    out = jax.block_until_ready(fwd(x, params))

    assert out.shape == (batch, 1), f"got {out.shape}, expected {(batch, 1)}"
    assert bool(jnp.all(jnp.isfinite(out)))
    assert bool(jnp.all((out >= 0.0) & (out <= 1.0)))   # sigmoid range
    print("KERNEL_OK")
</pallas_src>

<mosaic_0001>
module attributes {stable_mosaic.version = 11 : i64} {
  func.func @_conv_bias_lrelu_kernel(%arg0: i32, %arg1: memref<128x64xbf16, #tpu.memory_space<vmem>>, %arg2: memref<64x128xbf16, #tpu.memory_space<vmem>>, %arg3: memref<1x128xf32, #tpu.memory_space<vmem>>, %arg4: memref<128x128xbf16, #tpu.memory_space<vmem>>) attributes {dimension_semantics = [#tpu.dimension_semantics<parallel>], iteration_bounds = array<i64: 1>, scalar_prefetch = 0 : i64, scratch_operands = 0 : i64, tpu.core_type = #tpu.core_type<tc>, window_params = [{transform_indices = @transform_0, window_bounds = array<i64: 128, 64>}, {pipeline_mode = #tpu.pipeline_mode<synchronous>, transform_indices = @transform_1, window_bounds = array<i64: 64, 128>}, {pipeline_mode = #tpu.pipeline_mode<synchronous>, transform_indices = @transform_2, window_bounds = array<i64: 1, 128>}, {transform_indices = @transform_3, window_bounds = array<i64: 128, 128>}]} {
    %c0 = arith.constant 0 : index
    %c0_0 = arith.constant 0 : index
    %0 = vector.load %arg1[%c0, %c0_0] : memref<128x64xbf16, #tpu.memory_space<vmem>>, vector<128x64xbf16>
    %c0_1 = arith.constant 0 : index
    %c0_2 = arith.constant 0 : index
    %1 = vector.load %arg2[%c0_1, %c0_2] : memref<64x128xbf16, #tpu.memory_space<vmem>>, vector<64x128xbf16>
    %cst = arith.constant dense<0.000000e+00> : vector<128x128xf32>
    %2 = tpu.matmul %0, %1, %cst {dimension_numbers = #tpu.dot_dimension_numbers<[1], [0], [0], [1], [0, 0, 1, 1], [], []>} : vector<128x64xbf16>, vector<64x128xbf16>, vector<128x128xf32> -> vector<128x128xf32>
    %c0_3 = arith.constant 0 : index
    %c0_4 = arith.constant 0 : index
    %3 = vector.load %arg3[%c0_3, %c0_4] : memref<1x128xf32, #tpu.memory_space<vmem>>, vector<1x128xf32>
    %4 = vector.broadcast %3 : vector<1x128xf32> to vector<128x128xf32>
    %5 = arith.addf %2, %4 : vector<128x128xf32>
    %cst_5 = arith.constant 0.000000e+00 : f32
    %6 = vector.broadcast %cst_5 : f32 to vector<128x128xf32>
    %7 = arith.cmpf oge, %5, %6 : vector<128x128xf32>
    %cst_6 = arith.constant 2.000000e-01 : f32
    %8 = vector.broadcast %cst_6 : f32 to vector<128x128xf32>
    %9 = arith.mulf %8, %5 : vector<128x128xf32>
    %10 = arith.select %7, %5, %9 : vector<128x128xi1>, vector<128x128xf32>
    %11 = arith.truncf %10 : vector<128x128xf32> to vector<128x128xbf16>
    %c0_7 = arith.constant 0 : index
    %c0_8 = arith.constant 0 : index
    %12 = vector.load %arg4[%c0_7, %c0_8] : memref<128x128xbf16, #tpu.memory_space<vmem>>, vector<128x128xbf16>
    tpu.vector_store %arg4[%c0_7, %c0_8], %11 {strides = array<i32>} : memref<128x128xbf16, #tpu.memory_space<vmem>>, vector<128x128xbf16>,
    return
  }
  func.func @transform_0(%arg0: i32) -> (i32, i32) {
    %c0_i32 = arith.constant 0 : i32
    %c0_i32_0 = arith.constant 0 : i32
    return %arg0, %c0_i32 : i32, i32
  }
  func.func @transform_1(%arg0: i32) -> (i32, i32) {
    %c0_i32 = arith.constant 0 : i32
    %c0_i32_0 = arith.constant 0 : i32
    %c0_i32_1 = arith.constant 0 : i32
    return %c0_i32, %c0_i32_0 : i32, i32
  }
  func.func @transform_2(%arg0: i32) -> (i32, i32) {
    %c0_i32 = arith.constant 0 : i32
    %c0_i32_0 = arith.constant 0 : i32
    %c0_i32_1 = arith.constant 0 : i32
    return %c0_i32, %c0_i32_0 : i32, i32
  }
  func.func @transform_3(%arg0: i32) -> (i32, i32) {
    %c0_i32 = arith.constant 0 : i32
    %c0_i32_0 = arith.constant 0 : i32
    return %arg0, %c0_i32 : i32, i32
  }
}

module attributes {stable_mosaic.version = 11 : i64} {
  func.func @_conv_stats_kernel(%arg0: i32, %arg1: memref<32x1024xbf16, #tpu.memory_space<vmem>>, %arg2: memref<1024x128xbf16, #tpu.memory_space<vmem>>, %arg3: memref<32x128xbf16, #tpu.memory_space<vmem>>, %arg4: memref<1x128xf32, #tpu.memory_space<vmem>>, %arg5: memref<1x128xf32, #tpu.memory_space<vmem>>) attributes {dimension_semantics = [#tpu.dimension_semantics<arbitrary>], iteration_bounds = array<i64: 1>, scalar_prefetch = 0 : i64, scratch_operands = 0 : i64, tpu.core_type = #tpu.core_type<tc>, window_params = [{transform_indices = @transform_0, window_bounds = array<i64: 32, 1024>}, {pipeline_mode = #tpu.pipeline_mode<synchronous>, transform_indices = @transform_1, window_bounds = array<i64: 1024, 128>}, {transform_indices = @transform_2, window_bounds = array<i64: 32, 128>}, {pipeline_mode = #tpu.pipeline_mode<synchronous>, transform_indices = @transform_3, window_bounds = array<i64: 1, 128>}, {pipeline_mode = #tpu.pipeline_mode<synchronous>, transform_indices = @transform_4, window_bounds = array<i64: 1, 128>}]} {
    %c0_i32 = arith.constant 0 : i32
    %0 = arith.cmpi eq, %arg0, %c0_i32 : i32
    %1 = arith.extui %0 : i1 to i32
    %c0_i32_0 = arith.constant 0 : i32
    %2 = arith.cmpi ne, %1, %c0_i32_0 : i32
    scf.if %2 {
      %cst_16 = arith.constant 0.000000e+00 : f32
      %19 = vector.broadcast %cst_16 : f32 to vector<1x128xf32>
      %c0_17 = arith.constant 0 : index
      %c0_18 = arith.constant 0 : index
      %20 = vector.load %arg4[%c0_17, %c0_18] : memref<1x128xf32, #tpu.memory_space<vmem>>, vector<1x128xf32>
      tpu.vector_store %arg4[%c0_17, %c0_18], %19 {strides = array<i32>} : memref<1x128xf32, #tpu.memory_space<vmem>>, vector<1x128xf32>,
      %cst_19 = arith.constant 0.000000e+00 : f32
      %21 = vector.broadcast %cst_19 : f32 to vector<1x128xf32>
      %c0_20 = arith.constant 0 : index
      %c0_21 = arith.constant 0 : index
      %22 = vector.load %arg5[%c0_20, %c0_21] : memref<1x128xf32, #tpu.memory_space<vmem>>, vector<1x128xf32>
      tpu.vector_store %arg5[%c0_20, %c0_21], %21 {strides = array<i32>} : memref<1x128xf32, #tpu.memory_space<vmem>>, vector<1x128xf32>,
    } else {
    }
    %c0 = arith.constant 0 : index
    %c0_1 = arith.constant 0 : index
    %3 = vector.load %arg1[%c0, %c0_1] : memref<32x1024xbf16, #tpu.memory_space<vmem>>, vector<32x1024xbf16>
    %c0_2 = arith.constant 0 : index
    %c0_3 = arith.constant 0 : index
    %4 = vector.load %arg2[%c0_2, %c0_3] : memref<1024x128xbf16, #tpu.memory_space<vmem>>, vector<1024x128xbf16>
    %cst = arith.constant dense<0.000000e+00> : vector<32x128xf32>
    %5 = tpu.matmul %3, %4, %cst {dimension_numbers = #tpu.dot_dimension_numbers<[1], [0], [0], [1], [0, 0, 1, 1], [], []>} : vector<32x1024xbf16>, vector<1024x128xbf16>, vector<32x128xf32> -> vector<32x128xf32>
    %6 = arith.truncf %5 : vector<32x128xf32> to vector<32x128xbf16>
    %c0_4 = arith.constant 0 : index
    %c0_5 = arith.constant 0 : index
    %7 = vector.load %arg3[%c0_4, %c0_5] : memref<32x128xbf16, #tpu.memory_space<vmem>>, vector<32x128xbf16>
    tpu.vector_store %arg3[%c0_4, %c0_5], %6 {strides = array<i32>} : memref<32x128xbf16, #tpu.memory_space<vmem>>, vector<32x128xbf16>,
    %c0_6 = arith.constant 0 : index
    %c0_7 = arith.constant 0 : index
    %8 = vector.load %arg4[%c0_6, %c0_7] : memref<1x128xf32, #tpu.memory_space<vmem>>, vector<1x128xf32>
    %cst_8 = arith.constant dense<0.000000e+00> : vector<128xf32>
    %9 = vector.multi_reduction <add>, %5, %cst_8 [0] : vector<32x128xf32> to vector<128xf32>
    %10 = vector.shape_cast %9 : vector<128xf32> to vector<1x128xf32>
    %11 = arith.addf %8, %10 : vector<1x128xf32>
    %c0_9 = arith.constant 0 : index
    %c0_10 = arith.constant 0 : index
    %12 = vector.load %arg4[%c0_9, %c0_10] : memref<1x128xf32, #tpu.memory_space<vmem>>, vector<1x128xf32>
    tpu.vector_store %arg4[%c0_9, %c0_10], %11 {strides = array<i32>} : memref<1x128xf32, #tpu.memory_space<vmem>>, vector<1x128xf32>,
    %c0_11 = arith.constant 0 : index
    %c0_12 = arith.constant 0 : index
    %13 = vector.load %arg5[%c0_11, %c0_12] : memref<1x128xf32, #tpu.memory_space<vmem>>, vector<1x128xf32>
    %14 = arith.mulf %5, %5 : vector<32x128xf32>
    %cst_13 = arith.constant dense<0.000000e+00> : vector<128xf32>
    %15 = vector.multi_reduction <add>, %14, %cst_13 [0] : vector<32x128xf32> to vector<128xf32>
    %16 = vector.shape_cast %15 : vector<128xf32> to vector<1x128xf32>
    %17 = arith.addf %13, %16 : vector<1x128xf32>
    %c0_14 = arith.constant 0 : index
    %c0_15 = arith.constant 0 : index
    %18 = vector.load %arg5[%c0_14, %c0_15] : memref<1x128xf32, #tpu.memory_space<vmem>>, vector<1x128xf32>
    tpu.vector_store %arg5[%c0_14, %c0_15], %17 {strides = array<i32>} : memref<1x128xf32, #tpu.memory_space<vmem>>, vector<1x128xf32>,
    return
  }
  func.func @transform_0(%arg0: i32) -> (i32, i32) {
    %c0_i32 = arith.constant 0 : i32
    %c0_i32_0 = arith.constant 0 : i32
    return %arg0, %c0_i32 : i32, i32
  }
  func.func @transform_1(%arg0: i32) -> (i32, i32) {
    %c0_i32 = arith.constant 0 : i32
    %c0_i32_0 = arith.constant 0 : i32
    %c0_i32_1 = arith.constant 0 : i32
    return %c0_i32, %c0_i32_0 : i32, i32
  }
  func.func @transform_2(%arg0: i32) -> (i32, i32) {
    %c0_i32 = arith.constant 0 : i32
    %c0_i32_0 = arith.constant 0 : i32
    return %arg0, %c0_i32 : i32, i32
  }
  func.func @transform_3(%arg0: i32) -> (i32, i32) {
    %c0_i32 = arith.constant 0 : i32
    %c0_i32_0 = arith.constant 0 : i32
    %c0_i32_1 = arith.constant 0 : i32
    return %c0_i32, %c0_i32_0 : i32, i32
  }
  func.func @transform_4(%arg0: i32) -> (i32, i32) {
    %c0_i32 = arith.constant 0 : i32
    %c0_i32_0 = arith.constant 0 : i32
    %c0_i32_1 = arith.constant 0 : i32
    return %c0_i32, %c0_i32_0 : i32, i32
  }
}

module attributes {stable_mosaic.version = 11 : i64} {
  func.func @_bn_apply_lrelu_kernel(%arg0: i32, %arg1: memref<32x128xbf16, #tpu.memory_space<vmem>>, %arg2: memref<1x128xf32, #tpu.memory_space<vmem>>, %arg3: memref<1x128xf32, #tpu.memory_space<vmem>>, %arg4: memref<32x128xbf16, #tpu.memory_space<vmem>>) attributes {dimension_semantics = [#tpu.dimension_semantics<parallel>], iteration_bounds = array<i64: 1>, scalar_prefetch = 0 : i64, scratch_operands = 0 : i64, tpu.core_type = #tpu.core_type<tc>, window_params = [{transform_indices = @transform_0, window_bounds = array<i64: 32, 128>}, {pipeline_mode = #tpu.pipeline_mode<synchronous>, transform_indices = @transform_1, window_bounds = array<i64: 1, 128>}, {pipeline_mode = #tpu.pipeline_mode<synchronous>, transform_indices = @transform_2, window_bounds = array<i64: 1, 128>}, {transform_indices = @transform_3, window_bounds = array<i64: 32, 128>}]} {
    %c0 = arith.constant 0 : index
    %c0_0 = arith.constant 0 : index
    %0 = vector.load %arg1[%c0, %c0_0] : memref<32x128xbf16, #tpu.memory_space<vmem>>, vector<32x128xbf16>
    %1 = arith.extf %0 : vector<32x128xbf16> to vector<32x128xf32>
    %c0_1 = arith.constant 0 : index
    %c0_2 = arith.constant 0 : index
    %2 = vector.load %arg2[%c0_1, %c0_2] : memref<1x128xf32, #tpu.memory_space<vmem>>, vector<1x128xf32>
    %3 = vector.broadcast %2 : vector<1x128xf32> to vector<32x128xf32>
    %4 = arith.mulf %1, %3 : vector<32x128xf32>
    %c0_3 = arith.constant 0 : index
    %c0_4 = arith.constant 0 : index
    %5 = vector.load %arg3[%c0_3, %c0_4] : memref<1x128xf32, #tpu.memory_space<vmem>>, vector<1x128xf32>
    %6 = vector.broadcast %5 : vector<1x128xf32> to vector<32x128xf32>
    %7 = arith.addf %4, %6 : vector<32x128xf32>
    %cst = arith.constant 0.000000e+00 : f32
    %8 = vector.broadcast %cst : f32 to vector<32x128xf32>
    %9 = arith.cmpf oge, %7, %8 : vector<32x128xf32>
    %cst_5 = arith.constant 2.000000e-01 : f32
    %10 = vector.broadcast %cst_5 : f32 to vector<32x128xf32>
    %11 = arith.mulf %10, %7 : vector<32x128xf32>
    %12 = arith.select %9, %7, %11 : vector<32x128xi1>, vector<32x128xf32>
    %13 = arith.truncf %12 : vector<32x128xf32> to vector<32x128xbf16>
    %c0_6 = arith.constant 0 : index
    %c0_7 = arith.constant 0 : index
    %14 = vector.load %arg4[%c0_6, %c0_7] : memref<32x128xbf16, #tpu.memory_space<vmem>>, vector<32x128xbf16>
    tpu.vector_store %arg4[%c0_6, %c0_7], %13 {strides = array<i32>} : memref<32x128xbf16, #tpu.memory_space<vmem>>, vector<32x128xbf16>,
    return
  }
  func.func @transform_0(%arg0: i32) -> (i32, i32) {
    %c0_i32 = arith.constant 0 : i32
    %c0_i32_0 = arith.constant 0 : i32
    return %arg0, %c0_i32 : i32, i32
  }
  func.func @transform_1(%arg0: i32) -> (i32, i32) {
    %c0_i32 = arith.constant 0 : i32
    %c0_i32_0 = arith.constant 0 : i32
    %c0_i32_1 = arith.constant 0 : i32
    return %c0_i32, %c0_i32_0 : i32, i32
  }
  func.func @transform_2(%arg0: i32) -> (i32, i32) {
    %c0_i32 = arith.constant 0 : i32
    %c0_i32_0 = arith.constant 0 : i32
    %c0_i32_1 = arith.constant 0 : i32
    return %c0_i32, %c0_i32_0 : i32, i32
  }
  func.func @transform_3(%arg0: i32) -> (i32, i32) {
    %c0_i32 = arith.constant 0 : i32
    %c0_i32_0 = arith.constant 0 : i32
    return %arg0, %c0_i32 : i32, i32
  }
}

module attributes {stable_mosaic.version = 11 : i64} {
  func.func @_conv_stats_kernel(%arg0: i32, %arg1: memref<8x2048xbf16, #tpu.memory_space<vmem>>, %arg2: memref<2048x256xbf16, #tpu.memory_space<vmem>>, %arg3: memref<8x256xbf16, #tpu.memory_space<vmem>>, %arg4: memref<1x256xf32, #tpu.memory_space<vmem>>, %arg5: memref<1x256xf32, #tpu.memory_space<vmem>>) attributes {dimension_semantics = [#tpu.dimension_semantics<arbitrary>], iteration_bounds = array<i64: 1>, scalar_prefetch = 0 : i64, scratch_operands = 0 : i64, tpu.core_type = #tpu.core_type<tc>, window_params = [{transform_indices = @transform_0, window_bounds = array<i64: 8, 2048>}, {pipeline_mode = #tpu.pipeline_mode<synchronous>, transform_indices = @transform_1, window_bounds = array<i64: 2048, 256>}, {transform_indices = @transform_2, window_bounds = array<i64: 8, 256>}, {pipeline_mode = #tpu.pipeline_mode<synchronous>, transform_indices = @transform_3, window_bounds = array<i64: 1, 256>}, {pipeline_mode = #tpu.pipeline_mode<synchronous>, transform_indices = @transform_4, window_bounds = array<i64: 1, 256>}]} {
    %c0_i32 = arith.constant 0 : i32
    %0 = arith.cmpi eq, %arg0, %c0_i32 : i32
    %1 = arith.extui %0 : i1 to i32
    %c0_i32_0 = arith.constant 0 : i32
    %2 = arith.cmpi ne, %1, %c0_i32_0 : i32
    scf.if %2 {
      %cst_16 = arith.constant 0.000000e+00 : f32
      %19 = vector.broadcast %cst_16 : f32 to vector<1x256xf32>
      %c0_17 = arith.constant 0 : index
      %c0_18 = arith.constant 0 : index
      %20 = vector.load %arg4[%c0_17, %c0_18] : memref<1x256xf32, #tpu.memory_space<vmem>>, vector<1x256xf32>
      tpu.vector_store %arg4[%c0_17, %c0_18], %19 {strides = array<i32>} : memref<1x256xf32, #tpu.memory_space<vmem>>, vector<1x256xf32>,
      %cst_19 = arith.constant 0.000000e+00 : f32
      %21 = vector.broadcast %cst_19 : f32 to vector<1x256xf32>
      %c0_20 = arith.constant 0 : index
      %c0_21 = arith.constant 0 : index
      %22 = vector.load %arg5[%c0_20, %c0_21] : memref<1x256xf32, #tpu.memory_space<vmem>>, vector<1x256xf32>
      tpu.vector_store %arg5[%c0_20, %c0_21], %21 {strides = array<i32>} : memref<1x256xf32, #tpu.memory_space<vmem>>, vector<1x256xf32>,
    } else {
    }
    %c0 = arith.constant 0 : index
    %c0_1 = arith.constant 0 : index
    %3 = vector.load %arg1[%c0, %c0_1] : memref<8x2048xbf16, #tpu.memory_space<vmem>>, vector<8x2048xbf16>
    %c0_2 = arith.constant 0 : index
    %c0_3 = arith.constant 0 : index
    %4 = vector.load %arg2[%c0_2, %c0_3] : memref<2048x256xbf16, #tpu.memory_space<vmem>>, vector<2048x256xbf16>
    %cst = arith.constant dense<0.000000e+00> : vector<8x256xf32>
    %5 = tpu.matmul %3, %4, %cst {dimension_numbers = #tpu.dot_dimension_numbers<[1], [0], [0], [1], [0, 0, 1, 1], [], []>} : vector<8x2048xbf16>, vector<2048x256xbf16>, vector<8x256xf32> -> vector<8x256xf32>
    %6 = arith.truncf %5 : vector<8x256xf32> to vector<8x256xbf16>
    %c0_4 = arith.constant 0 : index
    %c0_5 = arith.constant 0 : index
    %7 = vector.load %arg3[%c0_4, %c0_5] : memref<8x256xbf16, #tpu.memory_space<vmem>>, vector<8x256xbf16>
    tpu.vector_store %arg3[%c0_4, %c0_5], %6 {strides = array<i32>} : memref<8x256xbf16, #tpu.memory_space<vmem>>, vector<8x256xbf16>,
    %c0_6 = arith.constant 0 : index
    %c0_7 = arith.constant 0 : index
    %8 = vector.load %arg4[%c0_6, %c0_7] : memref<1x256xf32, #tpu.memory_space<vmem>>, vector<1x256xf32>
    %cst_8 = arith.constant dense<0.000000e+00> : vector<256xf32>
    %9 = vector.multi_reduction <add>, %5, %cst_8 [0] : vector<8x256xf32> to vector<256xf32>
    %10 = vector.shape_cast %9 : vector<256xf32> to vector<1x256xf32>
    %11 = arith.addf %8, %10 : vector<1x256xf32>
    %c0_9 = arith.constant 0 : index
    %c0_10 = arith.constant 0 : index
    %12 = vector.load %arg4[%c0_9, %c0_10] : memref<1x256xf32, #tpu.memory_space<vmem>>, vector<1x256xf32>
    tpu.vector_store %arg4[%c0_9, %c0_10], %11 {strides = array<i32>} : memref<1x256xf32, #tpu.memory_space<vmem>>, vector<1x256xf32>,
    %c0_11 = arith.constant 0 : index
    %c0_12 = arith.constant 0 : index
    %13 = vector.load %arg5[%c0_11, %c0_12] : memref<1x256xf32, #tpu.memory_space<vmem>>, vector<1x256xf32>
    %14 = arith.mulf %5, %5 : vector<8x256xf32>
    %cst_13 = arith.constant dense<0.000000e+00> : vector<256xf32>
    %15 = vector.multi_reduction <add>, %14, %cst_13 [0] : vector<8x256xf32> to vector<256xf32>
    %16 = vector.shape_cast %15 : vector<256xf32> to vector<1x256xf32>
    %17 = arith.addf %13, %16 : vector<1x256xf32>
    %c0_14 = arith.constant 0 : index
    %c0_15 = arith.constant 0 : index
    %18 = vector.load %arg5[%c0_14, %c0_15] : memref<1x256xf32, #tpu.memory_space<vmem>>, vector<1x256xf32>
    tpu.vector_store %arg5[%c0_14, %c0_15], %17 {strides = array<i32>} : memref<1x256xf32, #tpu.memory_space<vmem>>, vector<1x256xf32>,
    return
  }
  func.func @transform_0(%arg0: i32) -> (i32, i32) {
    %c0_i32 = arith.constant 0 : i32
    %c0_i32_0 = arith.constant 0 : i32
    return %arg0, %c0_i32 : i32, i32
  }
  func.func @transform_1(%arg0: i32) -> (i32, i32) {
    %c0_i32 = arith.constant 0 : i32
    %c0_i32_0 = arith.constant 0 : i32
    %c0_i32_1 = arith.constant 0 : i32
    return %c0_i32, %c0_i32_0 : i32, i32
  }
  func.func @transform_2(%arg0: i32) -> (i32, i32) {
    %c0_i32 = arith.constant 0 : i32
    %c0_i32_0 = arith.constant 0 : i32
    return %arg0, %c0_i32 : i32, i32
  }
  func.func @transform_3(%arg0: i32) -> (i32, i32) {
    %c0_i32 = arith.constant 0 : i32
    %c0_i32_0 = arith.constant 0 : i32
    %c0_i32_1 = arith.constant 0 : i32
    return %c0_i32, %c0_i32_0 : i32, i32
  }
  func.func @transform_4(%arg0: i32) -> (i32, i32) {
    %c0_i32 = arith.constant 0 : i32
    %c0_i32_0 = arith.constant 0 : i32
    %c0_i32_1 = arith.constant 0 : i32
    return %c0_i32, %c0_i32_0 : i32, i32
  }
}

module attributes {stable_mosaic.version = 11 : i64} {
  func.func @_bn_apply_lrelu_kernel(%arg0: i32, %arg1: memref<8x256xbf16, #tpu.memory_space<vmem>>, %arg2: memref<1x256xf32, #tpu.memory_space<vmem>>, %arg3: memref<1x256xf32, #tpu.memory_space<vmem>>, %arg4: memref<8x256xbf16, #tpu.memory_space<vmem>>) attributes {dimension_semantics = [#tpu.dimension_semantics<parallel>], iteration_bounds = array<i64: 1>, scalar_prefetch = 0 : i64, scratch_operands = 0 : i64, tpu.core_type = #tpu.core_type<tc>, window_params = [{transform_indices = @transform_0, window_bounds = array<i64: 8, 256>}, {pipeline_mode = #tpu.pipeline_mode<synchronous>, transform_indices = @transform_1, window_bounds = array<i64: 1, 256>}, {pipeline_mode = #tpu.pipeline_mode<synchronous>, transform_indices = @transform_2, window_bounds = array<i64: 1, 256>}, {transform_indices = @transform_3, window_bounds = array<i64: 8, 256>}]} {
    %c0 = arith.constant 0 : index
    %c0_0 = arith.constant 0 : index
    %0 = vector.load %arg1[%c0, %c0_0] : memref<8x256xbf16, #tpu.memory_space<vmem>>, vector<8x256xbf16>
    %1 = arith.extf %0 : vector<8x256xbf16> to vector<8x256xf32>
    %c0_1 = arith.constant 0 : index
    %c0_2 = arith.constant 0 : index
    %2 = vector.load %arg2[%c0_1, %c0_2] : memref<1x256xf32, #tpu.memory_space<vmem>>, vector<1x256xf32>
    %3 = vector.broadcast %2 : vector<1x256xf32> to vector<8x256xf32>
    %4 = arith.mulf %1, %3 : vector<8x256xf32>
    %c0_3 = arith.constant 0 : index
    %c0_4 = arith.constant 0 : index
    %5 = vector.load %arg3[%c0_3, %c0_4] : memref<1x256xf32, #tpu.memory_space<vmem>>, vector<1x256xf32>
    %6 = vector.broadcast %5 : vector<1x256xf32> to vector<8x256xf32>
    %7 = arith.addf %4, %6 : vector<8x256xf32>
    %cst = arith.constant 0.000000e+00 : f32
    %8 = vector.broadcast %cst : f32 to vector<8x256xf32>
    %9 = arith.cmpf oge, %7, %8 : vector<8x256xf32>
    %cst_5 = arith.constant 2.000000e-01 : f32
    %10 = vector.broadcast %cst_5 : f32 to vector<8x256xf32>
    %11 = arith.mulf %10, %7 : vector<8x256xf32>
    %12 = arith.select %9, %7, %11 : vector<8x256xi1>, vector<8x256xf32>
    %13 = arith.truncf %12 : vector<8x256xf32> to vector<8x256xbf16>
    %c0_6 = arith.constant 0 : index
    %c0_7 = arith.constant 0 : index
    %14 = vector.load %arg4[%c0_6, %c0_7] : memref<8x256xbf16, #tpu.memory_space<vmem>>, vector<8x256xbf16>
    tpu.vector_store %arg4[%c0_6, %c0_7], %13 {strides = array<i32>} : memref<8x256xbf16, #tpu.memory_space<vmem>>, vector<8x256xbf16>,
    return
  }
  func.func @transform_0(%arg0: i32) -> (i32, i32) {
    %c0_i32 = arith.constant 0 : i32
    %c0_i32_0 = arith.constant 0 : i32
    return %arg0, %c0_i32 : i32, i32
  }
  func.func @transform_1(%arg0: i32) -> (i32, i32) {
    %c0_i32 = arith.constant 0 : i32
    %c0_i32_0 = arith.constant 0 : i32
    %c0_i32_1 = arith.constant 0 : i32
    return %c0_i32, %c0_i32_0 : i32, i32
  }
  func.func @transform_2(%arg0: i32) -> (i32, i32) {
    %c0_i32 = arith.constant 0 : i32
    %c0_i32_0 = arith.constant 0 : i32
    %c0_i32_1 = arith.constant 0 : i32
    return %c0_i32, %c0_i32_0 : i32, i32
  }
  func.func @transform_3(%arg0: i32) -> (i32, i32) {
    %c0_i32 = arith.constant 0 : i32
    %c0_i32_0 = arith.constant 0 : i32
    return %arg0, %c0_i32 : i32, i32
  }
}

module attributes {stable_mosaic.version = 11 : i64} {
  func.func @_conv_stats_kernel(%arg0: i32, %arg1: memref<2x4096xbf16, #tpu.memory_space<vmem>>, %arg2: memref<4096x512xbf16, #tpu.memory_space<vmem>>, %arg3: memref<2x512xbf16, #tpu.memory_space<vmem>>, %arg4: memref<1x512xf32, #tpu.memory_space<vmem>>, %arg5: memref<1x512xf32, #tpu.memory_space<vmem>>) attributes {dimension_semantics = [#tpu.dimension_semantics<arbitrary>], iteration_bounds = array<i64: 1>, scalar_prefetch = 0 : i64, scratch_operands = 0 : i64, tpu.core_type = #tpu.core_type<tc>, window_params = [{transform_indices = @transform_0, window_bounds = array<i64: 2, 4096>}, {pipeline_mode = #tpu.pipeline_mode<synchronous>, transform_indices = @transform_1, window_bounds = array<i64: 4096, 512>}, {transform_indices = @transform_2, window_bounds = array<i64: 2, 512>}, {pipeline_mode = #tpu.pipeline_mode<synchronous>, transform_indices = @transform_3, window_bounds = array<i64: 1, 512>}, {pipeline_mode = #tpu.pipeline_mode<synchronous>, transform_indices = @transform_4, window_bounds = array<i64: 1, 512>}]} {
    %c0_i32 = arith.constant 0 : i32
    %0 = arith.cmpi eq, %arg0, %c0_i32 : i32
    %1 = arith.extui %0 : i1 to i32
    %c0_i32_0 = arith.constant 0 : i32
    %2 = arith.cmpi ne, %1, %c0_i32_0 : i32
    scf.if %2 {
      %cst_16 = arith.constant 0.000000e+00 : f32
      %19 = vector.broadcast %cst_16 : f32 to vector<1x512xf32>
      %c0_17 = arith.constant 0 : index
      %c0_18 = arith.constant 0 : index
      %20 = vector.load %arg4[%c0_17, %c0_18] : memref<1x512xf32, #tpu.memory_space<vmem>>, vector<1x512xf32>
      tpu.vector_store %arg4[%c0_17, %c0_18], %19 {strides = array<i32>} : memref<1x512xf32, #tpu.memory_space<vmem>>, vector<1x512xf32>,
      %cst_19 = arith.constant 0.000000e+00 : f32
      %21 = vector.broadcast %cst_19 : f32 to vector<1x512xf32>
      %c0_20 = arith.constant 0 : index
      %c0_21 = arith.constant 0 : index
      %22 = vector.load %arg5[%c0_20, %c0_21] : memref<1x512xf32, #tpu.memory_space<vmem>>, vector<1x512xf32>
      tpu.vector_store %arg5[%c0_20, %c0_21], %21 {strides = array<i32>} : memref<1x512xf32, #tpu.memory_space<vmem>>, vector<1x512xf32>,
    } else {
    }
    %c0 = arith.constant 0 : index
    %c0_1 = arith.constant 0 : index
    %3 = vector.load %arg1[%c0, %c0_1] : memref<2x4096xbf16, #tpu.memory_space<vmem>>, vector<2x4096xbf16>
    %c0_2 = arith.constant 0 : index
    %c0_3 = arith.constant 0 : index
    %4 = vector.load %arg2[%c0_2, %c0_3] : memref<4096x512xbf16, #tpu.memory_space<vmem>>, vector<4096x512xbf16>
    %cst = arith.constant dense<0.000000e+00> : vector<2x512xf32>
    %5 = tpu.matmul %3, %4, %cst {dimension_numbers = #tpu.dot_dimension_numbers<[1], [0], [0], [1], [0, 0, 1, 1], [], []>} : vector<2x4096xbf16>, vector<4096x512xbf16>, vector<2x512xf32> -> vector<2x512xf32>
    %6 = arith.truncf %5 : vector<2x512xf32> to vector<2x512xbf16>
    %c0_4 = arith.constant 0 : index
    %c0_5 = arith.constant 0 : index
    %7 = vector.load %arg3[%c0_4, %c0_5] : memref<2x512xbf16, #tpu.memory_space<vmem>>, vector<2x512xbf16>
    tpu.vector_store %arg3[%c0_4, %c0_5], %6 {strides = array<i32>} : memref<2x512xbf16, #tpu.memory_space<vmem>>, vector<2x512xbf16>,
    %c0_6 = arith.constant 0 : index
    %c0_7 = arith.constant 0 : index
    %8 = vector.load %arg4[%c0_6, %c0_7] : memref<1x512xf32, #tpu.memory_space<vmem>>, vector<1x512xf32>
    %cst_8 = arith.constant dense<0.000000e+00> : vector<512xf32>
    %9 = vector.multi_reduction <add>, %5, %cst_8 [0] : vector<2x512xf32> to vector<512xf32>
    %10 = vector.shape_cast %9 : vector<512xf32> to vector<1x512xf32>
    %11 = arith.addf %8, %10 : vector<1x512xf32>
    %c0_9 = arith.constant 0 : index
    %c0_10 = arith.constant 0 : index
    %12 = vector.load %arg4[%c0_9, %c0_10] : memref<1x512xf32, #tpu.memory_space<vmem>>, vector<1x512xf32>
    tpu.vector_store %arg4[%c0_9, %c0_10], %11 {strides = array<i32>} : memref<1x512xf32, #tpu.memory_space<vmem>>, vector<1x512xf32>,
    %c0_11 = arith.constant 0 : index
    %c0_12 = arith.constant 0 : index
    %13 = vector.load %arg5[%c0_11, %c0_12] : memref<1x512xf32, #tpu.memory_space<vmem>>, vector<1x512xf32>
    %14 = arith.mulf %5, %5 : vector<2x512xf32>
    %cst_13 = arith.constant dense<0.000000e+00> : vector<512xf32>
    %15 = vector.multi_reduction <add>, %14, %cst_13 [0] : vector<2x512xf32> to vector<512xf32>
    %16 = vector.shape_cast %15 : vector<512xf32> to vector<1x512xf32>
    %17 = arith.addf %13, %16 : vector<1x512xf32>
    %c0_14 = arith.constant 0 : index
    %c0_15 = arith.constant 0 : index
    %18 = vector.load %arg5[%c0_14, %c0_15] : memref<1x512xf32, #tpu.memory_space<vmem>>, vector<1x512xf32>
    tpu.vector_store %arg5[%c0_14, %c0_15], %17 {strides = array<i32>} : memref<1x512xf32, #tpu.memory_space<vmem>>, vector<1x512xf32>,
    return
  }
  func.func @transform_0(%arg0: i32) -> (i32, i32) {
    %c0_i32 = arith.constant 0 : i32
    %c0_i32_0 = arith.constant 0 : i32
    return %arg0, %c0_i32 : i32, i32
  }
  func.func @transform_1(%arg0: i32) -> (i32, i32) {
    %c0_i32 = arith.constant 0 : i32
    %c0_i32_0 = arith.constant 0 : i32
    %c0_i32_1 = arith.constant 0 : i32
    return %c0_i32, %c0_i32_0 : i32, i32
  }
  func.func @transform_2(%arg0: i32) -> (i32, i32) {
    %c0_i32 = arith.constant 0 : i32
    %c0_i32_0 = arith.constant 0 : i32
    return %arg0, %c0_i32 : i32, i32
  }
  func.func @transform_3(%arg0: i32) -> (i32, i32) {
    %c0_i32 = arith.constant 0 : i32
    %c0_i32_0 = arith.constant 0 : i32
    %c0_i32_1 = arith.constant 0 : i32
    return %c0_i32, %c0_i32_0 : i32, i32
  }
  func.func @transform_4(%arg0: i32) -> (i32, i32) {
    %c0_i32 = arith.constant 0 : i32
    %c0_i32_0 = arith.constant 0 : i32
    %c0_i32_1 = arith.constant 0 : i32
    return %c0_i32, %c0_i32_0 : i32, i32
  }
}

module attributes {stable_mosaic.version = 11 : i64} {
  func.func @_bn_apply_lrelu_kernel(%arg0: i32, %arg1: memref<2x512xbf16, #tpu.memory_space<vmem>>, %arg2: memref<1x512xf32, #tpu.memory_space<vmem>>, %arg3: memref<1x512xf32, #tpu.memory_space<vmem>>, %arg4: memref<2x512xbf16, #tpu.memory_space<vmem>>) attributes {dimension_semantics = [#tpu.dimension_semantics<parallel>], iteration_bounds = array<i64: 1>, scalar_prefetch = 0 : i64, scratch_operands = 0 : i64, tpu.core_type = #tpu.core_type<tc>, window_params = [{transform_indices = @transform_0, window_bounds = array<i64: 2, 512>}, {pipeline_mode = #tpu.pipeline_mode<synchronous>, transform_indices = @transform_1, window_bounds = array<i64: 1, 512>}, {pipeline_mode = #tpu.pipeline_mode<synchronous>, transform_indices = @transform_2, window_bounds = array<i64: 1, 512>}, {transform_indices = @transform_3, window_bounds = array<i64: 2, 512>}]} {
    %c0 = arith.constant 0 : index
    %c0_0 = arith.constant 0 : index
    %0 = vector.load %arg1[%c0, %c0_0] : memref<2x512xbf16, #tpu.memory_space<vmem>>, vector<2x512xbf16>
    %1 = arith.extf %0 : vector<2x512xbf16> to vector<2x512xf32>
    %c0_1 = arith.constant 0 : index
    %c0_2 = arith.constant 0 : index
    %2 = vector.load %arg2[%c0_1, %c0_2] : memref<1x512xf32, #tpu.memory_space<vmem>>, vector<1x512xf32>
    %3 = vector.broadcast %2 : vector<1x512xf32> to vector<2x512xf32>
    %4 = arith.mulf %1, %3 : vector<2x512xf32>
    %c0_3 = arith.constant 0 : index
    %c0_4 = arith.constant 0 : index
    %5 = vector.load %arg3[%c0_3, %c0_4] : memref<1x512xf32, #tpu.memory_space<vmem>>, vector<1x512xf32>
    %6 = vector.broadcast %5 : vector<1x512xf32> to vector<2x512xf32>
    %7 = arith.addf %4, %6 : vector<2x512xf32>
    %cst = arith.constant 0.000000e+00 : f32
    %8 = vector.broadcast %cst : f32 to vector<2x512xf32>
    %9 = arith.cmpf oge, %7, %8 : vector<2x512xf32>
    %cst_5 = arith.constant 2.000000e-01 : f32
    %10 = vector.broadcast %cst_5 : f32 to vector<2x512xf32>
    %11 = arith.mulf %10, %7 : vector<2x512xf32>
    %12 = arith.select %9, %7, %11 : vector<2x512xi1>, vector<2x512xf32>
    %13 = arith.truncf %12 : vector<2x512xf32> to vector<2x512xbf16>
    %c0_6 = arith.constant 0 : index
    %c0_7 = arith.constant 0 : index
    %14 = vector.load %arg4[%c0_6, %c0_7] : memref<2x512xbf16, #tpu.memory_space<vmem>>, vector<2x512xbf16>
    tpu.vector_store %arg4[%c0_6, %c0_7], %13 {strides = array<i32>} : memref<2x512xbf16, #tpu.memory_space<vmem>>, vector<2x512xbf16>,
    return
  }
  func.func @transform_0(%arg0: i32) -> (i32, i32) {
    %c0_i32 = arith.constant 0 : i32
    %c0_i32_0 = arith.constant 0 : i32
    return %arg0, %c0_i32 : i32, i32
  }
  func.func @transform_1(%arg0: i32) -> (i32, i32) {
    %c0_i32 = arith.constant 0 : i32
    %c0_i32_0 = arith.constant 0 : i32
    %c0_i32_1 = arith.constant 0 : i32
    return %c0_i32, %c0_i32_0 : i32, i32
  }
  func.func @transform_2(%arg0: i32) -> (i32, i32) {
    %c0_i32 = arith.constant 0 : i32
    %c0_i32_0 = arith.constant 0 : i32
    %c0_i32_1 = arith.constant 0 : i32
    return %c0_i32, %c0_i32_0 : i32, i32
  }
  func.func @transform_3(%arg0: i32) -> (i32, i32) {
    %c0_i32 = arith.constant 0 : i32
    %c0_i32_0 = arith.constant 0 : i32
    return %arg0, %c0_i32 : i32, i32
  }
}

module attributes {stable_mosaic.version = 11 : i64} {
  func.func @_head_kernel(%arg0: memref<2x1x512xbf16, #tpu.memory_space<vmem>>, %arg1: memref<1x512xf32, #tpu.memory_space<vmem>>, %arg2: memref<1x1xf32, #tpu.memory_space<vmem>>, %arg3: memref<2x1xf32, #tpu.memory_space<vmem>>) attributes {dimension_semantics = [], scalar_prefetch = 0 : i64, scratch_operands = 0 : i64, tpu.core_type = #tpu.core_type<tc>} {
    %c0 = arith.constant 0 : index
    %c0_0 = arith.constant 0 : index
    %c0_1 = arith.constant 0 : index
    %0 = vector.load %arg0[%c0, %c0_0, %c0_1] : memref<2x1x512xbf16, #tpu.memory_space<vmem>>, vector<2x1x512xbf16>
    %1 = arith.extf %0 : vector<2x1x512xbf16> to vector<2x1x512xf32>
    %cst = arith.constant dense<0.000000e+00> : vector<2x512xf32>
    %2 = vector.multi_reduction <add>, %1, %cst [1] : vector<2x1x512xf32> to vector<2x512xf32>
    %cst_2 = arith.constant 1.000000e+00 : f32
    %3 = vector.broadcast %cst_2 : f32 to vector<2x512xf32>
    %4 = arith.divf %2, %3 : vector<2x512xf32>
    %c0_3 = arith.constant 0 : index
    %c0_4 = arith.constant 0 : index
    %5 = vector.load %arg1[%c0_3, %c0_4] : memref<1x512xf32, #tpu.memory_space<vmem>>, vector<1x512xf32>
    %6 = vector.broadcast %5 : vector<1x512xf32> to vector<2x512xf32>
    %7 = arith.mulf %4, %6 : vector<2x512xf32>
    %cst_5 = arith.constant dense<0.000000e+00> : vector<2xf32>
    %8 = vector.multi_reduction <add>, %7, %cst_5 [1] : vector<2x512xf32> to vector<2xf32>
    %9 = vector.shape_cast %8 : vector<2xf32> to vector<2x1xf32>
    %c0_6 = arith.constant 0 : index
    %c0_7 = arith.constant 0 : index
    %10 = vector.load %arg2[%c0_6, %c0_7] : memref<1x1xf32, #tpu.memory_space<vmem>>, vector<1x1xf32>
    %11 = vector.broadcast %10 : vector<1x1xf32> to vector<2x1xf32>
    %12 = arith.addf %9, %11 : vector<2x1xf32>
    %13 = arith.negf %12 : vector<2x1xf32>
    %14 = math.exp %13 : vector<2x1xf32>
    %cst_8 = arith.constant 1.000000e+00 : f32
    %15 = vector.broadcast %cst_8 : f32 to vector<2x1xf32>
    %16 = arith.addf %15, %14 : vector<2x1xf32>
    %17 = arith.divf %15, %16 : vector<2x1xf32>
    %c0_9 = arith.constant 0 : index
    %c0_10 = arith.constant 0 : index
    %18 = vector.load %arg3[%c0_9, %c0_10] : memref<2x1xf32, #tpu.memory_space<vmem>>, vector<2x1xf32>
    tpu.vector_store %arg3[%c0_9, %c0_10], %17 {strides = array<i32>} : memref<2x1xf32, #tpu.memory_space<vmem>>, vector<2x1xf32>,
    return
  }
}

</mosaic_0001>

<llo_original>
// kernel: discriminator_forward.8
$region0: #{discriminator_forward.8}
  #allocation0 [shape = 'u32[]', space=smem, size = 0x4, offset = 0x4, fixed_abs, tag = 'smem constant byte address 0x4 - core index']
  #allocation1 [shape = 'u32[72,128]{1,0:T(1,128)}', space=vmem, size = 0x9000, scoped, tag = 'internal scratch']
  %s0 = inlined_call_operand.vmem [shape: bf16[128,64], index: 0, kind: input, shape index: {}]
  %s1 = inlined_call_operand.vmem [shape: bf16[64,128], index: 1, kind: input, shape index: {}]
  %s2 = inlined_call_operand.vmem [shape: f32[1,128], index: 2, kind: input, shape index: {}]
  %s3 = inlined_call_operand.vmem [shape: bf16[128,128], index: 3, kind: output, shape index: {}]
  %s4 = sld [smem:[#allocation0]]
  $region22: #{discriminator_forward.8} parent=0
    _
  %s6 = ssub.s32 1, %s4
  %s7 = scalar_select 0, %s6, %s4
  // Predicated region
  $region2: #{discriminator_forward.8} parent=0 // pred_check
    _
  $region3: #{discriminator_forward.8} parent=0 // pred_check_branch
    %9 = sbr.rel (0) target = $region5
  $region4: #{discriminator_forward.8} parent=0 // pred_region
    _
  $region5: #{discriminator_forward.8} parent=0 // pred_fallthru
    _
  // Predicated region
  $region6: #{discriminator_forward.8} parent=0 // pred_check
    _
  $region7: #{discriminator_forward.8} parent=0 // pred_check_branch
    %11 = sbr.rel (0) target = $region9
  $region8: #{discriminator_forward.8} parent=0 // pred_region
    _
  $region9: #{discriminator_forward.8} parent=0 // pred_fallthru
    _
  // Predicated region
  $region10: #{discriminator_forward.8} parent=0 // pred_check
    _
  $region11: #{discriminator_forward.8} parent=0 // pred_check_branch
    %13 = sbr.rel (0) target = $region13
  $region12: #{discriminator_forward.8} parent=0 // pred_region
    _
  $region13: #{discriminator_forward.8} parent=0 // pred_fallthru
    _
  %v15 = vld [vmem:[%s0] sm:$0xf]
  %v16 = vld [vmem:[%s0 + $0x4] sm:$0xf]
  %v17 = vld [vmem:[%s0 + $0x8] sm:$0xf]
  %v18 = vld [vmem:[%s0 + $0xc] sm:$0xf]
  %v19 = vld [vmem:[%s0 + $0x10] sm:$0xf]
  %v20 = vld [vmem:[%s0 + $0x14] sm:$0xf]
  %v21 = vld [vmem:[%s0 + $0x18] sm:$0xf]
  %v22 = vld [vmem:[%s0 + $0x1c] sm:$0xf]
  %v23 = vld [vmem:[%s0 + $0x20] sm:$0xf]
  %v24 = vld [vmem:[%s0 + $0x24] sm:$0xf]
  %v25 = vld [vmem:[%s0 + $0x28] sm:$0xf]
  %v26 = vld [vmem:[%s0 + $0x2c] sm:$0xf]
  %v27 = vld [vmem:[%s0 + $0x30] sm:$0xf]
  %v28 = vld [vmem:[%s0 + $0x34] sm:$0xf]
  %v29 = vld [vmem:[%s0 + $0x38] sm:$0xf]
  %v30 = vld [vmem:[%s0 + $0x3c] sm:$0xf]
  %v31 = vld [vmem:[%s1] sm:$0xf]
  %v32 = vld [vmem:[%s1 + $0x4] sm:$0xf]
  %v33 = vld [vmem:[%s1 + $0x8] sm:$0xf]
  %v34 = vld [vmem:[%s1 + $0xc] sm:$0xf]
  %v35 = vld [vmem:[%s1 + $0x10] sm:$0xf]
  %v36 = vld [vmem:[%s1 + $0x14] sm:$0xf]
  %v37 = vld [vmem:[%s1 + $0x18] sm:$0xf]
  %v38 = vld [vmem:[%s1 + $0x1c] sm:$0xf]
  %v39 = vld [vmem:[%s2] sm:$0x1]
  %v41 = vperm.slane %v39, 0
  %v59 = vunpack.c.l.b16 %v15
  %v60 = vunpack.c.l.b16 %v16
  %v61 = vunpack.c.l.b16 %v17
  %v62 = vunpack.c.l.b16 %v18
  %v63 = vunpack.c.l.b16 %v19
  %v64 = vunpack.c.l.b16 %v20
  %v65 = vunpack.c.l.b16 %v21
  %v66 = vunpack.c.l.b16 %v22
  %v67 = vunpack.c.l.b16 %v23
  %v68 = vunpack.c.l.b16 %v24
  %v69 = vunpack.c.l.b16 %v25
  %v70 = vunpack.c.l.b16 %v26
  %v71 = vunpack.c.l.b16 %v27
  %v72 = vunpack.c.l.b16 %v28
  %v73 = vunpack.c.l.b16 %v29
  %v74 = vunpack.c.l.b16 %v30
  %v75 = vpack.c.b16 %v60, %v59
  %v76 = vpack.c.b16 %v62, %v61
  %v77 = vpack.c.b16 %v64, %v63
  %v78 = vpack.c.b16 %v66, %v65
  %v79 = vpack.c.b16 %v68, %v67
  %v80 = vpack.c.b16 %v70, %v69
  %v81 = vpack.c.b16 %v72, %v71
  %v82 = vpack.c.b16 %v74, %v73
  %v91 = vunpack.c.l.b16 %v31
  %v92 = vunpack.c.l.b16 %v32
  %v93 = vunpack.c.l.b16 %v33
  %v94 = vunpack.c.l.b16 %v34
  %v95 = vunpack.c.l.b16 %v35
  %v96 = vunpack.c.l.b16 %v36
  %v97 = vunpack.c.l.b16 %v37
  %v98 = vunpack.c.l.b16 %v38
  %v99 = vpack.c.b16 %v92, %v91
  %v100 = vpack.c.b16 %v94, %v93
  %v101 = vpack.c.b16 %v96, %v95
  %v102 = vpack.c.b16 %v98, %v97
  %vm107 = vcmask 523264
  %v109 = vsel %vm107, %v75, 0
  %v112 = vsel %vm107, %v76, 0
  %v115 = vsel %vm107, %v77, 0
  %v118 = vsel %vm107, %v78, 0
  %v121 = vsel %vm107, %v79, 0
  %v124 = vsel %vm107, %v80, 0
  %v127 = vsel %vm107, %v81, 0
  %v130 = vsel %vm107, %v82, 0
  %132 = vmatpush.bf16.msra.mxu0 0
  %133 = vmatpush.bf16.msra.mxu0 0
  %134 = vmatpush.bf16.msra.mxu0 0
  %135 = vmatpush.bf16.msra.mxu0 0
  %136 = vmatpush.bf16.msra.mxu0 %v102
  %137 = vmatpush.bf16.msra.mxu0 %v101
  %138 = vmatpush.bf16.msra.mxu0 %v100
  %139 = vmatpush.bf16.msra.mxu0 %v99
  %140 = vmatmul.bf16.gmra.mxu0 %v109
  %v141 = vpop.f32.mrf.mxu0
  %v142 = vadd.f32 %v41, %v141
  %v143 = vpop.f32.mrf.mxu0
  %v144 = vadd.f32 %v41, %v143
  %145 = vmatmul.bf16.gmra.mxu0 %v112
  %v146 = vpop.f32.mrf.mxu0
  %v147 = vadd.f32 %v41, %v146
  %v148 = vpop.f32.mrf.mxu0
  %v149 = vadd.f32 %v41, %v148
  %150 = vmatmul.bf16.gmra.mxu0 %v115
  %v151 = vpop.f32.mrf.mxu0
  %v152 = vadd.f32 %v41, %v151
  %v153 = vpop.f32.mrf.mxu0
  %v154 = vadd.f32 %v41, %v153
  %155 = vmatmul.bf16.gmra.mxu0 %v118
  %v156 = vpop.f32.mrf.mxu0
  %v157 = vadd.f32 %v41, %v156
  %v158 = vpop.f32.mrf.mxu0
  %v159 = vadd.f32 %v41, %v158
  %160 = vmatmul.bf16.gmra.mxu0 %v121
  %v161 = vpop.f32.mrf.mxu0
  %v162 = vadd.f32 %v41, %v161
  %v163 = vpop.f32.mrf.mxu0
  %v164 = vadd.f32 %v41, %v163
  %165 = vmatmul.bf16.gmra.mxu0 %v124
  %v166 = vpop.f32.mrf.mxu0
  %v167 = vadd.f32 %v41, %v166
  %v168 = vpop.f32.mrf.mxu0
  %v169 = vadd.f32 %v41, %v168
  %170 = vmatmul.bf16.gmra.mxu0 %v127
  %v171 = vpop.f32.mrf.mxu0
  %v172 = vadd.f32 %v41, %v171
  %v173 = vpop.f32.mrf.mxu0
  %v174 = vadd.f32 %v41, %v173
  %175 = vmatmul.bf16.gmra.mxu0 %v130
  %v176 = vpop.f32.mrf.mxu0
  %v177 = vadd.f32 %v41, %v176
  %v178 = vpop.f32.mrf.mxu0
  %v179 = vadd.f32 %v41, %v178
  %180 = vdwg.mxu0
  %vm181 = vcmp.ge.f32.partialorder %v142, 0.0
  %vm182 = vcmp.ge.f32.partialorder %v144, 0.0
  %vm183 = vcmp.ge.f32.partialorder %v147, 0.0
  %vm184 = vcmp.ge.f32.partialorder %v149, 0.0
  %vm185 = vcmp.ge.f32.partialorder %v152, 0.0
  %vm186 = vcmp.ge.f32.partialorder %v154, 0.0
  %vm187 = vcmp.ge.f32.partialorder %v157, 0.0
  %vm188 = vcmp.ge.f32.partialorder %v159, 0.0
  %vm189 = vcmp.ge.f32.partialorder %v162, 0.0
  %vm190 = vcmp.ge.f32.partialorder %v164, 0.0
  %vm191 = vcmp.ge.f32.partialorder %v167, 0.0
  %vm192 = vcmp.ge.f32.partialorder %v169, 0.0
  %vm193 = vcmp.ge.f32.partialorder %v172, 0.0
  %vm194 = vcmp.ge.f32.partialorder %v174, 0.0
  %vm195 = vcmp.ge.f32.partialorder %v177, 0.0
  %vm196 = vcmp.ge.f32.partialorder %v179, 0.0
  %v197 = vmul.f32 %v142, 0.2
  %v198 = vmul.f32 %v144, 0.2
  %v199 = vmul.f32 %v147, 0.2
  %v200 = vmul.f32 %v149, 0.2
  %v201 = vmul.f32 %v152, 0.2
  %v202 = vmul.f32 %v154, 0.2
  %v203 = vmul.f32 %v157, 0.2
  %v204 = vmul.f32 %v159, 0.2
  %v205 = vmul.f32 %v162, 0.2
  %v206 = vmul.f32 %v164, 0.2
  %v207 = vmul.f32 %v167, 0.2
  %v208 = vmul.f32 %v169, 0.2
  %v209 = vmul.f32 %v172, 0.2
  %v210 = vmul.f32 %v174, 0.2
  %v211 = vmul.f32 %v177, 0.2
  %v212 = vmul.f32 %v179, 0.2
  %v213 = vsel %vm181, %v142, %v197
  %v214 = vsel %vm182, %v144, %v198
  %v215 = vsel %vm183, %v147, %v199
  %v216 = vsel %vm184, %v149, %v200
  %v217 = vsel %vm185, %v152, %v201
  %v218 = vsel %vm186, %v154, %v202
  %v219 = vsel %vm187, %v157, %v203
  %v220 = vsel %vm188, %v159, %v204
  %v221 = vsel %vm189, %v162, %v205
  %v222 = vsel %vm190, %v164, %v206
  %v223 = vsel %vm191, %v167, %v207
  %v224 = vsel %vm192, %v169, %v208
  %v225 = vsel %vm193, %v172, %v209
  %v226 = vsel %vm194, %v174, %v210
  %v227 = vsel %vm195, %v177, %v211
  %v228 = vsel %vm196, %v179, %v212
  %v229 = vpack.c.bf16 %v213, %v213
  %v230 = vpack.c.bf16 %v214, %v214
  %v231 = vpack.c.bf16 %v215, %v215
  %v232 = vpack.c.bf16 %v216, %v216
  %v233 = vpack.c.bf16 %v217, %v217
  %v234 = vpack.c.bf16 %v218, %v218
  %v235 = vpack.c.bf16 %v219, %v219
  %v236 = vpack.c.bf16 %v220, %v220
  %v237 = vpack.c.bf16 %v221, %v221
  %v238 = vpack.c.bf16 %v222, %v222
  %v239 = vpack.c.bf16 %v223, %v223
  %v240 = vpack.c.bf16 %v224, %v224
  %v241 = vpack.c.bf16 %v225, %v225
  %v242 = vpack.c.bf16 %v226, %v226
  %v243 = vpack.c.bf16 %v227, %v227
  %v244 = vpack.c.bf16 %v228, %v228
  %245 = vst [vmem:[%s3] sm:$0xf] %v229
  %246 = vst [vmem:[%s3 + $0x4] sm:$0xf] %v230
  %247 = vst [vmem:[%s3 + $0x8] sm:$0xf] %v231
  %248 = vst [vmem:[%s3 + $0xc] sm:$0xf] %v232
  %249 = vst [vmem:[%s3 + $0x10] sm:$0xf] %v233
  %250 = vst [vmem:[%s3 + $0x14] sm:$0xf] %v234
  %251 = vst [vmem:[%s3 + $0x18] sm:$0xf] %v235
  %252 = vst [vmem:[%s3 + $0x1c] sm:$0xf] %v236
  %253 = vst [vmem:[%s3 + $0x20] sm:$0xf] %v237
  %254 = vst [vmem:[%s3 + $0x24] sm:$0xf] %v238
  %255 = vst [vmem:[%s3 + $0x28] sm:$0xf] %v239
  %256 = vst [vmem:[%s3 + $0x2c] sm:$0xf] %v240
  %257 = vst [vmem:[%s3 + $0x30] sm:$0xf] %v241
  %258 = vst [vmem:[%s3 + $0x34] sm:$0xf] %v242
  %259 = vst [vmem:[%s3 + $0x38] sm:$0xf] %v243
  %260 = vst [vmem:[%s3 + $0x3c] sm:$0xf] %v244
  // Predicated region
  $region14: #{discriminator_forward.8} parent=0 // pred_check
    _
  $region15: #{discriminator_forward.8} parent=0 // pred_check_branch
    %262 = sbr.rel (0) target = $region17
  $region16: #{discriminator_forward.8} parent=0 // pred_region
    _
  $region17: #{discriminator_forward.8} parent=0 // pred_fallthru
    _
  // Predicated region
  $region18: #{discriminator_forward.8} parent=0 // pred_check
    _
  $region19: #{discriminator_forward.8} parent=0 // pred_check_branch
    %264 = sbr.rel (0) target = $region21
  $region20: #{discriminator_forward.8} parent=0 // pred_region
    _
  $region21: #{discriminator_forward.8} parent=0 // pred_fallthru
    _

// kernel: discriminator_forward.10
$region0: #{discriminator_forward.10}
  #allocation0 [shape = 'u32[]', space=smem, size = 0x4, offset = 0x4, fixed_abs, tag = 'smem constant byte address 0x4 - core index']
  #allocation1 [shape = 'u32[72,128]{1,0:T(1,128)}', space=vmem, size = 0x9000, scoped, tag = 'internal scratch']
  %s0 = inlined_call_operand.vmem [shape: bf16[32,128], index: 0, kind: input, shape index: {}]
  %s1 = inlined_call_operand.vmem [shape: f32[1,128], index: 1, kind: input, shape index: {}]
  %s2 = inlined_call_operand.vmem [shape: f32[1,128], index: 2, kind: input, shape index: {}]
  %s3 = inlined_call_operand.vmem [shape: bf16[32,128], index: 3, kind: output, shape index: {}]
  %s4 = sld [smem:[#allocation0]]
  $region22: #{discriminator_forward.10} parent=0
    _
  %s6 = ssub.s32 1, %s4
  %s7 = scalar_select 0, %s6, %s4
  // Predicated region
  $region2: #{discriminator_forward.10} parent=0 // pred_check
    _
  $region3: #{discriminator_forward.10} parent=0 // pred_check_branch
    %9 = sbr.rel (0) target = $region5
  $region4: #{discriminator_forward.10} parent=0 // pred_region
    _
  $region5: #{discriminator_forward.10} parent=0 // pred_fallthru
    _
  // Predicated region
  $region6: #{discriminator_forward.10} parent=0 // pred_check
    _
  $region7: #{discriminator_forward.10} parent=0 // pred_check_branch
    %11 = sbr.rel (0) target = $region9
  $region8: #{discriminator_forward.10} parent=0 // pred_region
    _
  $region9: #{discriminator_forward.10} parent=0 // pred_fallthru
    _
  // Predicated region
  $region10: #{discriminator_forward.10} parent=0 // pred_check
    _
  $region11: #{discriminator_forward.10} parent=0 // pred_check_branch
    %13 = sbr.rel (0) target = $region13
  $region12: #{discriminator_forward.10} parent=0 // pred_region
    _
  $region13: #{discriminator_forward.10} parent=0 // pred_fallthru
    _
  %v14 = vld [vmem:[%s0] sm:$0xf]
  %v15 = vld [vmem:[%s0 + $0x4] sm:$0xf]
  %v16 = vld [vmem:[%s0 + $0x8] sm:$0xf]
  %v17 = vld [vmem:[%s0 + $0xc] sm:$0xf]
  %v18 = vunpack.c.l.bf16 %v14
  %v19 = vunpack.c.l.bf16 %v15
  %v20 = vunpack.c.l.bf16 %v16
  %v21 = vunpack.c.l.bf16 %v17
  %v22 = vld [vmem:[%s1] sm:$0x1]
  %v24 = vperm.slane %v22, 0
  %v26 = vmul.f32 %v18, %v24
  %v27 = vmul.f32 %v19, %v24
  %v28 = vmul.f32 %v20, %v24
  %v29 = vmul.f32 %v21, %v24
  %v30 = vld [vmem:[%s2] sm:$0x1]
  %v32 = vperm.slane %v30, 0
  %v34 = vadd.f32 %v26, %v32
  %v35 = vadd.f32 %v27, %v32
  %v36 = vadd.f32 %v28, %v32
  %v37 = vadd.f32 %v29, %v32
  %vm38 = vcmp.ge.f32.partialorder %v34, 0.0
  %vm39 = vcmp.ge.f32.partialorder %v35, 0.0
  %vm40 = vcmp.ge.f32.partialorder %v36, 0.0
  %vm41 = vcmp.ge.f32.partialorder %v37, 0.0
  %v42 = vmul.f32 %v34, 0.2
  %v43 = vmul.f32 %v35, 0.2
  %v44 = vmul.f32 %v36, 0.2
  %v45 = vmul.f32 %v37, 0.2
  %v46 = vsel %vm38, %v34, %v42
  %v47 = vsel %vm39, %v35, %v43
  %v48 = vsel %vm40, %v36, %v44
  %v49 = vsel %vm41, %v37, %v45
  %v50 = vpack.c.bf16 %v46, %v46
  %v51 = vpack.c.bf16 %v47, %v47
  %v52 = vpack.c.bf16 %v48, %v48
  %v53 = vpack.c.bf16 %v49, %v49
  %54 = vst [vmem:[%s3] sm:$0xf] %v50
  %55 = vst [vmem:[%s3 + $0x4] sm:$0xf] %v51
  %56 = vst [vmem:[%s3 + $0x8] sm:$0xf] %v52
  %57 = vst [vmem:[%s3 + $0xc] sm:$0xf] %v53
  // Predicated region
  $region14: #{discriminator_forward.10} parent=0 // pred_check
    _
  $region15: #{discriminator_forward.10} parent=0 // pred_check_branch
    %59 = sbr.rel (0) target = $region17
  $region16: #{discriminator_forward.10} parent=0 // pred_region
    _
  $region17: #{discriminator_forward.10} parent=0 // pred_fallthru
    _
  // Predicated region
  $region18: #{discriminator_forward.10} parent=0 // pred_check
    _
  $region19: #{discriminator_forward.10} parent=0 // pred_check_branch
    %61 = sbr.rel (0) target = $region21
  $region20: #{discriminator_forward.10} parent=0 // pred_region
    _
  $region21: #{discriminator_forward.10} parent=0 // pred_fallthru
    _

// kernel: discriminator_forward.9
$region0: #{discriminator_forward.9}
  #allocation0 [shape = 'u32[]', space=smem, size = 0x4, offset = 0x4, fixed_abs, tag = 'smem constant byte address 0x4 - core index']
  #allocation1 [shape = 'u32[72,128]{1,0:T(1,128)}', space=vmem, size = 0x9000, scoped, tag = 'internal scratch']
  %s0 = inlined_call_operand.vmem [shape: bf16[32,1024], index: 0, kind: input, shape index: {}]
  %s1 = inlined_call_operand.vmem [shape: bf16[1024,128], index: 1, kind: input, shape index: {}]
  %s2 = inlined_call_operand.vmem [shape: bf16[32,128], index: 2, kind: output, shape index: {0}]
  %s3 = inlined_call_operand.vmem [shape: f32[1,128], index: 3, kind: output, shape index: {1}]
  %s4 = inlined_call_operand.vmem [shape: f32[1,128], index: 4, kind: output, shape index: {2}]
  %5 = xla_tuple %s2, %s3, %s4
  %s6 = sld [smem:[#allocation0]]
  $region38: #{discriminator_forward.9} parent=0
    _
  %s8 = ssub.s32 1, %s6
  %s9 = scalar_select 0, %s8, %s6
  // Predicated region
  $region2: #{discriminator_forward.9} parent=0 // pred_check
    _
  $region3: #{discriminator_forward.9} parent=0 // pred_check_branch
    %11 = sbr.rel (0) target = $region5
  $region4: #{discriminator_forward.9} parent=0 // pred_region
    _
  $region5: #{discriminator_forward.9} parent=0 // pred_fallthru
    _
  // Predicated region
  $region6: #{discriminator_forward.9} parent=0 // pred_check
    _
  $region7: #{discriminator_forward.9} parent=0 // pred_check_branch
    %13 = sbr.rel (0) target = $region9
  $region8: #{discriminator_forward.9} parent=0 // pred_region
    _
  $region9: #{discriminator_forward.9} parent=0 // pred_fallthru
    _
  %p14 = scmp.eq.s32.totalorder 0, 0
  // Predicated region
  $region10: #{discriminator_forward.9} parent=0 // pred_check
    %p15 = pneg %p14
  $region11: #{discriminator_forward.9} parent=0 // pred_check_branch
    %17 = sbr.rel (%p15) target = $region13
  $region12: #{discriminator_forward.9} parent=0 // pred_region
    %18 = vst [vmem:[%s3] sm:$0x1] 0.0
    %19 = vst [vmem:[%s4] sm:$0x1] 0.0
  $region13: #{discriminator_forward.9} parent=0 // pred_fallthru
    _
  %v20 = vld [vmem:[%s0] sm:$0xff]
  %v21 = vld [vmem:[%s0 + $0x8] sm:$0xff]
  %v22 = vld [vmem:[%s0 + $0x10] sm:$0xff]
  %v23 = vld [vmem:[%s0 + $0x18] sm:$0xff]
  %v24 = vld [vmem:[%s0 + $0x20] sm:$0xff]
  %v25 = vld [vmem:[%s0 + $0x28] sm:$0xff]
  %v26 = vld [vmem:[%s0 + $0x30] sm:$0xff]
  %v27 = vld [vmem:[%s0 + $0x38] sm:$0xff]
  %v28 = vld [vmem:[%s0 + $0x40] sm:$0xff]
  %v29 = vld [vmem:[%s0 + $0x48] sm:$0xff]
  %v30 = vld [vmem:[%s0 + $0x50] sm:$0xff]
  %v31 = vld [vmem:[%s0 + $0x58] sm:$0xff]
  %v32 = vld [vmem:[%s0 + $0x60] sm:$0xff]
  %v33 = vld [vmem:[%s0 + $0x68] sm:$0xff]
  %v34 = vld [vmem:[%s0 + $0x70] sm:$0xff]
  %v35 = vld [vmem:[%s0 + $0x78] sm:$0xff]
  %v36 = vld [vmem:[%s1] sm:$0xf]
  %v37 = vld [vmem:[%s1 + $0x4] sm:$0xf]
  %v38 = vld [vmem:[%s1 + $0x8] sm:$0xf]
  %v39 = vld [vmem:[%s1 + $0xc] sm:$0xf]
  %v40 = vld [vmem:[%s1 + $0x10] sm:$0xf]
  %v41 = vld [vmem:[%s1 + $0x14] sm:$0xf]
  %v42 = vld [vmem:[%s1 + $0x18] sm:$0xf]
  %v43 = vld [vmem:[%s1 + $0x1c] sm:$0xf]
  %v44 = vld [vmem:[%s1 + $0x20] sm:$0xf]
  %v45 = vld [vmem:[%s1 + $0x24] sm:$0xf]
  %v46 = vld [vmem:[%s1 + $0x28] sm:$0xf]
  %v47 = vld [vmem:[%s1 + $0x2c] sm:$0xf]
  %v48 = vld [vmem:[%s1 + $0x30] sm:$0xf]
  %v49 = vld [vmem:[%s1 + $0x34] sm:$0xf]
  %v50 = vld [vmem:[%s1 + $0x38] sm:$0xf]
  %v51 = vld [vmem:[%s1 + $0x3c] sm:$0xf]
  %v52 = vld [vmem:[%s1 + $0x40] sm:$0xf]
  %v53 = vld [vmem:[%s1 + $0x44] sm:$0xf]
  %v54 = vld [vmem:[%s1 + $0x48] sm:$0xf]
  %v55 = vld [vmem:[%s1 + $0x4c] sm:$0xf]
  %v56 = vld [vmem:[%s1 + $0x50] sm:$0xf]
  %v57 = vld [vmem:[%s1 + $0x54] sm:$0xf]
  %v58 = vld [vmem:[%s1 + $0x58] sm:$0xf]
  %v59 = vld [vmem:[%s1 + $0x5c] sm:$0xf]
  %v60 = vld [vmem:[%s1 + $0x60] sm:$0xf]
  %v61 = vld [vmem:[%s1 + $0x64] sm:$0xf]
  %v62 = vld [vmem:[%s1 + $0x68] sm:$0xf]
  %v63 = vld [vmem:[%s1 + $0x6c] sm:$0xf]
  %v64 = vld [vmem:[%s1 + $0x70] sm:$0xf]
  %v65 = vld [vmem:[%s1 + $0x74] sm:$0xf]
  %v66 = vld [vmem:[%s1 + $0x78] sm:$0xf]
  %v67 = vld [vmem:[%s1 + $0x7c] sm:$0xf]
  %v68 = vld [vmem:[%s1 + $0x80] sm:$0xf]
  %v69 = vld [vmem:[%s1 + $0x84] sm:$0xf]
  %v70 = vld [vmem:[%s1 + $0x88] sm:$0xf]
  %v71 = vld [vmem:[%s1 + $0x8c] sm:$0xf]
  %v72 = vld [vmem:[%s1 + $0x90] sm:$0xf]
  %v73 = vld [vmem:[%s1 + $0x94] sm:$0xf]
  %v74 = vld [vmem:[%s1 + $0x98] sm:$0xf]
  %v75 = vld [vmem:[%s1 + $0x9c] sm:$0xf]
  %v76 = vld [vmem:[%s1 + $0xa0] sm:$0xf]
  %v77 = vld [vmem:[%s1 + $0xa4] sm:$0xf]
  %v78 = vld [vmem:[%s1 + $0xa8] sm:$0xf]
  %v79 = vld [vmem:[%s1 + $0xac] sm:$0xf]
  %v80 = vld [vmem:[%s1 + $0xb0] sm:$0xf]
  %v81 = vld [vmem:[%s1 + $0xb4] sm:$0xf]
  %v82 = vld [vmem:[%s1 + $0xb8] sm:$0xf]
  %v83 = vld [vmem:[%s1 + $0xbc] sm:$0xf]
  %v84 = vld [vmem:[%s1 + $0xc0] sm:$0xf]
  %v85 = vld [vmem:[%s1 + $0xc4] sm:$0xf]
  %v86 = vld [vmem:[%s1 + $0xc8] sm:$0xf]
  %v87 = vld [vmem:[%s1 + $0xcc] sm:$0xf]
  %v88 = vld [vmem:[%s1 + $0xd0] sm:$0xf]
  %v89 = vld [vmem:[%s1 + $0xd4] sm:$0xf]
  %v90 = vld [vmem:[%s1 + $0xd8] sm:$0xf]
  %v91 = vld [vmem:[%s1 + $0xdc] sm:$0xf]
  %v92 = vld [vmem:[%s1 + $0xe0] sm:$0xf]
  %v93 = vld [vmem:[%s1 + $0xe4] sm:$0xf]
  %v94 = vld [vmem:[%s1 + $0xe8] sm:$0xf]
  %v95 = vld [vmem:[%s1 + $0xec] sm:$0xf]
  %v96 = vld [vmem:[%s1 + $0xf0] sm:$0xf]
  %v97 = vld [vmem:[%s1 + $0xf4] sm:$0xf]
  %v98 = vld [vmem:[%s1 + $0xf8] sm:$0xf]
  %v99 = vld [vmem:[%s1 + $0xfc] sm:$0xf]
  %v100 = vld [vmem:[%s1 + $0x100] sm:$0xf]
  %v101 = vld [vmem:[%s1 + $0x104] sm:$0xf]
  %v102 = vld [vmem:[%s1 + $0x108] sm:$0xf]
  %v103 = vld [vmem:[%s1 + $0x10c] sm:$0xf]
  %v104 = vld [vmem:[%s1 + $0x110] sm:$0xf]
  %v105 = vld [vmem:[%s1 + $0x114] sm:$0xf]
  %v106 = vld [vmem:[%s1 + $0x118] sm:$0xf]
  %v107 = vld [vmem:[%s1 + $0x11c] sm:$0xf]
  %v108 = vld [vmem:[%s1 + $0x120] sm:$0xf]
  %v109 = vld [vmem:[%s1 + $0x124] sm:$0xf]
  %v110 = vld [vmem:[%s1 + $0x128] sm:$0xf]
  %v111 = vld [vmem:[%s1 + $0x12c] sm:$0xf]
  %v112 = vld [vmem:[%s1 + $0x130] sm:$0xf]
  %v113 = vld [vmem:[%s1 + $0x134] sm:$0xf]
  %v114 = vld [vmem:[%s1 + $0x138] sm:$0xf]
  %v115 = vld [vmem:[%s1 + $0x13c] sm:$0xf]
  %v116 = vld [vmem:[%s1 + $0x140] sm:$0xf]
  %v117 = vld [vmem:[%s1 + $0x144] sm:$0xf]
  %v118 = vld [vmem:[%s1 + $0x148] sm:$0xf]
  %v119 = vld [vmem:[%s1 + $0x14c] sm:$0xf]
  %v120 = vld [vmem:[%s1 + $0x150] sm:$0xf]
  %v121 = vld [vmem:[%s1 + $0x154] sm:$0xf]
  %v122 = vld [vmem:[%s1 + $0x158] sm:$0xf]
  %v123 = vld [vmem:[%s1 + $0x15c] sm:$0xf]
  %v124 = vld [vmem:[%s1 + $0x160] sm:$0xf]
  %v125 = vld [vmem:[%s1 + $0x164] sm:$0xf]
  %v126 = vld [vmem:[%s1 + $0x168] sm:$0xf]
  %v127 = vld [vmem:[%s1 + $0x16c] sm:$0xf]
  %v128 = vld [vmem:[%s1 + $0x170] sm:$0xf]
  %v129 = vld [vmem:[%s1 + $0x174] sm:$0xf]
  %v130 = vld [vmem:[%s1 + $0x178] sm:$0xf]
  %v131 = vld [vmem:[%s1 + $0x17c] sm:$0xf]
  %v132 = vld [vmem:[%s1 + $0x180] sm:$0xf]
  %v133 = vld [vmem:[%s1 + $0x184] sm:$0xf]
  %v134 = vld [vmem:[%s1 + $0x188] sm:$0xf]
  %v135 = vld [vmem:[%s1 + $0x18c] sm:$0xf]
  %v136 = vld [vmem:[%s1 + $0x190] sm:$0xf]
  %v137 = vld [vmem:[%s1 + $0x194] sm:$0xf]
  %v138 = vld [vmem:[%s1 + $0x198] sm:$0xf]
  %v139 = vld [vmem:[%s1 + $0x19c] sm:$0xf]
  %v140 = vld [vmem:[%s1 + $0x1a0] sm:$0xf]
  %v141 = vld [vmem:[%s1 + $0x1a4] sm:$0xf]
  %v142 = vld [vmem:[%s1 + $0x1a8] sm:$0xf]
  %v143 = vld [vmem:[%s1 + $0x1ac] sm:$0xf]
  %v144 = vld [vmem:[%s1 + $0x1b0] sm:$0xf]
  %v145 = vld [vmem:[%s1 + $0x1b4] sm:$0xf]
  %v146 = vld [vmem:[%s1 + $0x1b8] sm:$0xf]
  %v147 = vld [vmem:[%s1 + $0x1bc] sm:$0xf]
  %v148 = vld [vmem:[%s1 + $0x1c0] sm:$0xf]
  %v149 = vld [vmem:[%s1 + $0x1c4] sm:$0xf]
  %v150 = vld [vmem:[%s1 + $0x1c8] sm:$0xf]
  %v151 = vld [vmem:[%s1 + $0x1cc] sm:$0xf]
  %v152 = vld [vmem:[%s1 + $0x1d0] sm:$0xf]
  %v153 = vld [vmem:[%s1 + $0x1d4] sm:$0xf]
  %v154 = vld [vmem:[%s1 + $0x1d8] sm:$0xf]
  %v155 = vld [vmem:[%s1 + $0x1dc] sm:$0xf]
  %v156 = vld [vmem:[%s1 + $0x1e0] sm:$0xf]
  %v157 = vld [vmem:[%s1 + $0x1e4] sm:$0xf]
  %v158 = vld [vmem:[%s1 + $0x1e8] sm:$0xf]
  %v159 = vld [vmem:[%s1 + $0x1ec] sm:$0xf]
  %v160 = vld [vmem:[%s1 + $0x1f0] sm:$0xf]
  %v161 = vld [vmem:[%s1 + $0x1f4] sm:$0xf]
  %v162 = vld [vmem:[%s1 + $0x1f8] sm:$0xf]
  %v163 = vld [vmem:[%s1 + $0x1fc] sm:$0xf]
  %v180 = vunpack.c.l.b16 %v20
  %v181 = vunpack.c.h.b16 %v20
  %v182 = vunpack.c.l.b16 %v21
  %v183 = vunpack.c.h.b16 %v21
  %v184 = vunpack.c.l.b16 %v22
  %v185 = vunpack.c.h.b16 %v22
  %v186 = vunpack.c.l.b16 %v23
  %v187 = vunpack.c.h.b16 %v23
  %v188 = vunpack.c.l.b16 %v24
  %v189 = vunpack.c.h.b16 %v24
  %v190 = vunpack.c.l.b16 %v25
  %v191 = vunpack.c.h.b16 %v25
  %v192 = vunpack.c.l.b16 %v26
  %v193 = vunpack.c.h.b16 %v26
  %v194 = vunpack.c.l.b16 %v27
  %v195 = vunpack.c.h.b16 %v27
  %v196 = vunpack.c.l.b16 %v28
  %v197 = vunpack.c.h.b16 %v28
  %v198 = vunpack.c.l.b16 %v29
  %v199 = vunpack.c.h.b16 %v29
  %v200 = vunpack.c.l.b16 %v30
  %v201 = vunpack.c.h.b16 %v30
  %v202 = vunpack.c.l.b16 %v31
  %v203 = vunpack.c.h.b16 %v31
  %v204 = vunpack.c.l.b16 %v32
  %v205 = vunpack.c.h.b16 %v32
  %v206 = vunpack.c.l.b16 %v33
  %v207 = vunpack.c.h.b16 %v33
  %v208 = vunpack.c.l.b16 %v34
  %v209 = vunpack.c.h.b16 %v34
  %v210 = vunpack.c.l.b16 %v35
  %v211 = vunpack.c.h.b16 %v35
  %v212 = vpack.c.b16 %v188, %v180
  %v213 = vpack.c.b16 %v189, %v181
  %v214 = vpack.c.b16 %v190, %v182
  %v215 = vpack.c.b16 %v191, %v183
  %v216 = vpack.c.b16 %v192, %v184
  %v217 = vpack.c.b16 %v193, %v185
  %v218 = vpack.c.b16 %v194, %v186
  %v219 = vpack.c.b16 %v195, %v187
  %v220 = vpack.c.b16 %v204, %v196
  %v221 = vpack.c.b16 %v205, %v197
  %v222 = vpack.c.b16 %v206, %v198
  %v223 = vpack.c.b16 %v207, %v199
  %v224 = vpack.c.b16 %v208, %v200
  %v225 = vpack.c.b16 %v209, %v201
  %v226 = vpack.c.b16 %v210, %v202
  %v227 = vpack.c.b16 %v211, %v203
  %v372 = vunpack.c.l.b16 %v36
  %v373 = vunpack.c.l.b16 %v37
  %v374 = vunpack.c.l.b16 %v38
  %v375 = vunpack.c.l.b16 %v39
  %v376 = vunpack.c.l.b16 %v40
  %v377 = vunpack.c.l.b16 %v41
  %v378 = vunpack.c.l.b16 %v42
  %v379 = vunpack.c.l.b16 %v43
  %v380 = vunpack.c.l.b16 %v44
  %v381 = vunpack.c.l.b16 %v45
  %v382 = vunpack.c.l.b16 %v46
  %v383 = vunpack.c.l.b16 %v47
  %v384 = vunpack.c.l.b16 %v48
  %v385 = vunpack.c.l.b16 %v49
  %v386 = vunpack.c.l.b16 %v50
  %v387 = vunpack.c.l.b16 %v51
  %v388 = vunpack.c.l.b16 %v52
  %v389 = vunpack.c.l.b16 %v53
  %v390 = vunpack.c.l.b16 %v54
  %v391 = vunpack.c.l.b16 %v55
  %v392 = vunpack.c.l.b16 %v56
  %v393 = vunpack.c.l.b16 %v57
  %v394 = vunpack.c.l.b16 %v58
  %v395 = vunpack.c.l.b16 %v59
  %v396 = vunpack.c.l.b16 %v60
  %v397 = vunpack.c.l.b16 %v61
  %v398 = vunpack.c.l.b16 %v62
  %v399 = vunpack.c.l.b16 %v63
  %v400 = vunpack.c.l.b16 %v64
  %v401 = vunpack.c.l.b16 %v65
  %v402 = vunpack.c.l.b16 %v66
  %v403 = vunpack.c.l.b16 %v67
  %v404 = vunpack.c.l.b16 %v68
  %v405 = vunpack.c.l.b16 %v69
  %v406 = vunpack.c.l.b16 %v70
  %v407 = vunpack.c.l.b16 %v71
  %v408 = vunpack.c.l.b16 %v72
  %v409 = vunpack.c.l.b16 %v73
  %v410 = vunpack.c.l.b16 %v74
  %v411 = vunpack.c.l.b16 %v75
  %v412 = vunpack.c.l.b16 %v76
  %v413 = vunpack.c.l.b16 %v77
  %v414 = vunpack.c.l.b16 %v78
  %v415 = vunpack.c.l.b16 %v79
  %v416 = vunpack.c.l.b16 %v80
  %v417 = vunpack.c.l.b16 %v81
  %v418 = vunpack.c.l.b16 %v82
  %v419 = vunpack.c.l.b16 %v83
  %v420 = vunpack.c.l.b16 %v84
  %v421 = vunpack.c.l.b16 %v85
  %v422 = vunpack.c.l.b16 %v86
  %v423 = vunpack.c.l.b16 %v87
  %v424 = vunpack.c.l.b16 %v88
  %v425 = vunpack.c.l.b16 %v89
  %v426 = vunpack.c.l.b16 %v90
  %v427 = vunpack.c.l.b16 %v91
  %v428 = vunpack.c.l.b16 %v92
  %v429 = vunpack.c.l.b16 %v93
  %v430 = vunpack.c.l.b16 %v94
  %v431 = vunpack.c.l.b16 %v95
  %v432 = vunpack.c.l.b16 %v96
  %v433 = vunpack.c.l.b16 %v97
  %v434 = vunpack.c.l.b16 %v98
  %v435 = vunpack.c.l.b16 %v99
  %v436 = vunpack.c.l.b16 %v100
  %v437 = vunpack.c.l.b16 %v101
  %v438 = vunpack.c.l.b16 %v102
  %v439 = vunpack.c.l.b16 %v103
  %v440 = vunpack.c.l.b16 %v104
  %v441 = vunpack.c.l.b16 %v105
  %v442 = vunpack.c.l.b16 %v106
  %v443 = vunpack.c.l.b16 %v107
  %v444 = vunpack.c.l.b16 %v108
  %v445 = vunpack.c.l.b16 %v109
  %v446 = vunpack.c.l.b16 %v110
  %v447 = vunpack.c.l.b16 %v111
  %v448 = vunpack.c.l.b16 %v112
  %v449 = vunpack.c.l.b16 %v113
  %v450 = vunpack.c.l.b16 %v114
  %v451 = vunpack.c.l.b16 %v115
  %v452 = vunpack.c.l.b16 %v116
  %v453 = vunpack.c.l.b16 %v117
  %v454 = vunpack.c.l.b16 %v118
  %v455 = vunpack.c.l.b16 %v119
  %v456 = vunpack.c.l.b16 %v120
  %v457 = vunpack.c.l.b16 %v121
  %v458 = vunpack.c.l.b16 %v122
  %v459 = vunpack.c.l.b16 %v123
  %v460 = vunpack.c.l.b16 %v124
  %v461 = vunpack.c.l.b16 %v125
  %v462 = vunpack.c.l.b16 %v126
  %v463 = vunpack.c.l.b16 %v127
  %v464 = vunpack.c.l.b16 %v128
  %v465 = vunpack.c.l.b16 %v129
  %v466 = vunpack.c.l.b16 %v130
  %v467 = vunpack.c.l.b16 %v131
  %v468 = vunpack.c.l.b16 %v132
  %v469 = vunpack.c.l.b16 %v133
  %v470 = vunpack.c.l.b16 %v134
  %v471 = vunpack.c.l.b16 %v135
  %v472 = vunpack.c.l.b16 %v136
  %v473 = vunpack.c.l.b16 %v137
  %v474 = vunpack.c.l.b16 %v138
  %v475 = vunpack.c.l.b16 %v139
  %v476 = vunpack.c.l.b16 %v140
  %v477 = vunpack.c.l.b16 %v141
  %v478 = vunpack.c.l.b16 %v142
  %v479 = vunpack.c.l.b16 %v143
  %v480 = vunpack.c.l.b16 %v144
  %v481 = vunpack.c.l.b16 %v145
  %v482 = vunpack.c.l.b16 %v146
  %v483 = vunpack.c.l.b16 %v147
  %v484 = vunpack.c.l.b16 %v148
  %v485 = vunpack.c.l.b16 %v149
  %v486 = vunpack.c.l.b16 %v150
  %v487 = vunpack.c.l.b16 %v151
  %v488 = vunpack.c.l.b16 %v152
  %v489 = vunpack.c.l.b16 %v153
  %v490 = vunpack.c.l.b16 %v154
  %v491 = vunpack.c.l.b16 %v155
  %v492 = vunpack.c.l.b16 %v156
  %v493 = vunpack.c.l.b16 %v157
  %v494 = vunpack.c.l.b16 %v158
  %v495 = vunpack.c.l.b16 %v159
  %v496 = vunpack.c.l.b16 %v160
  %v497 = vunpack.c.l.b16 %v161
  %v498 = vunpack.c.l.b16 %v162
  %v499 = vunpack.c.l.b16 %v163
  %v500 = vpack.c.b16 %v373, %v372
  %v501 = vpack.c.b16 %v375, %v374
  %v502 = vpack.c.b16 %v377, %v376
  %v503 = vpack.c.b16 %v379, %v378
  %v504 = vpack.c.b16 %v381, %v380
  %v505 = vpack.c.b16 %v383, %v382
  %v506 = vpack.c.b16 %v385, %v384
  %v507 = vpack.c.b16 %v387, %v386
  %v508 = vpack.c.b16 %v389, %v388
  %v509 = vpack.c.b16 %v391, %v390
  %v510 = vpack.c.b16 %v393, %v392
  %v511 = vpack.c.b16 %v395, %v394
  %v512 = vpack.c.b16 %v397, %v396
  %v513 = vpack.c.b16 %v399, %v398
  %v514 = vpack.c.b16 %v401, %v400
  %v515 = vpack.c.b16 %v403, %v402
  %v516 = vpack.c.b16 %v405, %v404
  %v517 = vpack.c.b16 %v407, %v406
  %v518 = vpack.c.b16 %v409, %v408
  %v519 = vpack.c.b16 %v411, %v410
  %v520 = vpack.c.b16 %v413, %v412
  %v521 = vpack.c.b16 %v415, %v414
  %v522 = vpack.c.b16 %v417, %v416
  %v523 = vpack.c.b16 %v419, %v418
  %v524 = vpack.c.b16 %v421, %v420
  %v525 = vpack.c.b16 %v423, %v422
  %v526 = vpack.c.b16 %v425, %v424
  %v527 = vpack.c.b16 %v427, %v426
  %v528 = vpack.c.b16 %v429, %v428
  %v529 = vpack.c.b16 %v431, %v430
  %v530 = vpack.c.b16 %v433, %v432
  %v531 = vpack.c.b16 %v435, %v434
  %v532 = vpack.c.b16 %v437, %v436
  %v533 = vpack.c.b16 %v439, %v438
  %v534 = vpack.c.b16 %v441, %v440
  %v535 = vpack.c.b16 %v443, %v442
  %v536 = vpack.c.b16 %v445, %v444
  %v537 = vpack.c.b16 %v447, %v446
  %v538 = vpack.c.b16 %v449, %v448
  %v539 = vpack.c.b16 %v451, %v450
  %v540 = vpack.c.b16 %v453, %v452
  %v541 = vpack.c.b16 %v455, %v454
  %v542 = vpack.c.b16 %v457, %v456
  %v543 = vpack.c.b16 %v459, %v458
  %v544 = vpack.c.b16 %v461, %v460
  %v545 = vpack.c.b16 %v463, %v462
  %v546 = vpack.c.b16 %v465, %v464
  %v547 = vpack.c.b16 %v467, %v466
  %v548 = vpack.c.b16 %v469, %v468
  %v549 = vpack.c.b16 %v471, %v470
  %v550 = vpack.c.b16 %v473, %v472
  %v551 = vpack.c.b16 %v475, %v474
  %v552 = vpack.c.b16 %v477, %v476
  %v553 = vpack.c.b16 %v479, %v478
  %v554 = vpack.c.b16 %v481, %v480
  %v555 = vpack.c.b16 %v483, %v482
  %v556 = vpack.c.b16 %v485, %v484
  %v557 = vpack.c.b16 %v487, %v486
  %v558 = vpack.c.b16 %v489, %v488
  %v559 = vpack.c.b16 %v491, %v490
  %v560 = vpack.c.b16 %v493, %v492
  %v561 = vpack.c.b16 %v495, %v494
  %v562 = vpack.c.b16 %v497, %v496
  %v563 = vpack.c.b16 %v499, %v498
  %628 = vmatpush.bf16.msra.mxu0 %v507
  %629 = vmatpush.bf16.msra.mxu0 %v506
  %630 = vmatpush.bf16.msra.mxu0 %v505
  %631 = vmatpush.bf16.msra.mxu0 %v504
  %632 = vmatpush.bf16.msra.mxu0 %v503
  %633 = vmatpush.bf16.msra.mxu0 %v502
  %634 = vmatpush.bf16.msra.mxu0 %v501
  %635 = vmatpush.bf16.msra.mxu0 %v500
  %636 = vmatmul.bf16.gmra.mxu0 %v212
  %v637 = vpop.f32.mrf.mxu0
  %v638 = vadd.f32 0.0, %v637
  %v639 = vpop.f32.mrf.mxu0
  %v640 = vadd.f32 0.0, %v639
  %641 = vmatmul.bf16.gmra.mxu0 %v220
  %v642 = vpop.f32.mrf.mxu0
  %v643 = vadd.f32 0.0, %v642
  %v644 = vpop.f32.mrf.mxu0
  %v645 = vadd.f32 0.0, %v644
  %646 = vdwg.mxu0
  %647 = vmatpush.bf16.msra.mxu0 %v515
  %648 = vmatpush.bf16.msra.mxu0 %v514
  %649 = vmatpush.bf16.msra.mxu0 %v513
  %650 = vmatpush.bf16.msra.mxu0 %v512
  %651 = vmatpush.bf16.msra.mxu0 %v511
  %652 = vmatpush.bf16.msra.mxu0 %v510
  %653 = vmatpush.bf16.msra.mxu0 %v509
  %654 = vmatpush.bf16.msra.mxu0 %v508
  %655 = vmatmul.bf16.gmra.mxu0 %v213
  %v656 = vpop.f32.mrf.mxu0
  %v657 = vadd.f32 %v638, %v656
  %v658 = vpop.f32.mrf.mxu0
  %v659 = vadd.f32 %v640, %v658
  %660 = vmatmul.bf16.gmra.mxu0 %v221
  %v661 = vpop.f32.mrf.mxu0
  %v662 = vadd.f32 %v643, %v661
  %v663 = vpop.f32.mrf.mxu0
  %v664 = vadd.f32 %v645, %v663
  %665 = vdwg.mxu0
  %666 = vmatpush.bf16.msra.mxu0 %v523
  %667 = vmatpush.bf16.msra.mxu0 %v522
  %668 = vmatpush.bf16.msra.mxu0 %v521
  %669 = vmatpush.bf16.msra.mxu0 %v520
  %670 = vmatpush.bf16.msra.mxu0 %v519
  %671 = vmatpush.bf16.msra.mxu0 %v518
  %672 = vmatpush.bf16.msra.mxu0 %v517
  %673 = vmatpush.bf16.msra.mxu0 %v516
  %674 = vmatmul.bf16.gmra.mxu0 %v214
  %v675 = vpop.f32.mrf.mxu0
  %v676 = vadd.f32 %v657, %v675
  %v677 = vpop.f32.mrf.mxu0
  %v678 = vadd.f32 %v659, %v677
  %679 = vmatmul.bf16.gmra.mxu0 %v222
  %v680 = vpop.f32.mrf.mxu0
  %v681 = vadd.f32 %v662, %v680
  %v682 = vpop.f32.mrf.mxu0
  %v683 = vadd.f32 %v664, %v682
  %684 = vdwg.mxu0
  %685 = vmatpush.bf16.msra.mxu0 %v531
  %686 = vmatpush.bf16.msra.mxu0 %v530
  %687 = vmatpush.bf16.msra.mxu0 %v529
  %688 = vmatpush.bf16.msra.mxu0 %v528
  %689 = vmatpush.bf16.msra.mxu0 %v527
  %690 = vmatpush.bf16.msra.mxu0 %v526
  %691 = vmatpush.bf16.msra.mxu0 %v525
  %692 = vmatpush.bf16.msra.mxu0 %v524
  %693 = vmatmul.bf16.gmra.mxu0 %v215
  %v694 = vpop.f32.mrf.mxu0
  %v695 = vadd.f32 %v676, %v694
  %v696 = vpop.f32.mrf.mxu0
  %v697 = vadd.f32 %v678, %v696
  %698 = vmatmul.bf16.gmra.mxu0 %v223
  %v699 = vpop.f32.mrf.mxu0
  %v700 = vadd.f32 %v681, %v699
  %v701 = vpop.f32.mrf.mxu0
  %v702 = vadd.f32 %v683, %v701
  %703 = vdwg.mxu0
  %704 = vmatpush.bf16.msra.mxu0 %v539
  %705 = vmatpush.bf16.msra.mxu0 %v538
  %706 = vmatpush.bf16.msra.mxu0 %v537
  %707 = vmatpush.bf16.msra.mxu0 %v536
  %708 = vmatpush.bf16.msra.mxu0 %v535
  %709 = vmatpush.bf16.msra.mxu0 %v534
  %710 = vmatpush.bf16.msra.mxu0 %v533
  %711 = vmatpush.bf16.msra.mxu0 %v532
  %712 = vmatmul.bf16.gmra.mxu0 %v216
  %v713 = vpop.f32.mrf.mxu0
  %v714 = vadd.f32 %v695, %v713
  %v715 = vpop.f32.mrf.mxu0
  %v716 = vadd.f32 %v697, %v715
  %717 = vmatmul.bf16.gmra.mxu0 %v224
  %v718 = vpop.f32.mrf.mxu0
  %v719 = vadd.f32 %v700, %v718
  %v720 = vpop.f32.mrf.mxu0
  %v721 = vadd.f32 %v702, %v720
  %722 = vdwg.mxu0
  %723 = vmatpush.bf16.msra.mxu0 %v547
  %724 = vmatpush.bf16.msra.mxu0 %v546
  %725 = vmatpush.bf16.msra.mxu0 %v545
  %726 = vmatpush.bf16.msra.mxu0 %v544
  %727 = vmatpush.bf16.msra.mxu0 %v543
  %728 = vmatpush.bf16.msra.mxu0 %v542
  %729 = vmatpush.bf16.msra.mxu0 %v541
  %730 = vmatpush.bf16.msra.mxu0 %v540
  %731 = vmatmul.bf16.gmra.mxu0 %v217
  %v732 = vpop.f32.mrf.mxu0
  %v733 = vadd.f32 %v714, %v732
  %v734 = vpop.f32.mrf.mxu0
  %v735 = vadd.f32 %v716, %v734
  %736 = vmatmul.bf16.gmra.mxu0 %v225
  %v737 = vpop.f32.mrf.mxu0
  %v738 = vadd.f32 %v719, %v737
  %v739 = vpop.f32.mrf.mxu0
  %v740 = vadd.f32 %v721, %v739
  %741 = vdwg.mxu0
  %742 = vmatpush.bf16.msra.mxu0 %v555
  %743 = vmatpush.bf16.msra.mxu0 %v554
  %744 = vmatpush.bf16.msra.mxu0 %v553
  %745 = vmatpush.bf16.msra.mxu0 %v552
  %746 = vmatpush.bf16.msra.mxu0 %v551
  %747 = vmatpush.bf16.msra.mxu0 %v550
  %748 = vmatpush.bf16.msra.mxu0 %v549
  %749 = vmatpush.bf16.msra.mxu0 %v548
  %750 = vmatmul.bf16.gmra.mxu0 %v218
  %v751 = vpop.f32.mrf.mxu0
  %v752 = vadd.f32 %v733, %v751
  %v753 = vpop.f32.mrf.mxu0
  %v754 = vadd.f32 %v735, %v753
  %755 = vmatmul.bf16.gmra.mxu0 %v226
  %v756 = vpop.f32.mrf.mxu0
  %v757 = vadd.f32 %v738, %v756
  %v758 = vpop.f32.mrf.mxu0
  %v759 = vadd.f32 %v740, %v758
  %760 = vdwg.mxu0
  %761 = vmatpush.bf16.msra.mxu0 %v563
  %762 = vmatpush.bf16.msra.mxu0 %v562
  %763 = vmatpush.bf16.msra.mxu0 %v561
  %764 = vmatpush.bf16.msra.mxu0 %v560
  %765 = vmatpush.bf16.msra.mxu0 %v559
  %766 = vmatpush.bf16.msra.mxu0 %v558
  %767 = vmatpush.bf16.msra.mxu0 %v557
  %768 = vmatpush.bf16.msra.mxu0 %v556
  %769 = vmatmul.bf16.gmra.mxu0 %v219
  %v770 = vpop.f32.mrf.mxu0
  %v771 = vadd.f32 %v752, %v770
  %v772 = vpop.f32.mrf.mxu0
  %v773 = vadd.f32 %v754, %v772
  %774 = vmatmul.bf16.gmra.mxu0 %v227
  %v775 = vpop.f32.mrf.mxu0
  %v776 = vadd.f32 %v757, %v775
  %v777 = vpop.f32.mrf.mxu0
  %v778 = vadd.f32 %v759, %v777
  %779 = vdwg.mxu0
  %v780 = vpack.c.bf16 %v771, %v771
  %v781 = vpack.c.bf16 %v773, %v773
  %v782 = vpack.c.bf16 %v776, %v776
  %v783 = vpack.c.bf16 %v778, %v778
  %784 = vst [vmem:[%s2] sm:$0xf] %v780
  %785 = vst [vmem:[%s2 + $0x4] sm:$0xf] %v781
  %786 = vst [vmem:[%s2 + $0x8] sm:$0xf] %v782
  %787 = vst [vmem:[%s2 + $0xc] sm:$0xf] %v783
  %v788 = vld [vmem:[%s3] sm:$0x1]
  %v789 = vadd.f32 %v771, %v773
  %v790 = vadd.f32 %v789, %v776
  %v791 = vadd.f32 %v790, %v778
  %v792 = vrot.slane %v791, 4
  %v793 = vadd.f32 %v791, %v792
  %v794 = vrot.slane %v793, 2
  %v795 = vadd.f32 %v793, %v794
  %v796 = vrot.slane %v795, 1
  %v797 = vadd.f32 %v795, %v796
  %v798 = vadd.f32 %v788, %v797
  %799 = vst [vmem:[%s3] sm:$0x1] %v798
  %v800 = vld [vmem:[%s4] sm:$0x1]
  %v801 = vmul.f32 %v771, %v771
  %v802 = vmul.f32 %v773, %v773
  %v803 = vmul.f32 %v776, %v776
  %v804 = vmul.f32 %v778, %v778
  %v805 = vadd.f32 %v801, %v802
  %v806 = vadd.f32 %v805, %v803
  %v807 = vadd.f32 %v806, %v804
  %v808 = vrot.slane %v807, 4
  %v809 = vadd.f32 %v807, %v808
  %v810 = vrot.slane %v809, 2
  %v811 = vadd.f32 %v809, %v810
  %v812 = vrot.slane %v811, 1
  %v813 = vadd.f32 %v811, %v812
  %v814 = vadd.f32 %v800, %v813
  %815 = vst [vmem:[%s4] sm:$0x1] %v814
  // Predicated region
  $region14: #{discriminator_forward.9} parent=0 // pred_check
    _
  $region15: #{discriminator_forward.9} parent=0 // pred_check_branch
    %817 = sbr.rel (0) target = $region17
  $region16: #{discriminator_forward.9} parent=0 // pred_region
    _
  $region17: #{discriminator_forward.9} parent=0 // pred_fallthru
    _
  // Predicated region
  $region18: #{discriminator_forward.9} parent=0 // pred_check
    _
  $region19: #{discriminator_forward.9} parent=0 // pred_check_branch
    %819 = sbr.rel (0) target = $region21
  $region20: #{discriminator_forward.9} parent=0 // pred_region
    _
  $region21: #{discriminator_forward.9} parent=0 // pred_fallthru
    _
  // Predicated region
  $region22: #{discriminator_forward.9} parent=0 // pred_check
    _
  $region23: #{discriminator_forward.9} parent=0 // pred_check_branch
    %821 = sbr.rel (0) target = $region25
  $region24: #{discriminator_forward.9} parent=0 // pred_region
    _
  $region25: #{discriminator_forward.9} parent=0 // pred_fallthru
    _
  // Predicated region
  $region26: #{discriminator_forward.9} parent=0 // pred_check
    _
  $region27: #{discriminator_forward.9} parent=0 // pred_check_branch
    %823 = sbr.rel (0) target = $region29
  $region28: #{discriminator_forward.9} parent=0 // pred_region
    _
  $region29: #{discriminator_forward.9} parent=0 // pred_fallthru
    _
  // Predicated region
  $region30: #{discriminator_forward.9} parent=0 // pred_check
    _
  $region31: #{discriminator_forward.9} parent=0 // pred_check_branch
    %825 = sbr.rel (0) target = $region33
  $region32: #{discriminator_forward.9} parent=0 // pred_region
    _
  $region33: #{discriminator_forward.9} parent=0 // pred_fallthru
    _
  // Predicated region
  $region34: #{discriminator_forward.9} parent=0 // pred_check
    _
  $region35: #{discriminator_forward.9} parent=0 // pred_check_branch
    %827 = sbr.rel (0) target = $region37
  $region36: #{discriminator_forward.9} parent=0 // pred_region
    _
  $region37: #{discriminator_forward.9} parent=0 // pred_fallthru
    _

// kernel: discriminator_forward.12
$region0: #{discriminator_forward.12}
  #allocation0 [shape = 'u32[]', space=smem, size = 0x4, offset = 0x4, fixed_abs, tag = 'smem constant byte address 0x4 - core index']
  #allocation1 [shape = 'u32[72,128]{1,0:T(1,128)}', space=vmem, size = 0x9000, scoped, tag = 'internal scratch']
  %s0 = inlined_call_operand.vmem [shape: bf16[8,256], index: 0, kind: input, shape index: {}]
  %s1 = inlined_call_operand.vmem [shape: f32[1,256], index: 1, kind: input, shape index: {}]
  %s2 = inlined_call_operand.vmem [shape: f32[1,256], index: 2, kind: input, shape index: {}]
  %s3 = inlined_call_operand.vmem [shape: bf16[8,256], index: 3, kind: output, shape index: {}]
  %s4 = sld [smem:[#allocation0]]
  $region22: #{discriminator_forward.12} parent=0
    _
  %s6 = ssub.s32 1, %s4
  %s7 = scalar_select 0, %s6, %s4
  // Predicated region
  $region2: #{discriminator_forward.12} parent=0 // pred_check
    _
  $region3: #{discriminator_forward.12} parent=0 // pred_check_branch
    %9 = sbr.rel (0) target = $region5
  $region4: #{discriminator_forward.12} parent=0 // pred_region
    _
  $region5: #{discriminator_forward.12} parent=0 // pred_fallthru
    _
  // Predicated region
  $region6: #{discriminator_forward.12} parent=0 // pred_check
    _
  $region7: #{discriminator_forward.12} parent=0 // pred_check_branch
    %11 = sbr.rel (0) target = $region9
  $region8: #{discriminator_forward.12} parent=0 // pred_region
    _
  $region9: #{discriminator_forward.12} parent=0 // pred_fallthru
    _
  // Predicated region
  $region10: #{discriminator_forward.12} parent=0 // pred_check
    _
  $region11: #{discriminator_forward.12} parent=0 // pred_check_branch
    %13 = sbr.rel (0) target = $region13
  $region12: #{discriminator_forward.12} parent=0 // pred_region
    _
  $region13: #{discriminator_forward.12} parent=0 // pred_fallthru
    _
  %v14 = vld [vmem:[%s0] sm:$0xff]
  %v15 = vunpack.c.l.bf16 %v14
  %v16 = vunpack.c.h.bf16 %v14
  %v17 = vld [vmem:[%s1] sm:$0x3]
  %v19 = vperm.slane %v17, 0
  %v20 = vperm.slane %v17, 1
  %v23 = vmul.f32 %v15, %v19
  %v24 = vmul.f32 %v16, %v20
  %v25 = vld [vmem:[%s2] sm:$0x3]
  %v27 = vperm.slane %v25, 0
  %v28 = vperm.slane %v25, 1
  %v31 = vadd.f32 %v23, %v27
  %v32 = vadd.f32 %v24, %v28
  %vm33 = vcmp.ge.f32.partialorder %v31, 0.0
  %vm34 = vcmp.ge.f32.partialorder %v32, 0.0
  %v35 = vmul.f32 %v31, 0.2
  %v36 = vmul.f32 %v32, 0.2
  %v37 = vsel %vm33, %v31, %v35
  %v38 = vsel %vm34, %v32, %v36
  %v39 = vpack.c.bf16 %v38, %v37
  %40 = vst [vmem:[%s3] sm:$0xff] %v39
  // Predicated region
  $region14: #{discriminator_forward.12} parent=0 // pred_check
    _
  $region15: #{discriminator_forward.12} parent=0 // pred_check_branch
    %42 = sbr.rel (0) target = $region17
  $region16: #{discriminator_forward.12} parent=0 // pred_region
    _
  $region17: #{discriminator_forward.12} parent=0 // pred_fallthru
    _
  // Predicated region
  $region18: #{discriminator_forward.12} parent=0 // pred_check
    _
  $region19: #{discriminator_forward.12} parent=0 // pred_check_branch
    %44 = sbr.rel (0) target = $region21
  $region20: #{discriminator_forward.12} parent=0 // pred_region
    _
  $region21: #{discriminator_forward.12} parent=0 // pred_fallthru
    _

// kernel: discriminator_forward.11
$region0: #{discriminator_forward.11}
  #allocation0 [shape = 'u32[]', space=smem, size = 0x4, offset = 0x4, fixed_abs, tag = 'smem constant byte address 0x4 - core index']
  #allocation1 [shape = 'u32[72,128]{1,0:T(1,128)}', space=vmem, size = 0x9000, scoped, tag = 'internal scratch']
  %s0 = inlined_call_operand.vmem [shape: bf16[8,2048], index: 0, kind: input, shape index: {}]
  %s1 = inlined_call_operand.vmem [shape: bf16[2048,256], index: 1, kind: input, shape index: {}]
  %s2 = inlined_call_operand.vmem [shape: bf16[8,256], index: 2, kind: output, shape index: {0}]
  %s3 = inlined_call_operand.vmem [shape: f32[1,256], index: 3, kind: output, shape index: {1}]
  %s4 = inlined_call_operand.vmem [shape: f32[1,256], index: 4, kind: output, shape index: {2}]
  %5 = xla_tuple %s2, %s3, %s4
  %s6 = sld [smem:[#allocation0]]
  $region38: #{discriminator_forward.11} parent=0
    _
  %s8 = ssub.s32 1, %s6
  %s9 = scalar_select 0, %s8, %s6
  // Predicated region
  $region2: #{discriminator_forward.11} parent=0 // pred_check
    _
  $region3: #{discriminator_forward.11} parent=0 // pred_check_branch
    %11 = sbr.rel (0) target = $region5
  $region4: #{discriminator_forward.11} parent=0 // pred_region
    _
  $region5: #{discriminator_forward.11} parent=0 // pred_fallthru
    _
  // Predicated region
  $region6: #{discriminator_forward.11} parent=0 // pred_check
    _
  $region7: #{discriminator_forward.11} parent=0 // pred_check_branch
    %13 = sbr.rel (0) target = $region9
  $region8: #{discriminator_forward.11} parent=0 // pred_region
    _
  $region9: #{discriminator_forward.11} parent=0 // pred_fallthru
    _
  %p14 = scmp.eq.s32.totalorder 0, 0
  // Predicated region
  $region10: #{discriminator_forward.11} parent=0 // pred_check
    %p15 = pneg %p14
  $region11: #{discriminator_forward.11} parent=0 // pred_check_branch
    %17 = sbr.rel (%p15) target = $region13
  $region12: #{discriminator_forward.11} parent=0 // pred_region
    %v18 = vlaneseq
    %vm19 = vcmp.ge.s32.totalorder %v18, 0
    %vm20 = vcmp.lt.s32.totalorder %v18, 256
    %vm21 = vmand %vm19, %vm20
    %22 = vst.msk [vmem:[%s3] sm:$0x3] %vm21, 0.0
    %23 = vst.msk [vmem:[%s4] sm:$0x3] %vm21, 0.0
  $region13: #{discriminator_forward.11} parent=0 // pred_fallthru
    _
  %v24 = vld [vmem:[%s0] sm:$0xff]
  %v25 = vld [vmem:[%s0 + $0x8] sm:$0xff]
  %v26 = vld [vmem:[%s0 + $0x10] sm:$0xff]
  %v27 = vld [vmem:[%s0 + $0x18] sm:$0xff]
  %v28 = vld [vmem:[%s0 + $0x20] sm:$0xff]
  %v29 = vld [vmem:[%s0 + $0x28] sm:$0xff]
  %v30 = vld [vmem:[%s0 + $0x30] sm:$0xff]
  %v31 = vld [vmem:[%s0 + $0x38] sm:$0xff]
  %v32 = vld [vmem:[%s1] sm:$0xff]
  %v33 = vld [vmem:[%s1 + $0x8] sm:$0xff]
  %v34 = vld [vmem:[%s1 + $0x10] sm:$0xff]
  %v35 = vld [vmem:[%s1 + $0x18] sm:$0xff]
  %v36 = vld [vmem:[%s1 + $0x20] sm:$0xff]
  %v37 = vld [vmem:[%s1 + $0x28] sm:$0xff]
  %v38 = vld [vmem:[%s1 + $0x30] sm:$0xff]
  %v39 = vld [vmem:[%s1 + $0x38] sm:$0xff]
  %v40 = vld [vmem:[%s1 + $0x40] sm:$0xff]
  %v41 = vld [vmem:[%s1 + $0x48] sm:$0xff]
  %v42 = vld [vmem:[%s1 + $0x50] sm:$0xff]
  %v43 = vld [vmem:[%s1 + $0x58] sm:$0xff]
  %v44 = vld [vmem:[%s1 + $0x60] sm:$0xff]
  %v45 = vld [vmem:[%s1 + $0x68] sm:$0xff]
  %v46 = vld [vmem:[%s1 + $0x70] sm:$0xff]
  %v47 = vld [vmem:[%s1 + $0x78] sm:$0xff]
  %v48 = vld [vmem:[%s1 + $0x80] sm:$0xff]
  %v49 = vld [vmem:[%s1 + $0x88] sm:$0xff]
  %v50 = vld [vmem:[%s1 + $0x90] sm:$0xff]
  %v51 = vld [vmem:[%s1 + $0x98] sm:$0xff]
  %v52 = vld [vmem:[%s1 + $0xa0] sm:$0xff]
  %v53 = vld [vmem:[%s1 + $0xa8] sm:$0xff]
  %v54 = vld [vmem:[%s1 + $0xb0] sm:$0xff]
  %v55 = vld [vmem:[%s1 + $0xb8] sm:$0xff]
  %v56 = vld [vmem:[%s1 + $0xc0] sm:$0xff]
  %v57 = vld [vmem:[%s1 + $0xc8] sm:$0xff]
  %v58 = vld [vmem:[%s1 + $0xd0] sm:$0xff]
  %v59 = vld [vmem:[%s1 + $0xd8] sm:$0xff]
  %v60 = vld [vmem:[%s1 + $0xe0] sm:$0xff]
  %v61 = vld [vmem:[%s1 + $0xe8] sm:$0xff]
  %v62 = vld [vmem:[%s1 + $0xf0] sm:$0xff]
  %v63 = vld [vmem:[%s1 + $0xf8] sm:$0xff]
  %v64 = vld [vmem:[%s1 + $0x100] sm:$0xff]
  %v65 = vld [vmem:[%s1 + $0x108] sm:$0xff]
  %v66 = vld [vmem:[%s1 + $0x110] sm:$0xff]
  %v67 = vld [vmem:[%s1 + $0x118] sm:$0xff]
  %v68 = vld [vmem:[%s1 + $0x120] sm:$0xff]
  %v69 = vld [vmem:[%s1 + $0x128] sm:$0xff]
  %v70 = vld [vmem:[%s1 + $0x130] sm:$0xff]
  %v71 = vld [vmem:[%s1 + $0x138] sm:$0xff]
  %v72 = vld [vmem:[%s1 + $0x140] sm:$0xff]
  %v73 = vld [vmem:[%s1 + $0x148] sm:$0xff]
  %v74 = vld [vmem:[%s1 + $0x150] sm:$0xff]
  %v75 = vld [vmem:[%s1 + $0x158] sm:$0xff]
  %v76 = vld [vmem:[%s1 + $0x160] sm:$0xff]
  %v77 = vld [vmem:[%s1 + $0x168] sm:$0xff]
  %v78 = vld [vmem:[%s1 + $0x170] sm:$0xff]
  %v79 = vld [vmem:[%s1 + $0x178] sm:$0xff]
  %v80 = vld [vmem:[%s1 + $0x180] sm:$0xff]
  %v81 = vld [vmem:[%s1 + $0x188] sm:$0xff]
  %v82 = vld [vmem:[%s1 + $0x190] sm:$0xff]
  %v83 = vld [vmem:[%s1 + $0x198] sm:$0xff]
  %v84 = vld [vmem:[%s1 + $0x1a0] sm:$0xff]
  %v85 = vld [vmem:[%s1 + $0x1a8] sm:$0xff]
  %v86 = vld [vmem:[%s1 + $0x1b0] sm:$0xff]
  %v87 = vld [vmem:[%s1 + $0x1b8] sm:$0xff]
  %v88 = vld [vmem:[%s1 + $0x1c0] sm:$0xff]
  %v89 = vld [vmem:[%s1 + $0x1c8] sm:$0xff]
  %v90 = vld [vmem:[%s1 + $0x1d0] sm:$0xff]
  %v91 = vld [vmem:[%s1 + $0x1d8] sm:$0xff]
  %v92 = vld [vmem:[%s1 + $0x1e0] sm:$0xff]
  %v93 = vld [vmem:[%s1 + $0x1e8] sm:$0xff]
  %v94 = vld [vmem:[%s1 + $0x1f0] sm:$0xff]
  %v95 = vld [vmem:[%s1 + $0x1f8] sm:$0xff]
  %v96 = vld [vmem:[%s1 + $0x200] sm:$0xff]
  %v97 = vld [vmem:[%s1 + $0x208] sm:$0xff]
  %v98 = vld [vmem:[%s1 + $0x210] sm:$0xff]
  %v99 = vld [vmem:[%s1 + $0x218] sm:$0xff]
  %v100 = vld [vmem:[%s1 + $0x220] sm:$0xff]
  %v101 = vld [vmem:[%s1 + $0x228] sm:$0xff]
  %v102 = vld [vmem:[%s1 + $0x230] sm:$0xff]
  %v103 = vld [vmem:[%s1 + $0x238] sm:$0xff]
  %v104 = vld [vmem:[%s1 + $0x240] sm:$0xff]
  %v105 = vld [vmem:[%s1 + $0x248] sm:$0xff]
  %v106 = vld [vmem:[%s1 + $0x250] sm:$0xff]
  %v107 = vld [vmem:[%s1 + $0x258] sm:$0xff]
  %v108 = vld [vmem:[%s1 + $0x260] sm:$0xff]
  %v109 = vld [vmem:[%s1 + $0x268] sm:$0xff]
  %v110 = vld [vmem:[%s1 + $0x270] sm:$0xff]
  %v111 = vld [vmem:[%s1 + $0x278] sm:$0xff]
  %v112 = vld [vmem:[%s1 + $0x280] sm:$0xff]
  %v113 = vld [vmem:[%s1 + $0x288] sm:$0xff]
  %v114 = vld [vmem:[%s1 + $0x290] sm:$0xff]
  %v115 = vld [vmem:[%s1 + $0x298] sm:$0xff]
  %v116 = vld [vmem:[%s1 + $0x2a0] sm:$0xff]
  %v117 = vld [vmem:[%s1 + $0x2a8] sm:$0xff]
  %v118 = vld [vmem:[%s1 + $0x2b0] sm:$0xff]
  %v119 = vld [vmem:[%s1 + $0x2b8] sm:$0xff]
  %v120 = vld [vmem:[%s1 + $0x2c0] sm:$0xff]
  %v121 = vld [vmem:[%s1 + $0x2c8] sm:$0xff]
  %v122 = vld [vmem:[%s1 + $0x2d0] sm:$0xff]
  %v123 = vld [vmem:[%s1 + $0x2d8] sm:$0xff]
  %v124 = vld [vmem:[%s1 + $0x2e0] sm:$0xff]
  %v125 = vld [vmem:[%s1 + $0x2e8] sm:$0xff]
  %v126 = vld [vmem:[%s1 + $0x2f0] sm:$0xff]
  %v127 = vld [vmem:[%s1 + $0x2f8] sm:$0xff]
  %v128 = vld [vmem:[%s1 + $0x300] sm:$0xff]
  %v129 = vld [vmem:[%s1 + $0x308] sm:$0xff]
  %v130 = vld [vmem:[%s1 + $0x310] sm:$0xff]
  %v131 = vld [vmem:[%s1 + $0x318] sm:$0xff]
  %v132 = vld [vmem:[%s1 + $0x320] sm:$0xff]
  %v133 = vld [vmem:[%s1 + $0x328] sm:$0xff]
  %v134 = vld [vmem:[%s1 + $0x330] sm:$0xff]
  %v135 = vld [vmem:[%s1 + $0x338] sm:$0xff]
  %v136 = vld [vmem:[%s1 + $0x340] sm:$0xff]
  %v137 = vld [vmem:[%s1 + $0x348] sm:$0xff]
  %v138 = vld [vmem:[%s1 + $0x350] sm:$0xff]
  %v139 = vld [vmem:[%s1 + $0x358] sm:$0xff]
  %v140 = vld [vmem:[%s1 + $0x360] sm:$0xff]
  %v141 = vld [vmem:[%s1 + $0x368] sm:$0xff]
  %v142 = vld [vmem:[%s1 + $0x370] sm:$0xff]
  %v143 = vld [vmem:[%s1 + $0x378] sm:$0xff]
  %v144 = vld [vmem:[%s1 + $0x380] sm:$0xff]
  %v145 = vld [vmem:[%s1 + $0x388] sm:$0xff]
  %v146 = vld [vmem:[%s1 + $0x390] sm:$0xff]
  %v147 = vld [vmem:[%s1 + $0x398] sm:$0xff]
  %v148 = vld [vmem:[%s1 + $0x3a0] sm:$0xff]
  %v149 = vld [vmem:[%s1 + $0x3a8] sm:$0xff]
  %v150 = vld [vmem:[%s1 + $0x3b0] sm:$0xff]
  %v151 = vld [vmem:[%s1 + $0x3b8] sm:$0xff]
  %v152 = vld [vmem:[%s1 + $0x3c0] sm:$0xff]
  %v153 = vld [vmem:[%s1 + $0x3c8] sm:$0xff]
  %v154 = vld [vmem:[%s1 + $0x3d0] sm:$0xff]
  %v155 = vld [vmem:[%s1 + $0x3d8] sm:$0xff]
  %v156 = vld [vmem:[%s1 + $0x3e0] sm:$0xff]
  %v157 = vld [vmem:[%s1 + $0x3e8] sm:$0xff]
  %v158 = vld [vmem:[%s1 + $0x3f0] sm:$0xff]
  %v159 = vld [vmem:[%s1 + $0x3f8] sm:$0xff]
  %v160 = vld [vmem:[%s1 + $0x400] sm:$0xff]
  %v161 = vld [vmem:[%s1 + $0x408] sm:$0xff]
  %v162 = vld [vmem:[%s1 + $0x410] sm:$0xff]
  %v163 = vld [vmem:[%s1 + $0x418] sm:$0xff]
  %v164 = vld [vmem:[%s1 + $0x420] sm:$0xff]
  %v165 = vld [vmem:[%s1 + $0x428] sm:$0xff]
  %v166 = vld [vmem:[%s1 + $0x430] sm:$0xff]
  %v167 = vld [vmem:[%s1 + $0x438] sm:$0xff]
  %v168 = vld [vmem:[%s1 + $0x440] sm:$0xff]
  %v169 = vld [vmem:[%s1 + $0x448] sm:$0xff]
  %v170 = vld [vmem:[%s1 + $0x450] sm:$0xff]
  %v171 = vld [vmem:[%s1 + $0x458] sm:$0xff]
  %v172 = vld [vmem:[%s1 + $0x460] sm:$0xff]
  %v173 = vld [vmem:[%s1 + $0x468] sm:$0xff]
  %v174 = vld [vmem:[%s1 + $0x470] sm:$0xff]
  %v175 = vld [vmem:[%s1 + $0x478] sm:$0xff]
  %v176 = vld [vmem:[%s1 + $0x480] sm:$0xff]
  %v177 = vld [vmem:[%s1 + $0x488] sm:$0xff]
  %v178 = vld [vmem:[%s1 + $0x490] sm:$0xff]
  %v179 = vld [vmem:[%s1 + $0x498] sm:$0xff]
  %v180 = vld [vmem:[%s1 + $0x4a0] sm:$0xff]
  %v181 = vld [vmem:[%s1 + $0x4a8] sm:$0xff]
  %v182 = vld [vmem:[%s1 + $0x4b0] sm:$0xff]
  %v183 = vld [vmem:[%s1 + $0x4b8] sm:$0xff]
  %v184 = vld [vmem:[%s1 + $0x4c0] sm:$0xff]
  %v185 = vld [vmem:[%s1 + $0x4c8] sm:$0xff]
  %v186 = vld [vmem:[%s1 + $0x4d0] sm:$0xff]
  %v187 = vld [vmem:[%s1 + $0x4d8] sm:$0xff]
  %v188 = vld [vmem:[%s1 + $0x4e0] sm:$0xff]
  %v189 = vld [vmem:[%s1 + $0x4e8] sm:$0xff]
  %v190 = vld [vmem:[%s1 + $0x4f0] sm:$0xff]
  %v191 = vld [vmem:[%s1 + $0x4f8] sm:$0xff]
  %v192 = vld [vmem:[%s1 + $0x500] sm:$0xff]
  %v193 = vld [vmem:[%s1 + $0x508] sm:$0xff]
  %v194 = vld [vmem:[%s1 + $0x510] sm:$0xff]
  %v195 = vld [vmem:[%s1 + $0x518] sm:$0xff]
  %v196 = vld [vmem:[%s1 + $0x520] sm:$0xff]
  %v197 = vld [vmem:[%s1 + $0x528] sm:$0xff]
  %v198 = vld [vmem:[%s1 + $0x530] sm:$0xff]
  %v199 = vld [vmem:[%s1 + $0x538] sm:$0xff]
  %v200 = vld [vmem:[%s1 + $0x540] sm:$0xff]
  %v201 = vld [vmem:[%s1 + $0x548] sm:$0xff]
  %v202 = vld [vmem:[%s1 + $0x550] sm:$0xff]
  %v203 = vld [vmem:[%s1 + $0x558] sm:$0xff]
  %v204 = vld [vmem:[%s1 + $0x560] sm:$0xff]
  %v205 = vld [vmem:[%s1 + $0x568] sm:$0xff]
  %v206 = vld [vmem:[%s1 + $0x570] sm:$0xff]
  %v207 = vld [vmem:[%s1 + $0x578] sm:$0xff]
  %v208 = vld [vmem:[%s1 + $0x580] sm:$0xff]
  %v209 = vld [vmem:[%s1 + $0x588] sm:$0xff]
  %v210 = vld [vmem:[%s1 + $0x590] sm:$0xff]
  %v211 = vld [vmem:[%s1 + $0x598] sm:$0xff]
  %v212 = vld [vmem:[%s1 + $0x5a0] sm:$0xff]
  %v213 = vld [vmem:[%s1 + $0x5a8] sm:$0xff]
  %v214 = vld [vmem:[%s1 + $0x5b0] sm:$0xff]
  %v215 = vld [vmem:[%s1 + $0x5b8] sm:$0xff]
  %v216 = vld [vmem:[%s1 + $0x5c0] sm:$0xff]
  %v217 = vld [vmem:[%s1 + $0x5c8] sm:$0xff]
  %v218 = vld [vmem:[%s1 + $0x5d0] sm:$0xff]
  %v219 = vld [vmem:[%s1 + $0x5d8] sm:$0xff]
  %v220 = vld [vmem:[%s1 + $0x5e0] sm:$0xff]
  %v221 = vld [vmem:[%s1 + $0x5e8] sm:$0xff]
  %v222 = vld [vmem:[%s1 + $0x5f0] sm:$0xff]
  %v223 = vld [vmem:[%s1 + $0x5f8] sm:$0xff]
  %v224 = vld [vmem:[%s1 + $0x600] sm:$0xff]
  %v225 = vld [vmem:[%s1 + $0x608] sm:$0xff]
  %v226 = vld [vmem:[%s1 + $0x610] sm:$0xff]
  %v227 = vld [vmem:[%s1 + $0x618] sm:$0xff]
  %v228 = vld [vmem:[%s1 + $0x620] sm:$0xff]
  %v229 = vld [vmem:[%s1 + $0x628] sm:$0xff]
  %v230 = vld [vmem:[%s1 + $0x630] sm:$0xff]
  %v231 = vld [vmem:[%s1 + $0x638] sm:$0xff]
  %v232 = vld [vmem:[%s1 + $0x640] sm:$0xff]
  %v233 = vld [vmem:[%s1 + $0x648] sm:$0xff]
  %v234 = vld [vmem:[%s1 + $0x650] sm:$0xff]
  %v235 = vld [vmem:[%s1 + $0x658] sm:$0xff]
  %v236 = vld [vmem:[%s1 + $0x660] sm:$0xff]
  %v237 = vld [vmem:[%s1 + $0x668] sm:$0xff]
  %v238 = vld [vmem:[%s1 + $0x670] sm:$0xff]
  %v239 = vld [vmem:[%s1 + $0x678] sm:$0xff]
  %v240 = vld [vmem:[%s1 + $0x680] sm:$0xff]
  %v241 = vld [vmem:[%s1 + $0x688] sm:$0xff]
  %v242 = vld [vmem:[%s1 + $0x690] sm:$0xff]
  %v243 = vld [vmem:[%s1 + $0x698] sm:$0xff]
  %v244 = vld [vmem:[%s1 + $0x6a0] sm:$0xff]
  %v245 = vld [vmem:[%s1 + $0x6a8] sm:$0xff]
  %v246 = vld [vmem:[%s1 + $0x6b0] sm:$0xff]
  %v247 = vld [vmem:[%s1 + $0x6b8] sm:$0xff]
  %v248 = vld [vmem:[%s1 + $0x6c0] sm:$0xff]
  %v249 = vld [vmem:[%s1 + $0x6c8] sm:$0xff]
  %v250 = vld [vmem:[%s1 + $0x6d0] sm:$0xff]
  %v251 = vld [vmem:[%s1 + $0x6d8] sm:$0xff]
  %v252 = vld [vmem:[%s1 + $0x6e0] sm:$0xff]
  %v253 = vld [vmem:[%s1 + $0x6e8] sm:$0xff]
  %v254 = vld [vmem:[%s1 + $0x6f0] sm:$0xff]
  %v255 = vld [vmem:[%s1 + $0x6f8] sm:$0xff]
  %v256 = vld [vmem:[%s1 + $0x700] sm:$0xff]
  %v257 = vld [vmem:[%s1 + $0x708] sm:$0xff]
  %v258 = vld [vmem:[%s1 + $0x710] sm:$0xff]
  %v259 = vld [vmem:[%s1 + $0x718] sm:$0xff]
  %v260 = vld [vmem:[%s1 + $0x720] sm:$0xff]
  %v261 = vld [vmem:[%s1 + $0x728] sm:$0xff]
  %v262 = vld [vmem:[%s1 + $0x730] sm:$0xff]
  %v263 = vld [vmem:[%s1 + $0x738] sm:$0xff]
  %v264 = vld [vmem:[%s1 + $0x740] sm:$0xff]
  %v265 = vld [vmem:[%s1 + $0x748] sm:$0xff]
  %v266 = vld [vmem:[%s1 + $0x750] sm:$0xff]
  %v267 = vld [vmem:[%s1 + $0x758] sm:$0xff]
  %v268 = vld [vmem:[%s1 + $0x760] sm:$0xff]
  %v269 = vld [vmem:[%s1 + $0x768] sm:$0xff]
  %v270 = vld [vmem:[%s1 + $0x770] sm:$0xff]
  %v271 = vld [vmem:[%s1 + $0x778] sm:$0xff]
  %v272 = vld [vmem:[%s1 + $0x780] sm:$0xff]
  %v273 = vld [vmem:[%s1 + $0x788] sm:$0xff]
  %v274 = vld [vmem:[%s1 + $0x790] sm:$0xff]
  %v275 = vld [vmem:[%s1 + $0x798] sm:$0xff]
  %v276 = vld [vmem:[%s1 + $0x7a0] sm:$0xff]
  %v277 = vld [vmem:[%s1 + $0x7a8] sm:$0xff]
  %v278 = vld [vmem:[%s1 + $0x7b0] sm:$0xff]
  %v279 = vld [vmem:[%s1 + $0x7b8] sm:$0xff]
  %v280 = vld [vmem:[%s1 + $0x7c0] sm:$0xff]
  %v281 = vld [vmem:[%s1 + $0x7c8] sm:$0xff]
  %v282 = vld [vmem:[%s1 + $0x7d0] sm:$0xff]
  %v283 = vld [vmem:[%s1 + $0x7d8] sm:$0xff]
  %v284 = vld [vmem:[%s1 + $0x7e0] sm:$0xff]
  %v285 = vld [vmem:[%s1 + $0x7e8] sm:$0xff]
  %v286 = vld [vmem:[%s1 + $0x7f0] sm:$0xff]
  %v287 = vld [vmem:[%s1 + $0x7f8] sm:$0xff]
  %v296 = vunpack.c.l.b16 %v24
  %v297 = vunpack.c.h.b16 %v24
  %v298 = vunpack.c.l.b16 %v25
  %v299 = vunpack.c.h.b16 %v25
  %v300 = vunpack.c.l.b16 %v26
  %v301 = vunpack.c.h.b16 %v26
  %v302 = vunpack.c.l.b16 %v27
  %v303 = vunpack.c.h.b16 %v27
  %v304 = vunpack.c.l.b16 %v28
  %v305 = vunpack.c.h.b16 %v28
  %v306 = vunpack.c.l.b16 %v29
  %v307 = vunpack.c.h.b16 %v29
  %v308 = vunpack.c.l.b16 %v30
  %v309 = vunpack.c.h.b16 %v30
  %v310 = vunpack.c.l.b16 %v31
  %v311 = vunpack.c.h.b16 %v31
  %v312 = vpack.c.b16 %v296, %v296
  %v313 = vpack.c.b16 %v297, %v297
  %v314 = vpack.c.b16 %v298, %v298
  %v315 = vpack.c.b16 %v299, %v299
  %v316 = vpack.c.b16 %v300, %v300
  %v317 = vpack.c.b16 %v301, %v301
  %v318 = vpack.c.b16 %v302, %v302
  %v319 = vpack.c.b16 %v303, %v303
  %v320 = vpack.c.b16 %v304, %v304
  %v321 = vpack.c.b16 %v305, %v305
  %v322 = vpack.c.b16 %v306, %v306
  %v323 = vpack.c.b16 %v307, %v307
  %v324 = vpack.c.b16 %v308, %v308
  %v325 = vpack.c.b16 %v309, %v309
  %v326 = vpack.c.b16 %v310, %v310
  %v327 = vpack.c.b16 %v311, %v311
  %v600 = vunpack.c.l.b16 %v32
  %v601 = vunpack.c.h.b16 %v32
  %v602 = vunpack.c.l.b16 %v33
  %v603 = vunpack.c.h.b16 %v33
  %v604 = vunpack.c.l.b16 %v34
  %v605 = vunpack.c.h.b16 %v34
  %v606 = vunpack.c.l.b16 %v35
  %v607 = vunpack.c.h.b16 %v35
  %v608 = vunpack.c.l.b16 %v36
  %v609 = vunpack.c.h.b16 %v36
  %v610 = vunpack.c.l.b16 %v37
  %v611 = vunpack.c.h.b16 %v37
  %v612 = vunpack.c.l.b16 %v38
  %v613 = vunpack.c.h.b16 %v38
  %v614 = vunpack.c.l.b16 %v39
  %v615 = vunpack.c.h.b16 %v39
  %v616 = vunpack.c.l.b16 %v40
  %v617 = vunpack.c.h.b16 %v40
  %v618 = vunpack.c.l.b16 %v41
  %v619 = vunpack.c.h.b16 %v41
  %v620 = vunpack.c.l.b16 %v42
  %v621 = vunpack.c.h.b16 %v42
  %v622 = vunpack.c.l.b16 %v43
  %v623 = vunpack.c.h.b16 %v43
  %v624 = vunpack.c.l.b16 %v44
  %v625 = vunpack.c.h.b16 %v44
  %v626 = vunpack.c.l.b16 %v45
  %v627 = vunpack.c.h.b16 %v45
  %v628 = vunpack.c.l.b16 %v46
  %v629 = vunpack.c.h.b16 %v46
  %v630 = vunpack.c.l.b16 %v47
  %v631 = vunpack.c.h.b16 %v47
  %v632 = vunpack.c.l.b16 %v48
  %v633 = vunpack.c.h.b16 %v48
  %v634 = vunpack.c.l.b16 %v49
  %v635 = vunpack.c.h.b16 %v49
  %v636 = vunpack.c.l.b16 %v50
  %v637 = vunpack.c.h.b16 %v50
  %v638 = vunpack.c.l.b16 %v51
  %v639 = vunpack.c.h.b16 %v51
  %v640 = vunpack.c.l.b16 %v52
  %v641 = vunpack.c.h.b16 %v52
  %v642 = vunpack.c.l.b16 %v53
  %v643 = vunpack.c.h.b16 %v53
  %v644 = vunpack.c.l.b16 %v54
  %v645 = vunpack.c.h.b16 %v54
  %v646 = vunpack.c.l.b16 %v55
  %v647 = vunpack.c.h.b16 %v55
  %v648 = vunpack.c.l.b16 %v56
  %v649 = vunpack.c.h.b16 %v56
  %v650 = vunpack.c.l.b16 %v57
  %v651 = vunpack.c.h.b16 %v57
  %v652 = vunpack.c.l.b16 %v58
  %v653 = vunpack.c.h.b16 %v58
  %v654 = vunpack.c.l.b16 %v59
  %v655 = vunpack.c.h.b16 %v59
  %v656 = vunpack.c.l.b16 %v60
  %v657 = vunpack.c.h.b16 %v60
  %v658 = vunpack.c.l.b16 %v61
  %v659 = vunpack.c.h.b16 %v61
  %v660 = vunpack.c.l.b16 %v62
  %v661 = vunpack.c.h.b16 %v62
  %v662 = vunpack.c.l.b16 %v63
  %v663 = vunpack.c.h.b16 %v63
  %v664 = vunpack.c.l.b16 %v64
  %v665 = vunpack.c.h.b16 %v64
  %v666 = vunpack.c.l.b16 %v65
  %v667 = vunpack.c.h.b16 %v65
  %v668 = vunpack.c.l.b16 %v66
  %v669 = vunpack.c.h.b16 %v66
  %v670 = vunpack.c.l.b16 %v67
  %v671 = vunpack.c.h.b16 %v67
  %v672 = vunpack.c.l.b16 %v68
  %v673 = vunpack.c.h.b16 %v68
  %v674 = vunpack.c.l.b16 %v69
  %v675 = vunpack.c.h.b16 %v69
  %v676 = vunpack.c.l.b16 %v70
  %v677 = vunpack.c.h.b16 %v70
  %v678 = vunpack.c.l.b16 %v71
  %v679 = vunpack.c.h.b16 %v71
  %v680 = vunpack.c.l.b16 %v72
  %v681 = vunpack.c.h.b16 %v72
  %v682 = vunpack.c.l.b16 %v73
  %v683 = vunpack.c.h.b16 %v73
  %v684 = vunpack.c.l.b16 %v74
  %v685 = vunpack.c.h.b16 %v74
  %v686 = vunpack.c.l.b16 %v75
  %v687 = vunpack.c.h.b16 %v75
  %v688 = vunpack.c.l.b16 %v76
  %v689 = vunpack.c.h.b16 %v76
  %v690 = vunpack.c.l.b16 %v77
  %v691 = vunpack.c.h.b16 %v77
  %v692 = vunpack.c.l.b16 %v78
  %v693 = vunpack.c.h.b16 %v78
  %v694 = vunpack.c.l.b16 %v79
  %v695 = vunpack.c.h.b16 %v79
  %v696 = vunpack.c.l.b16 %v80
  %v697 = vunpack.c.h.b16 %v80
  %v698 = vunpack.c.l.b16 %v81
  %v699 = vunpack.c.h.b16 %v81
  %v700 = vunpack.c.l.b16 %v82
  %v701 = vunpack.c.h.b16 %v82
  %v702 = vunpack.c.l.b16 %v83
  %v703 = vunpack.c.h.b16 %v83
  %v704 = vunpack.c.l.b16 %v84
  %v705 = vunpack.c.h.b16 %v84
  %v706 = vunpack.c.l.b16 %v85
  %v707 = vunpack.c.h.b16 %v85
  %v708 = vunpack.c.l.b16 %v86
  %v709 = vunpack.c.h.b16 %v86
  %v710 = vunpack.c.l.b16 %v87
  %v711 = vunpack.c.h.b16 %v87
  %v712 = vunpack.c.l.b16 %v88
  %v713 = vunpack.c.h.b16 %v88
  %v714 = vunpack.c.l.b16 %v89
  %v715 = vunpack.c.h.b16 %v89
  %v716 = vunpack.c.l.b16 %v90
  %v717 = vunpack.c.h.b16 %v90
  %v718 = vunpack.c.l.b16 %v91
  %v719 = vunpack.c.h.b16 %v91
  %v720 = vunpack.c.l.b16 %v92
  %v721 = vunpack.c.h.b16 %v92
  %v722 = vunpack.c.l.b16 %v93
  %v723 = vunpack.c.h.b16 %v93
  %v724 = vunpack.c.l.b16 %v94
  %v725 = vunpack.c.h.b16 %v94
  %v726 = vunpack.c.l.b16 %v95
  %v727 = vunpack.c.h.b16 %v95
  %v728 = vunpack.c.l.b16 %v96
  %v729 = vunpack.c.h.b16 %v96
  %v730 = vunpack.c.l.b16 %v97
  %v731 = vunpack.c.h.b16 %v97
  %v732 = vunpack.c.l.b16 %v98
  %v733 = vunpack.c.h.b16 %v98
  %v734 = vunpack.c.l.b16 %v99
  %v735 = vunpack.c.h.b16 %v99
  %v736 = vunpack.c.l.b16 %v100
  %v737 = vunpack.c.h.b16 %v100
  %v738 = vunpack.c.l.b16 %v101
  %v739 = vunpack.c.h.b16 %v101
  %v740 = vunpack.c.l.b16 %v102
  %v741 = vunpack.c.h.b16 %v102
  %v742 = vunpack.c.l.b16 %v103
  %v743 = vunpack.c.h.b16 %v103
  %v744 = vunpack.c.l.b16 %v104
  %v745 = vunpack.c.h.b16 %v104
  %v746 = vunpack.c.l.b16 %v105
  %v747 = vunpack.c.h.b16 %v105
  %v748 = vunpack.c.l.b16 %v106
  %v749 = vunpack.c.h.b16 %v106
  %v750 = vunpack.c.l.b16 %v107
  %v751 = vunpack.c.h.b16 %v107
  %v752 = vunpack.c.l.b16 %v108
  %v753 = vunpack.c.h.b16 %v108
  %v754 = vunpack.c.l.b16 %v109
  %v755 = vunpack.c.h.b16 %v109
  %v756 = vunpack.c.l.b16 %v110
  %v757 = vunpack.c.h.b16 %v110
  %v758 = vunpack.c.l.b16 %v111
  %v759 = vunpack.c.h.b16 %v111
  %v760 = vunpack.c.l.b16 %v112
  %v761 = vunpack.c.h.b16 %v112
  %v762 = vunpack.c.l.b16 %v113
  %v763 = vunpack.c.h.b16 %v113
  %v764 = vunpack.c.l.b16 %v114
  %v765 = vunpack.c.h.b16 %v114
  %v766 = vunpack.c.l.b16 %v115
  %v767 = vunpack.c.h.b16 %v115
  %v768 = vunpack.c.l.b16 %v116
  %v769 = vunpack.c.h.b16 %v116
  %v770 = vunpack.c.l.b16 %v117
  %v771 = vunpack.c.h.b16 %v117
  %v772 = vunpack.c.l.b16 %v118
  %v773 = vunpack.c.h.b16 %v118
  %v774 = vunpack.c.l.b16 %v119
  %v775 = vunpack.c.h.b16 %v119
  %v776 = vunpack.c.l.b16 %v120
  %v777 = vunpack.c.h.b16 %v120
  %v778 = vunpack.c.l.b16 %v121
  %v779 = vunpack.c.h.b16 %v121
  %v780 = vunpack.c.l.b16 %v122
  %v781 = vunpack.c.h.b16 %v122
  %v782 = vunpack.c.l.b16 %v123
  %v783 = vunpack.c.h.b16 %v123
  %v784 = vunpack.c.l.b16 %v124
  %v785 = vunpack.c.h.b16 %v124
  %v786 = vunpack.c.l.b16 %v125
  %v787 = vunpack.c.h.b16 %v125
  %v788 = vunpack.c.l.b16 %v126
  %v789 = vunpack.c.h.b16 %v126
  %v790 = vunpack.c.l.b16 %v127
  %v791 = vunpack.c.h.b16 %v127
  %v792 = vunpack.c.l.b16 %v128
  %v793 = vunpack.c.h.b16 %v128
  %v794 = vunpack.c.l.b16 %v129
  %v795 = vunpack.c.h.b16 %v129
  %v796 = vunpack.c.l.b16 %v130
  %v797 = vunpack.c.h.b16 %v130
  %v798 = vunpack.c.l.b16 %v131
  %v799 = vunpack.c.h.b16 %v131
  %v800 = vunpack.c.l.b16 %v132
  %v801 = vunpack.c.h.b16 %v132
  %v802 = vunpack.c.l.b16 %v133
  %v803 = vunpack.c.h.b16 %v133
  %v804 = vunpack.c.l.b16 %v134
  %v805 = vunpack.c.h.b16 %v134
  %v806 = vunpack.c.l.b16 %v135
  %v807 = vunpack.c.h.b16 %v135
  %v808 = vunpack.c.l.b16 %v136
  %v809 = vunpack.c.h.b16 %v136
  %v810 = vunpack.c.l.b16 %v137
  %v811 = vunpack.c.h.b16 %v137
  %v812 = vunpack.c.l.b16 %v138
  %v813 = vunpack.c.h.b16 %v138
  %v814 = vunpack.c.l.b16 %v139
  %v815 = vunpack.c.h.b16 %v139
  %v816 = vunpack.c.l.b16 %v140
  %v817 = vunpack.c.h.b16 %v140
  %v818 = vunpack.c.l.b16 %v141
  %v819 = vunpack.c.h.b16 %v141
  %v820 = vunpack.c.l.b16 %v142
  %v821 = vunpack.c.h.b16 %v142
  %v822 = vunpack.c.l.b16 %v143
  %v823 = vunpack.c.h.b16 %v143
  %v824 = vunpack.c.l.b16 %v144
  %v825 = vunpack.c.h.b16 %v144
  %v826 = vunpack.c.l.b16 %v145
  %v827 = vunpack.c.h.b16 %v145
  %v828 = vunpack.c.l.b16 %v146
  %v829 = vunpack.c.h.b16 %v146
  %v830 = vunpack.c.l.b16 %v147
  %v831 = vunpack.c.h.b16 %v147
  %v832 = vunpack.c.l.b16 %v148
  %v833 = vunpack.c.h.b16 %v148
  %v834 = vunpack.c.l.b16 %v149
  %v835 = vunpack.c.h.b16 %v149
  %v836 = vunpack.c.l.b16 %v150
  %v837 = vunpack.c.h.b16 %v150
  %v838 = vunpack.c.l.b16 %v151
  %v839 = vunpack.c.h.b16 %v151
  %v840 = vunpack.c.l.b16 %v152
  %v841 = vunpack.c.h.b16 %v152
  %v842 = vunpack.c.l.b16 %v153
  %v843 = vunpack.c.h.b16 %v153
  %v844 = vunpack.c.l.b16 %v154
  %v845 = vunpack.c.h.b16 %v154
  %v846 = vunpack.c.l.b16 %v155
  %v847 = vunpack.c.h.b16 %v155
  %v848 = vunpack.c.l.b16 %v156
  %v849 = vunpack.c.h.b16 %v156
  %v850 = vunpack.c.l.b16 %v157
  %v851 = vunpack.c.h.b16 %v157
  %v852 = vunpack.c.l.b16 %v158
  %v853 = vunpack.c.h.b16 %v158
  %v854 = vunpack.c.l.b16 %v159
  %v855 = vunpack.c.h.b16 %v159
  %v856 = vunpack.c.l.b16 %v160
  %v857 = vunpack.c.h.b16 %v160
  %v858 = vunpack.c.l.b16 %v161
  %v859 = vunpack.c.h.b16 %v161
  %v860 = vunpack.c.l.b16 %v162
  %v861 = vunpack.c.h.b16 %v162
  %v862 = vunpack.c.l.b16 %v163
  %v863 = vunpack.c.h.b16 %v163
  %v864 = vunpack.c.l.b16 %v164
  %v865 = vunpack.c.h.b16 %v164
  %v866 = vunpack.c.l.b16 %v165
  %v867 = vunpack.c.h.b16 %v165
  %v868 = vunpack.c.l.b16 %v166
  %v869 = vunpack.c.h.b16 %v166
  %v870 = vunpack.c.l.b16 %v167
  %v871 = vunpack.c.h.b16 %v167
  %v872 = vunpack.c.l.b16 %v168
  %v873 = vunpack.c.h.b16 %v168
  %v874 = vunpack.c.l.b16 %v169
  %v875 = vunpack.c.h.b16 %v169
  %v876 = vunpack.c.l.b16 %v170
  %v877 = vunpack.c.h.b16 %v170
  %v878 = vunpack.c.l.b16 %v171
  %v879 = vunpack.c.h.b16 %v171
  %v880 = vunpack.c.l.b16 %v172
  %v881 = vunpack.c.h.b16 %v172
  %v882 = vunpack.c.l.b16 %v173
  %v883 = vunpack.c.h.b16 %v173
  %v884 = vunpack.c.l.b16 %v174
  %v885 = vunpack.c.h.b16 %v174
  %v886 = vunpack.c.l.b16 %v175
  %v887 = vunpack.c.h.b16 %v175
  %v888 = vunpack.c.l.b16 %v176
  %v889 = vunpack.c.h.b16 %v176
  %v890 = vunpack.c.l.b16 %v177
  %v891 = vunpack.c.h.b16 %v177
  %v892 = vunpack.c.l.b16 %v178
  %v893 = vunpack.c.h.b16 %v178
  %v894 = vunpack.c.l.b16 %v179
  %v895 = vunpack.c.h.b16 %v179
  %v896 = vunpack.c.l.b16 %v180
  %v897 = vunpack.c.h.b16 %v180
  %v898 = vunpack.c.l.b16 %v181
  %v899 = vunpack.c.h.b16 %v181
  %v900 = vunpack.c.l.b16 %v182
  %v901 = vunpack.c.h.b16 %v182
  %v902 = vunpack.c.l.b16 %v183
  %v903 = vunpack.c.h.b16 %v183
  %v904 = vunpack.c.l.b16 %v184
  %v905 = vunpack.c.h.b16 %v184
  %v906 = vunpack.c.l.b16 %v185
  %v907 = vunpack.c.h.b16 %v185
  %v908 = vunpack.c.l.b16 %v186
  %v909 = vunpack.c.h.b16 %v186
  %v910 = vunpack.c.l.b16 %v187
  %v911 = vunpack.c.h.b16 %v187
  %v912 = vunpack.c.l.b16 %v188
  %v913 = vunpack.c.h.b16 %v188
  %v914 = vunpack.c.l.b16 %v189
  %v915 = vunpack.c.h.b16 %v189
  %v916 = vunpack.c.l.b16 %v190
  %v917 = vunpack.c.h.b16 %v190
  %v918 = vunpack.c.l.b16 %v191
  %v919 = vunpack.c.h.b16 %v191
  %v920 = vunpack.c.l.b16 %v192
  %v921 = vunpack.c.h.b16 %v192
  %v922 = vunpack.c.l.b16 %v193
  %v923 = vunpack.c.h.b16 %v193
  %v924 = vunpack.c.l.b16 %v194
  %v925 = vunpack.c.h.b16 %v194
  %v926 = vunpack.c.l.b16 %v195
  %v927 = vunpack.c.h.b16 %v195
  %v928 = vunpack.c.l.b16 %v196
  %v929 = vunpack.c.h.b16 %v196
  %v930 = vunpack.c.l.b16 %v197
  %v931 = vunpack.c.h.b16 %v197
  %v932 = vunpack.c.l.b16 %v198
  %v933 = vunpack.c.h.b16 %v198
  %v934 = vunpack.c.l.b16 %v199
  %v935 = vunpack.c.h.b16 %v199
  %v936 = vunpack.c.l.b16 %v200
  %v937 = vunpack.c.h.b16 %v200
  %v938 = vunpack.c.l.b16 %v201
  %v939 = vunpack.c.h.b16 %v201
  %v940 = vunpack.c.l.b16 %v202
  %v941 = vunpack.c.h.b16 %v202
  %v942 = vunpack.c.l.b16 %v203
  %v943 = vunpack.c.h.b16 %v203
  %v944 = vunpack.c.l.b16 %v204
  %v945 = vunpack.c.h.b16 %v204
  %v946 = vunpack.c.l.b16 %v205
  %v947 = vunpack.c.h.b16 %v205
  %v948 = vunpack.c.l.b16 %v206
  %v949 = vunpack.c.h.b16 %v206
  %v950 = vunpack.c.l.b16 %v207
  %v951 = vunpack.c.h.b16 %v207
  %v952 = vunpack.c.l.b16 %v208
  %v953 = vunpack.c.h.b16 %v208
  %v954 = vunpack.c.l.b16 %v209
  %v955 = vunpack.c.h.b16 %v209
  %v956 = vunpack.c.l.b16 %v210
  %v957 = vunpack.c.h.b16 %v210
  %v958 = vunpack.c.l.b16 %v211
  %v959 = vunpack.c.h.b16 %v211
  %v960 = vunpack.c.l.b16 %v212
  %v961 = vunpack.c.h.b16 %v212
  %v962 = vunpack.c.l.b16 %v213
  %v963 = vunpack.c.h.b16 %v213
  %v964 = vunpack.c.l.b16 %v214
  %v965 = vunpack.c.h.b16 %v214
  %v966 = vunpack.c.l.b16 %v215
  %v967 = vunpack.c.h.b16 %v215
  %v968 = vunpack.c.l.b16 %v216
  %v969 = vunpack.c.h.b16 %v216
  %v970 = vunpack.c.l.b16 %v217
  %v971 = vunpack.c.h.b16 %v217
  %v972 = vunpack.c.l.b16 %v218
  %v973 = vunpack.c.h.b16 %v218
  %v974 = vunpack.c.l.b16 %v219
  %v975 = vunpack.c.h.b16 %v219
  %v976 = vunpack.c.l.b16 %v220
  %v977 = vunpack.c.h.b16 %v220
  %v978 = vunpack.c.l.b16 %v221
  %v979 = vunpack.c.h.b16 %v221
  %v980 = vunpack.c.l.b16 %v222
  %v981 = vunpack.c.h.b16 %v222
  %v982 = vunpack.c.l.b16 %v223
  %v983 = vunpack.c.h.b16 %v223
  %v984 = vunpack.c.l.b16 %v224
  %v985 = vunpack.c.h.b16 %v224
  %v986 = vunpack.c.l.b16 %v225
  %v987 = vunpack.c.h.b16 %v225
  %v988 = vunpack.c.l.b16 %v226
  %v989 = vunpack.c.h.b16 %v226
  %v990 = vunpack.c.l.b16 %v227
  %v991 = vunpack.c.h.b16 %v227
  %v992 = vunpack.c.l.b16 %v228
  %v993 = vunpack.c.h.b16 %v228
  %v994 = vunpack.c.l.b16 %v229
  %v995 = vunpack.c.h.b16 %v229
  %v996 = vunpack.c.l.b16 %v230
  %v997 = vunpack.c.h.b16 %v230
  %v998 = vunpack.c.l.b16 %v231
  %v999 = vunpack.c.h.b16 %v231
  %v1000 = vunpack.c.l.b16 %v232
  %v1001 = vunpack.c.h.b16 %v232
  %v1002 = vunpack.c.l.b16 %v233
  %v1003 = vunpack.c.h.b16 %v233
  %v1004 = vunpack.c.l.b16 %v234
  %v1005 = vunpack.c.h.b16 %v234
  %v1006 = vunpack.c.l.b16 %v235
  %v1007 = vunpack.c.h.b16 %v235
  %v1008 = vunpack.c.l.b16 %v236
  %v1009 = vunpack.c.h.b16 %v236
  %v1010 = vunpack.c.l.b16 %v237
  %v1011 = vunpack.c.h.b16 %v237
  %v1012 = vunpack.c.l.b16 %v238
  %v1013 = vunpack.c.h.b16 %v238
  %v1014 = vunpack.c.l.b16 %v239
  %v1015 = vunpack.c.h.b16 %v239
  %v1016 = vunpack.c.l.b16 %v240
  %v1017 = vunpack.c.h.b16 %v240
  %v1018 = vunpack.c.l.b16 %v241
  %v1019 = vunpack.c.h.b16 %v241
  %v1020 = vunpack.c.l.b16 %v242
  %v1021 = vunpack.c.h.b16 %v242
  %v1022 = vunpack.c.l.b16 %v243
  %v1023 = vunpack.c.h.b16 %v243
  %v1024 = vunpack.c.l.b16 %v244
  %v1025 = vunpack.c.h.b16 %v244
  %v1026 = vunpack.c.l.b16 %v245
  %v1027 = vunpack.c.h.b16 %v245
  %v1028 = vunpack.c.l.b16 %v246
  %v1029 = vunpack.c.h.b16 %v246
  %v1030 = vunpack.c.l.b16 %v247
  %v1031 = vunpack.c.h.b16 %v247
  %v1032 = vunpack.c.l.b16 %v248
  %v1033 = vunpack.c.h.b16 %v248
  %v1034 = vunpack.c.l.b16 %v249
  %v1035 = vunpack.c.h.b16 %v249
  %v1036 = vunpack.c.l.b16 %v250
  %v1037 = vunpack.c.h.b16 %v250
  %v1038 = vunpack.c.l.b16 %v251
  %v1039 = vunpack.c.h.b16 %v251
  %v1040 = vunpack.c.l.b16 %v252
  %v1041 = vunpack.c.h.b16 %v252
  %v1042 = vunpack.c.l.b16 %v253
  %v1043 = vunpack.c.h.b16 %v253
  %v1044 = vunpack.c.l.b16 %v254
  %v1045 = vunpack.c.h.b16 %v254
  %v1046 = vunpack.c.l.b16 %v255
  %v1047 = vunpack.c.h.b16 %v255
  %v1048 = vunpack.c.l.b16 %v256
  %v1049 = vunpack.c.h.b16 %v256
  %v1050 = vunpack.c.l.b16 %v257
  %v1051 = vunpack.c.h.b16 %v257
  %v1052 = vunpack.c.l.b16 %v258
  %v1053 = vunpack.c.h.b16 %v258
  %v1054 = vunpack.c.l.b16 %v259
  %v1055 = vunpack.c.h.b16 %v259
  %v1056 = vunpack.c.l.b16 %v260
  %v1057 = vunpack.c.h.b16 %v260
  %v1058 = vunpack.c.l.b16 %v261
  %v1059 = vunpack.c.h.b16 %v261
  %v1060 = vunpack.c.l.b16 %v262
  %v1061 = vunpack.c.h.b16 %v262
  %v1062 = vunpack.c.l.b16 %v263
  %v1063 = vunpack.c.h.b16 %v263
  %v1064 = vunpack.c.l.b16 %v264
  %v1065 = vunpack.c.h.b16 %v264
  %v1066 = vunpack.c.l.b16 %v265
  %v1067 = vunpack.c.h.b16 %v265
  %v1068 = vunpack.c.l.b16 %v266
  %v1069 = vunpack.c.h.b16 %v266
  %v1070 = vunpack.c.l.b16 %v267
  %v1071 = vunpack.c.h.b16 %v267
  %v1072 = vunpack.c.l.b16 %v268
  %v1073 = vunpack.c.h.b16 %v268
  %v1074 = vunpack.c.l.b16 %v269
  %v1075 = vunpack.c.h.b16 %v269
  %v1076 = vunpack.c.l.b16 %v270
  %v1077 = vunpack.c.h.b16 %v270
  %v1078 = vunpack.c.l.b16 %v271
  %v1079 = vunpack.c.h.b16 %v271
  %v1080 = vunpack.c.l.b16 %v272
  %v1081 = vunpack.c.h.b16 %v272
  %v1082 = vunpack.c.l.b16 %v273
  %v1083 = vunpack.c.h.b16 %v273
  %v1084 = vunpack.c.l.b16 %v274
  %v1085 = vunpack.c.h.b16 %v274
  %v1086 = vunpack.c.l.b16 %v275
  %v1087 = vunpack.c.h.b16 %v275
  %v1088 = vunpack.c.l.b16 %v276
  %v1089 = vunpack.c.h.b16 %v276
  %v1090 = vunpack.c.l.b16 %v277
  %v1091 = vunpack.c.h.b16 %v277
  %v1092 = vunpack.c.l.b16 %v278
  %v1093 = vunpack.c.h.b16 %v278
  %v1094 = vunpack.c.l.b16 %v279
  %v1095 = vunpack.c.h.b16 %v279
  %v1096 = vunpack.c.l.b16 %v280
  %v1097 = vunpack.c.h.b16 %v280
  %v1098 = vunpack.c.l.b16 %v281
  %v1099 = vunpack.c.h.b16 %v281
  %v1100 = vunpack.c.l.b16 %v282
  %v1101 = vunpack.c.h.b16 %v282
  %v1102 = vunpack.c.l.b16 %v283
  %v1103 = vunpack.c.h.b16 %v283
  %v1104 = vunpack.c.l.b16 %v284
  %v1105 = vunpack.c.h.b16 %v284
  %v1106 = vunpack.c.l.b16 %v285
  %v1107 = vunpack.c.h.b16 %v285
  %v1108 = vunpack.c.l.b16 %v286
  %v1109 = vunpack.c.h.b16 %v286
  %v1110 = vunpack.c.l.b16 %v287
  %v1111 = vunpack.c.h.b16 %v287
  %v1112 = vpack.c.b16 %v602, %v600
  %v1113 = vpack.c.b16 %v603, %v601
  %v1114 = vpack.c.b16 %v606, %v604
  %v1115 = vpack.c.b16 %v607, %v605
  %v1116 = vpack.c.b16 %v610, %v608
  %v1117 = vpack.c.b16 %v611, %v609
  %v1118 = vpack.c.b16 %v614, %v612
  %v1119 = vpack.c.b16 %v615, %v613
  %v1120 = vpack.c.b16 %v618, %v616
  %v1121 = vpack.c.b16 %v619, %v617
  %v1122 = vpack.c.b16 %v622, %v620
  %v1123 = vpack.c.b16 %v623, %v621
  %v1124 = vpack.c.b16 %v626, %v624
  %v1125 = vpack.c.b16 %v627, %v625
  %v1126 = vpack.c.b16 %v630, %v628
  %v1127 = vpack.c.b16 %v631, %v629
  %v1128 = vpack.c.b16 %v634, %v632
  %v1129 = vpack.c.b16 %v635, %v633
  %v1130 = vpack.c.b16 %v638, %v636
  %v1131 = vpack.c.b16 %v639, %v637
  %v1132 = vpack.c.b16 %v642, %v640
  %v1133 = vpack.c.b16 %v643, %v641
  %v1134 = vpack.c.b16 %v646, %v644
  %v1135 = vpack.c.b16 %v647, %v645
  %v1136 = vpack.c.b16 %v650, %v648
  %v1137 = vpack.c.b16 %v651, %v649
  %v1138 = vpack.c.b16 %v654, %v652
  %v1139 = vpack.c.b16 %v655, %v653
  %v1140 = vpack.c.b16 %v658, %v656
  %v1141 = vpack.c.b16 %v659, %v657
  %v1142 = vpack.c.b16 %v662, %v660
  %v1143 = vpack.c.b16 %v663, %v661
  %v1144 = vpack.c.b16 %v666, %v664
  %v1145 = vpack.c.b16 %v667, %v665
  %v1146 = vpack.c.b16 %v670, %v668
  %v1147 = vpack.c.b16 %v671, %v669
  %v1148 = vpack.c.b16 %v674, %v672
  %v1149 = vpack.c.b16 %v675, %v673
  %v1150 = vpack.c.b16 %v678, %v676
  %v1151 = vpack.c.b16 %v679, %v677
  %v1152 = vpack.c.b16 %v682, %v680
  %v1153 = vpack.c.b16 %v683, %v681
  %v1154 = vpack.c.b16 %v686, %v684
  %v1155 = vpack.c.b16 %v687, %v685
  %v1156 = vpack.c.b16 %v690, %v688
  %v1157 = vpack.c.b16 %v691, %v689
  %v1158 = vpack.c.b16 %v694, %v692
  %v1159 = vpack.c.b16 %v695, %v693
  %v1160 = vpack.c.b16 %v698, %v696
  %v1161 = vpack.c.b16 %v699, %v697
  %v1162 = vpack.c.b16 %v702, %v700
  %v1163 = vpack.c.b16 %v703, %v701
  %v1164 = vpack.c.b16 %v706, %v704
  %v1165 = vpack.c.b16 %v707, %v705
  %v1166 = vpack.c.b16 %v710, %v708
  %v1167 = vpack.c.b16 %v711, %v709
  %v1168 = vpack.c.b16 %v714, %v712
  %v1169 = vpack.c.b16 %v715, %v713
  %v1170 = vpack.c.b16 %v718, %v716
  %v1171 = vpack.c.b16 %v719, %v717
  %v1172 = vpack.c.b16 %v722, %v720
  %v1173 = vpack.c.b16 %v723, %v721
  %v1174 = vpack.c.b16 %v726, %v724
  %v1175 = vpack.c.b16 %v727, %v725
  %v1176 = vpack.c.b16 %v730, %v728
  %v1177 = vpack.c.b16 %v731, %v729
  %v1178 = vpack.c.b16 %v734, %v732
  %v1179 = vpack.c.b16 %v735, %v733
  %v1180 = vpack.c.b16 %v738, %v736
  %v1181 = vpack.c.b16 %v739, %v737
  %v1182 = vpack.c.b16 %v742, %v740
  %v1183 = vpack.c.b16 %v743, %v741
  %v1184 = vpack.c.b16 %v746, %v744
  %v1185 = vpack.c.b16 %v747, %v745
  %v1186 = vpack.c.b16 %v750, %v748
  %v1187 = vpack.c.b16 %v751, %v749
  %v1188 = vpack.c.b16 %v754, %v752
  %v1189 = vpack.c.b16 %v755, %v753
  %v1190 = vpack.c.b16 %v758, %v756
  %v1191 = vpack.c.b16 %v759, %v757
  %v1192 = vpack.c.b16 %v762, %v760
  %v1193 = vpack.c.b16 %v763, %v761
  %v1194 = vpack.c.b16 %v766, %v764
  %v1195 = vpack.c.b16 %v767, %v765
  %v1196 = vpack.c.b16 %v770, %v768
  %v1197 = vpack.c.b16 %v771, %v769
  %v1198 = vpack.c.b16 %v774, %v772
  %v1199 = vpack.c.b16 %v775, %v773
  %v1200 = vpack.c.b16 %v778, %v776
  %v1201 = vpack.c.b16 %v779, %v777
  %v1202 = vpack.c.b16 %v782, %v780
  %v1203 = vpack.c.b16 %v783, %v781
  %v1204 = vpack.c.b16 %v786, %v784
  %v1205 = vpack.c.b16 %v787, %v785
  %v1206 = vpack.c.b16 %v790, %v788
  %v1207 = vpack.c.b16 %v791, %v789
  %v1208 = vpack.c.b16 %v794, %v792
  %v1209 = vpack.c.b16 %v795, %v793
  %v1210 = vpack.c.b16 %v798, %v796
  %v1211 = vpack.c.b16 %v799, %v797
  %v1212 = vpack.c.b16 %v802, %v800
  %v1213 = vpack.c.b16 %v803, %v801
  %v1214 = vpack.c.b16 %v806, %v804
  %v1215 = vpack.c.b16 %v807, %v805
  %v1216 = vpack.c.b16 %v810, %v808
  %v1217 = vpack.c.b16 %v811, %v809
  %v1218 = vpack.c.b16 %v814, %v812
  %v1219 = vpack.c.b16 %v815, %v813
  %v1220 = vpack.c.b16 %v818, %v816
  %v1221 = vpack.c.b16 %v819, %v817
  %v1222 = vpack.c.b16 %v822, %v820
  %v1223 = vpack.c.b16 %v823, %v821
  %v1224 = vpack.c.b16 %v826, %v824
  %v1225 = vpack.c.b16 %v827, %v825
  %v1226 = vpack.c.b16 %v830, %v828
  %v1227 = vpack.c.b16 %v831, %v829
  %v1228 = vpack.c.b16 %v834, %v832
  %v1229 = vpack.c.b16 %v835, %v833
  %v1230 = vpack.c.b16 %v838, %v836
  %v1231 = vpack.c.b16 %v839, %v837
  %v1232 = vpack.c.b16 %v842, %v840
  %v1233 = vpack.c.b16 %v843, %v841
  %v1234 = vpack.c.b16 %v846, %v844
  %v1235 = vpack.c.b16 %v847, %v845
  %v1236 = vpack.c.b16 %v850, %v848
  %v1237 = vpack.c.b16 %v851, %v849
  %v1238 = vpack.c.b16 %v854, %v852
  %v1239 = vpack.c.b16 %v855, %v853
  %v1240 = vpack.c.b16 %v858, %v856
  %v1241 = vpack.c.b16 %v859, %v857
  %v1242 = vpack.c.b16 %v862, %v860
  %v1243 = vpack.c.b16 %v863, %v861
  %v1244 = vpack.c.b16 %v866, %v864
  %v1245 = vpack.c.b16 %v867, %v865
  %v1246 = vpack.c.b16 %v870, %v868
  %v1247 = vpack.c.b16 %v871, %v869
  %v1248 = vpack.c.b16 %v874, %v872
  %v1249 = vpack.c.b16 %v875, %v873
  %v1250 = vpack.c.b16 %v878, %v876
  %v1251 = vpack.c.b16 %v879, %v877
  %v1252 = vpack.c.b16 %v882, %v880
  %v1253 = vpack.c.b16 %v883, %v881
  %v1254 = vpack.c.b16 %v886, %v884
  %v1255 = vpack.c.b16 %v887, %v885
  %v1256 = vpack.c.b16 %v890, %v888
  %v1257 = vpack.c.b16 %v891, %v889
  %v1258 = vpack.c.b16 %v894, %v892
  %v1259 = vpack.c.b16 %v895, %v893
  %v1260 = vpack.c.b16 %v898, %v896
  %v1261 = vpack.c.b16 %v899, %v897
  %v1262 = vpack.c.b16 %v902, %v900
  %v1263 = vpack.c.b16 %v903, %v901
  %v1264 = vpack.c.b16 %v906, %v904
  %v1265 = vpack.c.b16 %v907, %v905
  %v1266 = vpack.c.b16 %v910, %v908
  %v1267 = vpack.c.b16 %v911, %v909
  %v1268 = vpack.c.b16 %v914, %v912
  %v1269 = vpack.c.b16 %v915, %v913
  %v1270 = vpack.c.b16 %v918, %v916
  %v1271 = vpack.c.b16 %v919, %v917
  %v1272 = vpack.c.b16 %v922, %v920
  %v1273 = vpack.c.b16 %v923, %v921
  %v1274 = vpack.c.b16 %v926, %v924
  %v1275 = vpack.c.b16 %v927, %v925
  %v1276 = vpack.c.b16 %v930, %v928
  %v1277 = vpack.c.b16 %v931, %v929
  %v1278 = vpack.c.b16 %v934, %v932
  %v1279 = vpack.c.b16 %v935, %v933
  %v1280 = vpack.c.b16 %v938, %v936
  %v1281 = vpack.c.b16 %v939, %v937
  %v1282 = vpack.c.b16 %v942, %v940
  %v1283 = vpack.c.b16 %v943, %v941
  %v1284 = vpack.c.b16 %v946, %v944
  %v1285 = vpack.c.b16 %v947, %v945
  %v1286 = vpack.c.b16 %v950, %v948
  %v1287 = vpack.c.b16 %v951, %v949
  %v1288 = vpack.c.b16 %v954, %v952
  %v1289 = vpack.c.b16 %v955, %v953
  %v1290 = vpack.c.b16 %v958, %v956
  %v1291 = vpack.c.b16 %v959, %v957
  %v1292 = vpack.c.b16 %v962, %v960
  %v1293 = vpack.c.b16 %v963, %v961
  %v1294 = vpack.c.b16 %v966, %v964
  %v1295 = vpack.c.b16 %v967, %v965
  %v1296 = vpack.c.b16 %v970, %v968
  %v1297 = vpack.c.b16 %v971, %v969
  %v1298 = vpack.c.b16 %v974, %v972
  %v1299 = vpack.c.b16 %v975, %v973
  %v1300 = vpack.c.b16 %v978, %v976
  %v1301 = vpack.c.b16 %v979, %v977
  %v1302 = vpack.c.b16 %v982, %v980
  %v1303 = vpack.c.b16 %v983, %v981
  %v1304 = vpack.c.b16 %v986, %v984
  %v1305 = vpack.c.b16 %v987, %v985
  %v1306 = vpack.c.b16 %v990, %v988
  %v1307 = vpack.c.b16 %v991, %v989
  %v1308 = vpack.c.b16 %v994, %v992
  %v1309 = vpack.c.b16 %v995, %v993
  %v1310 = vpack.c.b16 %v998, %v996
  %v1311 = vpack.c.b16 %v999, %v997
  %v1312 = vpack.c.b16 %v1002, %v1000
  %v1313 = vpack.c.b16 %v1003, %v1001
  %v1314 = vpack.c.b16 %v1006, %v1004
  %v1315 = vpack.c.b16 %v1007, %v1005
  %v1316 = vpack.c.b16 %v1010, %v1008
  %v1317 = vpack.c.b16 %v1011, %v1009
  %v1318 = vpack.c.b16 %v1014, %v1012
  %v1319 = vpack.c.b16 %v1015, %v1013
  %v1320 = vpack.c.b16 %v1018, %v1016
  %v1321 = vpack.c.b16 %v1019, %v1017
  %v1322 = vpack.c.b16 %v1022, %v1020
  %v1323 = vpack.c.b16 %v1023, %v1021
  %v1324 = vpack.c.b16 %v1026, %v1024
  %v1325 = vpack.c.b16 %v1027, %v1025
  %v1326 = vpack.c.b16 %v1030, %v1028
  %v1327 = vpack.c.b16 %v1031, %v1029
  %v1328 = vpack.c.b16 %v1034, %v1032
  %v1329 = vpack.c.b16 %v1035, %v1033
  %v1330 = vpack.c.b16 %v1038, %v1036
  %v1331 = vpack.c.b16 %v1039, %v1037
  %v1332 = vpack.c.b16 %v1042, %v1040
  %v1333 = vpack.c.b16 %v1043, %v1041
  %v1334 = vpack.c.b16 %v1046, %v1044
  %v1335 = vpack.c.b16 %v1047, %v1045
  %v1336 = vpack.c.b16 %v1050, %v1048
  %v1337 = vpack.c.b16 %v1051, %v1049
  %v1338 = vpack.c.b16 %v1054, %v1052
  %v1339 = vpack.c.b16 %v1055, %v1053
  %v1340 = vpack.c.b16 %v1058, %v1056
  %v1341 = vpack.c.b16 %v1059, %v1057
  %v1342 = vpack.c.b16 %v1062, %v1060
  %v1343 = vpack.c.b16 %v1063, %v1061
  %v1344 = vpack.c.b16 %v1066, %v1064
  %v1345 = vpack.c.b16 %v1067, %v1065
  %v1346 = vpack.c.b16 %v1070, %v1068
  %v1347 = vpack.c.b16 %v1071, %v1069
  %v1348 = vpack.c.b16 %v1074, %v1072
  %v1349 = vpack.c.b16 %v1075, %v1073
  %v1350 = vpack.c.b16 %v1078, %v1076
  %v1351 = vpack.c.b16 %v1079, %v1077
  %v1352 = vpack.c.b16 %v1082, %v1080
  %v1353 = vpack.c.b16 %v1083, %v1081
  %v1354 = vpack.c.b16 %v1086, %v1084
  %v1355 = vpack.c.b16 %v1087, %v1085
  %v1356 = vpack.c.b16 %v1090, %v1088
  %v1357 = vpack.c.b16 %v1091, %v1089
  %v1358 = vpack.c.b16 %v1094, %v1092
  %v1359 = vpack.c.b16 %v1095, %v1093
  %v1360 = vpack.c.b16 %v1098, %v1096
  %v1361 = vpack.c.b16 %v1099, %v1097
  %v1362 = vpack.c.b16 %v1102, %v1100
  %v1363 = vpack.c.b16 %v1103, %v1101
  %v1364 = vpack.c.b16 %v1106, %v1104
  %v1365 = vpack.c.b16 %v1107, %v1105
  %v1366 = vpack.c.b16 %v1110, %v1108
  %v1367 = vpack.c.b16 %v1111, %v1109
  %1624 = vmatpush.bf16.msra.mxu0 %v1126
  %1625 = vmatpush.bf16.msra.mxu0 %v1124
  %1626 = vmatpush.bf16.msra.mxu0 %v1122
  %1627 = vmatpush.bf16.msra.mxu0 %v1120
  %1628 = vmatpush.bf16.msra.mxu0 %v1118
  %1629 = vmatpush.bf16.msra.mxu0 %v1116
  %1630 = vmatpush.bf16.msra.mxu0 %v1114
  %1631 = vmatpush.bf16.msra.mxu0 %v1112
  %1632 = vmatmul.bf16.gmra.mxu0 %v312
  %v1633 = vpop.f32.mrf.mxu0
  %v1634 = vadd.f32 0.0, %v1633
  %v1635 = vpop.f32.mrf.mxu0
  %1636 = vdwg.mxu0
  %1637 = vmatpush.bf16.msra.mxu0 %v1142
  %1638 = vmatpush.bf16.msra.mxu0 %v1140
  %1639 = vmatpush.bf16.msra.mxu0 %v1138
  %1640 = vmatpush.bf16.msra.mxu0 %v1136
  %1641 = vmatpush.bf16.msra.mxu0 %v1134
  %1642 = vmatpush.bf16.msra.mxu0 %v1132
  %1643 = vmatpush.bf16.msra.mxu0 %v1130
  %1644 = vmatpush.bf16.msra.mxu0 %v1128
  %1645 = vmatmul.bf16.gmra.mxu0 %v313
  %v1646 = vpop.f32.mrf.mxu0
  %v1647 = vadd.f32 %v1634, %v1646
  %v1648 = vpop.f32.mrf.mxu0
  %1649 = vdwg.mxu0
  %1650 = vmatpush.bf16.msra.mxu0 %v1158
  %1651 = vmatpush.bf16.msra.mxu0 %v1156
  %1652 = vmatpush.bf16.msra.mxu0 %v1154
  %1653 = vmatpush.bf16.msra.mxu0 %v1152
  %1654 = vmatpush.bf16.msra.mxu0 %v1150
  %1655 = vmatpush.bf16.msra.mxu0 %v1148
  %1656 = vmatpush.bf16.msra.mxu0 %v1146
  %1657 = vmatpush.bf16.msra.mxu0 %v1144
  %1658 = vmatmul.bf16.gmra.mxu0 %v314
  %v1659 = vpop.f32.mrf.mxu0
  %v1660 = vadd.f32 %v1647, %v1659
  %v1661 = vpop.f32.mrf.mxu0
  %1662 = vdwg.mxu0
  %1663 = vmatpush.bf16.msra.mxu0 %v1174
  %1664 = vmatpush.bf16.msra.mxu0 %v1172
  %1665 = vmatpush.bf16.msra.mxu0 %v1170
  %1666 = vmatpush.bf16.msra.mxu0 %v1168
  %1667 = vmatpush.bf16.msra.mxu0 %v1166
  %1668 = vmatpush.bf16.msra.mxu0 %v1164
  %1669 = vmatpush.bf16.msra.mxu0 %v1162
  %1670 = vmatpush.bf16.msra.mxu0 %v1160
  %1671 = vmatmul.bf16.gmra.mxu0 %v315
  %v1672 = vpop.f32.mrf.mxu0
  %v1673 = vadd.f32 %v1660, %v1672
  %v1674 = vpop.f32.mrf.mxu0
  %1675 = vdwg.mxu0
  %1676 = vmatpush.bf16.msra.mxu0 %v1190
  %1677 = vmatpush.bf16.msra.mxu0 %v1188
  %1678 = vmatpush.bf16.msra.mxu0 %v1186
  %1679 = vmatpush.bf16.msra.mxu0 %v1184
  %1680 = vmatpush.bf16.msra.mxu0 %v1182
  %1681 = vmatpush.bf16.msra.mxu0 %v1180
  %1682 = vmatpush.bf16.msra.mxu0 %v1178
  %1683 = vmatpush.bf16.msra.mxu0 %v1176
  %1684 = vmatmul.bf16.gmra.mxu0 %v316
  %v1685 = vpop.f32.mrf.mxu0
  %v1686 = vadd.f32 %v1673, %v1685
  %v1687 = vpop.f32.mrf.mxu0
  %1688 = vdwg.mxu0
  %1689 = vmatpush.bf16.msra.mxu0 %v1206
  %1690 = vmatpush.bf16.msra.mxu0 %v1204
  %1691 = vmatpush.bf16.msra.mxu0 %v1202
  %1692 = vmatpush.bf16.msra.mxu0 %v1200
  %1693 = vmatpush.bf16.msra.mxu0 %v1198
  %1694 = vmatpush.bf16.msra.mxu0 %v1196
  %1695 = vmatpush.bf16.msra.mxu0 %v1194
  %1696 = vmatpush.bf16.msra.mxu0 %v1192
  %1697 = vmatmul.bf16.gmra.mxu0 %v317
  %v1698 = vpop.f32.mrf.mxu0
  %v1699 = vadd.f32 %v1686, %v1698
  %v1700 = vpop.f32.mrf.mxu0
  %1701 = vdwg.mxu0
  %1702 = vmatpush.bf16.msra.mxu0 %v1222
  %1703 = vmatpush.bf16.msra.mxu0 %v1220
  %1704 = vmatpush.bf16.msra.mxu0 %v1218
  %1705 = vmatpush.bf16.msra.mxu0 %v1216
  %1706 = vmatpush.bf16.msra.mxu0 %v1214
  %1707 = vmatpush.bf16.msra.mxu0 %v1212
  %1708 = vmatpush.bf16.msra.mxu0 %v1210
  %1709 = vmatpush.bf16.msra.mxu0 %v1208
  %1710 = vmatmul.bf16.gmra.mxu0 %v318
  %v1711 = vpop.f32.mrf.mxu0
  %v1712 = vadd.f32 %v1699, %v1711
  %v1713 = vpop.f32.mrf.mxu0
  %1714 = vdwg.mxu0
  %1715 = vmatpush.bf16.msra.mxu0 %v1238
  %1716 = vmatpush.bf16.msra.mxu0 %v1236
  %1717 = vmatpush.bf16.msra.mxu0 %v1234
  %1718 = vmatpush.bf16.msra.mxu0 %v1232
  %1719 = vmatpush.bf16.msra.mxu0 %v1230
  %1720 = vmatpush.bf16.msra.mxu0 %v1228
  %1721 = vmatpush.bf16.msra.mxu0 %v1226
  %1722 = vmatpush.bf16.msra.mxu0 %v1224
  %1723 = vmatmul.bf16.gmra.mxu0 %v319
  %v1724 = vpop.f32.mrf.mxu0
  %v1725 = vadd.f32 %v1712, %v1724
  %v1726 = vpop.f32.mrf.mxu0
  %1727 = vdwg.mxu0
  %1728 = vmatpush.bf16.msra.mxu0 %v1254
  %1729 = vmatpush.bf16.msra.mxu0 %v1252
  %1730 = vmatpush.bf16.msra.mxu0 %v1250
  %1731 = vmatpush.bf16.msra.mxu0 %v1248
  %1732 = vmatpush.bf16.msra.mxu0 %v1246
  %1733 = vmatpush.bf16.msra.mxu0 %v1244
  %1734 = vmatpush.bf16.msra.mxu0 %v1242
  %1735 = vmatpush.bf16.msra.mxu0 %v1240
  %1736 = vmatmul.bf16.gmra.mxu0 %v320
  %v1737 = vpop.f32.mrf.mxu0
  %v1738 = vadd.f32 %v1725, %v1737
  %v1739 = vpop.f32.mrf.mxu0
  %1740 = vdwg.mxu0
  %1741 = vmatpush.bf16.msra.mxu0 %v1270
  %1742 = vmatpush.bf16.msra.mxu0 %v1268
  %1743 = vmatpush.bf16.msra.mxu0 %v1266
  %1744 = vmatpush.bf16.msra.mxu0 %v1264
  %1745 = vmatpush.bf16.msra.mxu0 %v1262
  %1746 = vmatpush.bf16.msra.mxu0 %v1260
  %1747 = vmatpush.bf16.msra.mxu0 %v1258
  %1748 = vmatpush.bf16.msra.mxu0 %v1256
  %1749 = vmatmul.bf16.gmra.mxu0 %v321
  %v1750 = vpop.f32.mrf.mxu0
  %v1751 = vadd.f32 %v1738, %v1750
  %v1752 = vpop.f32.mrf.mxu0
  %1753 = vdwg.mxu0
  %1754 = vmatpush.bf16.msra.mxu0 %v1286
  %1755 = vmatpush.bf16.msra.mxu0 %v1284
  %1756 = vmatpush.bf16.msra.mxu0 %v1282
  %1757 = vmatpush.bf16.msra.mxu0 %v1280
  %1758 = vmatpush.bf16.msra.mxu0 %v1278
  %1759 = vmatpush.bf16.msra.mxu0 %v1276
  %1760 = vmatpush.bf16.msra.mxu0 %v1274
  %1761 = vmatpush.bf16.msra.mxu0 %v1272
  %1762 = vmatmul.bf16.gmra.mxu0 %v322
  %v1763 = vpop.f32.mrf.mxu0
  %v1764 = vadd.f32 %v1751, %v1763
  %v1765 = vpop.f32.mrf.mxu0
  %1766 = vdwg.mxu0
  %1767 = vmatpush.bf16.msra.mxu0 %v1302
  %1768 = vmatpush.bf16.msra.mxu0 %v1300
  %1769 = vmatpush.bf16.msra.mxu0 %v1298
  %1770 = vmatpush.bf16.msra.mxu0 %v1296
  %1771 = vmatpush.bf16.msra.mxu0 %v1294
  %1772 = vmatpush.bf16.msra.mxu0 %v1292
  %1773 = vmatpush.bf16.msra.mxu0 %v1290
  %1774 = vmatpush.bf16.msra.mxu0 %v1288
  %1775 = vmatmul.bf16.gmra.mxu0 %v323
  %v1776 = vpop.f32.mrf.mxu0
  %v1777 = vadd.f32 %v1764, %v1776
  %v1778 = vpop.f32.mrf.mxu0
  %1779 = vdwg.mxu0
  %1780 = vmatpush.bf16.msra.mxu0 %v1318
  %1781 = vmatpush.bf16.msra.mxu0 %v1316
  %1782 = vmatpush.bf16.msra.mxu0 %v1314
  %1783 = vmatpush.bf16.msra.mxu0 %v1312
  %1784 = vmatpush.bf16.msra.mxu0 %v1310
  %1785 = vmatpush.bf16.msra.mxu0 %v1308
  %1786 = vmatpush.bf16.msra.mxu0 %v1306
  %1787 = vmatpush.bf16.msra.mxu0 %v1304
  %1788 = vmatmul.bf16.gmra.mxu0 %v324
  %v1789 = vpop.f32.mrf.mxu0
  %v1790 = vadd.f32 %v1777, %v1789
  %v1791 = vpop.f32.mrf.mxu0
  %1792 = vdwg.mxu0
  %1793 = vmatpush.bf16.msra.mxu0 %v1334
  %1794 = vmatpush.bf16.msra.mxu0 %v1332
  %1795 = vmatpush.bf16.msra.mxu0 %v1330
  %1796 = vmatpush.bf16.msra.mxu0 %v1328
  %1797 = vmatpush.bf16.msra.mxu0 %v1326
  %1798 = vmatpush.bf16.msra.mxu0 %v1324
  %1799 = vmatpush.bf16.msra.mxu0 %v1322
  %1800 = vmatpush.bf16.msra.mxu0 %v1320
  %1801 = vmatmul.bf16.gmra.mxu0 %v325
  %v1802 = vpop.f32.mrf.mxu0
  %v1803 = vadd.f32 %v1790, %v1802
  %v1804 = vpop.f32.mrf.mxu0
  %1805 = vdwg.mxu0
  %1806 = vmatpush.bf16.msra.mxu0 %v1350
  %1807 = vmatpush.bf16.msra.mxu0 %v1348
  %1808 = vmatpush.bf16.msra.mxu0 %v1346
  %1809 = vmatpush.bf16.msra.mxu0 %v1344
  %1810 = vmatpush.bf16.msra.mxu0 %v1342
  %1811 = vmatpush.bf16.msra.mxu0 %v1340
  %1812 = vmatpush.bf16.msra.mxu0 %v1338
  %1813 = vmatpush.bf16.msra.mxu0 %v1336
  %1814 = vmatmul.bf16.gmra.mxu0 %v326
  %v1815 = vpop.f32.mrf.mxu0
  %v1816 = vadd.f32 %v1803, %v1815
  %v1817 = vpop.f32.mrf.mxu0
  %1818 = vdwg.mxu0
  %1819 = vmatpush.bf16.msra.mxu0 %v1366
  %1820 = vmatpush.bf16.msra.mxu0 %v1364
  %1821 = vmatpush.bf16.msra.mxu0 %v1362
  %1822 = vmatpush.bf16.msra.mxu0 %v1360
  %1823 = vmatpush.bf16.msra.mxu0 %v1358
  %1824 = vmatpush.bf16.msra.mxu0 %v1356
  %1825 = vmatpush.bf16.msra.mxu0 %v1354
  %1826 = vmatpush.bf16.msra.mxu0 %v1352
  %1827 = vmatmul.bf16.gmra.mxu0 %v327
  %v1828 = vpop.f32.mrf.mxu0
  %v1829 = vadd.f32 %v1816, %v1828
  %v1830 = vpop.f32.mrf.mxu0
  %1831 = vdwg.mxu0
  %1832 = vmatpush.bf16.msra.mxu0 %v1127
  %1833 = vmatpush.bf16.msra.mxu0 %v1125
  %1834 = vmatpush.bf16.msra.mxu0 %v1123
  %1835 = vmatpush.bf16.msra.mxu0 %v1121
  %1836 = vmatpush.bf16.msra.mxu0 %v1119
  %1837 = vmatpush.bf16.msra.mxu0 %v1117
  %1838 = vmatpush.bf16.msra.mxu0 %v1115
  %1839 = vmatpush.bf16.msra.mxu0 %v1113
  %1840 = vmatmul.bf16.gmra.mxu0 %v312
  %v1841 = vpop.f32.mrf.mxu0
  %v1842 = vadd.f32 0.0, %v1841
  %v1843 = vpop.f32.mrf.mxu0
  %1844 = vdwg.mxu0
  %1845 = vmatpush.bf16.msra.mxu0 %v1143
  %1846 = vmatpush.bf16.msra.mxu0 %v1141
  %1847 = vmatpush.bf16.msra.mxu0 %v1139
  %1848 = vmatpush.bf16.msra.mxu0 %v1137
  %1849 = vmatpush.bf16.msra.mxu0 %v1135
  %1850 = vmatpush.bf16.msra.mxu0 %v1133
  %1851 = vmatpush.bf16.msra.mxu0 %v1131
  %1852 = vmatpush.bf16.msra.mxu0 %v1129
  %1853 = vmatmul.bf16.gmra.mxu0 %v313
  %v1854 = vpop.f32.mrf.mxu0
  %v1855 = vadd.f32 %v1842, %v1854
  %v1856 = vpop.f32.mrf.mxu0
  %1857 = vdwg.mxu0
  %1858 = vmatpush.bf16.msra.mxu0 %v1159
  %1859 = vmatpush.bf16.msra.mxu0 %v1157
  %1860 = vmatpush.bf16.msra.mxu0 %v1155
  %1861 = vmatpush.bf16.msra.mxu0 %v1153
  %1862 = vmatpush.bf16.msra.mxu0 %v1151
  %1863 = vmatpush.bf16.msra.mxu0 %v1149
  %1864 = vmatpush.bf16.msra.mxu0 %v1147
  %1865 = vmatpush.bf16.msra.mxu0 %v1145
  %1866 = vmatmul.bf16.gmra.mxu0 %v314
  %v1867 = vpop.f32.mrf.mxu0
  %v1868 = vadd.f32 %v1855, %v1867
  %v1869 = vpop.f32.mrf.mxu0
  %1870 = vdwg.mxu0
  %1871 = vmatpush.bf16.msra.mxu0 %v1175
  %1872 = vmatpush.bf16.msra.mxu0 %v1173
  %1873 = vmatpush.bf16.msra.mxu0 %v1171
  %1874 = vmatpush.bf16.msra.mxu0 %v1169
  %1875 = vmatpush.bf16.msra.mxu0 %v1167
  %1876 = vmatpush.bf16.msra.mxu0 %v1165
  %1877 = vmatpush.bf16.msra.mxu0 %v1163
  %1878 = vmatpush.bf16.msra.mxu0 %v1161
  %1879 = vmatmul.bf16.gmra.mxu0 %v315
  %v1880 = vpop.f32.mrf.mxu0
  %v1881 = vadd.f32 %v1868, %v1880
  %v1882 = vpop.f32.mrf.mxu0
  %1883 = vdwg.mxu0
  %1884 = vmatpush.bf16.msra.mxu0 %v1191
  %1885 = vmatpush.bf16.msra.mxu0 %v1189
  %1886 = vmatpush.bf16.msra.mxu0 %v1187
  %1887 = vmatpush.bf16.msra.mxu0 %v1185
  %1888 = vmatpush.bf16.msra.mxu0 %v1183
  %1889 = vmatpush.bf16.msra.mxu0 %v1181
  %1890 = vmatpush.bf16.msra.mxu0 %v1179
  %1891 = vmatpush.bf16.msra.mxu0 %v1177
  %1892 = vmatmul.bf16.gmra.mxu0 %v316
  %v1893 = vpop.f32.mrf.mxu0
  %v1894 = vadd.f32 %v1881, %v1893
  %v1895 = vpop.f32.mrf.mxu0
  %1896 = vdwg.mxu0
  %1897 = vmatpush.bf16.msra.mxu0 %v1207
  %1898 = vmatpush.bf16.msra.mxu0 %v1205
  %1899 = vmatpush.bf16.msra.mxu0 %v1203
  %1900 = vmatpush.bf16.msra.mxu0 %v1201
  %1901 = vmatpush.bf16.msra.mxu0 %v1199
  %1902 = vmatpush.bf16.msra.mxu0 %v1197
  %1903 = vmatpush.bf16.msra.mxu0 %v1195
  %1904 = vmatpush.bf16.msra.mxu0 %v1193
  %1905 = vmatmul.bf16.gmra.mxu0 %v317
  %v1906 = vpop.f32.mrf.mxu0
  %v1907 = vadd.f32 %v1894, %v1906
  %v1908 = vpop.f32.mrf.mxu0
  %1909 = vdwg.mxu0
  %1910 = vmatpush.bf16.msra.mxu0 %v1223
  %1911 = vmatpush.bf16.msra.mxu0 %v1221
  %1912 = vmatpush.bf16.msra.mxu0 %v1219
  %1913 = vmatpush.bf16.msra.mxu0 %v1217
  %1914 = vmatpush.bf16.msra.mxu0 %v1215
  %1915 = vmatpush.bf16.msra.mxu0 %v1213
  %1916 = vmatpush.bf16.msra.mxu0 %v1211
  %1917 = vmatpush.bf16.msra.mxu0 %v1209
  %1918 = vmatmul.bf16.gmra.mxu0 %v318
  %v1919 = vpop.f32.mrf.mxu0
  %v1920 = vadd.f32 %v1907, %v1919
  %v1921 = vpop.f32.mrf.mxu0
  %1922 = vdwg.mxu0
  %1923 = vmatpush.bf16.msra.mxu0 %v1239
  %1924 = vmatpush.bf16.msra.mxu0 %v1237
  %1925 = vmatpush.bf16.msra.mxu0 %v1235
  %1926 = vmatpush.bf16.msra.mxu0 %v1233
  %1927 = vmatpush.bf16.msra.mxu0 %v1231
  %1928 = vmatpush.bf16.msra.mxu0 %v1229
  %1929 = vmatpush.bf16.msra.mxu0 %v1227
  %1930 = vmatpush.bf16.msra.mxu0 %v1225
  %1931 = vmatmul.bf16.gmra.mxu0 %v319
  %v1932 = vpop.f32.mrf.mxu0
  %v1933 = vadd.f32 %v1920, %v1932
  %v1934 = vpop.f32.mrf.mxu0
  %1935 = vdwg.mxu0
  %1936 = vmatpush.bf16.msra.mxu0 %v1255
  %1937 = vmatpush.bf16.msra.mxu0 %v1253
  %1938 = vmatpush.bf16.msra.mxu0 %v1251
  %1939 = vmatpush.bf16.msra.mxu0 %v1249
  %1940 = vmatpush.bf16.msra.mxu0 %v1247
  %1941 = vmatpush.bf16.msra.mxu0 %v1245
  %1942 = vmatpush.bf16.msra.mxu0 %v1243
  %1943 = vmatpush.bf16.msra.mxu0 %v1241
  %1944 = vmatmul.bf16.gmra.mxu0 %v320
  %v1945 = vpop.f32.mrf.mxu0
  %v1946 = vadd.f32 %v1933, %v1945
  %v1947 = vpop.f32.mrf.mxu0
  %1948 = vdwg.mxu0
  %1949 = vmatpush.bf16.msra.mxu0 %v1271
  %1950 = vmatpush.bf16.msra.mxu0 %v1269
  %1951 = vmatpush.bf16.msra.mxu0 %v1267
  %1952 = vmatpush.bf16.msra.mxu0 %v1265
  %1953 = vmatpush.bf16.msra.mxu0 %v1263
  %1954 = vmatpush.bf16.msra.mxu0 %v1261
  %1955 = vmatpush.bf16.msra.mxu0 %v1259
  %1956 = vmatpush.bf16.msra.mxu0 %v1257
  %1957 = vmatmul.bf16.gmra.mxu0 %v321
  %v1958 = vpop.f32.mrf.mxu0
  %v1959 = vadd.f32 %v1946, %v1958
  %v1960 = vpop.f32.mrf.mxu0
  %1961 = vdwg.mxu0
  %1962 = vmatpush.bf16.msra.mxu0 %v1287
  %1963 = vmatpush.bf16.msra.mxu0 %v1285
  %1964 = vmatpush.bf16.msra.mxu0 %v1283
  %1965 = vmatpush.bf16.msra.mxu0 %v1281
  %1966 = vmatpush.bf16.msra.mxu0 %v1279
  %1967 = vmatpush.bf16.msra.mxu0 %v1277
  %1968 = vmatpush.bf16.msra.mxu0 %v1275
  %1969 = vmatpush.bf16.msra.mxu0 %v1273
  %1970 = vmatmul.bf16.gmra.mxu0 %v322
  %v1971 = vpop.f32.mrf.mxu0
  %v1972 = vadd.f32 %v1959, %v1971
  %v1973 = vpop.f32.mrf.mxu0
  %1974 = vdwg.mxu0
  %1975 = vmatpush.bf16.msra.mxu0 %v1303
  %1976 = vmatpush.bf16.msra.mxu0 %v1301
  %1977 = vmatpush.bf16.msra.mxu0 %v1299
  %1978 = vmatpush.bf16.msra.mxu0 %v1297
  %1979 = vmatpush.bf16.msra.mxu0 %v1295
  %1980 = vmatpush.bf16.msra.mxu0 %v1293
  %1981 = vmatpush.bf16.msra.mxu0 %v1291
  %1982 = vmatpush.bf16.msra.mxu0 %v1289
  %1983 = vmatmul.bf16.gmra.mxu0 %v323
  %v1984 = vpop.f32.mrf.mxu0
  %v1985 = vadd.f32 %v1972, %v1984
  %v1986 = vpop.f32.mrf.mxu0
  %1987 = vdwg.mxu0
  %1988 = vmatpush.bf16.msra.mxu0 %v1319
  %1989 = vmatpush.bf16.msra.mxu0 %v1317
  %1990 = vmatpush.bf16.msra.mxu0 %v1315
  %1991 = vmatpush.bf16.msra.mxu0 %v1313
  %1992 = vmatpush.bf16.msra.mxu0 %v1311
  %1993 = vmatpush.bf16.msra.mxu0 %v1309
  %1994 = vmatpush.bf16.msra.mxu0 %v1307
  %1995 = vmatpush.bf16.msra.mxu0 %v1305
  %1996 = vmatmul.bf16.gmra.mxu0 %v324
  %v1997 = vpop.f32.mrf.mxu0
  %v1998 = vadd.f32 %v1985, %v1997
  %v1999 = vpop.f32.mrf.mxu0
  %2000 = vdwg.mxu0
  %2001 = vmatpush.bf16.msra.mxu0 %v1335
  %2002 = vmatpush.bf16.msra.mxu0 %v1333
  %2003 = vmatpush.bf16.msra.mxu0 %v1331
  %2004 = vmatpush.bf16.msra.mxu0 %v1329
  %2005 = vmatpush.bf16.msra.mxu0 %v1327
  %2006 = vmatpush.bf16.msra.mxu0 %v1325
  %2007 = vmatpush.bf16.msra.mxu0 %v1323
  %2008 = vmatpush.bf16.msra.mxu0 %v1321
  %2009 = vmatmul.bf16.gmra.mxu0 %v325
  %v2010 = vpop.f32.mrf.mxu0
  %v2011 = vadd.f32 %v1998, %v2010
  %v2012 = vpop.f32.mrf.mxu0
  %2013 = vdwg.mxu0
  %2014 = vmatpush.bf16.msra.mxu0 %v1351
  %2015 = vmatpush.bf16.msra.mxu0 %v1349
  %2016 = vmatpush.bf16.msra.mxu0 %v1347
  %2017 = vmatpush.bf16.msra.mxu0 %v1345
  %2018 = vmatpush.bf16.msra.mxu0 %v1343
  %2019 = vmatpush.bf16.msra.mxu0 %v1341
  %2020 = vmatpush.bf16.msra.mxu0 %v1339
  %2021 = vmatpush.bf16.msra.mxu0 %v1337
  %2022 = vmatmul.bf16.gmra.mxu0 %v326
  %v2023 = vpop.f32.mrf.mxu0
  %v2024 = vadd.f32 %v2011, %v2023
  %v2025 = vpop.f32.mrf.mxu0
  %2026 = vdwg.mxu0
  %2027 = vmatpush.bf16.msra.mxu0 %v1367
  %2028 = vmatpush.bf16.msra.mxu0 %v1365
  %2029 = vmatpush.bf16.msra.mxu0 %v1363
  %2030 = vmatpush.bf16.msra.mxu0 %v1361
  %2031 = vmatpush.bf16.msra.mxu0 %v1359
  %2032 = vmatpush.bf16.msra.mxu0 %v1357
  %2033 = vmatpush.bf16.msra.mxu0 %v1355
  %2034 = vmatpush.bf16.msra.mxu0 %v1353
  %2035 = vmatmul.bf16.gmra.mxu0 %v327
  %v2036 = vpop.f32.mrf.mxu0
  %v2037 = vadd.f32 %v2024, %v2036
  %v2038 = vpop.f32.mrf.mxu0
  %2039 = vdwg.mxu0
  %v2040 = vpack.c.bf16 %v2037, %v1829
  %2041 = vst [vmem:[%s2] sm:$0xff] %v2040
  %v2042 = vld [vmem:[%s3] sm:$0x3]
  %v2043 = vrot.slane %v1829, 4
  %v2044 = vadd.f32 %v1829, %v2043
  %v2045 = vrot.slane %v2044, 2
  %v2046 = vadd.f32 %v2044, %v2045
  %v2047 = vrot.slane %v2046, 1
  %v2048 = vadd.f32 %v2046, %v2047
  %v2049 = vrot.slane %v2037, 4
  %v2050 = vadd.f32 %v2037, %v2049
  %v2051 = vrot.slane %v2050, 2
  %v2052 = vadd.f32 %v2050, %v2051
  %v2053 = vrot.slane %v2052, 1
  %v2054 = vadd.f32 %v2052, %v2053
  %v2057 = vrot.slane %v2054, 7
  %vm2058 = vcmask 1040384
  %v2059 = vsel %vm2058, %v2048, %v2057
  %v2061 = vadd.f32 %v2042, %v2059
  %v2062 = vlaneseq
  %vm2063 = vcmp.ge.s32.totalorder %v2062, 0
  %vm2064 = vcmp.lt.s32.totalorder %v2062, 256
  %vm2065 = vmand %vm2063, %vm2064
  %2066 = vst.msk [vmem:[%s3] sm:$0x3] %vm2065, %v2061
  %v2067 = vld [vmem:[%s4] sm:$0x3]
  %v2068 = vmul.f32 %v1829, %v1829
  %v2069 = vmul.f32 %v2037, %v2037
  %v2070 = vrot.slane %v2068, 4
  %v2071 = vadd.f32 %v2068, %v2070
  %v2072 = vrot.slane %v2071, 2
  %v2073 = vadd.f32 %v2071, %v2072
  %v2074 = vrot.slane %v2073, 1
  %v2075 = vadd.f32 %v2073, %v2074
  %v2076 = vrot.slane %v2069, 4
  %v2077 = vadd.f32 %v2069, %v2076
  %v2078 = vrot.slane %v2077, 2
  %v2079 = vadd.f32 %v2077, %v2078
  %v2080 = vrot.slane %v2079, 1
  %v2081 = vadd.f32 %v2079, %v2080
  %v2084 = vrot.slane %v2081, 7
  %v2085 = vsel %vm2058, %v2075, %v2084
  %v2087 = vadd.f32 %v2067, %v2085
  %2088 = vst.msk [vmem:[%s4] sm:$0x3] %vm2065, %v2087
  // Predicated region
  $region14: #{discriminator_forward.11} parent=0 // pred_check
    _
  $region15: #{discriminator_forward.11} parent=0 // pred_check_branch
    %2090 = sbr.rel (0) target = $region17
  $region16: #{discriminator_forward.11} parent=0 // pred_region
    _
  $region17: #{discriminator_forward.11} parent=0 // pred_fallthru
    _
  // Predicated region
  $region18: #{discriminator_forward.11} parent=0 // pred_check
    _
  $region19: #{discriminator_forward.11} parent=0 // pred_check_branch
    %2092 = sbr.rel (0) target = $region21
  $region20: #{discriminator_forward.11} parent=0 // pred_region
    _
  $region21: #{discriminator_forward.11} parent=0 // pred_fallthru
    _
  // Predicated region
  $region22: #{discriminator_forward.11} parent=0 // pred_check
    _
  $region23: #{discriminator_forward.11} parent=0 // pred_check_branch
    %2094 = sbr.rel (0) target = $region25
  $region24: #{discriminator_forward.11} parent=0 // pred_region
    _
  $region25: #{discriminator_forward.11} parent=0 // pred_fallthru
    _
  // Predicated region
  $region26: #{discriminator_forward.11} parent=0 // pred_check
    _
  $region27: #{discriminator_forward.11} parent=0 // pred_check_branch
    %2096 = sbr.rel (0) target = $region29
  $region28: #{discriminator_forward.11} parent=0 // pred_region
    _
  $region29: #{discriminator_forward.11} parent=0 // pred_fallthru
    _
  // Predicated region
  $region30: #{discriminator_forward.11} parent=0 // pred_check
    _
  $region31: #{discriminator_forward.11} parent=0 // pred_check_branch
    %2098 = sbr.rel (0) target = $region33
  $region32: #{discriminator_forward.11} parent=0 // pred_region
    _
  $region33: #{discriminator_forward.11} parent=0 // pred_fallthru
    _
  // Predicated region
  $region34: #{discriminator_forward.11} parent=0 // pred_check
    _
  $region35: #{discriminator_forward.11} parent=0 // pred_check_branch
    %2100 = sbr.rel (0) target = $region37
  $region36: #{discriminator_forward.11} parent=0 // pred_region
    _
  $region37: #{discriminator_forward.11} parent=0 // pred_fallthru
    _

// kernel: discriminator_forward.14
$region0: #{discriminator_forward.14}
  #allocation0 [shape = 'u32[]', space=smem, size = 0x4, offset = 0x4, fixed_abs, tag = 'smem constant byte address 0x4 - core index']
  #allocation1 [shape = 'u32[72,128]{1,0:T(1,128)}', space=vmem, size = 0x9000, scoped, tag = 'internal scratch']
  %s0 = inlined_call_operand.vmem [shape: bf16[2,512], index: 0, kind: input, shape index: {}]
  %s1 = inlined_call_operand.vmem [shape: f32[1,512], index: 1, kind: input, shape index: {}]
  %s2 = inlined_call_operand.vmem [shape: f32[1,512], index: 2, kind: input, shape index: {}]
  %s3 = inlined_call_operand.vmem [shape: bf16[2,512], index: 3, kind: output, shape index: {}]
  %s4 = sld [smem:[#allocation0]]
  $region22: #{discriminator_forward.14} parent=0
    _
  %s6 = ssub.s32 1, %s4
  %s7 = scalar_select 0, %s6, %s4
  // Predicated region
  $region2: #{discriminator_forward.14} parent=0 // pred_check
    _
  $region3: #{discriminator_forward.14} parent=0 // pred_check_branch
    %9 = sbr.rel (0) target = $region5
  $region4: #{discriminator_forward.14} parent=0 // pred_region
    _
  $region5: #{discriminator_forward.14} parent=0 // pred_fallthru
    _
  // Predicated region
  $region6: #{discriminator_forward.14} parent=0 // pred_check
    _
  $region7: #{discriminator_forward.14} parent=0 // pred_check_branch
    %11 = sbr.rel (0) target = $region9
  $region8: #{discriminator_forward.14} parent=0 // pred_region
    _
  $region9: #{discriminator_forward.14} parent=0 // pred_fallthru
    _
  // Predicated region
  $region10: #{discriminator_forward.14} parent=0 // pred_check
    _
  $region11: #{discriminator_forward.14} parent=0 // pred_check_branch
    %13 = sbr.rel (0) target = $region13
  $region12: #{discriminator_forward.14} parent=0 // pred_region
    _
  $region13: #{discriminator_forward.14} parent=0 // pred_fallthru
    _
  %v14 = vld [vmem:[%s0] sm:$0xf]
  %v15 = vunpack.c.l.bf16 %v14
  %v16 = vld [vmem:[%s1] sm:$0xf]
  %v18 = vperm.slane %v16, 0
  %v19 = vperm.slane %v16, 1
  %v20 = vperm.slane %v16, 2
  %v21 = vperm.slane %v16, 3
  %v22 = vrot.slane %v19, 6
  %v23 = vrot.slane %v20, 4
  %v24 = vrot.slane %v21, 2
  %vm25 = vcmask 1041408
  %v26 = vsel %vm25, %v18, %v22
  %vm27 = vcmask 1045508
  %v28 = vsel %vm27, %v23, %v24
  %vm29 = vcmask 1043456
  %v30 = vsel %vm29, %v26, %v28
  %v32 = vmul.f32 %v15, %v30
  %v33 = vld [vmem:[%s2] sm:$0xf]
  %v35 = vperm.slane %v33, 0
  %v36 = vperm.slane %v33, 1
  %v37 = vperm.slane %v33, 2
  %v38 = vperm.slane %v33, 3
  %v39 = vrot.slane %v36, 6
  %v40 = vrot.slane %v37, 4
  %v41 = vrot.slane %v38, 2
  %v42 = vsel %vm25, %v35, %v39
  %v43 = vsel %vm27, %v40, %v41
  %v44 = vsel %vm29, %v42, %v43
  %v46 = vadd.f32 %v32, %v44
  %vm47 = vcmp.ge.f32.partialorder %v46, 0.0
  %v48 = vmul.f32 %v46, 0.2
  %v49 = vsel %vm47, %v46, %v48
  %51 = vst [vmem:[#allocation1] ss:$4 sm:$0xff] %v49
  %v52 = vld.sshfl [vmem:[#allocation1] sm:$0xff pattern:$0x73625140]
  %v53 = vld.sshfl [vmem:[#allocation1 + $0x8] sm:$0xff pattern:$0x73625140]
  %v54 = vld.sshfl [vmem:[#allocation1 + $0x10] sm:$0xff pattern:$0x73625140]
  %v55 = vld.sshfl [vmem:[#allocation1 + $0x18] sm:$0xff pattern:$0x73625140]
  %v60 = vpack.c.bf16 %v53, %v52
  %v61 = vpack.c.bf16 %v55, %v54
  %v64 = vrot.slane %v60, 3
  %v65 = vrot.slane %v61, 6
  %v66 = vrot.slane %v61, 1
  %vm67 = vcmask 1040384
  %v70 = vsel %vm67, %v60, %v64
  %vm71 = vcmask 1042434
  %v74 = vsel %vm71, %v65, %v66
  %v75 = vsel %vm25, %v70, %v74
  %77 = vst [vmem:[%s3] sm:$0xf] %v75
  // Predicated region
  $region14: #{discriminator_forward.14} parent=0 // pred_check
    _
  $region15: #{discriminator_forward.14} parent=0 // pred_check_branch
    %79 = sbr.rel (0) target = $region17
  $region16: #{discriminator_forward.14} parent=0 // pred_region
    _
  $region17: #{discriminator_forward.14} parent=0 // pred_fallthru
    _
  // Predicated region
  $region18: #{discriminator_forward.14} parent=0 // pred_check
    _
  $region19: #{discriminator_forward.14} parent=0 // pred_check_branch
    %81 = sbr.rel (0) target = $region21
  $region20: #{discriminator_forward.14} parent=0 // pred_region
    _
  $region21: #{discriminator_forward.14} parent=0 // pred_fallthru
    _

// kernel: discriminator_forward.15
$region0: #{discriminator_forward.15}
  #allocation0 [shape = 'u32[]', space=smem, size = 0x4, offset = 0x4, fixed_abs, tag = 'smem constant byte address 0x4 - core index']
  #allocation1 [shape = 'u32[72,128]{1,0:T(1,128)}', space=vmem, size = 0x9000, scoped, tag = 'internal scratch']
  #allocation2 [shape = 'f32[1,1]{1,0:T(1,128)S(1)}', space=vmem, size = 0x200, scoped, tag = 'scoped memory for discriminator_forward.15']
  %s0 = inlined_call_operand.vmem [shape: bf16[2,1,512], index: 0, kind: input, shape index: {}]
  %s1 = inlined_call_operand.vmem [shape: f32[1,512], index: 1, kind: input, shape index: {}]
  %s2 = inlined_call_operand.<no memory space> [shape: f32[1,1], index: 2, kind: input, shape index: {}]
  %s3 = inlined_call_operand.vmem [shape: f32[2,1], index: 3, kind: output, shape index: {}]
  %s4 = sld [smem:[#allocation0]]
  $region22: #{discriminator_forward.15} parent=0
    _
  %s6 = ssub.s32 1, %s4
  %s7 = scalar_select 0, %s6, %s4
  %v8 = vstv %s2
  %9 = vst [vmem:[#allocation2] sm:$0x1] %v8
  // Predicated region
  $region2: #{discriminator_forward.15} parent=0 // pred_check
    _
  $region3: #{discriminator_forward.15} parent=0 // pred_check_branch
    %11 = sbr.rel (0) target = $region5
  $region4: #{discriminator_forward.15} parent=0 // pred_region
    _
  $region5: #{discriminator_forward.15} parent=0 // pred_fallthru
    _
  // Predicated region
  $region6: #{discriminator_forward.15} parent=0 // pred_check
    _
  $region7: #{discriminator_forward.15} parent=0 // pred_check_branch
    %13 = sbr.rel (0) target = $region9
  $region8: #{discriminator_forward.15} parent=0 // pred_region
    _
  $region9: #{discriminator_forward.15} parent=0 // pred_fallthru
    _
  // Predicated region
  $region10: #{discriminator_forward.15} parent=0 // pred_check
    _
  $region11: #{discriminator_forward.15} parent=0 // pred_check_branch
    %15 = sbr.rel (0) target = $region13
  $region12: #{discriminator_forward.15} parent=0 // pred_region
    _
  $region13: #{discriminator_forward.15} parent=0 // pred_fallthru
    _
  %v16 = vld [vmem:[%s0] sm:$0xf]
  %v17 = vld [vmem:[%s0 + $0x4] sm:$0xf]
  %v18 = vunpack.c.l.bf16 %v16
  %v19 = vunpack.c.l.bf16 %v17
  %v20 = vadd.f32 %v18, 0.0
  %v21 = vadd.f32 %v19, 0.0
  %v22 = vld [vmem:[%s1] sm:$0xf]
  %v24 = vperm.slane %v22, 0
  %v25 = vperm.slane %v22, 1
  %v26 = vperm.slane %v22, 2
  %v27 = vperm.slane %v22, 3
  %v28 = vrot.slane %v25, 6
  %v29 = vrot.slane %v26, 4
  %v30 = vrot.slane %v27, 2
  %vm31 = vcmask 1041408
  %v32 = vsel %vm31, %v24, %v28
  %vm33 = vcmask 1045508
  %v34 = vsel %vm33, %v29, %v30
  %vm35 = vcmask 1043456
  %v36 = vsel %vm35, %v32, %v34
  %v37 = vrot.slane %v36, 1
  %v40 = vmul.f32 %v20, %v36
  %v41 = vmul.f32 %v21, %v37
  %v44 = vperm.slane %v40, 0
  %v45 = vperm.slane %v40, 2
  %v46 = vperm.slane %v40, 4
  %v47 = vperm.slane %v40, 6
  %v48 = vperm.slane %v41, 0
  %v49 = vperm.slane %v41, 2
  %v50 = vperm.slane %v41, 4
  %v51 = vperm.slane %v41, 6
  %vm52 = vcmask 1041409
  %v53 = vsel %vm52, %v48, %v44
  %v54 = vsel %vm52, %v49, %v45
  %v55 = vsel %vm52, %v50, %v46
  %v56 = vsel %vm52, %v51, %v47
  %v61 = vsel %vm31, %v53, 0.0
  %v62 = vsel %vm31, %v54, 0.0
  %v63 = vadd.f32 %v61, %v62
  %v64 = vsel %vm31, %v55, 0.0
  %v65 = vadd.f32 %v63, %v64
  %v66 = vsel %vm31, %v56, 0.0
  %v67 = vadd.f32 %v65, %v66
  %68 = vadd.xlane.f32.xlu0 %v67
  %v69 = vpop.xlane.xlu0 %68
  %v70 = vld [vmem:[#allocation2] sm:$0x1]
  %v72 = vperm.slane %v70, 0
  %v74 = vadd.f32 %v69, %v72
  %v75 = vxor.u32 %v74, 2147483648
  %v76 = vmul.f32 %v75, 1.442695
  %v77 = vpow.pop %v76
  %v78 = vadd.f32 %v77, 1.0
  %v79 = vrcp.pop %v78
  %v80 = vmul.f32 %v78, %v79
  %v81 = vsub.f32 1.0, %v80
  %v82 = vmul.f32 %v79, %v81
  %v83 = vadd.f32 %v79, %v82
  %vm84 = vweird.f32 %v78
  %vm85 = vweird.f32 %v79
  %vm86 = vmor %vm84, %vm85
  %v87 = vsel %vm86, %v79, %v83
  %v88 = vand.u32 2147483647, %v78
  %vm89 = vcmp.eq.f32.partialorder %v88, 8.507059e+37
  %v90 = vand.u32 %v78, 2147483648
  %v91 = vor.u32 1.1754944e-38, %v90
  %v92 = vsel %vm89, %v91, %v87
  %v93 = vmul.f32 1.0, %v92
  %vm94 = vcmask 1024
  %95 = vst.msk [vmem:[%s3] sm:$0x3] %vm94, %v93
  // Predicated region
  $region14: #{discriminator_forward.15} parent=0 // pred_check
    _
  $region15: #{discriminator_forward.15} parent=0 // pred_check_branch
    %97 = sbr.rel (0) target = $region17
  $region16: #{discriminator_forward.15} parent=0 // pred_region
    _
  $region17: #{discriminator_forward.15} parent=0 // pred_fallthru
    _
  // Predicated region
  $region18: #{discriminator_forward.15} parent=0 // pred_check
    _
  $region19: #{discriminator_forward.15} parent=0 // pred_check_branch
    %99 = sbr.rel (0) target = $region21
  $region20: #{discriminator_forward.15} parent=0 // pred_region
    _
  $region21: #{discriminator_forward.15} parent=0 // pred_fallthru
    _

// kernel: discriminator_forward.13
$region0: #{discriminator_forward.13}
  #allocation0 [shape = 'u32[]', space=smem, size = 0x4, offset = 0x4, fixed_abs, tag = 'smem constant byte address 0x4 - core index']
  #allocation1 [shape = 'u32[72,128]{1,0:T(1,128)}', space=vmem, size = 0x9000, scoped, tag = 'internal scratch']
  %s0 = inlined_call_operand.vmem [shape: bf16[2,4096], index: 0, kind: input, shape index: {}]
  %s1 = inlined_call_operand.vmem [shape: bf16[4096,512], index: 1, kind: input, shape index: {}]
  %s2 = inlined_call_operand.vmem [shape: bf16[2,512], index: 2, kind: output, shape index: {0}]
  %s3 = inlined_call_operand.vmem [shape: f32[1,512], index: 3, kind: output, shape index: {1}]
  %s4 = inlined_call_operand.vmem [shape: f32[1,512], index: 4, kind: output, shape index: {2}]
  %5 = xla_tuple %s2, %s3, %s4
  %s6 = sld [smem:[#allocation0]]
  $region38: #{discriminator_forward.13} parent=0
    _
  %s8 = ssub.s32 1, %s6
  %s9 = scalar_select 0, %s8, %s6
  // Predicated region
  $region2: #{discriminator_forward.13} parent=0 // pred_check
    _
  $region3: #{discriminator_forward.13} parent=0 // pred_check_branch
    %11 = sbr.rel (0) target = $region5
  $region4: #{discriminator_forward.13} parent=0 // pred_region
    _
  $region5: #{discriminator_forward.13} parent=0 // pred_fallthru
    _
  // Predicated region
  $region6: #{discriminator_forward.13} parent=0 // pred_check
    _
  $region7: #{discriminator_forward.13} parent=0 // pred_check_branch
    %13 = sbr.rel (0) target = $region9
  $region8: #{discriminator_forward.13} parent=0 // pred_region
    _
  $region9: #{discriminator_forward.13} parent=0 // pred_fallthru
    _
  %p14 = scmp.eq.s32.totalorder 0, 0
  // Predicated region
  $region10: #{discriminator_forward.13} parent=0 // pred_check
    %p15 = pneg %p14
  $region11: #{discriminator_forward.13} parent=0 // pred_check_branch
    %17 = sbr.rel (%p15) target = $region13
  $region12: #{discriminator_forward.13} parent=0 // pred_region
    %v18 = vlaneseq
    %vm19 = vcmp.ge.s32.totalorder %v18, 0
    %vm20 = vcmp.lt.s32.totalorder %v18, 512
    %vm21 = vmand %vm19, %vm20
    %22 = vst.msk [vmem:[%s3] sm:$0xf] %vm21, 0.0
    %23 = vst.msk [vmem:[%s4] sm:$0xf] %vm21, 0.0
  $region13: #{discriminator_forward.13} parent=0 // pred_fallthru
    _
  %v24 = vld [vmem:[%s0] sm:$0xff]
  %v25 = vld [vmem:[%s0 + $0x8] sm:$0xff]
  %v26 = vld [vmem:[%s0 + $0x10] sm:$0xff]
  %v27 = vld [vmem:[%s0 + $0x18] sm:$0xff]
  %v28 = vld [vmem:[%s1] sm:$0xff]
  %v29 = vld [vmem:[%s1 + $0x8] sm:$0xff]
  %v30 = vld [vmem:[%s1 + $0x10] sm:$0xff]
  %v31 = vld [vmem:[%s1 + $0x18] sm:$0xff]
  %v32 = vld [vmem:[%s1 + $0x20] sm:$0xff]
  %v33 = vld [vmem:[%s1 + $0x28] sm:$0xff]
  %v34 = vld [vmem:[%s1 + $0x30] sm:$0xff]
  %v35 = vld [vmem:[%s1 + $0x38] sm:$0xff]
  %v36 = vld [vmem:[%s1 + $0x40] sm:$0xff]
  %v37 = vld [vmem:[%s1 + $0x48] sm:$0xff]
  %v38 = vld [vmem:[%s1 + $0x50] sm:$0xff]
  %v39 = vld [vmem:[%s1 + $0x58] sm:$0xff]
  %v40 = vld [vmem:[%s1 + $0x60] sm:$0xff]
  %v41 = vld [vmem:[%s1 + $0x68] sm:$0xff]
  %v42 = vld [vmem:[%s1 + $0x70] sm:$0xff]
  %v43 = vld [vmem:[%s1 + $0x78] sm:$0xff]
  %v44 = vld [vmem:[%s1 + $0x80] sm:$0xff]
  %v45 = vld [vmem:[%s1 + $0x88] sm:$0xff]
  %v46 = vld [vmem:[%s1 + $0x90] sm:$0xff]
  %v47 = vld [vmem:[%s1 + $0x98] sm:$0xff]
  %v48 = vld [vmem:[%s1 + $0xa0] sm:$0xff]
  %v49 = vld [vmem:[%s1 + $0xa8] sm:$0xff]
  %v50 = vld [vmem:[%s1 + $0xb0] sm:$0xff]
  %v51 = vld [vmem:[%s1 + $0xb8] sm:$0xff]
  %v52 = vld [vmem:[%s1 + $0xc0] sm:$0xff]
  %v53 = vld [vmem:[%s1 + $0xc8] sm:$0xff]
  %v54 = vld [vmem:[%s1 + $0xd0] sm:$0xff]
  %v55 = vld [vmem:[%s1 + $0xd8] sm:$0xff]
  %v56 = vld [vmem:[%s1 + $0xe0] sm:$0xff]
  %v57 = vld [vmem:[%s1 + $0xe8] sm:$0xff]
  %v58 = vld [vmem:[%s1 + $0xf0] sm:$0xff]
  %v59 = vld [vmem:[%s1 + $0xf8] sm:$0xff]
  %v60 = vld [vmem:[%s1 + $0x100] sm:$0xff]
  %v61 = vld [vmem:[%s1 + $0x108] sm:$0xff]
  %v62 = vld [vmem:[%s1 + $0x110] sm:$0xff]
  %v63 = vld [vmem:[%s1 + $0x118] sm:$0xff]
  %v64 = vld [vmem:[%s1 + $0x120] sm:$0xff]
  %v65 = vld [vmem:[%s1 + $0x128] sm:$0xff]
  %v66 = vld [vmem:[%s1 + $0x130] sm:$0xff]
  %v67 = vld [vmem:[%s1 + $0x138] sm:$0xff]
  %v68 = vld [vmem:[%s1 + $0x140] sm:$0xff]
  %v69 = vld [vmem:[%s1 + $0x148] sm:$0xff]
  %v70 = vld [vmem:[%s1 + $0x150] sm:$0xff]
  %v71 = vld [vmem:[%s1 + $0x158] sm:$0xff]
  %v72 = vld [vmem:[%s1 + $0x160] sm:$0xff]
  %v73 = vld [vmem:[%s1 + $0x168] sm:$0xff]
  %v74 = vld [vmem:[%s1 + $0x170] sm:$0xff]
  %v75 = vld [vmem:[%s1 + $0x178] sm:$0xff]
  %v76 = vld [vmem:[%s1 + $0x180] sm:$0xff]
  %v77 = vld [vmem:[%s1 + $0x188] sm:$0xff]
  %v78 = vld [vmem:[%s1 + $0x190] sm:$0xff]
  %v79 = vld [vmem:[%s1 + $0x198] sm:$0xff]
  %v80 = vld [vmem:[%s1 + $0x1a0] sm:$0xff]
  %v81 = vld [vmem:[%s1 + $0x1a8] sm:$0xff]
  %v82 = vld [vmem:[%s1 + $0x1b0] sm:$0xff]
  %v83 = vld [vmem:[%s1 + $0x1b8] sm:$0xff]
  %v84 = vld [vmem:[%s1 + $0x1c0] sm:$0xff]
  %v85 = vld [vmem:[%s1 + $0x1c8] sm:$0xff]
  %v86 = vld [vmem:[%s1 + $0x1d0] sm:$0xff]
  %v87 = vld [vmem:[%s1 + $0x1d8] sm:$0xff]
  %v88 = vld [vmem:[%s1 + $0x1e0] sm:$0xff]
  %v89 = vld [vmem:[%s1 + $0x1e8] sm:$0xff]
  %v90 = vld [vmem:[%s1 + $0x1f0] sm:$0xff]
  %v91 = vld [vmem:[%s1 + $0x1f8] sm:$0xff]
  %v92 = vld [vmem:[%s1 + $0x200] sm:$0xff]
  %v93 = vld [vmem:[%s1 + $0x208] sm:$0xff]
  %v94 = vld [vmem:[%s1 + $0x210] sm:$0xff]
  %v95 = vld [vmem:[%s1 + $0x218] sm:$0xff]
  %v96 = vld [vmem:[%s1 + $0x220] sm:$0xff]
  %v97 = vld [vmem:[%s1 + $0x228] sm:$0xff]
  %v98 = vld [vmem:[%s1 + $0x230] sm:$0xff]
  %v99 = vld [vmem:[%s1 + $0x238] sm:$0xff]
  %v100 = vld [vmem:[%s1 + $0x240] sm:$0xff]
  %v101 = vld [vmem:[%s1 + $0x248] sm:$0xff]
  %v102 = vld [vmem:[%s1 + $0x250] sm:$0xff]
  %v103 = vld [vmem:[%s1 + $0x258] sm:$0xff]
  %v104 = vld [vmem:[%s1 + $0x260] sm:$0xff]
  %v105 = vld [vmem:[%s1 + $0x268] sm:$0xff]
  %v106 = vld [vmem:[%s1 + $0x270] sm:$0xff]
  %v107 = vld [vmem:[%s1 + $0x278] sm:$0xff]
  %v108 = vld [vmem:[%s1 + $0x280] sm:$0xff]
  %v109 = vld [vmem:[%s1 + $0x288] sm:$0xff]
  %v110 = vld [vmem:[%s1 + $0x290] sm:$0xff]
  %v111 = vld [vmem:[%s1 + $0x298] sm:$0xff]
  %v112 = vld [vmem:[%s1 + $0x2a0] sm:$0xff]
  %v113 = vld [vmem:[%s1 + $0x2a8] sm:$0xff]
  %v114 = vld [vmem:[%s1 + $0x2b0] sm:$0xff]
  %v115 = vld [vmem:[%s1 + $0x2b8] sm:$0xff]
  %v116 = vld [vmem:[%s1 + $0x2c0] sm:$0xff]
  %v117 = vld [vmem:[%s1 + $0x2c8] sm:$0xff]
  %v118 = vld [vmem:[%s1 + $0x2d0] sm:$0xff]
  %v119 = vld [vmem:[%s1 + $0x2d8] sm:$0xff]
  %v120 = vld [vmem:[%s1 + $0x2e0] sm:$0xff]
  %v121 = vld [vmem:[%s1 + $0x2e8] sm:$0xff]
  %v122 = vld [vmem:[%s1 + $0x2f0] sm:$0xff]
  %v123 = vld [vmem:[%s1 + $0x2f8] sm:$0xff]
  %v124 = vld [vmem:[%s1 + $0x300] sm:$0xff]
  %v125 = vld [vmem:[%s1 + $0x308] sm:$0xff]
  %v126 = vld [vmem:[%s1 + $0x310] sm:$0xff]
  %v127 = vld [vmem:[%s1 + $0x318] sm:$0xff]
  %v128 = vld [vmem:[%s1 + $0x320] sm:$0xff]
  %v129 = vld [vmem:[%s1 + $0x328] sm:$0xff]
  %v130 = vld [vmem:[%s1 + $0x330] sm:$0xff]
  %v131 = vld [vmem:[%s1 + $0x338] sm:$0xff]
  %v132 = vld [vmem:[%s1 + $0x340] sm:$0xff]
  %v133 = vld [vmem:[%s1 + $0x348] sm:$0xff]
  %v134 = vld [vmem:[%s1 + $0x350] sm:$0xff]
  %v135 = vld [vmem:[%s1 + $0x358] sm:$0xff]
  %v136 = vld [vmem:[%s1 + $0x360] sm:$0xff]
  %v137 = vld [vmem:[%s1 + $0x368] sm:$0xff]
  %v138 = vld [vmem:[%s1 + $0x370] sm:$0xff]
  %v139 = vld [vmem:[%s1 + $0x378] sm:$0xff]
  %v140 = vld [vmem:[%s1 + $0x380] sm:$0xff]
  %v141 = vld [vmem:[%s1 + $0x388] sm:$0xff]
  %v142 = vld [vmem:[%s1 + $0x390] sm:$0xff]
  %v143 = vld [vmem:[%s1 + $0x398] sm:$0xff]
  %v144 = vld [vmem:[%s1 + $0x3a0] sm:$0xff]
  %v145 = vld [vmem:[%s1 + $0x3a8] sm:$0xff]
  %v146 = vld [vmem:[%s1 + $0x3b0] sm:$0xff]
  %v147 = vld [vmem:[%s1 + $0x3b8] sm:$0xff]
  %v148 = vld [vmem:[%s1 + $0x3c0] sm:$0xff]
  %v149 = vld [vmem:[%s1 + $0x3c8] sm:$0xff]
  %v150 = vld [vmem:[%s1 + $0x3d0] sm:$0xff]
  %v151 = vld [vmem:[%s1 + $0x3d8] sm:$0xff]
  %v152 = vld [vmem:[%s1 + $0x3e0] sm:$0xff]
  %v153 = vld [vmem:[%s1 + $0x3e8] sm:$0xff]
  %v154 = vld [vmem:[%s1 + $0x3f0] sm:$0xff]
  %v155 = vld [vmem:[%s1 + $0x3f8] sm:$0xff]
  %v156 = vld [vmem:[%s1 + $0x400] sm:$0xff]
  %v157 = vld [vmem:[%s1 + $0x408] sm:$0xff]
  %v158 = vld [vmem:[%s1 + $0x410] sm:$0xff]
  %v159 = vld [vmem:[%s1 + $0x418] sm:$0xff]
  %v160 = vld [vmem:[%s1 + $0x420] sm:$0xff]
  %v161 = vld [vmem:[%s1 + $0x428] sm:$0xff]
  %v162 = vld [vmem:[%s1 + $0x430] sm:$0xff]
  %v163 = vld [vmem:[%s1 + $0x438] sm:$0xff]
  %v164 = vld [vmem:[%s1 + $0x440] sm:$0xff]
  %v165 = vld [vmem:[%s1 + $0x448] sm:$0xff]
  %v166 = vld [vmem:[%s1 + $0x450] sm:$0xff]
  %v167 = vld [vmem:[%s1 + $0x458] sm:$0xff]
  %v168 = vld [vmem:[%s1 + $0x460] sm:$0xff]
  %v169 = vld [vmem:[%s1 + $0x468] sm:$0xff]
  %v170 = vld [vmem:[%s1 + $0x470] sm:$0xff]
  %v171 = vld [vmem:[%s1 + $0x478] sm:$0xff]
  %v172 = vld [vmem:[%s1 + $0x480] sm:$0xff]
  %v173 = vld [vmem:[%s1 + $0x488] sm:$0xff]
  %v174 = vld [vmem:[%s1 + $0x490] sm:$0xff]
  %v175 = vld [vmem:[%s1 + $0x498] sm:$0xff]
  %v176 = vld [vmem:[%s1 + $0x4a0] sm:$0xff]
  %v177 = vld [vmem:[%s1 + $0x4a8] sm:$0xff]
  %v178 = vld [vmem:[%s1 + $0x4b0] sm:$0xff]
  %v179 = vld [vmem:[%s1 + $0x4b8] sm:$0xff]
  %v180 = vld [vmem:[%s1 + $0x4c0] sm:$0xff]
  %v181 = vld [vmem:[%s1 + $0x4c8] sm:$0xff]
  %v182 = vld [vmem:[%s1 + $0x4d0] sm:$0xff]
  %v183 = vld [vmem:[%s1 + $0x4d8] sm:$0xff]
  %v184 = vld [vmem:[%s1 + $0x4e0] sm:$0xff]
  %v185 = vld [vmem:[%s1 + $0x4e8] sm:$0xff]
  %v186 = vld [vmem:[%s1 + $0x4f0] sm:$0xff]
  %v187 = vld [vmem:[%s1 + $0x4f8] sm:$0xff]
  %v188 = vld [vmem:[%s1 + $0x500] sm:$0xff]
  %v189 = vld [vmem:[%s1 + $0x508] sm:$0xff]
  %v190 = vld [vmem:[%s1 + $0x510] sm:$0xff]
  %v191 = vld [vmem:[%s1 + $0x518] sm:$0xff]
  %v192 = vld [vmem:[%s1 + $0x520] sm:$0xff]
  %v193 = vld [vmem:[%s1 + $0x528] sm:$0xff]
  %v194 = vld [vmem:[%s1 + $0x530] sm:$0xff]
  %v195 = vld [vmem:[%s1 + $0x538] sm:$0xff]
  %v196 = vld [vmem:[%s1 + $0x540] sm:$0xff]
  %v197 = vld [vmem:[%s1 + $0x548] sm:$0xff]
  %v198 = vld [vmem:[%s1 + $0x550] sm:$0xff]
  %v199 = vld [vmem:[%s1 + $0x558] sm:$0xff]
  %v200 = vld [vmem:[%s1 + $0x560] sm:$0xff]
  %v201 = vld [vmem:[%s1 + $0x568] sm:$0xff]
  %v202 = vld [vmem:[%s1 + $0x570] sm:$0xff]
  %v203 = vld [vmem:[%s1 + $0x578] sm:$0xff]
  %v204 = vld [vmem:[%s1 + $0x580] sm:$0xff]
  %v205 = vld [vmem:[%s1 + $0x588] sm:$0xff]
  %v206 = vld [vmem:[%s1 + $0x590] sm:$0xff]
  %v207 = vld [vmem:[%s1 + $0x598] sm:$0xff]
  %v208 = vld [vmem:[%s1 + $0x5a0] sm:$0xff]
  %v209 = vld [vmem:[%s1 + $0x5a8] sm:$0xff]
  %v210 = vld [vmem:[%s1 + $0x5b0] sm:$0xff]
  %v211 = vld [vmem:[%s1 + $0x5b8] sm:$0xff]
  %v212 = vld [vmem:[%s1 + $0x5c0] sm:$0xff]
  %v213 = vld [vmem:[%s1 + $0x5c8] sm:$0xff]
  %v214 = vld [vmem:[%s1 + $0x5d0] sm:$0xff]
  %v215 = vld [vmem:[%s1 + $0x5d8] sm:$0xff]
  %v216 = vld [vmem:[%s1 + $0x5e0] sm:$0xff]
  %v217 = vld [vmem:[%s1 + $0x5e8] sm:$0xff]
  %v218 = vld [vmem:[%s1 + $0x5f0] sm:$0xff]
  %v219 = vld [vmem:[%s1 + $0x5f8] sm:$0xff]
  %v220 = vld [vmem:[%s1 + $0x600] sm:$0xff]
  %v221 = vld [vmem:[%s1 + $0x608] sm:$0xff]
  %v222 = vld [vmem:[%s1 + $0x610] sm:$0xff]
  %v223 = vld [vmem:[%s1 + $0x618] sm:$0xff]
  %v224 = vld [vmem:[%s1 + $0x620] sm:$0xff]
  %v225 = vld [vmem:[%s1 + $0x628] sm:$0xff]
  %v226 = vld [vmem:[%s1 + $0x630] sm:$0xff]
  %v227 = vld [vmem:[%s1 + $0x638] sm:$0xff]
  %v228 = vld [vmem:[%s1 + $0x640] sm:$0xff]
  %v229 = vld [vmem:[%s1 + $0x648] sm:$0xff]
  %v230 = vld [vmem:[%s1 + $0x650] sm:$0xff]
  %v231 = vld [vmem:[%s1 + $0x658] sm:$0xff]
  %v232 = vld [vmem:[%s1 + $0x660] sm:$0xff]
  %v233 = vld [vmem:[%s1 + $0x668] sm:$0xff]
  %v234 = vld [vmem:[%s1 + $0x670] sm:$0xff]
  %v235 = vld [vmem:[%s1 + $0x678] sm:$0xff]
  %v236 = vld [vmem:[%s1 + $0x680] sm:$0xff]
  %v237 = vld [vmem:[%s1 + $0x688] sm:$0xff]
  %v238 = vld [vmem:[%s1 + $0x690] sm:$0xff]
  %v239 = vld [vmem:[%s1 + $0x698] sm:$0xff]
  %v240 = vld [vmem:[%s1 + $0x6a0] sm:$0xff]
  %v241 = vld [vmem:[%s1 + $0x6a8] sm:$0xff]
  %v242 = vld [vmem:[%s1 + $0x6b0] sm:$0xff]
  %v243 = vld [vmem:[%s1 + $0x6b8] sm:$0xff]
  %v244 = vld [vmem:[%s1 + $0x6c0] sm:$0xff]
  %v245 = vld [vmem:[%s1 + $0x6c8] sm:$0xff]
  %v246 = vld [vmem:[%s1 + $0x6d0] sm:$0xff]
  %v247 = vld [vmem:[%s1 + $0x6d8] sm:$0xff]
  %v248 = vld [vmem:[%s1 + $0x6e0] sm:$0xff]
  %v249 = vld [vmem:[%s1 + $0x6e8] sm:$0xff]
  %v250 = vld [vmem:[%s1 + $0x6f0] sm:$0xff]
  %v251 = vld [vmem:[%s1 + $0x6f8] sm:$0xff]
  %v252 = vld [vmem:[%s1 + $0x700] sm:$0xff]
  %v253 = vld [vmem:[%s1 + $0x708] sm:$0xff]
  %v254 = vld [vmem:[%s1 + $0x710] sm:$0xff]
  %v255 = vld [vmem:[%s1 + $0x718] sm:$0xff]
  %v256 = vld [vmem:[%s1 + $0x720] sm:$0xff]
  %v257 = vld [vmem:[%s1 + $0x728] sm:$0xff]
  %v258 = vld [vmem:[%s1 + $0x730] sm:$0xff]
  %v259 = vld [vmem:[%s1 + $0x738] sm:$0xff]
  %v260 = vld [vmem:[%s1 + $0x740] sm:$0xff]
  %v261 = vld [vmem:[%s1 + $0x748] sm:$0xff]
  %v262 = vld [vmem:[%s1 + $0x750] sm:$0xff]
  %v263 = vld [vmem:[%s1 + $0x758] sm:$0xff]
  %v264 = vld [vmem:[%s1 + $0x760] sm:$0xff]
  %v265 = vld [vmem:[%s1 + $0x768] sm:$0xff]
  %v266 = vld [vmem:[%s1 + $0x770] sm:$0xff]
  %v267 = vld [vmem:[%s1 + $0x778] sm:$0xff]
  %v268 = vld [vmem:[%s1 + $0x780] sm:$0xff]
  %v269 = vld [vmem:[%s1 + $0x788] sm:$0xff]
  %v270 = vld [vmem:[%s1 + $0x790] sm:$0xff]
  %v271 = vld [vmem:[%s1 + $0x798] sm:$0xff]
  %v272 = vld [vmem:[%s1 + $0x7a0] sm:$0xff]
  %v273 = vld [vmem:[%s1 + $0x7a8] sm:$0xff]
  %v274 = vld [vmem:[%s1 + $0x7b0] sm:$0xff]
  %v275 = vld [vmem:[%s1 + $0x7b8] sm:$0xff]
  %v276 = vld [vmem:[%s1 + $0x7c0] sm:$0xff]
  %v277 = vld [vmem:[%s1 + $0x7c8] sm:$0xff]
  %v278 = vld [vmem:[%s1 + $0x7d0] sm:$0xff]
  %v279 = vld [vmem:[%s1 + $0x7d8] sm:$0xff]
  %v280 = vld [vmem:[%s1 + $0x7e0] sm:$0xff]
  %v281 = vld [vmem:[%s1 + $0x7e8] sm:$0xff]
  %v282 = vld [vmem:[%s1 + $0x7f0] sm:$0xff]
  %v283 = vld [vmem:[%s1 + $0x7f8] sm:$0xff]
  %v284 = vld [vmem:[%s1 + $0x800] sm:$0xff]
  %v285 = vld [vmem:[%s1 + $0x808] sm:$0xff]
  %v286 = vld [vmem:[%s1 + $0x810] sm:$0xff]
  %v287 = vld [vmem:[%s1 + $0x818] sm:$0xff]
  %v288 = vld [vmem:[%s1 + $0x820] sm:$0xff]
  %v289 = vld [vmem:[%s1 + $0x828] sm:$0xff]
  %v290 = vld [vmem:[%s1 + $0x830] sm:$0xff]
  %v291 = vld [vmem:[%s1 + $0x838] sm:$0xff]
  %v292 = vld [vmem:[%s1 + $0x840] sm:$0xff]
  %v293 = vld [vmem:[%s1 + $0x848] sm:$0xff]
  %v294 = vld [vmem:[%s1 + $0x850] sm:$0xff]
  %v295 = vld [vmem:[%s1 + $0x858] sm:$0xff]
  %v296 = vld [vmem:[%s1 + $0x860] sm:$0xff]
  %v297 = vld [vmem:[%s1 + $0x868] sm:$0xff]
  %v298 = vld [vmem:[%s1 + $0x870] sm:$0xff]
  %v299 = vld [vmem:[%s1 + $0x878] sm:$0xff]
  %v300 = vld [vmem:[%s1 + $0x880] sm:$0xff]
  %v301 = vld [vmem:[%s1 + $0x888] sm:$0xff]
  %v302 = vld [vmem:[%s1 + $0x890] sm:$0xff]
  %v303 = vld [vmem:[%s1 + $0x898] sm:$0xff]
  %v304 = vld [vmem:[%s1 + $0x8a0] sm:$0xff]
  %v305 = vld [vmem:[%s1 + $0x8a8] sm:$0xff]
  %v306 = vld [vmem:[%s1 + $0x8b0] sm:$0xff]
  %v307 = vld [vmem:[%s1 + $0x8b8] sm:$0xff]
  %v308 = vld [vmem:[%s1 + $0x8c0] sm:$0xff]
  %v309 = vld [vmem:[%s1 + $0x8c8] sm:$0xff]
  %v310 = vld [vmem:[%s1 + $0x8d0] sm:$0xff]
  %v311 = vld [vmem:[%s1 + $0x8d8] sm:$0xff]
  %v312 = vld [vmem:[%s1 + $0x8e0] sm:$0xff]
  %v313 = vld [vmem:[%s1 + $0x8e8] sm:$0xff]
  %v314 = vld [vmem:[%s1 + $0x8f0] sm:$0xff]
  %v315 = vld [vmem:[%s1 + $0x8f8] sm:$0xff]
  %v316 = vld [vmem:[%s1 + $0x900] sm:$0xff]
  %v317 = vld [vmem:[%s1 + $0x908] sm:$0xff]
  %v318 = vld [vmem:[%s1 + $0x910] sm:$0xff]
  %v319 = vld [vmem:[%s1 + $0x918] sm:$0xff]
  %v320 = vld [vmem:[%s1 + $0x920] sm:$0xff]
  %v321 = vld [vmem:[%s1 + $0x928] sm:$0xff]
  %v322 = vld [vmem:[%s1 + $0x930] sm:$0xff]
  %v323 = vld [vmem:[%s1 + $0x938] sm:$0xff]
  %v324 = vld [vmem:[%s1 + $0x940] sm:$0xff]
  %v325 = vld [vmem:[%s1 + $0x948] sm:$0xff]
  %v326 = vld [vmem:[%s1 + $0x950] sm:$0xff]
  %v327 = vld [vmem:[%s1 + $0x958] sm:$0xff]
  %v328 = vld [vmem:[%s1 + $0x960] sm:$0xff]
  %v329 = vld [vmem:[%s1 + $0x968] sm:$0xff]
  %v330 = vld [vmem:[%s1 + $0x970] sm:$0xff]
  %v331 = vld [vmem:[%s1 + $0x978] sm:$0xff]
  %v332 = vld [vmem:[%s1 + $0x980] sm:$0xff]
  %v333 = vld [vmem:[%s1 + $0x988] sm:$0xff]
  %v334 = vld [vmem:[%s1 + $0x990] sm:$0xff]
  %v335 = vld [vmem:[%s1 + $0x998] sm:$0xff]
  %v336 = vld [vmem:[%s1 + $0x9a0] sm:$0xff]
  %v337 = vld [vmem:[%s1 + $0x9a8] sm:$0xff]
  %v338 = vld [vmem:[%s1 + $0x9b0] sm:$0xff]
  %v339 = vld [vmem:[%s1 + $0x9b8] sm:$0xff]
  %v340 = vld [vmem:[%s1 + $0x9c0] sm:$0xff]
  %v341 = vld [vmem:[%s1 + $0x9c8] sm:$0xff]
  %v342 = vld [vmem:[%s1 + $0x9d0] sm:$0xff]
  %v343 = vld [vmem:[%s1 + $0x9d8] sm:$0xff]
  %v344 = vld [vmem:[%s1 + $0x9e0] sm:$0xff]
  %v345 = vld [vmem:[%s1 + $0x9e8] sm:$0xff]
  %v346 = vld [vmem:[%s1 + $0x9f0] sm:$0xff]
  %v347 = vld [vmem:[%s1 + $0x9f8] sm:$0xff]
  %v348 = vld [vmem:[%s1 + $0xa00] sm:$0xff]
  %v349 = vld [vmem:[%s1 + $0xa08] sm:$0xff]
  %v350 = vld [vmem:[%s1 + $0xa10] sm:$0xff]
  %v351 = vld [vmem:[%s1 + $0xa18] sm:$0xff]
  %v352 = vld [vmem:[%s1 + $0xa20] sm:$0xff]
  %v353 = vld [vmem:[%s1 + $0xa28] sm:$0xff]
  %v354 = vld [vmem:[%s1 + $0xa30] sm:$0xff]
  %v355 = vld [vmem:[%s1 + $0xa38] sm:$0xff]
  %v356 = vld [vmem:[%s1 + $0xa40] sm:$0xff]
  %v357 = vld [vmem:[%s1 + $0xa48] sm:$0xff]
  %v358 = vld [vmem:[%s1 + $0xa50] sm:$0xff]
  %v359 = vld [vmem:[%s1 + $0xa58] sm:$0xff]
  %v360 = vld [vmem:[%s1 + $0xa60] sm:$0xff]
  %v361 = vld [vmem:[%s1 + $0xa68] sm:$0xff]
  %v362 = vld [vmem:[%s1 + $0xa70] sm:$0xff]
  %v363 = vld [vmem:[%s1 + $0xa78] sm:$0xff]
  %v364 = vld [vmem:[%s1 + $0xa80] sm:$0xff]
  %v365 = vld [vmem:[%s1 + $0xa88] sm:$0xff]
  %v366 = vld [vmem:[%s1 + $0xa90] sm:$0xff]
  %v367 = vld [vmem:[%s1 + $0xa98] sm:$0xff]
  %v368 = vld [vmem:[%s1 + $0xaa0] sm:$0xff]
  %v369 = vld [vmem:[%s1 + $0xaa8] sm:$0xff]
  %v370 = vld [vmem:[%s1 + $0xab0] sm:$0xff]
  %v371 = vld [vmem:[%s1 + $0xab8] sm:$0xff]
  %v372 = vld [vmem:[%s1 + $0xac0] sm:$0xff]
  %v373 = vld [vmem:[%s1 + $0xac8] sm:$0xff]
  %v374 = vld [vmem:[%s1 + $0xad0] sm:$0xff]
  %v375 = vld [vmem:[%s1 + $0xad8] sm:$0xff]
  %v376 = vld [vmem:[%s1 + $0xae0] sm:$0xff]
  %v377 = vld [vmem:[%s1 + $0xae8] sm:$0xff]
  %v378 = vld [vmem:[%s1 + $0xaf0] sm:$0xff]
  %v379 = vld [vmem:[%s1 + $0xaf8] sm:$0xff]
  %v380 = vld [vmem:[%s1 + $0xb00] sm:$0xff]
  %v381 = vld [vmem:[%s1 + $0xb08] sm:$0xff]
  %v382 = vld [vmem:[%s1 + $0xb10] sm:$0xff]
  %v383 = vld [vmem:[%s1 + $0xb18] sm:$0xff]
  %v384 = vld [vmem:[%s1 + $0xb20] sm:$0xff]
  %v385 = vld [vmem:[%s1 + $0xb28] sm:$0xff]
  %v386 = vld [vmem:[%s1 + $0xb30] sm:$0xff]
  %v387 = vld [vmem:[%s1 + $0xb38] sm:$0xff]
  %v388 = vld [vmem:[%s1 + $0xb40] sm:$0xff]
  %v389 = vld [vmem:[%s1 + $0xb48] sm:$0xff]
  %v390 = vld [vmem:[%s1 + $0xb50] sm:$0xff]
  %v391 = vld [vmem:[%s1 + $0xb58] sm:$0xff]
  %v392 = vld [vmem:[%s1 + $0xb60] sm:$0xff]
  %v393 = vld [vmem:[%s1 + $0xb68] sm:$0xff]
  %v394 = vld [vmem:[%s1 + $0xb70] sm:$0xff]
  %v395 = vld [vmem:[%s1 + $0xb78] sm:$0xff]
  %v396 = vld [vmem:[%s1 + $0xb80] sm:$0xff]
  %v397 = vld [vmem:[%s1 + $0xb88] sm:$0xff]
  %v398 = vld [vmem:[%s1 + $0xb90] sm:$0xff]
  %v399 = vld [vmem:[%s1 + $0xb98] sm:$0xff]
  %v400 = vld [vmem:[%s1 + $0xba0] sm:$0xff]
  %v401 = vld [vmem:[%s1 + $0xba8] sm:$0xff]
  %v402 = vld [vmem:[%s1 + $0xbb0] sm:$0xff]
  %v403 = vld [vmem:[%s1 + $0xbb8] sm:$0xff]
  %v404 = vld [vmem:[%s1 + $0xbc0] sm:$0xff]
  %v405 = vld [vmem:[%s1 + $0xbc8] sm:$0xff]
  %v406 = vld [vmem:[%s1 + $0xbd0] sm:$0xff]
  %v407 = vld [vmem:[%s1 + $0xbd8] sm:$0xff]
  %v408 = vld [vmem:[%s1 + $0xbe0] sm:$0xff]
  %v409 = vld [vmem:[%s1 + $0xbe8] sm:$0xff]
  %v410 = vld [vmem:[%s1 + $0xbf0] sm:$0xff]
  %v411 = vld [vmem:[%s1 + $0xbf8] sm:$0xff]
  %v412 = vld [vmem:[%s1 + $0xc00] sm:$0xff]
  %v413 = vld [vmem:[%s1 + $0xc08] sm:$0xff]
  %v414 = vld [vmem:[%s1 + $0xc10] sm:$0xff]
  %v415 = vld [vmem:[%s1 + $0xc18] sm:$0xff]
  %v416 = vld [vmem:[%s1 + $0xc20] sm:$0xff]
  %v417 = vld [vmem:[%s1 + $0xc28] sm:$0xff]
  %v418 = vld [vmem:[%s1 + $0xc30] sm:$0xff]
  %v419 = vld [vmem:[%s1 + $0xc38] sm:$0xff]
  %v420 = vld [vmem:[%s1 + $0xc40] sm:$0xff]
  %v421 = vld [vmem:[%s1 + $0xc48] sm:$0xff]
  %v422 = vld [vmem:[%s1 + $0xc50] sm:$0xff]
  %v423 = vld [vmem:[%s1 + $0xc58] sm:$0xff]
  %v424 = vld [vmem:[%s1 + $0xc60] sm:$0xff]
  %v425 = vld [vmem:[%s1 + $0xc68] sm:$0xff]
  %v426 = vld [vmem:[%s1 + $0xc70] sm:$0xff]
  %v427 = vld [vmem:[%s1 + $0xc78] sm:$0xff]
  %v428 = vld [vmem:[%s1 + $0xc80] sm:$0xff]
  %v429 = vld [vmem:[%s1 + $0xc88] sm:$0xff]
  %v430 = vld [vmem:[%s1 + $0xc90] sm:$0xff]
  %v431 = vld [vmem:[%s1 + $0xc98] sm:$0xff]
  %v432 = vld [vmem:[%s1 + $0xca0] sm:$0xff]
  %v433 = vld [vmem:[%s1 + $0xca8] sm:$0xff]
  %v434 = vld [vmem:[%s1 + $0xcb0] sm:$0xff]
  %v435 = vld [vmem:[%s1 + $0xcb8] sm:$0xff]
  %v436 = vld [vmem:[%s1 + $0xcc0] sm:$0xff]
  %v437 = vld [vmem:[%s1 + $0xcc8] sm:$0xff]
  %v438 = vld [vmem:[%s1 + $0xcd0] sm:$0xff]
  %v439 = vld [vmem:[%s1 + $0xcd8] sm:$0xff]
  %v440 = vld [vmem:[%s1 + $0xce0] sm:$0xff]
  %v441 = vld [vmem:[%s1 + $0xce8] sm:$0xff]
  %v442 = vld [vmem:[%s1 + $0xcf0] sm:$0xff]
  %v443 = vld [vmem:[%s1 + $0xcf8] sm:$0xff]
  %v444 = vld [vmem:[%s1 + $0xd00] sm:$0xff]
  %v445 = vld [vmem:[%s1 + $0xd08] sm:$0xff]
  %v446 = vld [vmem:[%s1 + $0xd10] sm:$0xff]
  %v447 = vld [vmem:[%s1 + $0xd18] sm:$0xff]
  %v448 = vld [vmem:[%s1 + $0xd20] sm:$0xff]
  %v449 = vld [vmem:[%s1 + $0xd28] sm:$0xff]
  %v450 = vld [vmem:[%s1 + $0xd30] sm:$0xff]
  %v451 = vld [vmem:[%s1 + $0xd38] sm:$0xff]
  %v452 = vld [vmem:[%s1 + $0xd40] sm:$0xff]
  %v453 = vld [vmem:[%s1 + $0xd48] sm:$0xff]
  %v454 = vld [vmem:[%s1 + $0xd50] sm:$0xff]
  %v455 = vld [vmem:[%s1 + $0xd58] sm:$0xff]
  %v456 = vld [vmem:[%s1 + $0xd60] sm:$0xff]
  %v457 = vld [vmem:[%s1 + $0xd68] sm:$0xff]
  %v458 = vld [vmem:[%s1 + $0xd70] sm:$0xff]
  %v459 = vld [vmem:[%s1 + $0xd78] sm:$0xff]
  %v460 = vld [vmem:[%s1 + $0xd80] sm:$0xff]
  %v461 = vld [vmem:[%s1 + $0xd88] sm:$0xff]
  %v462 = vld [vmem:[%s1 + $0xd90] sm:$0xff]
  %v463 = vld [vmem:[%s1 + $0xd98] sm:$0xff]
  %v464 = vld [vmem:[%s1 + $0xda0] sm:$0xff]
  %v465 = vld [vmem:[%s1 + $0xda8] sm:$0xff]
  %v466 = vld [vmem:[%s1 + $0xdb0] sm:$0xff]
  %v467 = vld [vmem:[%s1 + $0xdb8] sm:$0xff]
  %v468 = vld [vmem:[%s1 + $0xdc0] sm:$0xff]
  %v469 = vld [vmem:[%s1 + $0xdc8] sm:$0xff]
  %v470 = vld [vmem:[%s1 + $0xdd0] sm:$0xff]
  %v471 = vld [vmem:[%s1 + $0xdd8] sm:$0xff]
  %v472 = vld [vmem:[%s1 + $0xde0] sm:$0xff]
  %v473 = vld [vmem:[%s1 + $0xde8] sm:$0xff]
  %v474 = vld [vmem:[%s1 + $0xdf0] sm:$0xff]
  %v475 = vld [vmem:[%s1 + $0xdf8] sm:$0xff]
  %v476 = vld [vmem:[%s1 + $0xe00] sm:$0xff]
  %v477 = vld [vmem:[%s1 + $0xe08] sm:$0xff]
  %v478 = vld [vmem:[%s1 + $0xe10] sm:$0xff]
  %v479 = vld [vmem:[%s1 + $0xe18] sm:$0xff]
  %v480 = vld [vmem:[%s1 + $0xe20] sm:$0xff]
  %v481 = vld [vmem:[%s1 + $0xe28] sm:$0xff]
  %v482 = vld [vmem:[%s1 + $0xe30] sm:$0xff]
  %v483 = vld [vmem:[%s1 + $0xe38] sm:$0xff]
  %v484 = vld [vmem:[%s1 + $0xe40] sm:$0xff]
  %v485 = vld [vmem:[%s1 + $0xe48] sm:$0xff]
  %v486 = vld [vmem:[%s1 + $0xe50] sm:$0xff]
  %v487 = vld [vmem:[%s1 + $0xe58] sm:$0xff]
  %v488 = vld [vmem:[%s1 + $0xe60] sm:$0xff]
  %v489 = vld [vmem:[%s1 + $0xe68] sm:$0xff]
  %v490 = vld [vmem:[%s1 + $0xe70] sm:$0xff]
  %v491 = vld [vmem:[%s1 + $0xe78] sm:$0xff]
  %v492 = vld [vmem:[%s1 + $0xe80] sm:$0xff]
  %v493 = vld [vmem:[%s1 + $0xe88] sm:$0xff]
  %v494 = vld [vmem:[%s1 + $0xe90] sm:$0xff]
  %v495 = vld [vmem:[%s1 + $0xe98] sm:$0xff]
  %v496 = vld [vmem:[%s1 + $0xea0] sm:$0xff]
  %v497 = vld [vmem:[%s1 + $0xea8] sm:$0xff]
  %v498 = vld [vmem:[%s1 + $0xeb0] sm:$0xff]
  %v499 = vld [vmem:[%s1 + $0xeb8] sm:$0xff]
  %v500 = vld [vmem:[%s1 + $0xec0] sm:$0xff]
  %v501 = vld [vmem:[%s1 + $0xec8] sm:$0xff]
  %v502 = vld [vmem:[%s1 + $0xed0] sm:$0xff]
  %v503 = vld [vmem:[%s1 + $0xed8] sm:$0xff]
  %v504 = vld [vmem:[%s1 + $0xee0] sm:$0xff]
  %v505 = vld [vmem:[%s1 + $0xee8] sm:$0xff]
  %v506 = vld [vmem:[%s1 + $0xef0] sm:$0xff]
  %v507 = vld [vmem:[%s1 + $0xef8] sm:$0xff]
  %v508 = vld [vmem:[%s1 + $0xf00] sm:$0xff]
  %v509 = vld [vmem:[%s1 + $0xf08] sm:$0xff]
  %v510 = vld [vmem:[%s1 + $0xf10] sm:$0xff]
  %v511 = vld [vmem:[%s1 + $0xf18] sm:$0xff]
  %v512 = vld [vmem:[%s1 + $0xf20] sm:$0xff]
  %v513 = vld [vmem:[%s1 + $0xf28] sm:$0xff]
  %v514 = vld [vmem:[%s1 + $0xf30] sm:$0xff]
  %v515 = vld [vmem:[%s1 + $0xf38] sm:$0xff]
  %v516 = vld [vmem:[%s1 + $0xf40] sm:$0xff]
  %v517 = vld [vmem:[%s1 + $0xf48] sm:$0xff]
  %v518 = vld [vmem:[%s1 + $0xf50] sm:$0xff]
  %v519 = vld [vmem:[%s1 + $0xf58] sm:$0xff]
  %v520 = vld [vmem:[%s1 + $0xf60] sm:$0xff]
  %v521 = vld [vmem:[%s1 + $0xf68] sm:$0xff]
  %v522 = vld [vmem:[%s1 + $0xf70] sm:$0xff]
  %v523 = vld [vmem:[%s1 + $0xf78] sm:$0xff]
  %v524 = vld [vmem:[%s1 + $0xf80] sm:$0xff]
  %v525 = vld [vmem:[%s1 + $0xf88] sm:$0xff]
  %v526 = vld [vmem:[%s1 + $0xf90] sm:$0xff]
  %v527 = vld [vmem:[%s1 + $0xf98] sm:$0xff]
  %v528 = vld [vmem:[%s1 + $0xfa0] sm:$0xff]
  %v529 = vld [vmem:[%s1 + $0xfa8] sm:$0xff]
  %v530 = vld [vmem:[%s1 + $0xfb0] sm:$0xff]
  %v531 = vld [vmem:[%s1 + $0xfb8] sm:$0xff]
  %v532 = vld [vmem:[%s1 + $0xfc0] sm:$0xff]
  %v533 = vld [vmem:[%s1 + $0xfc8] sm:$0xff]
  %v534 = vld [vmem:[%s1 + $0xfd0] sm:$0xff]
  %v535 = vld [vmem:[%s1 + $0xfd8] sm:$0xff]
  %v536 = vld [vmem:[%s1 + $0xfe0] sm:$0xff]
  %v537 = vld [vmem:[%s1 + $0xfe8] sm:$0xff]
  %v538 = vld [vmem:[%s1 + $0xff0] sm:$0xff]
  %v539 = vld [vmem:[%s1 + $0xff8] sm:$0xff]
  %v540 = vld [vmem:[%s1 + $0x1000] sm:$0xff]
  %v541 = vld [vmem:[%s1 + $0x1008] sm:$0xff]
  %v542 = vld [vmem:[%s1 + $0x1010] sm:$0xff]
  %v543 = vld [vmem:[%s1 + $0x1018] sm:$0xff]
  %v544 = vld [vmem:[%s1 + $0x1020] sm:$0xff]
  %v545 = vld [vmem:[%s1 + $0x1028] sm:$0xff]
  %v546 = vld [vmem:[%s1 + $0x1030] sm:$0xff]
  %v547 = vld [vmem:[%s1 + $0x1038] sm:$0xff]
  %v548 = vld [vmem:[%s1 + $0x1040] sm:$0xff]
  %v549 = vld [vmem:[%s1 + $0x1048] sm:$0xff]
  %v550 = vld [vmem:[%s1 + $0x1050] sm:$0xff]
  %v551 = vld [vmem:[%s1 + $0x1058] sm:$0xff]
  %v552 = vld [vmem:[%s1 + $0x1060] sm:$0xff]
  %v553 = vld [vmem:[%s1 + $0x1068] sm:$0xff]
  %v554 = vld [vmem:[%s1 + $0x1070] sm:$0xff]
  %v555 = vld [vmem:[%s1 + $0x1078] sm:$0xff]
  %v556 = vld [vmem:[%s1 + $0x1080] sm:$0xff]
  %v557 = vld [vmem:[%s1 + $0x1088] sm:$0xff]
  %v558 = vld [vmem:[%s1 + $0x1090] sm:$0xff]
  %v559 = vld [vmem:[%s1 + $0x1098] sm:$0xff]
  %v560 = vld [vmem:[%s1 + $0x10a0] sm:$0xff]
  %v561 = vld [vmem:[%s1 + $0x10a8] sm:$0xff]
  %v562 = vld [vmem:[%s1 + $0x10b0] sm:$0xff]
  %v563 = vld [vmem:[%s1 + $0x10b8] sm:$0xff]
  %v564 = vld [vmem:[%s1 + $0x10c0] sm:$0xff]
  %v565 = vld [vmem:[%s1 + $0x10c8] sm:$0xff]
  %v566 = vld [vmem:[%s1 + $0x10d0] sm:$0xff]
  %v567 = vld [vmem:[%s1 + $0x10d8] sm:$0xff]
  %v568 = vld [vmem:[%s1 + $0x10e0] sm:$0xff]
  %v569 = vld [vmem:[%s1 + $0x10e8] sm:$0xff]
  %v570 = vld [vmem:[%s1 + $0x10f0] sm:$0xff]
  %v571 = vld [vmem:[%s1 + $0x10f8] sm:$0xff]
  %v572 = vld [vmem:[%s1 + $0x1100] sm:$0xff]
  %v573 = vld [vmem:[%s1 + $0x1108] sm:$0xff]
  %v574 = vld [vmem:[%s1 + $0x1110] sm:$0xff]
  %v575 = vld [vmem:[%s1 + $0x1118] sm:$0xff]
  %v576 = vld [vmem:[%s1 + $0x1120] sm:$0xff]
  %v577 = vld [vmem:[%s1 + $0x1128] sm:$0xff]
  %v578 = vld [vmem:[%s1 + $0x1130] sm:$0xff]
  %v579 = vld [vmem:[%s1 + $0x1138] sm:$0xff]
  %v580 = vld [vmem:[%s1 + $0x1140] sm:$0xff]
  %v581 = vld [vmem:[%s1 + $0x1148] sm:$0xff]
  %v582 = vld [vmem:[%s1 + $0x1150] sm:$0xff]
  %v583 = vld [vmem:[%s1 + $0x1158] sm:$0xff]
  %v584 = vld [vmem:[%s1 + $0x1160] sm:$0xff]
  %v585 = vld [vmem:[%s1 + $0x1168] sm:$0xff]
  %v586 = vld [vmem:[%s1 + $0x1170] sm:$0xff]
  %v587 = vld [vmem:[%s1 + $0x1178] sm:$0xff]
  %v588 = vld [vmem:[%s1 + $0x1180] sm:$0xff]
  %v589 = vld [vmem:[%s1 + $0x1188] sm:$0xff]
  %v590 = vld [vmem:[%s1 + $0x1190] sm:$0xff]
  %v591 = vld [vmem:[%s1 + $0x1198] sm:$0xff]
  %v592 = vld [vmem:[%s1 + $0x11a0] sm:$0xff]
  %v593 = vld [vmem:[%s1 + $0x11a8] sm:$0xff]
  %v594 = vld [vmem:[%s1 + $0x11b0] sm:$0xff]
  %v595 = vld [vmem:[%s1 + $0x11b8] sm:$0xff]
  %v596 = vld [vmem:[%s1 + $0x11c0] sm:$0xff]
  %v597 = vld [vmem:[%s1 + $0x11c8] sm:$0xff]
  %v598 = vld [vmem:[%s1 + $0x11d0] sm:$0xff]
  %v599 = vld [vmem:[%s1 + $0x11d8] sm:$0xff]
  %v600 = vld [vmem:[%s1 + $0x11e0] sm:$0xff]
  %v601 = vld [vmem:[%s1 + $0x11e8] sm:$0xff]
  %v602 = vld [vmem:[%s1 + $0x11f0] sm:$0xff]
  %v603 = vld [vmem:[%s1 + $0x11f8] sm:$0xff]
  %v604 = vld [vmem:[%s1 + $0x1200] sm:$0xff]
  %v605 = vld [vmem:[%s1 + $0x1208] sm:$0xff]
  %v606 = vld [vmem:[%s1 + $0x1210] sm:$0xff]
  %v607 = vld [vmem:[%s1 + $0x1218] sm:$0xff]
  %v608 = vld [vmem:[%s1 + $0x1220] sm:$0xff]
  %v609 = vld [vmem:[%s1 + $0x1228] sm:$0xff]
  %v610 = vld [vmem:[%s1 + $0x1230] sm:$0xff]
  %v611 = vld [vmem:[%s1 + $0x1238] sm:$0xff]
  %v612 = vld [vmem:[%s1 + $0x1240] sm:$0xff]
  %v613 = vld [vmem:[%s1 + $0x1248] sm:$0xff]
  %v614 = vld [vmem:[%s1 + $0x1250] sm:$0xff]
  %v615 = vld [vmem:[%s1 + $0x1258] sm:$0xff]
  %v616 = vld [vmem:[%s1 + $0x1260] sm:$0xff]
  %v617 = vld [vmem:[%s1 + $0x1268] sm:$0xff]
  %v618 = vld [vmem:[%s1 + $0x1270] sm:$0xff]
  %v619 = vld [vmem:[%s1 + $0x1278] sm:$0xff]
  %v620 = vld [vmem:[%s1 + $0x1280] sm:$0xff]
  %v621 = vld [vmem:[%s1 + $0x1288] sm:$0xff]
  %v622 = vld [vmem:[%s1 + $0x1290] sm:$0xff]
  %v623 = vld [vmem:[%s1 + $0x1298] sm:$0xff]
  %v624 = vld [vmem:[%s1 + $0x12a0] sm:$0xff]
  %v625 = vld [vmem:[%s1 + $0x12a8] sm:$0xff]
  %v626 = vld [vmem:[%s1 + $0x12b0] sm:$0xff]
  %v627 = vld [vmem:[%s1 + $0x12b8] sm:$0xff]
  %v628 = vld [vmem:[%s1 + $0x12c0] sm:$0xff]
  %v629 = vld [vmem:[%s1 + $0x12c8] sm:$0xff]
  %v630 = vld [vmem:[%s1 + $0x12d0] sm:$0xff]
  %v631 = vld [vmem:[%s1 + $0x12d8] sm:$0xff]
  %v632 = vld [vmem:[%s1 + $0x12e0] sm:$0xff]
  %v633 = vld [vmem:[%s1 + $0x12e8] sm:$0xff]
  %v634 = vld [vmem:[%s1 + $0x12f0] sm:$0xff]
  %v635 = vld [vmem:[%s1 + $0x12f8] sm:$0xff]
  %v636 = vld [vmem:[%s1 + $0x1300] sm:$0xff]
  %v637 = vld [vmem:[%s1 + $0x1308] sm:$0xff]
  %v638 = vld [vmem:[%s1 + $0x1310] sm:$0xff]
  %v639 = vld [vmem:[%s1 + $0x1318] sm:$0xff]
  %v640 = vld [vmem:[%s1 + $0x1320] sm:$0xff]
  %v641 = vld [vmem:[%s1 + $0x1328] sm:$0xff]
  %v642 = vld [vmem:[%s1 + $0x1330] sm:$0xff]
  %v643 = vld [vmem:[%s1 + $0x1338] sm:$0xff]
  %v644 = vld [vmem:[%s1 + $0x1340] sm:$0xff]
  %v645 = vld [vmem:[%s1 + $0x1348] sm:$0xff]
  %v646 = vld [vmem:[%s1 + $0x1350] sm:$0xff]
  %v647 = vld [vmem:[%s1 + $0x1358] sm:$0xff]
  %v648 = vld [vmem:[%s1 + $0x1360] sm:$0xff]
  %v649 = vld [vmem:[%s1 + $0x1368] sm:$0xff]
  %v650 = vld [vmem:[%s1 + $0x1370] sm:$0xff]
  %v651 = vld [vmem:[%s1 + $0x1378] sm:$0xff]
  %v652 = vld [vmem:[%s1 + $0x1380] sm:$0xff]
  %v653 = vld [vmem:[%s1 + $0x1388] sm:$0xff]
  %v654 = vld [vmem:[%s1 + $0x1390] sm:$0xff]
  %v655 = vld [vmem:[%s1 + $0x1398] sm:$0xff]
  %v656 = vld [vmem:[%s1 + $0x13a0] sm:$0xff]
  %v657 = vld [vmem:[%s1 + $0x13a8] sm:$0xff]
  %v658 = vld [vmem:[%s1 + $0x13b0] sm:$0xff]
  %v659 = vld [vmem:[%s1 + $0x13b8] sm:$0xff]
  %v660 = vld [vmem:[%s1 + $0x13c0] sm:$0xff]
  %v661 = vld [vmem:[%s1 + $0x13c8] sm:$0xff]
  %v662 = vld [vmem:[%s1 + $0x13d0] sm:$0xff]
  %v663 = vld [vmem:[%s1 + $0x13d8] sm:$0xff]
  %v664 = vld [vmem:[%s1 + $0x13e0] sm:$0xff]
  %v665 = vld [vmem:[%s1 + $0x13e8] sm:$0xff]
  %v666 = vld [vmem:[%s1 + $0x13f0] sm:$0xff]
  %v667 = vld [vmem:[%s1 + $0x13f8] sm:$0xff]
  %v668 = vld [vmem:[%s1 + $0x1400] sm:$0xff]
  %v669 = vld [vmem:[%s1 + $0x1408] sm:$0xff]
  %v670 = vld [vmem:[%s1 + $0x1410] sm:$0xff]
  %v671 = vld [vmem:[%s1 + $0x1418] sm:$0xff]
  %v672 = vld [vmem:[%s1 + $0x1420] sm:$0xff]
  %v673 = vld [vmem:[%s1 + $0x1428] sm:$0xff]
  %v674 = vld [vmem:[%s1 + $0x1430] sm:$0xff]
  %v675 = vld [vmem:[%s1 + $0x1438] sm:$0xff]
  %v676 = vld [vmem:[%s1 + $0x1440] sm:$0xff]
  %v677 = vld [vmem:[%s1 + $0x1448] sm:$0xff]
  %v678 = vld [vmem:[%s1 + $0x1450] sm:$0xff]
  %v679 = vld [vmem:[%s1 + $0x1458] sm:$0xff]
  %v680 = vld [vmem:[%s1 + $0x1460] sm:$0xff]
  %v681 = vld [vmem:[%s1 + $0x1468] sm:$0xff]
  %v682 = vld [vmem:[%s1 + $0x1470] sm:$0xff]
  %v683 = vld [vmem:[%s1 + $0x1478] sm:$0xff]
  %v684 = vld [vmem:[%s1 + $0x1480] sm:$0xff]
  %v685 = vld [vmem:[%s1 + $0x1488] sm:$0xff]
  %v686 = vld [vmem:[%s1 + $0x1490] sm:$0xff]
  %v687 = vld [vmem:[%s1 + $0x1498] sm:$0xff]
  %v688 = vld [vmem:[%s1 + $0x14a0] sm:$0xff]
  %v689 = vld [vmem:[%s1 + $0x14a8] sm:$0xff]
  %v690 = vld [vmem:[%s1 + $0x14b0] sm:$0xff]
  %v691 = vld [vmem:[%s1 + $0x14b8] sm:$0xff]
  %v692 = vld [vmem:[%s1 + $0x14c0] sm:$0xff]
  %v693 = vld [vmem:[%s1 + $0x14c8] sm:$0xff]
  %v694 = vld [vmem:[%s1 + $0x14d0] sm:$0xff]
  %v695 = vld [vmem:[%s1 + $0x14d8] sm:$0xff]
  %v696 = vld [vmem:[%s1 + $0x14e0] sm:$0xff]
  %v697 = vld [vmem:[%s1 + $0x14e8] sm:$0xff]
  %v698 = vld [vmem:[%s1 + $0x14f0] sm:$0xff]
  %v699 = vld [vmem:[%s1 + $0x14f8] sm:$0xff]
  %v700 = vld [vmem:[%s1 + $0x1500] sm:$0xff]
  %v701 = vld [vmem:[%s1 + $0x1508] sm:$0xff]
  %v702 = vld [vmem:[%s1 + $0x1510] sm:$0xff]
  %v703 = vld [vmem:[%s1 + $0x1518] sm:$0xff]
  %v704 = vld [vmem:[%s1 + $0x1520] sm:$0xff]
  %v705 = vld [vmem:[%s1 + $0x1528] sm:$0xff]
  %v706 = vld [vmem:[%s1 + $0x1530] sm:$0xff]
  %v707 = vld [vmem:[%s1 + $0x1538] sm:$0xff]
  %v708 = vld [vmem:[%s1 + $0x1540] sm:$0xff]
  %v709 = vld [vmem:[%s1 + $0x1548] sm:$0xff]
  %v710 = vld [vmem:[%s1 + $0x1550] sm:$0xff]
  %v711 = vld [vmem:[%s1 + $0x1558] sm:$0xff]
  %v712 = vld [vmem:[%s1 + $0x1560] sm:$0xff]
  %v713 = vld [vmem:[%s1 + $0x1568] sm:$0xff]
  %v714 = vld [vmem:[%s1 + $0x1570] sm:$0xff]
  %v715 = vld [vmem:[%s1 + $0x1578] sm:$0xff]
  %v716 = vld [vmem:[%s1 + $0x1580] sm:$0xff]
  %v717 = vld [vmem:[%s1 + $0x1588] sm:$0xff]
  %v718 = vld [vmem:[%s1 + $0x1590] sm:$0xff]
  %v719 = vld [vmem:[%s1 + $0x1598] sm:$0xff]
  %v720 = vld [vmem:[%s1 + $0x15a0] sm:$0xff]
  %v721 = vld [vmem:[%s1 + $0x15a8] sm:$0xff]
  %v722 = vld [vmem:[%s1 + $0x15b0] sm:$0xff]
  %v723 = vld [vmem:[%s1 + $0x15b8] sm:$0xff]
  %v724 = vld [vmem:[%s1 + $0x15c0] sm:$0xff]
  %v725 = vld [vmem:[%s1 + $0x15c8] sm:$0xff]
  %v726 = vld [vmem:[%s1 + $0x15d0] sm:$0xff]
  %v727 = vld [vmem:[%s1 + $0x15d8] sm:$0xff]
  %v728 = vld [vmem:[%s1 + $0x15e0] sm:$0xff]
  %v729 = vld [vmem:[%s1 + $0x15e8] sm:$0xff]
  %v730 = vld [vmem:[%s1 + $0x15f0] sm:$0xff]
  %v731 = vld [vmem:[%s1 + $0x15f8] sm:$0xff]
  %v732 = vld [vmem:[%s1 + $0x1600] sm:$0xff]
  %v733 = vld [vmem:[%s1 + $0x1608] sm:$0xff]
  %v734 = vld [vmem:[%s1 + $0x1610] sm:$0xff]
  %v735 = vld [vmem:[%s1 + $0x1618] sm:$0xff]
  %v736 = vld [vmem:[%s1 + $0x1620] sm:$0xff]
  %v737 = vld [vmem:[%s1 + $0x1628] sm:$0xff]
  %v738 = vld [vmem:[%s1 + $0x1630] sm:$0xff]
  %v739 = vld [vmem:[%s1 + $0x1638] sm:$0xff]
  %v740 = vld [vmem:[%s1 + $0x1640] sm:$0xff]
  %v741 = vld [vmem:[%s1 + $0x1648] sm:$0xff]
  %v742 = vld [vmem:[%s1 + $0x1650] sm:$0xff]
  %v743 = vld [vmem:[%s1 + $0x1658] sm:$0xff]
  %v744 = vld [vmem:[%s1 + $0x1660] sm:$0xff]
  %v745 = vld [vmem:[%s1 + $0x1668] sm:$0xff]
  %v746 = vld [vmem:[%s1 + $0x1670] sm:$0xff]
  %v747 = vld [vmem:[%s1 + $0x1678] sm:$0xff]
  %v748 = vld [vmem:[%s1 + $0x1680] sm:$0xff]
  %v749 = vld [vmem:[%s1 + $0x1688] sm:$0xff]
  %v750 = vld [vmem:[%s1 + $0x1690] sm:$0xff]
  %v751 = vld [vmem:[%s1 + $0x1698] sm:$0xff]
  %v752 = vld [vmem:[%s1 + $0x16a0] sm:$0xff]
  %v753 = vld [vmem:[%s1 + $0x16a8] sm:$0xff]
  %v754 = vld [vmem:[%s1 + $0x16b0] sm:$0xff]
  %v755 = vld [vmem:[%s1 + $0x16b8] sm:$0xff]
  %v756 = vld [vmem:[%s1 + $0x16c0] sm:$0xff]
  %v757 = vld [vmem:[%s1 + $0x16c8] sm:$0xff]
  %v758 = vld [vmem:[%s1 + $0x16d0] sm:$0xff]
  %v759 = vld [vmem:[%s1 + $0x16d8] sm:$0xff]
  %v760 = vld [vmem:[%s1 + $0x16e0] sm:$0xff]
  %v761 = vld [vmem:[%s1 + $0x16e8] sm:$0xff]
  %v762 = vld [vmem:[%s1 + $0x16f0] sm:$0xff]
  %v763 = vld [vmem:[%s1 + $0x16f8] sm:$0xff]
  %v764 = vld [vmem:[%s1 + $0x1700] sm:$0xff]
  %v765 = vld [vmem:[%s1 + $0x1708] sm:$0xff]
  %v766 = vld [vmem:[%s1 + $0x1710] sm:$0xff]
  %v767 = vld [vmem:[%s1 + $0x1718] sm:$0xff]
  %v768 = vld [vmem:[%s1 + $0x1720] sm:$0xff]
  %v769 = vld [vmem:[%s1 + $0x1728] sm:$0xff]
  %v770 = vld [vmem:[%s1 + $0x1730] sm:$0xff]
  %v771 = vld [vmem:[%s1 + $0x1738] sm:$0xff]
  %v772 = vld [vmem:[%s1 + $0x1740] sm:$0xff]
  %v773 = vld [vmem:[%s1 + $0x1748] sm:$0xff]
  %v774 = vld [vmem:[%s1 + $0x1750] sm:$0xff]
  %v775 = vld [vmem:[%s1 + $0x1758] sm:$0xff]
  %v776 = vld [vmem:[%s1 + $0x1760] sm:$0xff]
  %v777 = vld [vmem:[%s1 + $0x1768] sm:$0xff]
  %v778 = vld [vmem:[%s1 + $0x1770] sm:$0xff]
  %v779 = vld [vmem:[%s1 + $0x1778] sm:$0xff]
  %v780 = vld [vmem:[%s1 + $0x1780] sm:$0xff]
  %v781 = vld [vmem:[%s1 + $0x1788] sm:$0xff]
  %v782 = vld [vmem:[%s1 + $0x1790] sm:$0xff]
  %v783 = vld [vmem:[%s1 + $0x1798] sm:$0xff]
  %v784 = vld [vmem:[%s1 + $0x17a0] sm:$0xff]
  %v785 = vld [vmem:[%s1 + $0x17a8] sm:$0xff]
  %v786 = vld [vmem:[%s1 + $0x17b0] sm:$0xff]
  %v787 = vld [vmem:[%s1 + $0x17b8] sm:$0xff]
  %v788 = vld [vmem:[%s1 + $0x17c0] sm:$0xff]
  %v789 = vld [vmem:[%s1 + $0x17c8] sm:$0xff]
  %v790 = vld [vmem:[%s1 + $0x17d0] sm:$0xff]
  %v791 = vld [vmem:[%s1 + $0x17d8] sm:$0xff]
  %v792 = vld [vmem:[%s1 + $0x17e0] sm:$0xff]
  %v793 = vld [vmem:[%s1 + $0x17e8] sm:$0xff]
  %v794 = vld [vmem:[%s1 + $0x17f0] sm:$0xff]
  %v795 = vld [vmem:[%s1 + $0x17f8] sm:$0xff]
  %v796 = vld [vmem:[%s1 + $0x1800] sm:$0xff]
  %v797 = vld [vmem:[%s1 + $0x1808] sm:$0xff]
  %v798 = vld [vmem:[%s1 + $0x1810] sm:$0xff]
  %v799 = vld [vmem:[%s1 + $0x1818] sm:$0xff]
  %v800 = vld [vmem:[%s1 + $0x1820] sm:$0xff]
  %v801 = vld [vmem:[%s1 + $0x1828] sm:$0xff]
  %v802 = vld [vmem:[%s1 + $0x1830] sm:$0xff]
  %v803 = vld [vmem:[%s1 + $0x1838] sm:$0xff]
  %v804 = vld [vmem:[%s1 + $0x1840] sm:$0xff]
  %v805 = vld [vmem:[%s1 + $0x1848] sm:$0xff]
  %v806 = vld [vmem:[%s1 + $0x1850] sm:$0xff]
  %v807 = vld [vmem:[%s1 + $0x1858] sm:$0xff]
  %v808 = vld [vmem:[%s1 + $0x1860] sm:$0xff]
  %v809 = vld [vmem:[%s1 + $0x1868] sm:$0xff]
  %v810 = vld [vmem:[%s1 + $0x1870] sm:$0xff]
  %v811 = vld [vmem:[%s1 + $0x1878] sm:$0xff]
  %v812 = vld [vmem:[%s1 + $0x1880] sm:$0xff]
  %v813 = vld [vmem:[%s1 + $0x1888] sm:$0xff]
  %v814 = vld [vmem:[%s1 + $0x1890] sm:$0xff]
  %v815 = vld [vmem:[%s1 + $0x1898] sm:$0xff]
  %v816 = vld [vmem:[%s1 + $0x18a0] sm:$0xff]
  %v817 = vld [vmem:[%s1 + $0x18a8] sm:$0xff]
  %v818 = vld [vmem:[%s1 + $0x18b0] sm:$0xff]
  %v819 = vld [vmem:[%s1 + $0x18b8] sm:$0xff]
  %v820 = vld [vmem:[%s1 + $0x18c0] sm:$0xff]
  %v821 = vld [vmem:[%s1 + $0x18c8] sm:$0xff]
  %v822 = vld [vmem:[%s1 + $0x18d0] sm:$0xff]
  %v823 = vld [vmem:[%s1 + $0x18d8] sm:$0xff]
  %v824 = vld [vmem:[%s1 + $0x18e0] sm:$0xff]
  %v825 = vld [vmem:[%s1 + $0x18e8] sm:$0xff]
  %v826 = vld [vmem:[%s1 + $0x18f0] sm:$0xff]
  %v827 = vld [vmem:[%s1 + $0x18f8] sm:$0xff]
  %v828 = vld [vmem:[%s1 + $0x1900] sm:$0xff]
  %v829 = vld [vmem:[%s1 + $0x1908] sm:$0xff]
  %v830 = vld [vmem:[%s1 + $0x1910] sm:$0xff]
  %v831 = vld [vmem:[%s1 + $0x1918] sm:$0xff]
  %v832 = vld [vmem:[%s1 + $0x1920] sm:$0xff]
  %v833 = vld [vmem:[%s1 + $0x1928] sm:$0xff]
  %v834 = vld [vmem:[%s1 + $0x1930] sm:$0xff]
  %v835 = vld [vmem:[%s1 + $0x1938] sm:$0xff]
  %v836 = vld [vmem:[%s1 + $0x1940] sm:$0xff]
  %v837 = vld [vmem:[%s1 + $0x1948] sm:$0xff]
  %v838 = vld [vmem:[%s1 + $0x1950] sm:$0xff]
  %v839 = vld [vmem:[%s1 + $0x1958] sm:$0xff]
  %v840 = vld [vmem:[%s1 + $0x1960] sm:$0xff]
  %v841 = vld [vmem:[%s1 + $0x1968] sm:$0xff]
  %v842 = vld [vmem:[%s1 + $0x1970] sm:$0xff]
  %v843 = vld [vmem:[%s1 + $0x1978] sm:$0xff]
  %v844 = vld [vmem:[%s1 + $0x1980] sm:$0xff]
  %v845 = vld [vmem:[%s1 + $0x1988] sm:$0xff]
  %v846 = vld [vmem:[%s1 + $0x1990] sm:$0xff]
  %v847 = vld [vmem:[%s1 + $0x1998] sm:$0xff]
  %v848 = vld [vmem:[%s1 + $0x19a0] sm:$0xff]
  %v849 = vld [vmem:[%s1 + $0x19a8] sm:$0xff]
  %v850 = vld [vmem:[%s1 + $0x19b0] sm:$0xff]
  %v851 = vld [vmem:[%s1 + $0x19b8] sm:$0xff]
  %v852 = vld [vmem:[%s1 + $0x19c0] sm:$0xff]
  %v853 = vld [vmem:[%s1 + $0x19c8] sm:$0xff]
  %v854 = vld [vmem:[%s1 + $0x19d0] sm:$0xff]
  %v855 = vld [vmem:[%s1 + $0x19d8] sm:$0xff]
  %v856 = vld [vmem:[%s1 + $0x19e0] sm:$0xff]
  %v857 = vld [vmem:[%s1 + $0x19e8] sm:$0xff]
  %v858 = vld [vmem:[%s1 + $0x19f0] sm:$0xff]
  %v859 = vld [vmem:[%s1 + $0x19f8] sm:$0xff]
  %v860 = vld [vmem:[%s1 + $0x1a00] sm:$0xff]
  %v861 = vld [vmem:[%s1 + $0x1a08] sm:$0xff]
  %v862 = vld [vmem:[%s1 + $0x1a10] sm:$0xff]
  %v863 = vld [vmem:[%s1 + $0x1a18] sm:$0xff]
  %v864 = vld [vmem:[%s1 + $0x1a20] sm:$0xff]
  %v865 = vld [vmem:[%s1 + $0x1a28] sm:$0xff]
  %v866 = vld [vmem:[%s1 + $0x1a30] sm:$0xff]
  %v867 = vld [vmem:[%s1 + $0x1a38] sm:$0xff]
  %v868 = vld [vmem:[%s1 + $0x1a40] sm:$0xff]
  %v869 = vld [vmem:[%s1 + $0x1a48] sm:$0xff]
  %v870 = vld [vmem:[%s1 + $0x1a50] sm:$0xff]
  %v871 = vld [vmem:[%s1 + $0x1a58] sm:$0xff]
  %v872 = vld [vmem:[%s1 + $0x1a60] sm:$0xff]
  %v873 = vld [vmem:[%s1 + $0x1a68] sm:$0xff]
  %v874 = vld [vmem:[%s1 + $0x1a70] sm:$0xff]
  %v875 = vld [vmem:[%s1 + $0x1a78] sm:$0xff]
  %v876 = vld [vmem:[%s1 + $0x1a80] sm:$0xff]
  %v877 = vld [vmem:[%s1 + $0x1a88] sm:$0xff]
  %v878 = vld [vmem:[%s1 + $0x1a90] sm:$0xff]
  %v879 = vld [vmem:[%s1 + $0x1a98] sm:$0xff]
  %v880 = vld [vmem:[%s1 + $0x1aa0] sm:$0xff]
  %v881 = vld [vmem:[%s1 + $0x1aa8] sm:$0xff]
  %v882 = vld [vmem:[%s1 + $0x1ab0] sm:$0xff]
  %v883 = vld [vmem:[%s1 + $0x1ab8] sm:$0xff]
  %v884 = vld [vmem:[%s1 + $0x1ac0] sm:$0xff]
  %v885 = vld [vmem:[%s1 + $0x1ac8] sm:$0xff]
  %v886 = vld [vmem:[%s1 + $0x1ad0] sm:$0xff]
  %v887 = vld [vmem:[%s1 + $0x1ad8] sm:$0xff]
  %v888 = vld [vmem:[%s1 + $0x1ae0] sm:$0xff]
  %v889 = vld [vmem:[%s1 + $0x1ae8] sm:$0xff]
  %v890 = vld [vmem:[%s1 + $0x1af0] sm:$0xff]
  %v891 = vld [vmem:[%s1 + $0x1af8] sm:$0xff]
  %v892 = vld [vmem:[%s1 + $0x1b00] sm:$0xff]
  %v893 = vld [vmem:[%s1 + $0x1b08] sm:$0xff]
  %v894 = vld [vmem:[%s1 + $0x1b10] sm:$0xff]
  %v895 = vld [vmem:[%s1 + $0x1b18] sm:$0xff]
  %v896 = vld [vmem:[%s1 + $0x1b20] sm:$0xff]
  %v897 = vld [vmem:[%s1 + $0x1b28] sm:$0xff]
  %v898 = vld [vmem:[%s1 + $0x1b30] sm:$0xff]
  %v899 = vld [vmem:[%s1 + $0x1b38] sm:$0xff]
  %v900 = vld [vmem:[%s1 + $0x1b40] sm:$0xff]
  %v901 = vld [vmem:[%s1 + $0x1b48] sm:$0xff]
  %v902 = vld [vmem:[%s1 + $0x1b50] sm:$0xff]
  %v903 = vld [vmem:[%s1 + $0x1b58] sm:$0xff]
  %v904 = vld [vmem:[%s1 + $0x1b60] sm:$0xff]
  %v905 = vld [vmem:[%s1 + $0x1b68] sm:$0xff]
  %v906 = vld [vmem:[%s1 + $0x1b70] sm:$0xff]
  %v907 = vld [vmem:[%s1 + $0x1b78] sm:$0xff]
  %v908 = vld [vmem:[%s1 + $0x1b80] sm:$0xff]
  %v909 = vld [vmem:[%s1 + $0x1b88] sm:$0xff]
  %v910 = vld [vmem:[%s1 + $0x1b90] sm:$0xff]
  %v911 = vld [vmem:[%s1 + $0x1b98] sm:$0xff]
  %v912 = vld [vmem:[%s1 + $0x1ba0] sm:$0xff]
  %v913 = vld [vmem:[%s1 + $0x1ba8] sm:$0xff]
  %v914 = vld [vmem:[%s1 + $0x1bb0] sm:$0xff]
  %v915 = vld [vmem:[%s1 + $0x1bb8] sm:$0xff]
  %v916 = vld [vmem:[%s1 + $0x1bc0] sm:$0xff]
  %v917 = vld [vmem:[%s1 + $0x1bc8] sm:$0xff]
  %v918 = vld [vmem:[%s1 + $0x1bd0] sm:$0xff]
  %v919 = vld [vmem:[%s1 + $0x1bd8] sm:$0xff]
  %v920 = vld [vmem:[%s1 + $0x1be0] sm:$0xff]
  %v921 = vld [vmem:[%s1 + $0x1be8] sm:$0xff]
  %v922 = vld [vmem:[%s1 + $0x1bf0] sm:$0xff]
  %v923 = vld [vmem:[%s1 + $0x1bf8] sm:$0xff]
  %v924 = vld [vmem:[%s1 + $0x1c00] sm:$0xff]
  %v925 = vld [vmem:[%s1 + $0x1c08] sm:$0xff]
  %v926 = vld [vmem:[%s1 + $0x1c10] sm:$0xff]
  %v927 = vld [vmem:[%s1 + $0x1c18] sm:$0xff]
  %v928 = vld [vmem:[%s1 + $0x1c20] sm:$0xff]
  %v929 = vld [vmem:[%s1 + $0x1c28] sm:$0xff]
  %v930 = vld [vmem:[%s1 + $0x1c30] sm:$0xff]
  %v931 = vld [vmem:[%s1 + $0x1c38] sm:$0xff]
  %v932 = vld [vmem:[%s1 + $0x1c40] sm:$0xff]
  %v933 = vld [vmem:[%s1 + $0x1c48] sm:$0xff]
  %v934 = vld [vmem:[%s1 + $0x1c50] sm:$0xff]
  %v935 = vld [vmem:[%s1 + $0x1c58] sm:$0xff]
  %v936 = vld [vmem:[%s1 + $0x1c60] sm:$0xff]
  %v937 = vld [vmem:[%s1 + $0x1c68] sm:$0xff]
  %v938 = vld [vmem:[%s1 + $0x1c70] sm:$0xff]
  %v939 = vld [vmem:[%s1 + $0x1c78] sm:$0xff]
  %v940 = vld [vmem:[%s1 + $0x1c80] sm:$0xff]
  %v941 = vld [vmem:[%s1 + $0x1c88] sm:$0xff]
  %v942 = vld [vmem:[%s1 + $0x1c90] sm:$0xff]
  %v943 = vld [vmem:[%s1 + $0x1c98] sm:$0xff]
  %v944 = vld [vmem:[%s1 + $0x1ca0] sm:$0xff]
  %v945 = vld [vmem:[%s1 + $0x1ca8] sm:$0xff]
  %v946 = vld [vmem:[%s1 + $0x1cb0] sm:$0xff]
  %v947 = vld [vmem:[%s1 + $0x1cb8] sm:$0xff]
  %v948 = vld [vmem:[%s1 + $0x1cc0] sm:$0xff]
  %v949 = vld [vmem:[%s1 + $0x1cc8] sm:$0xff]
  %v950 = vld [vmem:[%s1 + $0x1cd0] sm:$0xff]
  %v951 = vld [vmem:[%s1 + $0x1cd8] sm:$0xff]
  %v952 = vld [vmem:[%s1 + $0x1ce0] sm:$0xff]
  %v953 = vld [vmem:[%s1 + $0x1ce8] sm:$0xff]
  %v954 = vld [vmem:[%s1 + $0x1cf0] sm:$0xff]
  %v955 = vld [vmem:[%s1 + $0x1cf8] sm:$0xff]
  %v956 = vld [vmem:[%s1 + $0x1d00] sm:$0xff]
  %v957 = vld [vmem:[%s1 + $0x1d08] sm:$0xff]
  %v958 = vld [vmem:[%s1 + $0x1d10] sm:$0xff]
  %v959 = vld [vmem:[%s1 + $0x1d18] sm:$0xff]
  %v960 = vld [vmem:[%s1 + $0x1d20] sm:$0xff]
  %v961 = vld [vmem:[%s1 + $0x1d28] sm:$0xff]
  %v962 = vld [vmem:[%s1 + $0x1d30] sm:$0xff]
  %v963 = vld [vmem:[%s1 + $0x1d38] sm:$0xff]
  %v964 = vld [vmem:[%s1 + $0x1d40] sm:$0xff]
  %v965 = vld [vmem:[%s1 + $0x1d48] sm:$0xff]
  %v966 = vld [vmem:[%s1 + $0x1d50] sm:$0xff]
  %v967 = vld [vmem:[%s1 + $0x1d58] sm:$0xff]
  %v968 = vld [vmem:[%s1 + $0x1d60] sm:$0xff]
  %v969 = vld [vmem:[%s1 + $0x1d68] sm:$0xff]
  %v970 = vld [vmem:[%s1 + $0x1d70] sm:$0xff]
  %v971 = vld [vmem:[%s1 + $0x1d78] sm:$0xff]
  %v972 = vld [vmem:[%s1 + $0x1d80] sm:$0xff]
  %v973 = vld [vmem:[%s1 + $0x1d88] sm:$0xff]
  %v974 = vld [vmem:[%s1 + $0x1d90] sm:$0xff]
  %v975 = vld [vmem:[%s1 + $0x1d98] sm:$0xff]
  %v976 = vld [vmem:[%s1 + $0x1da0] sm:$0xff]
  %v977 = vld [vmem:[%s1 + $0x1da8] sm:$0xff]
  %v978 = vld [vmem:[%s1 + $0x1db0] sm:$0xff]
  %v979 = vld [vmem:[%s1 + $0x1db8] sm:$0xff]
  %v980 = vld [vmem:[%s1 + $0x1dc0] sm:$0xff]
  %v981 = vld [vmem:[%s1 + $0x1dc8] sm:$0xff]
  %v982 = vld [vmem:[%s1 + $0x1dd0] sm:$0xff]
  %v983 = vld [vmem:[%s1 + $0x1dd8] sm:$0xff]
  %v984 = vld [vmem:[%s1 + $0x1de0] sm:$0xff]
  %v985 = vld [vmem:[%s1 + $0x1de8] sm:$0xff]
  %v986 = vld [vmem:[%s1 + $0x1df0] sm:$0xff]
  %v987 = vld [vmem:[%s1 + $0x1df8] sm:$0xff]
  %v988 = vld [vmem:[%s1 + $0x1e00] sm:$0xff]
  %v989 = vld [vmem:[%s1 + $0x1e08] sm:$0xff]
  %v990 = vld [vmem:[%s1 + $0x1e10] sm:$0xff]
  %v991 = vld [vmem:[%s1 + $0x1e18] sm:$0xff]
  %v992 = vld [vmem:[%s1 + $0x1e20] sm:$0xff]
  %v993 = vld [vmem:[%s1 + $0x1e28] sm:$0xff]
  %v994 = vld [vmem:[%s1 + $0x1e30] sm:$0xff]
  %v995 = vld [vmem:[%s1 + $0x1e38] sm:$0xff]
  %v996 = vld [vmem:[%s1 + $0x1e40] sm:$0xff]
  %v997 = vld [vmem:[%s1 + $0x1e48] sm:$0xff]
  %v998 = vld [vmem:[%s1 + $0x1e50] sm:$0xff]
  %v999 = vld [vmem:[%s1 + $0x1e58] sm:$0xff]
  %v1000 = vld [vmem:[%s1 + $0x1e60] sm:$0xff]
  %v1001 = vld [vmem:[%s1 + $0x1e68] sm:$0xff]
  %v1002 = vld [vmem:[%s1 + $0x1e70] sm:$0xff]
  %v1003 = vld [vmem:[%s1 + $0x1e78] sm:$0xff]
  %v1004 = vld [vmem:[%s1 + $0x1e80] sm:$0xff]
  %v1005 = vld [vmem:[%s1 + $0x1e88] sm:$0xff]
  %v1006 = vld [vmem:[%s1 + $0x1e90] sm:$0xff]
  %v1007 = vld [vmem:[%s1 + $0x1e98] sm:$0xff]
  %v1008 = vld [vmem:[%s1 + $0x1ea0] sm:$0xff]
  %v1009 = vld [vmem:[%s1 + $0x1ea8] sm:$0xff]
  %v1010 = vld [vmem:[%s1 + $0x1eb0] sm:$0xff]
  %v1011 = vld [vmem:[%s1 + $0x1eb8] sm:$0xff]
  %v1012 = vld [vmem:[%s1 + $0x1ec0] sm:$0xff]
  %v1013 = vld [vmem:[%s1 + $0x1ec8] sm:$0xff]
  %v1014 = vld [vmem:[%s1 + $0x1ed0] sm:$0xff]
  %v1015 = vld [vmem:[%s1 + $0x1ed8] sm:$0xff]
  %v1016 = vld [vmem:[%s1 + $0x1ee0] sm:$0xff]
  %v1017 = vld [vmem:[%s1 + $0x1ee8] sm:$0xff]
  %v1018 = vld [vmem:[%s1 + $0x1ef0] sm:$0xff]
  %v1019 = vld [vmem:[%s1 + $0x1ef8] sm:$0xff]
  %v1020 = vld [vmem:[%s1 + $0x1f00] sm:$0xff]
  %v1021 = vld [vmem:[%s1 + $0x1f08] sm:$0xff]
  %v1022 = vld [vmem:[%s1 + $0x1f10] sm:$0xff]
  %v1023 = vld [vmem:[%s1 + $0x1f18] sm:$0xff]
  %v1024 = vld [vmem:[%s1 + $0x1f20] sm:$0xff]
  %v1025 = vld [vmem:[%s1 + $0x1f28] sm:$0xff]
  %v1026 = vld [vmem:[%s1 + $0x1f30] sm:$0xff]
  %v1027 = vld [vmem:[%s1 + $0x1f38] sm:$0xff]
  %v1028 = vld [vmem:[%s1 + $0x1f40] sm:$0xff]
  %v1029 = vld [vmem:[%s1 + $0x1f48] sm:$0xff]
  %v1030 = vld [vmem:[%s1 + $0x1f50] sm:$0xff]
  %v1031 = vld [vmem:[%s1 + $0x1f58] sm:$0xff]
  %v1032 = vld [vmem:[%s1 + $0x1f60] sm:$0xff]
  %v1033 = vld [vmem:[%s1 + $0x1f68] sm:$0xff]
  %v1034 = vld [vmem:[%s1 + $0x1f70] sm:$0xff]
  %v1035 = vld [vmem:[%s1 + $0x1f78] sm:$0xff]
  %v1036 = vld [vmem:[%s1 + $0x1f80] sm:$0xff]
  %v1037 = vld [vmem:[%s1 + $0x1f88] sm:$0xff]
  %v1038 = vld [vmem:[%s1 + $0x1f90] sm:$0xff]
  %v1039 = vld [vmem:[%s1 + $0x1f98] sm:$0xff]
  %v1040 = vld [vmem:[%s1 + $0x1fa0] sm:$0xff]
  %v1041 = vld [vmem:[%s1 + $0x1fa8] sm:$0xff]
  %v1042 = vld [vmem:[%s1 + $0x1fb0] sm:$0xff]
  %v1043 = vld [vmem:[%s1 + $0x1fb8] sm:$0xff]
  %v1044 = vld [vmem:[%s1 + $0x1fc0] sm:$0xff]
  %v1045 = vld [vmem:[%s1 + $0x1fc8] sm:$0xff]
  %v1046 = vld [vmem:[%s1 + $0x1fd0] sm:$0xff]
  %v1047 = vld [vmem:[%s1 + $0x1fd8] sm:$0xff]
  %v1048 = vld [vmem:[%s1 + $0x1fe0] sm:$0xff]
  %v1049 = vld [vmem:[%s1 + $0x1fe8] sm:$0xff]
  %v1050 = vld [vmem:[%s1 + $0x1ff0] sm:$0xff]
  %v1051 = vld [vmem:[%s1 + $0x1ff8] sm:$0xff]
  %1053 = vst [vmem:[#allocation1] ss:$9 sm:$0xff] %v24
  %v1054 = vld [vmem:[#allocation1] sm:$0xff]
  %v1055 = vld [vmem:[#allocation1 + $0x9] sm:$0xff]
  %v1056 = vld [vmem:[#allocation1 + $0x12] sm:$0xff]
  %v1057 = vld [vmem:[#allocation1 + $0x1b] sm:$0xff]
  %v1058 = vld [vmem:[#allocation1 + $0x24] sm:$0xff]
  %v1059 = vld [vmem:[#allocation1 + $0x2d] sm:$0xff]
  %v1060 = vld [vmem:[#allocation1 + $0x36] sm:$0xff]
  %v1061 = vld [vmem:[#allocation1 + $0x3f] sm:$0xff]
  %1063 = vst [vmem:[#allocation1] ss:$9 sm:$0xff] %v25
  %v1064 = vld [vmem:[#allocation1] sm:$0xff]
  %v1065 = vld [vmem:[#allocation1 + $0x9] sm:$0xff]
  %v1066 = vld [vmem:[#allocation1 + $0x12] sm:$0xff]
  %v1067 = vld [vmem:[#allocation1 + $0x1b] sm:$0xff]
  %v1068 = vld [vmem:[#allocation1 + $0x24] sm:$0xff]
  %v1069 = vld [vmem:[#allocation1 + $0x2d] sm:$0xff]
  %v1070 = vld [vmem:[#allocation1 + $0x36] sm:$0xff]
  %v1071 = vld [vmem:[#allocation1 + $0x3f] sm:$0xff]
  %1073 = vst [vmem:[#allocation1] ss:$9 sm:$0xff] %v26
  %v1074 = vld [vmem:[#allocation1] sm:$0xff]
  %v1075 = vld [vmem:[#allocation1 + $0x9] sm:$0xff]
  %v1076 = vld [vmem:[#allocation1 + $0x12] sm:$0xff]
  %v1077 = vld [vmem:[#allocation1 + $0x1b] sm:$0xff]
  %v1078 = vld [vmem:[#allocation1 + $0x24] sm:$0xff]
  %v1079 = vld [vmem:[#allocation1 + $0x2d] sm:$0xff]
  %v1080 = vld [vmem:[#allocation1 + $0x36] sm:$0xff]
  %v1081 = vld [vmem:[#allocation1 + $0x3f] sm:$0xff]
  %1083 = vst [vmem:[#allocation1] ss:$9 sm:$0xff] %v27
  %v1084 = vld [vmem:[#allocation1] sm:$0xff]
  %v1085 = vld [vmem:[#allocation1 + $0x9] sm:$0xff]
  %v1086 = vld [vmem:[#allocation1 + $0x12] sm:$0xff]
  %v1087 = vld [vmem:[#allocation1 + $0x1b] sm:$0xff]
  %v1088 = vld [vmem:[#allocation1 + $0x24] sm:$0xff]
  %v1089 = vld [vmem:[#allocation1 + $0x2d] sm:$0xff]
  %v1090 = vld [vmem:[#allocation1 + $0x36] sm:$0xff]
  %v1091 = vld [vmem:[#allocation1 + $0x3f] sm:$0xff]
  %v2148 = vunpack.c.l.b16 %v28
  %v2149 = vunpack.c.h.b16 %v28
  %v2150 = vunpack.c.l.b16 %v29
  %v2151 = vunpack.c.h.b16 %v29
  %v2152 = vunpack.c.l.b16 %v30
  %v2153 = vunpack.c.h.b16 %v30
  %v2154 = vunpack.c.l.b16 %v31
  %v2155 = vunpack.c.h.b16 %v31
  %v2156 = vunpack.c.l.b16 %v32
  %v2157 = vunpack.c.h.b16 %v32
  %v2158 = vunpack.c.l.b16 %v33
  %v2159 = vunpack.c.h.b16 %v33
  %v2160 = vunpack.c.l.b16 %v34
  %v2161 = vunpack.c.h.b16 %v34
  %v2162 = vunpack.c.l.b16 %v35
  %v2163 = vunpack.c.h.b16 %v35
  %v2164 = vunpack.c.l.b16 %v36
  %v2165 = vunpack.c.h.b16 %v36
  %v2166 = vunpack.c.l.b16 %v37
  %v2167 = vunpack.c.h.b16 %v37
  %v2168 = vunpack.c.l.b16 %v38
  %v2169 = vunpack.c.h.b16 %v38
  %v2170 = vunpack.c.l.b16 %v39
  %v2171 = vunpack.c.h.b16 %v39
  %v2172 = vunpack.c.l.b16 %v40
  %v2173 = vunpack.c.h.b16 %v40
  %v2174 = vunpack.c.l.b16 %v41
  %v2175 = vunpack.c.h.b16 %v41
  %v2176 = vunpack.c.l.b16 %v42
  %v2177 = vunpack.c.h.b16 %v42
  %v2178 = vunpack.c.l.b16 %v43
  %v2179 = vunpack.c.h.b16 %v43
  %v2180 = vunpack.c.l.b16 %v44
  %v2181 = vunpack.c.h.b16 %v44
  %v2182 = vunpack.c.l.b16 %v45
  %v2183 = vunpack.c.h.b16 %v45
  %v2184 = vunpack.c.l.b16 %v46
  %v2185 = vunpack.c.h.b16 %v46
  %v2186 = vunpack.c.l.b16 %v47
  %v2187 = vunpack.c.h.b16 %v47
  %v2188 = vunpack.c.l.b16 %v48
  %v2189 = vunpack.c.h.b16 %v48
  %v2190 = vunpack.c.l.b16 %v49
  %v2191 = vunpack.c.h.b16 %v49
  %v2192 = vunpack.c.l.b16 %v50
  %v2193 = vunpack.c.h.b16 %v50
  %v2194 = vunpack.c.l.b16 %v51
  %v2195 = vunpack.c.h.b16 %v51
  %v2196 = vunpack.c.l.b16 %v52
  %v2197 = vunpack.c.h.b16 %v52
  %v2198 = vunpack.c.l.b16 %v53
  %v2199 = vunpack.c.h.b16 %v53
  %v2200 = vunpack.c.l.b16 %v54
  %v2201 = vunpack.c.h.b16 %v54
  %v2202 = vunpack.c.l.b16 %v55
  %v2203 = vunpack.c.h.b16 %v55
  %v2204 = vunpack.c.l.b16 %v56
  %v2205 = vunpack.c.h.b16 %v56
  %v2206 = vunpack.c.l.b16 %v57
  %v2207 = vunpack.c.h.b16 %v57
  %v2208 = vunpack.c.l.b16 %v58
  %v2209 = vunpack.c.h.b16 %v58
  %v2210 = vunpack.c.l.b16 %v59
  %v2211 = vunpack.c.h.b16 %v59
  %v2212 = vunpack.c.l.b16 %v60
  %v2213 = vunpack.c.h.b16 %v60
  %v2214 = vunpack.c.l.b16 %v61
  %v2215 = vunpack.c.h.b16 %v61
  %v2216 = vunpack.c.l.b16 %v62
  %v2217 = vunpack.c.h.b16 %v62
  %v2218 = vunpack.c.l.b16 %v63
  %v2219 = vunpack.c.h.b16 %v63
  %v2220 = vunpack.c.l.b16 %v64
  %v2221 = vunpack.c.h.b16 %v64
  %v2222 = vunpack.c.l.b16 %v65
  %v2223 = vunpack.c.h.b16 %v65
  %v2224 = vunpack.c.l.b16 %v66
  %v2225 = vunpack.c.h.b16 %v66
  %v2226 = vunpack.c.l.b16 %v67
  %v2227 = vunpack.c.h.b16 %v67
  %v2228 = vunpack.c.l.b16 %v68
  %v2229 = vunpack.c.h.b16 %v68
  %v2230 = vunpack.c.l.b16 %v69
  %v2231 = vunpack.c.h.b16 %v69
  %v2232 = vunpack.c.l.b16 %v70
  %v2233 = vunpack.c.h.b16 %v70
  %v2234 = vunpack.c.l.b16 %v71
  %v2235 = vunpack.c.h.b16 %v71
  %v2236 = vunpack.c.l.b16 %v72
  %v2237 = vunpack.c.h.b16 %v72
  %v2238 = vunpack.c.l.b16 %v73
  %v2239 = vunpack.c.h.b16 %v73
  %v2240 = vunpack.c.l.b16 %v74
  %v2241 = vunpack.c.h.b16 %v74
  %v2242 = vunpack.c.l.b16 %v75
  %v2243 = vunpack.c.h.b16 %v75
  %v2244 = vunpack.c.l.b16 %v76
  %v2245 = vunpack.c.h.b16 %v76
  %v2246 = vunpack.c.l.b16 %v77
  %v2247 = vunpack.c.h.b16 %v77
  %v2248 = vunpack.c.l.b16 %v78
  %v2249 = vunpack.c.h.b16 %v78
  %v2250 = vunpack.c.l.b16 %v79
  %v2251 = vunpack.c.h.b16 %v79
  %v2252 = vunpack.c.l.b16 %v80
  %v2253 = vunpack.c.h.b16 %v80
  %v2254 = vunpack.c.l.b16 %v81
  %v2255 = vunpack.c.h.b16 %v81
  %v2256 = vunpack.c.l.b16 %v82
  %v2257 = vunpack.c.h.b16 %v82
  %v2258 = vunpack.c.l.b16 %v83
  %v2259 = vunpack.c.h.b16 %v83
  %v2260 = vunpack.c.l.b16 %v84
  %v2261 = vunpack.c.h.b16 %v84
  %v2262 = vunpack.c.l.b16 %v85
  %v2263 = vunpack.c.h.b16 %v85
  %v2264 = vunpack.c.l.b16 %v86
  %v2265 = vunpack.c.h.b16 %v86
  %v2266 = vunpack.c.l.b16 %v87
  %v2267 = vunpack.c.h.b16 %v87
  %v2268 = vunpack.c.l.b16 %v88
  %v2269 = vunpack.c.h.b16 %v88
  %v2270 = vunpack.c.l.b16 %v89
  %v2271 = vunpack.c.h.b16 %v89
  %v2272 = vunpack.c.l.b16 %v90
  %v2273 = vunpack.c.h.b16 %v90
  %v2274 = vunpack.c.l.b16 %v91
  %v2275 = vunpack.c.h.b16 %v91
  %v2276 = vunpack.c.l.b16 %v92
  %v2277 = vunpack.c.h.b16 %v92
  %v2278 = vunpack.c.l.b16 %v93
  %v2279 = vunpack.c.h.b16 %v93
  %v2280 = vunpack.c.l.b16 %v94
  %v2281 = vunpack.c.h.b16 %v94
  %v2282 = vunpack.c.l.b16 %v95
  %v2283 = vunpack.c.h.b16 %v95
  %v2284 = vunpack.c.l.b16 %v96
  %v2285 = vunpack.c.h.b16 %v96
  %v2286 = vunpack.c.l.b16 %v97
  %v2287 = vunpack.c.h.b16 %v97
  %v2288 = vunpack.c.l.b16 %v98
  %v2289 = vunpack.c.h.b16 %v98
  %v2290 = vunpack.c.l.b16 %v99
  %v2291 = vunpack.c.h.b16 %v99
  %v2292 = vunpack.c.l.b16 %v100
  %v2293 = vunpack.c.h.b16 %v100
  %v2294 = vunpack.c.l.b16 %v101
  %v2295 = vunpack.c.h.b16 %v101
  %v2296 = vunpack.c.l.b16 %v102
  %v2297 = vunpack.c.h.b16 %v102
  %v2298 = vunpack.c.l.b16 %v103
  %v2299 = vunpack.c.h.b16 %v103
  %v2300 = vunpack.c.l.b16 %v104
  %v2301 = vunpack.c.h.b16 %v104
  %v2302 = vunpack.c.l.b16 %v105
  %v2303 = vunpack.c.h.b16 %v105
  %v2304 = vunpack.c.l.b16 %v106
  %v2305 = vunpack.c.h.b16 %v106
  %v2306 = vunpack.c.l.b16 %v107
  %v2307 = vunpack.c.h.b16 %v107
  %v2308 = vunpack.c.l.b16 %v108
  %v2309 = vunpack.c.h.b16 %v108
  %v2310 = vunpack.c.l.b16 %v109
  %v2311 = vunpack.c.h.b16 %v109
  %v2312 = vunpack.c.l.b16 %v110
  %v2313 = vunpack.c.h.b16 %v110
  %v2314 = vunpack.c.l.b16 %v111
  %v2315 = vunpack.c.h.b16 %v111
  %v2316 = vunpack.c.l.b16 %v112
  %v2317 = vunpack.c.h.b16 %v112
  %v2318 = vunpack.c.l.b16 %v113
  %v2319 = vunpack.c.h.b16 %v113
  %v2320 = vunpack.c.l.b16 %v114
  %v2321 = vunpack.c.h.b16 %v114
  %v2322 = vunpack.c.l.b16 %v115
  %v2323 = vunpack.c.h.b16 %v115
  %v2324 = vunpack.c.l.b16 %v116
  %v2325 = vunpack.c.h.b16 %v116
  %v2326 = vunpack.c.l.b16 %v117
  %v2327 = vunpack.c.h.b16 %v117
  %v2328 = vunpack.c.l.b16 %v118
  %v2329 = vunpack.c.h.b16 %v118
  %v2330 = vunpack.c.l.b16 %v119
  %v2331 = vunpack.c.h.b16 %v119
  %v2332 = vunpack.c.l.b16 %v120
  %v2333 = vunpack.c.h.b16 %v120
  %v2334 = vunpack.c.l.b16 %v121
  %v2335 = vunpack.c.h.b16 %v121
  %v2336 = vunpack.c.l.b16 %v122
  %v2337 = vunpack.c.h.b16 %v122
  %v2338 = vunpack.c.l.b16 %v123
  %v2339 = vunpack.c.h.b16 %v123
  %v2340 = vunpack.c.l.b16 %v124
  %v2341 = vunpack.c.h.b16 %v124
  %v2342 = vunpack.c.l.b16 %v125
  %v2343 = vunpack.c.h.b16 %v125
  %v2344 = vunpack.c.l.b16 %v126
  %v2345 = vunpack.c.h.b16 %v126
  %v2346 = vunpack.c.l.b16 %v127
  %v2347 = vunpack.c.h.b16 %v127
  %v2348 = vunpack.c.l.b16 %v128
  %v2349 = vunpack.c.h.b16 %v128
  %v2350 = vunpack.c.l.b16 %v129
  %v2351 = vunpack.c.h.b16 %v129
  %v2352 = vunpack.c.l.b16 %v130
  %v2353 = vunpack.c.h.b16 %v130
  %v2354 = vunpack.c.l.b16 %v131
  %v2355 = vunpack.c.h.b16 %v131
  %v2356 = vunpack.c.l.b16 %v132
  %v2357 = vunpack.c.h.b16 %v132
  %v2358 = vunpack.c.l.b16 %v133
  %v2359 = vunpack.c.h.b16 %v133
  %v2360 = vunpack.c.l.b16 %v134
  %v2361 = vunpack.c.h.b16 %v134
  %v2362 = vunpack.c.l.b16 %v135
  %v2363 = vunpack.c.h.b16 %v135
  %v2364 = vunpack.c.l.b16 %v136
  %v2365 = vunpack.c.h.b16 %v136
  %v2366 = vunpack.c.l.b16 %v137
  %v2367 = vunpack.c.h.b16 %v137
  %v2368 = vunpack.c.l.b16 %v138
  %v2369 = vunpack.c.h.b16 %v138
  %v2370 = vunpack.c.l.b16 %v139
  %v2371 = vunpack.c.h.b16 %v139
  %v2372 = vunpack.c.l.b16 %v140
  %v2373 = vunpack.c.h.b16 %v140
  %v2374 = vunpack.c.l.b16 %v141
  %v2375 = vunpack.c.h.b16 %v141
  %v2376 = vunpack.c.l.b16 %v142
  %v2377 = vunpack.c.h.b16 %v142
  %v2378 = vunpack.c.l.b16 %v143
  %v2379 = vunpack.c.h.b16 %v143
  %v2380 = vunpack.c.l.b16 %v144
  %v2381 = vunpack.c.h.b16 %v144
  %v2382 = vunpack.c.l.b16 %v145
  %v2383 = vunpack.c.h.b16 %v145
  %v2384 = vunpack.c.l.b16 %v146
  %v2385 = vunpack.c.h.b16 %v146
  %v2386 = vunpack.c.l.b16 %v147
  %v2387 = vunpack.c.h.b16 %v147
  %v2388 = vunpack.c.l.b16 %v148
  %v2389 = vunpack.c.h.b16 %v148
  %v2390 = vunpack.c.l.b16 %v149
  %v2391 = vunpack.c.h.b16 %v149
  %v2392 = vunpack.c.l.b16 %v150
  %v2393 = vunpack.c.h.b16 %v150
  %v2394 = vunpack.c.l.b16 %v151
  %v2395 = vunpack.c.h.b16 %v151
  %v2396 = vunpack.c.l.b16 %v152
  %v2397 = vunpack.c.h.b16 %v152
  %v2398 = vunpack.c.l.b16 %v153
  %v2399 = vunpack.c.h.b16 %v153
  %v2400 = vunpack.c.l.b16 %v154
  %v2401 = vunpack.c.h.b16 %v154
  %v2402 = vunpack.c.l.b16 %v155
  %v2403 = vunpack.c.h.b16 %v155
  %v2404 = vunpack.c.l.b16 %v156
  %v2405 = vunpack.c.h.b16 %v156
  %v2406 = vunpack.c.l.b16 %v157
  %v2407 = vunpack.c.h.b16 %v157
  %v2408 = vunpack.c.l.b16 %v158
  %v2409 = vunpack.c.h.b16 %v158
  %v2410 = vunpack.c.l.b16 %v159
  %v2411 = vunpack.c.h.b16 %v159
  %v2412 = vunpack.c.l.b16 %v160
  %v2413 = vunpack.c.h.b16 %v160
  %v2414 = vunpack.c.l.b16 %v161
  %v2415 = vunpack.c.h.b16 %v161
  %v2416 = vunpack.c.l.b16 %v162
  %v2417 = vunpack.c.h.b16 %v162
  %v2418 = vunpack.c.l.b16 %v163
  %v2419 = vunpack.c.h.b16 %v163
  %v2420 = vunpack.c.l.b16 %v164
  %v2421 = vunpack.c.h.b16 %v164
  %v2422 = vunpack.c.l.b16 %v165
  %v2423 = vunpack.c.h.b16 %v165
  %v2424 = vunpack.c.l.b16 %v166
  %v2425 = vunpack.c.h.b16 %v166
  %v2426 = vunpack.c.l.b16 %v167
  %v2427 = vunpack.c.h.b16 %v167
  %v2428 = vunpack.c.l.b16 %v168
  %v2429 = vunpack.c.h.b16 %v168
  %v2430 = vunpack.c.l.b16 %v169
  %v2431 = vunpack.c.h.b16 %v169
  %v2432 = vunpack.c.l.b16 %v170
  %v2433 = vunpack.c.h.b16 %v170
  %v2434 = vunpack.c.l.b16 %v171
  %v2435 = vunpack.c.h.b16 %v171
  %v2436 = vunpack.c.l.b16 %v172
  %v2437 = vunpack.c.h.b16 %v172
  %v2438 = vunpack.c.l.b16 %v173
  %v2439 = vunpack.c.h.b16 %v173
  %v2440 = vunpack.c.l.b16 %v174
  %v2441 = vunpack.c.h.b16 %v174
  %v2442 = vunpack.c.l.b16 %v175
  %v2443 = vunpack.c.h.b16 %v175
  %v2444 = vunpack.c.l.b16 %v176
  %v2445 = vunpack.c.h.b16 %v176
  %v2446 = vunpack.c.l.b16 %v177
  %v2447 = vunpack.c.h.b16 %v177
  %v2448 = vunpack.c.l.b16 %v178
  %v2449 = vunpack.c.h.b16 %v178
  %v2450 = vunpack.c.l.b16 %v179
  %v2451 = vunpack.c.h.b16 %v179
  %v2452 = vunpack.c.l.b16 %v180
  %v2453 = vunpack.c.h.b16 %v180
  %v2454 = vunpack.c.l.b16 %v181
  %v2455 = vunpack.c.h.b16 %v181
  %v2456 = vunpack.c.l.b16 %v182
  %v2457 = vunpack.c.h.b16 %v182
  %v2458 = vunpack.c.l.b16 %v183
  %v2459 = vunpack.c.h.b16 %v183
  %v2460 = vunpack.c.l.b16 %v184
  %v2461 = vunpack.c.h.b16 %v184
  %v2462 = vunpack.c.l.b16 %v185
  %v2463 = vunpack.c.h.b16 %v185
  %v2464 = vunpack.c.l.b16 %v186
  %v2465 = vunpack.c.h.b16 %v186
  %v2466 = vunpack.c.l.b16 %v187
  %v2467 = vunpack.c.h.b16 %v187
  %v2468 = vunpack.c.l.b16 %v188
  %v2469 = vunpack.c.h.b16 %v188
  %v2470 = vunpack.c.l.b16 %v189
  %v2471 = vunpack.c.h.b16 %v189
  %v2472 = vunpack.c.l.b16 %v190
  %v2473 = vunpack.c.h.b16 %v190
  %v2474 = vunpack.c.l.b16 %v191
  %v2475 = vunpack.c.h.b16 %v191
  %v2476 = vunpack.c.l.b16 %v192
  %v2477 = vunpack.c.h.b16 %v192
  %v2478 = vunpack.c.l.b16 %v193
  %v2479 = vunpack.c.h.b16 %v193
  %v2480 = vunpack.c.l.b16 %v194
  %v2481 = vunpack.c.h.b16 %v194
  %v2482 = vunpack.c.l.b16 %v195
  %v2483 = vunpack.c.h.b16 %v195
  %v2484 = vunpack.c.l.b16 %v196
  %v2485 = vunpack.c.h.b16 %v196
  %v2486 = vunpack.c.l.b16 %v197
  %v2487 = vunpack.c.h.b16 %v197
  %v2488 = vunpack.c.l.b16 %v198
  %v2489 = vunpack.c.h.b16 %v198
  %v2490 = vunpack.c.l.b16 %v199
  %v2491 = vunpack.c.h.b16 %v199
  %v2492 = vunpack.c.l.b16 %v200
  %v2493 = vunpack.c.h.b16 %v200
  %v2494 = vunpack.c.l.b16 %v201
  %v2495 = vunpack.c.h.b16 %v201
  %v2496 = vunpack.c.l.b16 %v202
  %v2497 = vunpack.c.h.b16 %v202
  %v2498 = vunpack.c.l.b16 %v203
  %v2499 = vunpack.c.h.b16 %v203
  %v2500 = vunpack.c.l.b16 %v204
  %v2501 = vunpack.c.h.b16 %v204
  %v2502 = vunpack.c.l.b16 %v205
  %v2503 = vunpack.c.h.b16 %v205
  %v2504 = vunpack.c.l.b16 %v206
  %v2505 = vunpack.c.h.b16 %v206
  %v2506 = vunpack.c.l.b16 %v207
  %v2507 = vunpack.c.h.b16 %v207
  %v2508 = vunpack.c.l.b16 %v208
  %v2509 = vunpack.c.h.b16 %v208
  %v2510 = vunpack.c.l.b16 %v209
  %v2511 = vunpack.c.h.b16 %v209
  %v2512 = vunpack.c.l.b16 %v210
  %v2513 = vunpack.c.h.b16 %v210
  %v2514 = vunpack.c.l.b16 %v211
  %v2515 = vunpack.c.h.b16 %v211
  %v2516 = vunpack.c.l.b16 %v212
  %v2517 = vunpack.c.h.b16 %v212
  %v2518 = vunpack.c.l.b16 %v213
  %v2519 = vunpack.c.h.b16 %v213
  %v2520 = vunpack.c.l.b16 %v214
  %v2521 = vunpack.c.h.b16 %v214
  %v2522 = vunpack.c.l.b16 %v215
  %v2523 = vunpack.c.h.b16 %v215
  %v2524 = vunpack.c.l.b16 %v216
  %v2525 = vunpack.c.h.b16 %v216
  %v2526 = vunpack.c.l.b16 %v217
  %v2527 = vunpack.c.h.b16 %v217
  %v2528 = vunpack.c.l.b16 %v218
  %v2529 = vunpack.c.h.b16 %v218
  %v2530 = vunpack.c.l.b16 %v219
  %v2531 = vunpack.c.h.b16 %v219
  %v2532 = vunpack.c.l.b16 %v220
  %v2533 = vunpack.c.h.b16 %v220
  %v2534 = vunpack.c.l.b16 %v221
  %v2535 = vunpack.c.h.b16 %v221
  %v2536 = vunpack.c.l.b16 %v222
  %v2537 = vunpack.c.h.b16 %v222
  %v2538 = vunpack.c.l.b16 %v223
  %v2539 = vunpack.c.h.b16 %v223
  %v2540 = vunpack.c.l.b16 %v224
  %v2541 = vunpack.c.h.b16 %v224
  %v2542 = vunpack.c.l.b16 %v225
  %v2543 = vunpack.c.h.b16 %v225
  %v2544 = vunpack.c.l.b16 %v226
  %v2545 = vunpack.c.h.b16 %v226
  %v2546 = vunpack.c.l.b16 %v227
  %v2547 = vunpack.c.h.b16 %v227
  %v2548 = vunpack.c.l.b16 %v228
  %v2549 = vunpack.c.h.b16 %v228
  %v2550 = vunpack.c.l.b16 %v229
  %v2551 = vunpack.c.h.b16 %v229
  %v2552 = vunpack.c.l.b16 %v230
  %v2553 = vunpack.c.h.b16 %v230
  %v2554 = vunpack.c.l.b16 %v231
  %v2555 = vunpack.c.h.b16 %v231
  %v2556 = vunpack.c.l.b16 %v232
  %v2557 = vunpack.c.h.b16 %v232
  %v2558 = vunpack.c.l.b16 %v233
  %v2559 = vunpack.c.h.b16 %v233
  %v2560 = vunpack.c.l.b16 %v234
  %v2561 = vunpack.c.h.b16 %v234
  %v2562 = vunpack.c.l.b16 %v235
  %v2563 = vunpack.c.h.b16 %v235
  %v2564 = vunpack.c.l.b16 %v236
  %v2565 = vunpack.c.h.b16 %v236
  %v2566 = vunpack.c.l.b16 %v237
  %v2567 = vunpack.c.h.b16 %v237
  %v2568 = vunpack.c.l.b16 %v238
  %v2569 = vunpack.c.h.b16 %v238
  %v2570 = vunpack.c.l.b16 %v239
  %v2571 = vunpack.c.h.b16 %v239
  %v2572 = vunpack.c.l.b16 %v240
  %v2573 = vunpack.c.h.b16 %v240
  %v2574 = vunpack.c.l.b16 %v241
  %v2575 = vunpack.c.h.b16 %v241
  %v2576 = vunpack.c.l.b16 %v242
  %v2577 = vunpack.c.h.b16 %v242
  %v2578 = vunpack.c.l.b16 %v243
  %v2579 = vunpack.c.h.b16 %v243
  %v2580 = vunpack.c.l.b16 %v244
  %v2581 = vunpack.c.h.b16 %v244
  %v2582 = vunpack.c.l.b16 %v245
  %v2583 = vunpack.c.h.b16 %v245
  %v2584 = vunpack.c.l.b16 %v246
  %v2585 = vunpack.c.h.b16 %v246
  %v2586 = vunpack.c.l.b16 %v247
  %v2587 = vunpack.c.h.b16 %v247
  %v2588 = vunpack.c.l.b16 %v248
  %v2589 = vunpack.c.h.b16 %v248
  %v2590 = vunpack.c.l.b16 %v249
  %v2591 = vunpack.c.h.b16 %v249
  %v2592 = vunpack.c.l.b16 %v250
  %v2593 = vunpack.c.h.b16 %v250
  %v2594 = vunpack.c.l.b16 %v251
  %v2595 = vunpack.c.h.b16 %v251
  %v2596 = vunpack.c.l.b16 %v252
  %v2597 = vunpack.c.h.b16 %v252
  %v2598 = vunpack.c.l.b16 %v253
  %v2599 = vunpack.c.h.b16 %v253
  %v2600 = vunpack.c.l.b16 %v254
  %v2601 = vunpack.c.h.b16 %v254
  %v2602 = vunpack.c.l.b16 %v255
  %v2603 = vunpack.c.h.b16 %v255
  %v2604 = vunpack.c.l.b16 %v256
  %v2605 = vunpack.c.h.b16 %v256
  %v2606 = vunpack.c.l.b16 %v257
  %v2607 = vunpack.c.h.b16 %v257
  %v2608 = vunpack.c.l.b16 %v258
  %v2609 = vunpack.c.h.b16 %v258
  %v2610 = vunpack.c.l.b16 %v259
  %v2611 = vunpack.c.h.b16 %v259
  %v2612 = vunpack.c.l.b16 %v260
  %v2613 = vunpack.c.h.b16 %v260
  %v2614 = vunpack.c.l.b16 %v261
  %v2615 = vunpack.c.h.b16 %v261
  %v2616 = vunpack.c.l.b16 %v262
  %v2617 = vunpack.c.h.b16 %v262
  %v2618 = vunpack.c.l.b16 %v263
  %v2619 = vunpack.c.h.b16 %v263
  %v2620 = vunpack.c.l.b16 %v264
  %v2621 = vunpack.c.h.b16 %v264
  %v2622 = vunpack.c.l.b16 %v265
  %v2623 = vunpack.c.h.b16 %v265
  %v2624 = vunpack.c.l.b16 %v266
  %v2625 = vunpack.c.h.b16 %v266
  %v2626 = vunpack.c.l.b16 %v267
  %v2627 = vunpack.c.h.b16 %v267
  %v2628 = vunpack.c.l.b16 %v268
  %v2629 = vunpack.c.h.b16 %v268
  %v2630 = vunpack.c.l.b16 %v269
  %v2631 = vunpack.c.h.b16 %v269
  %v2632 = vunpack.c.l.b16 %v270
  %v2633 = vunpack.c.h.b16 %v270
  %v2634 = vunpack.c.l.b16 %v271
  %v2635 = vunpack.c.h.b16 %v271
  %v2636 = vunpack.c.l.b16 %v272
  %v2637 = vunpack.c.h.b16 %v272
  %v2638 = vunpack.c.l.b16 %v273
  %v2639 = vunpack.c.h.b16 %v273
  %v2640 = vunpack.c.l.b16 %v274
  %v2641 = vunpack.c.h.b16 %v274
  %v2642 = vunpack.c.l.b16 %v275
  %v2643 = vunpack.c.h.b16 %v275
  %v2644 = vunpack.c.l.b16 %v276
  %v2645 = vunpack.c.h.b16 %v276
  %v2646 = vunpack.c.l.b16 %v277
  %v2647 = vunpack.c.h.b16 %v277
  %v2648 = vunpack.c.l.b16 %v278
  %v2649 = vunpack.c.h.b16 %v278
  %v2650 = vunpack.c.l.b16 %v279
  %v2651 = vunpack.c.h.b16 %v279
  %v2652 = vunpack.c.l.b16 %v280
  %v2653 = vunpack.c.h.b16 %v280
  %v2654 = vunpack.c.l.b16 %v281
  %v2655 = vunpack.c.h.b16 %v281
  %v2656 = vunpack.c.l.b16 %v282
  %v2657 = vunpack.c.h.b16 %v282
  %v2658 = vunpack.c.l.b16 %v283
  %v2659 = vunpack.c.h.b16 %v283
  %v2660 = vunpack.c.l.b16 %v284
  %v2661 = vunpack.c.h.b16 %v284
  %v2662 = vunpack.c.l.b16 %v285
  %v2663 = vunpack.c.h.b16 %v285
  %v2664 = vunpack.c.l.b16 %v286
  %v2665 = vunpack.c.h.b16 %v286
  %v2666 = vunpack.c.l.b16 %v287
  %v2667 = vunpack.c.h.b16 %v287
  %v2668 = vunpack.c.l.b16 %v288
  %v2669 = vunpack.c.h.b16 %v288
  %v2670 = vunpack.c.l.b16 %v289
  %v2671 = vunpack.c.h.b16 %v289
  %v2672 = vunpack.c.l.b16 %v290
  %v2673 = vunpack.c.h.b16 %v290
  %v2674 = vunpack.c.l.b16 %v291
  %v2675 = vunpack.c.h.b16 %v291
  %v2676 = vunpack.c.l.b16 %v292
  %v2677 = vunpack.c.h.b16 %v292
  %v2678 = vunpack.c.l.b16 %v293
  %v2679 = vunpack.c.h.b16 %v293
  %v2680 = vunpack.c.l.b16 %v294
  %v2681 = vunpack.c.h.b16 %v294
  %v2682 = vunpack.c.l.b16 %v295
  %v2683 = vunpack.c.h.b16 %v295
  %v2684 = vunpack.c.l.b16 %v296
  %v2685 = vunpack.c.h.b16 %v296
  %v2686 = vunpack.c.l.b16 %v297
  %v2687 = vunpack.c.h.b16 %v297
  %v2688 = vunpack.c.l.b16 %v298
  %v2689 = vunpack.c.h.b16 %v298
  %v2690 = vunpack.c.l.b16 %v299
  %v2691 = vunpack.c.h.b16 %v299
  %v2692 = vunpack.c.l.b16 %v300
  %v2693 = vunpack.c.h.b16 %v300
  %v2694 = vunpack.c.l.b16 %v301
  %v2695 = vunpack.c.h.b16 %v301
  %v2696 = vunpack.c.l.b16 %v302
  %v2697 = vunpack.c.h.b16 %v302
  %v2698 = vunpack.c.l.b16 %v303
  %v2699 = vunpack.c.h.b16 %v303
  %v2700 = vunpack.c.l.b16 %v304
  %v2701 = vunpack.c.h.b16 %v304
  %v2702 = vunpack.c.l.b16 %v305
  %v2703 = vunpack.c.h.b16 %v305
  %v2704 = vunpack.c.l.b16 %v306
  %v2705 = vunpack.c.h.b16 %v306
  %v2706 = vunpack.c.l.b16 %v307
  %v2707 = vunpack.c.h.b16 %v307
  %v2708 = vunpack.c.l.b16 %v308
  %v2709 = vunpack.c.h.b16 %v308
  %v2710 = vunpack.c.l.b16 %v309
  %v2711 = vunpack.c.h.b16 %v309
  %v2712 = vunpack.c.l.b16 %v310
  %v2713 = vunpack.c.h.b16 %v310
  %v2714 = vunpack.c.l.b16 %v311
  %v2715 = vunpack.c.h.b16 %v311
  %v2716 = vunpack.c.l.b16 %v312
  %v2717 = vunpack.c.h.b16 %v312
  %v2718 = vunpack.c.l.b16 %v313
  %v2719 = vunpack.c.h.b16 %v313
  %v2720 = vunpack.c.l.b16 %v314
  %v2721 = vunpack.c.h.b16 %v314
  %v2722 = vunpack.c.l.b16 %v315
  %v2723 = vunpack.c.h.b16 %v315
  %v2724 = vunpack.c.l.b16 %v316
  %v2725 = vunpack.c.h.b16 %v316
  %v2726 = vunpack.c.l.b16 %v317
  %v2727 = vunpack.c.h.b16 %v317
  %v2728 = vunpack.c.l.b16 %v318
  %v2729 = vunpack.c.h.b16 %v318
  %v2730 = vunpack.c.l.b16 %v319
  %v2731 = vunpack.c.h.b16 %v319
  %v2732 = vunpack.c.l.b16 %v320
  %v2733 = vunpack.c.h.b16 %v320
  %v2734 = vunpack.c.l.b16 %v321
  %v2735 = vunpack.c.h.b16 %v321
  %v2736 = vunpack.c.l.b16 %v322
  %v2737 = vunpack.c.h.b16 %v322
  %v2738 = vunpack.c.l.b16 %v323
  %v2739 = vunpack.c.h.b16 %v323
  %v2740 = vunpack.c.l.b16 %v324
  %v2741 = vunpack.c.h.b16 %v324
  %v2742 = vunpack.c.l.b16 %v325
  %v2743 = vunpack.c.h.b16 %v325
  %v2744 = vunpack.c.l.b16 %v326
  %v2745 = vunpack.c.h.b16 %v326
  %v2746 = vunpack.c.l.b16 %v327
  %v2747 = vunpack.c.h.b16 %v327
  %v2748 = vunpack.c.l.b16 %v328
  %v2749 = vunpack.c.h.b16 %v328
  %v2750 = vunpack.c.l.b16 %v329
  %v2751 = vunpack.c.h.b16 %v329
  %v2752 = vunpack.c.l.b16 %v330
  %v2753 = vunpack.c.h.b16 %v330
  %v2754 = vunpack.c.l.b16 %v331
  %v2755 = vunpack.c.h.b16 %v331
  %v2756 = vunpack.c.l.b16 %v332
  %v2757 = vunpack.c.h.b16 %v332
  %v2758 = vunpack.c.l.b16 %v333
  %v2759 = vunpack.c.h.b16 %v333
  %v2760 = vunpack.c.l.b16 %v334
  %v2761 = vunpack.c.h.b16 %v334
  %v2762 = vunpack.c.l.b16 %v335
  %v2763 = vunpack.c.h.b16 %v335
  %v2764 = vunpack.c.l.b16 %v336
  %v2765 = vunpack.c.h.b16 %v336
  %v2766 = vunpack.c.l.b16 %v337
  %v2767 = vunpack.c.h.b16 %v337
  %v2768 = vunpack.c.l.b16 %v338
  %v2769 = vunpack.c.h.b16 %v338
  %v2770 = vunpack.c.l.b16 %v339
  %v2771 = vunpack.c.h.b16 %v339
  %v2772 = vunpack.c.l.b16 %v340
  %v2773 = vunpack.c.h.b16 %v340
  %v2774 = vunpack.c.l.b16 %v341
  %v2775 = vunpack.c.h.b16 %v341
  %v2776 = vunpack.c.l.b16 %v342
  %v2777 = vunpack.c.h.b16 %v342
  %v2778 = vunpack.c.l.b16 %v343
  %v2779 = vunpack.c.h.b16 %v343
  %v2780 = vunpack.c.l.b16 %v344
  %v2781 = vunpack.c.h.b16 %v344
  %v2782 = vunpack.c.l.b16 %v345
  %v2783 = vunpack.c.h.b16 %v345
  %v2784 = vunpack.c.l.b16 %v346
  %v2785 = vunpack.c.h.b16 %v346
  %v2786 = vunpack.c.l.b16 %v347
  %v2787 = vunpack.c.h.b16 %v347
  %v2788 = vunpack.c.l.b16 %v348
  %v2789 = vunpack.c.h.b16 %v348
  %v2790 = vunpack.c.l.b16 %v349
  %v2791 = vunpack.c.h.b16 %v349
  %v2792 = vunpack.c.l.b16 %v350
  %v2793 = vunpack.c.h.b16 %v350
  %v2794 = vunpack.c.l.b16 %v351
  %v2795 = vunpack.c.h.b16 %v351
  %v2796 = vunpack.c.l.b16 %v352
  %v2797 = vunpack.c.h.b16 %v352
  %v2798 = vunpack.c.l.b16 %v353
  %v2799 = vunpack.c.h.b16 %v353
  %v2800 = vunpack.c.l.b16 %v354
  %v2801 = vunpack.c.h.b16 %v354
  %v2802 = vunpack.c.l.b16 %v355
  %v2803 = vunpack.c.h.b16 %v355
  %v2804 = vunpack.c.l.b16 %v356
  %v2805 = vunpack.c.h.b16 %v356
  %v2806 = vunpack.c.l.b16 %v357
  %v2807 = vunpack.c.h.b16 %v357
  %v2808 = vunpack.c.l.b16 %v358
  %v2809 = vunpack.c.h.b16 %v358
  %v2810 = vunpack.c.l.b16 %v359
  %v2811 = vunpack.c.h.b16 %v359
  %v2812 = vunpack.c.l.b16 %v360
  %v2813 = vunpack.c.h.b16 %v360
  %v2814 = vunpack.c.l.b16 %v361
  %v2815 = vunpack.c.h.b16 %v361
  %v2816 = vunpack.c.l.b16 %v362
  %v2817 = vunpack.c.h.b16 %v362
  %v2818 = vunpack.c.l.b16 %v363
  %v2819 = vunpack.c.h.b16 %v363
  %v2820 = vunpack.c.l.b16 %v364
  %v2821 = vunpack.c.h.b16 %v364
  %v2822 = vunpack.c.l.b16 %v365
  %v2823 = vunpack.c.h.b16 %v365
  %v2824 = vunpack.c.l.b16 %v366
  %v2825 = vunpack.c.h.b16 %v366
  %v2826 = vunpack.c.l.b16 %v367
  %v2827 = vunpack.c.h.b16 %v367
  %v2828 = vunpack.c.l.b16 %v368
  %v2829 = vunpack.c.h.b16 %v368
  %v2830 = vunpack.c.l.b16 %v369
  %v2831 = vunpack.c.h.b16 %v369
  %v2832 = vunpack.c.l.b16 %v370
  %v2833 = vunpack.c.h.b16 %v370
  %v2834 = vunpack.c.l.b16 %v371
  %v2835 = vunpack.c.h.b16 %v371
  %v2836 = vunpack.c.l.b16 %v372
  %v2837 = vunpack.c.h.b16 %v372
  %v2838 = vunpack.c.l.b16 %v373
  %v2839 = vunpack.c.h.b16 %v373
  %v2840 = vunpack.c.l.b16 %v374
  %v2841 = vunpack.c.h.b16 %v374
  %v2842 = vunpack.c.l.b16 %v375
  %v2843 = vunpack.c.h.b16 %v375
  %v2844 = vunpack.c.l.b16 %v376
  %v2845 = vunpack.c.h.b16 %v376
  %v2846 = vunpack.c.l.b16 %v377
  %v2847 = vunpack.c.h.b16 %v377
  %v2848 = vunpack.c.l.b16 %v378
  %v2849 = vunpack.c.h.b16 %v378
  %v2850 = vunpack.c.l.b16 %v379
  %v2851 = vunpack.c.h.b16 %v379
  %v2852 = vunpack.c.l.b16 %v380
  %v2853 = vunpack.c.h.b16 %v380
  %v2854 = vunpack.c.l.b16 %v381
  %v2855 = vunpack.c.h.b16 %v381
  %v2856 = vunpack.c.l.b16 %v382
  %v2857 = vunpack.c.h.b16 %v382
  %v2858 = vunpack.c.l.b16 %v383
  %v2859 = vunpack.c.h.b16 %v383
  %v2860 = vunpack.c.l.b16 %v384
  %v2861 = vunpack.c.h.b16 %v384
  %v2862 = vunpack.c.l.b16 %v385
  %v2863 = vunpack.c.h.b16 %v385
  %v2864 = vunpack.c.l.b16 %v386
  %v2865 = vunpack.c.h.b16 %v386
  %v2866 = vunpack.c.l.b16 %v387
  %v2867 = vunpack.c.h.b16 %v387
  %v2868 = vunpack.c.l.b16 %v388
  %v2869 = vunpack.c.h.b16 %v388
  %v2870 = vunpack.c.l.b16 %v389
  %v2871 = vunpack.c.h.b16 %v389
  %v2872 = vunpack.c.l.b16 %v390
  %v2873 = vunpack.c.h.b16 %v390
  %v2874 = vunpack.c.l.b16 %v391
  %v2875 = vunpack.c.h.b16 %v391
  %v2876 = vunpack.c.l.b16 %v392
  %v2877 = vunpack.c.h.b16 %v392
  %v2878 = vunpack.c.l.b16 %v393
  %v2879 = vunpack.c.h.b16 %v393
  %v2880 = vunpack.c.l.b16 %v394
  %v2881 = vunpack.c.h.b16 %v394
  %v2882 = vunpack.c.l.b16 %v395
  %v2883 = vunpack.c.h.b16 %v395
  %v2884 = vunpack.c.l.b16 %v396
  %v2885 = vunpack.c.h.b16 %v396
  %v2886 = vunpack.c.l.b16 %v397
  %v2887 = vunpack.c.h.b16 %v397
  %v2888 = vunpack.c.l.b16 %v398
  %v2889 = vunpack.c.h.b16 %v398
  %v2890 = vunpack.c.l.b16 %v399
  %v2891 = vunpack.c.h.b16 %v399
  %v2892 = vunpack.c.l.b16 %v400
  %v2893 = vunpack.c.h.b16 %v400
  %v2894 = vunpack.c.l.b16 %v401
  %v2895 = vunpack.c.h.b16 %v401
  %v2896 = vunpack.c.l.b16 %v402
  %v2897 = vunpack.c.h.b16 %v402
  %v2898 = vunpack.c.l.b16 %v403
  %v2899 = vunpack.c.h.b16 %v403
  %v2900 = vunpack.c.l.b16 %v404
  %v2901 = vunpack.c.h.b16 %v404
  %v2902 = vunpack.c.l.b16 %v405
  %v2903 = vunpack.c.h.b16 %v405
  %v2904 = vunpack.c.l.b16 %v406
  %v2905 = vunpack.c.h.b16 %v406
  %v2906 = vunpack.c.l.b16 %v407
  %v2907 = vunpack.c.h.b16 %v407
  %v2908 = vunpack.c.l.b16 %v408
  %v2909 = vunpack.c.h.b16 %v408
  %v2910 = vunpack.c.l.b16 %v409
  %v2911 = vunpack.c.h.b16 %v409
  %v2912 = vunpack.c.l.b16 %v410
  %v2913 = vunpack.c.h.b16 %v410
  %v2914 = vunpack.c.l.b16 %v411
  %v2915 = vunpack.c.h.b16 %v411
  %v2916 = vunpack.c.l.b16 %v412
  %v2917 = vunpack.c.h.b16 %v412
  %v2918 = vunpack.c.l.b16 %v413
  %v2919 = vunpack.c.h.b16 %v413
  %v2920 = vunpack.c.l.b16 %v414
  %v2921 = vunpack.c.h.b16 %v414
  %v2922 = vunpack.c.l.b16 %v415
  %v2923 = vunpack.c.h.b16 %v415
  %v2924 = vunpack.c.l.b16 %v416
  %v2925 = vunpack.c.h.b16 %v416
  %v2926 = vunpack.c.l.b16 %v417
  %v2927 = vunpack.c.h.b16 %v417
  %v2928 = vunpack.c.l.b16 %v418
  %v2929 = vunpack.c.h.b16 %v418
  %v2930 = vunpack.c.l.b16 %v419
  %v2931 = vunpack.c.h.b16 %v419
  %v2932 = vunpack.c.l.b16 %v420
  %v2933 = vunpack.c.h.b16 %v420
  %v2934 = vunpack.c.l.b16 %v421
  %v2935 = vunpack.c.h.b16 %v421
  %v2936 = vunpack.c.l.b16 %v422
  %v2937 = vunpack.c.h.b16 %v422
  %v2938 = vunpack.c.l.b16 %v423
  %v2939 = vunpack.c.h.b16 %v423
  %v2940 = vunpack.c.l.b16 %v424
  %v2941 = vunpack.c.h.b16 %v424
  %v2942 = vunpack.c.l.b16 %v425
  %v2943 = vunpack.c.h.b16 %v425
  %v2944 = vunpack.c.l.b16 %v426
  %v2945 = vunpack.c.h.b16 %v426
  %v2946 = vunpack.c.l.b16 %v427
  %v2947 = vunpack.c.h.b16 %v427
  %v2948 = vunpack.c.l.b16 %v428
  %v2949 = vunpack.c.h.b16 %v428
  %v2950 = vunpack.c.l.b16 %v429
  %v2951 = vunpack.c.h.b16 %v429
  %v2952 = vunpack.c.l.b16 %v430
  %v2953 = vunpack.c.h.b16 %v430
  %v2954 = vunpack.c.l.b16 %v431
  %v2955 = vunpack.c.h.b16 %v431
  %v2956 = vunpack.c.l.b16 %v432
  %v2957 = vunpack.c.h.b16 %v432
  %v2958 = vunpack.c.l.b16 %v433
  %v2959 = vunpack.c.h.b16 %v433
  %v2960 = vunpack.c.l.b16 %v434
  %v2961 = vunpack.c.h.b16 %v434
  %v2962 = vunpack.c.l.b16 %v435
  %v2963 = vunpack.c.h.b16 %v435
  %v2964 = vunpack.c.l.b16 %v436
  %v2965 = vunpack.c.h.b16 %v436
  %v2966 = vunpack.c.l.b16 %v437
  %v2967 = vunpack.c.h.b16 %v437
  %v2968 = vunpack.c.l.b16 %v438
  %v2969 = vunpack.c.h.b16 %v438
  %v2970 = vunpack.c.l.b16 %v439
  %v2971 = vunpack.c.h.b16 %v439
  %v2972 = vunpack.c.l.b16 %v440
  %v2973 = vunpack.c.h.b16 %v440
  %v2974 = vunpack.c.l.b16 %v441
  %v2975 = vunpack.c.h.b16 %v441
  %v2976 = vunpack.c.l.b16 %v442
  %v2977 = vunpack.c.h.b16 %v442
  %v2978 = vunpack.c.l.b16 %v443
  %v2979 = vunpack.c.h.b16 %v443
  %v2980 = vunpack.c.l.b16 %v444
  %v2981 = vunpack.c.h.b16 %v444
  %v2982 = vunpack.c.l.b16 %v445
  %v2983 = vunpack.c.h.b16 %v445
  %v2984 = vunpack.c.l.b16 %v446
  %v2985 = vunpack.c.h.b16 %v446
  %v2986 = vunpack.c.l.b16 %v447
  %v2987 = vunpack.c.h.b16 %v447
  %v2988 = vunpack.c.l.b16 %v448
  %v2989 = vunpack.c.h.b16 %v448
  %v2990 = vunpack.c.l.b16 %v449
  %v2991 = vunpack.c.h.b16 %v449
  %v2992 = vunpack.c.l.b16 %v450
  %v2993 = vunpack.c.h.b16 %v450
  %v2994 = vunpack.c.l.b16 %v451
  %v2995 = vunpack.c.h.b16 %v451
  %v2996 = vunpack.c.l.b16 %v452
  %v2997 = vunpack.c.h.b16 %v452
  %v2998 = vunpack.c.l.b16 %v453
  %v2999 = vunpack.c.h.b16 %v453
  %v3000 = vunpack.c.l.b16 %v454
  %v3001 = vunpack.c.h.b16 %v454
  %v3002 = vunpack.c.l.b16 %v455
  %v3003 = vunpack.c.h.b16 %v455
  %v3004 = vunpack.c.l.b16 %v456
  %v3005 = vunpack.c.h.b16 %v456
  %v3006 = vunpack.c.l.b16 %v457
  %v3007 = vunpack.c.h.b16 %v457
  %v3008 = vunpack.c.l.b16 %v458
  %v3009 = vunpack.c.h.b16 %v458
  %v3010 = vunpack.c.l.b16 %v459
  %v3011 = vunpack.c.h.b16 %v459
  %v3012 = vunpack.c.l.b16 %v460
  %v3013 = vunpack.c.h.b16 %v460
  %v3014 = vunpack.c.l.b16 %v461
  %v3015 = vunpack.c.h.b16 %v461
  %v3016 = vunpack.c.l.b16 %v462
  %v3017 = vunpack.c.h.b16 %v462
  %v3018 = vunpack.c.l.b16 %v463
  %v3019 = vunpack.c.h.b16 %v463
  %v3020 = vunpack.c.l.b16 %v464
  %v3021 = vunpack.c.h.b16 %v464
  %v3022 = vunpack.c.l.b16 %v465
  %v3023 = vunpack.c.h.b16 %v465
  %v3024 = vunpack.c.l.b16 %v466
  %v3025 = vunpack.c.h.b16 %v466
  %v3026 = vunpack.c.l.b16 %v467
  %v3027 = vunpack.c.h.b16 %v467
  %v3028 = vunpack.c.l.b16 %v468
  %v3029 = vunpack.c.h.b16 %v468
  %v3030 = vunpack.c.l.b16 %v469
  %v3031 = vunpack.c.h.b16 %v469
  %v3032 = vunpack.c.l.b16 %v470
  %v3033 = vunpack.c.h.b16 %v470
  %v3034 = vunpack.c.l.b16 %v471
  %v3035 = vunpack.c.h.b16 %v471
  %v3036 = vunpack.c.l.b16 %v472
  %v3037 = vunpack.c.h.b16 %v472
  %v3038 = vunpack.c.l.b16 %v473
  %v3039 = vunpack.c.h.b16 %v473
  %v3040 = vunpack.c.l.b16 %v474
  %v3041 = vunpack.c.h.b16 %v474
  %v3042 = vunpack.c.l.b16 %v475
  %v3043 = vunpack.c.h.b16 %v475
  %v3044 = vunpack.c.l.b16 %v476
  %v3045 = vunpack.c.h.b16 %v476
  %v3046 = vunpack.c.l.b16 %v477
  %v3047 = vunpack.c.h.b16 %v477
  %v3048 = vunpack.c.l.b16 %v478
  %v3049 = vunpack.c.h.b16 %v478
  %v3050 = vunpack.c.l.b16 %v479
  %v3051 = vunpack.c.h.b16 %v479
  %v3052 = vunpack.c.l.b16 %v480
  %v3053 = vunpack.c.h.b16 %v480
  %v3054 = vunpack.c.l.b16 %v481
  %v3055 = vunpack.c.h.b16 %v481
  %v3056 = vunpack.c.l.b16 %v482
  %v3057 = vunpack.c.h.b16 %v482
  %v3058 = vunpack.c.l.b16 %v483
  %v3059 = vunpack.c.h.b16 %v483
  %v3060 = vunpack.c.l.b16 %v484
  %v3061 = vunpack.c.h.b16 %v484
  %v3062 = vunpack.c.l.b16 %v485
  %v3063 = vunpack.c.h.b16 %v485
  %v3064 = vunpack.c.l.b16 %v486
  %v3065 = vunpack.c.h.b16 %v486
  %v3066 = vunpack.c.l.b16 %v487
  %v3067 = vunpack.c.h.b16 %v487
  %v3068 = vunpack.c.l.b16 %v488
  %v3069 = vunpack.c.h.b16 %v488
  %v3070 = vunpack.c.l.b16 %v489
  %v3071 = vunpack.c.h.b16 %v489
  %v3072 = vunpack.c.l.b16 %v490
  %v3073 = vunpack.c.h.b16 %v490
  %v3074 = vunpack.c.l.b16 %v491
  %v3075 = vunpack.c.h.b16 %v491
  %v3076 = vunpack.c.l.b16 %v492
  %v3077 = vunpack.c.h.b16 %v492
  %v3078 = vunpack.c.l.b16 %v493
  %v3079 = vunpack.c.h.b16 %v493
  %v3080 = vunpack.c.l.b16 %v494
  %v3081 = vunpack.c.h.b16 %v494
  %v3082 = vunpack.c.l.b16 %v495
  %v3083 = vunpack.c.h.b16 %v495
  %v3084 = vunpack.c.l.b16 %v496
  %v3085 = vunpack.c.h.b16 %v496
  %v3086 = vunpack.c.l.b16 %v497
  %v3087 = vunpack.c.h.b16 %v497
  %v3088 = vunpack.c.l.b16 %v498
  %v3089 = vunpack.c.h.b16 %v498
  %v3090 = vunpack.c.l.b16 %v499
  %v3091 = vunpack.c.h.b16 %v499
  %v3092 = vunpack.c.l.b16 %v500
  %v3093 = vunpack.c.h.b16 %v500
  %v3094 = vunpack.c.l.b16 %v501
  %v3095 = vunpack.c.h.b16 %v501
  %v3096 = vunpack.c.l.b16 %v502
  %v3097 = vunpack.c.h.b16 %v502
  %v3098 = vunpack.c.l.b16 %v503
  %v3099 = vunpack.c.h.b16 %v503
  %v3100 = vunpack.c.l.b16 %v504
  %v3101 = vunpack.c.h.b16 %v504
  %v3102 = vunpack.c.l.b16 %v505
  %v3103 = vunpack.c.h.b16 %v505
  %v3104 = vunpack.c.l.b16 %v506
  %v3105 = vunpack.c.h.b16 %v506
  %v3106 = vunpack.c.l.b16 %v507
  %v3107 = vunpack.c.h.b16 %v507
  %v3108 = vunpack.c.l.b16 %v508
  %v3109 = vunpack.c.h.b16 %v508
  %v3110 = vunpack.c.l.b16 %v509
  %v3111 = vunpack.c.h.b16 %v509
  %v3112 = vunpack.c.l.b16 %v510
  %v3113 = vunpack.c.h.b16 %v510
  %v3114 = vunpack.c.l.b16 %v511
  %v3115 = vunpack.c.h.b16 %v511
  %v3116 = vunpack.c.l.b16 %v512
  %v3117 = vunpack.c.h.b16 %v512
  %v3118 = vunpack.c.l.b16 %v513
  %v3119 = vunpack.c.h.b16 %v513
  %v3120 = vunpack.c.l.b16 %v514
  %v3121 = vunpack.c.h.b16 %v514
  %v3122 = vunpack.c.l.b16 %v515
  %v3123 = vunpack.c.h.b16 %v515
  %v3124 = vunpack.c.l.b16 %v516
  %v3125 = vunpack.c.h.b16 %v516
  %v3126 = vunpack.c.l.b16 %v517
  %v3127 = vunpack.c.h.b16 %v517
  %v3128 = vunpack.c.l.b16 %v518
  %v3129 = vunpack.c.h.b16 %v518
  %v3130 = vunpack.c.l.b16 %v519
  %v3131 = vunpack.c.h.b16 %v519
  %v3132 = vunpack.c.l.b16 %v520
  %v3133 = vunpack.c.h.b16 %v520
  %v3134 = vunpack.c.l.b16 %v521
  %v3135 = vunpack.c.h.b16 %v521
  %v3136 = vunpack.c.l.b16 %v522
  %v3137 = vunpack.c.h.b16 %v522
  %v3138 = vunpack.c.l.b16 %v523
  %v3139 = vunpack.c.h.b16 %v523
  %v3140 = vunpack.c.l.b16 %v524
  %v3141 = vunpack.c.h.b16 %v524
  %v3142 = vunpack.c.l.b16 %v525
  %v3143 = vunpack.c.h.b16 %v525
  %v3144 = vunpack.c.l.b16 %v526
  %v3145 = vunpack.c.h.b16 %v526
  %v3146 = vunpack.c.l.b16 %v527
  %v3147 = vunpack.c.h.b16 %v527
  %v3148 = vunpack.c.l.b16 %v528
  %v3149 = vunpack.c.h.b16 %v528
  %v3150 = vunpack.c.l.b16 %v529
  %v3151 = vunpack.c.h.b16 %v529
  %v3152 = vunpack.c.l.b16 %v530
  %v3153 = vunpack.c.h.b16 %v530
  %v3154 = vunpack.c.l.b16 %v531
  %v3155 = vunpack.c.h.b16 %v531
  %v3156 = vunpack.c.l.b16 %v532
  %v3157 = vunpack.c.h.b16 %v532
  %v3158 = vunpack.c.l.b16 %v533
  %v3159 = vunpack.c.h.b16 %v533
  %v3160 = vunpack.c.l.b16 %v534
  %v3161 = vunpack.c.h.b16 %v534
  %v3162 = vunpack.c.l.b16 %v535
  %v3163 = vunpack.c.h.b16 %v535
  %v3164 = vunpack.c.l.b16 %v536
  %v3165 = vunpack.c.h.b16 %v536
  %v3166 = vunpack.c.l.b16 %v537
  %v3167 = vunpack.c.h.b16 %v537
  %v3168 = vunpack.c.l.b16 %v538
  %v3169 = vunpack.c.h.b16 %v538
  %v3170 = vunpack.c.l.b16 %v539
  %v3171 = vunpack.c.h.b16 %v539
  %v3172 = vunpack.c.l.b16 %v540
  %v3173 = vunpack.c.h.b16 %v540
  %v3174 = vunpack.c.l.b16 %v541
  %v3175 = vunpack.c.h.b16 %v541
  %v3176 = vunpack.c.l.b16 %v542
  %v3177 = vunpack.c.h.b16 %v542
  %v3178 = vunpack.c.l.b16 %v543
  %v3179 = vunpack.c.h.b16 %v543
  %v3180 = vunpack.c.l.b16 %v544
  %v3181 = vunpack.c.h.b16 %v544
  %v3182 = vunpack.c.l.b16 %v545
  %v3183 = vunpack.c.h.b16 %v545
  %v3184 = vunpack.c.l.b16 %v546
  %v3185 = vunpack.c.h.b16 %v546
  %v3186 = vunpack.c.l.b16 %v547
  %v3187 = vunpack.c.h.b16 %v547
  %v3188 = vunpack.c.l.b16 %v548
  %v3189 = vunpack.c.h.b16 %v548
  %v3190 = vunpack.c.l.b16 %v549
  %v3191 = vunpack.c.h.b16 %v549
  %v3192 = vunpack.c.l.b16 %v550
  %v3193 = vunpack.c.h.b16 %v550
  %v3194 = vunpack.c.l.b16 %v551
  %v3195 = vunpack.c.h.b16 %v551
  %v3196 = vunpack.c.l.b16 %v552
  %v3197 = vunpack.c.h.b16 %v552
  %v3198 = vunpack.c.l.b16 %v553
  %v3199 = vunpack.c.h.b16 %v553
  %v3200 = vunpack.c.l.b16 %v554
  %v3201 = vunpack.c.h.b16 %v554
  %v3202 = vunpack.c.l.b16 %v555
  %v3203 = vunpack.c.h.b16 %v555
  %v3204 = vunpack.c.l.b16 %v556
  %v3205 = vunpack.c.h.b16 %v556
  %v3206 = vunpack.c.l.b16 %v557
  %v3207 = vunpack.c.h.b16 %v557
  %v3208 = vunpack.c.l.b16 %v558
  %v3209 = vunpack.c.h.b16 %v558
  %v3210 = vunpack.c.l.b16 %v559
  %v3211 = vunpack.c.h.b16 %v559
  %v3212 = vunpack.c.l.b16 %v560
  %v3213 = vunpack.c.h.b16 %v560
  %v3214 = vunpack.c.l.b16 %v561
  %v3215 = vunpack.c.h.b16 %v561
  %v3216 = vunpack.c.l.b16 %v562
  %v3217 = vunpack.c.h.b16 %v562
  %v3218 = vunpack.c.l.b16 %v563
  %v3219 = vunpack.c.h.b16 %v563
  %v3220 = vunpack.c.l.b16 %v564
  %v3221 = vunpack.c.h.b16 %v564
  %v3222 = vunpack.c.l.b16 %v565
  %v3223 = vunpack.c.h.b16 %v565
  %v3224 = vunpack.c.l.b16 %v566
  %v3225 = vunpack.c.h.b16 %v566
  %v3226 = vunpack.c.l.b16 %v567
  %v3227 = vunpack.c.h.b16 %v567
  %v3228 = vunpack.c.l.b16 %v568
  %v3229 = vunpack.c.h.b16 %v568
  %v3230 = vunpack.c.l.b16 %v569
  %v3231 = vunpack.c.h.b16 %v569
  %v3232 = vunpack.c.l.b16 %v570
  %v3233 = vunpack.c.h.b16 %v570
  %v3234 = vunpack.c.l.b16 %v571
  %v3235 = vunpack.c.h.b16 %v571
  %v3236 = vunpack.c.l.b16 %v572
  %v3237 = vunpack.c.h.b16 %v572
  %v3238 = vunpack.c.l.b16 %v573
  %v3239 = vunpack.c.h.b16 %v573
  %v3240 = vunpack.c.l.b16 %v574
  %v3241 = vunpack.c.h.b16 %v574
  %v3242 = vunpack.c.l.b16 %v575
  %v3243 = vunpack.c.h.b16 %v575
  %v3244 = vunpack.c.l.b16 %v576
  %v3245 = vunpack.c.h.b16 %v576
  %v3246 = vunpack.c.l.b16 %v577
  %v3247 = vunpack.c.h.b16 %v577
  %v3248 = vunpack.c.l.b16 %v578
  %v3249 = vunpack.c.h.b16 %v578
  %v3250 = vunpack.c.l.b16 %v579
  %v3251 = vunpack.c.h.b16 %v579
  %v3252 = vunpack.c.l.b16 %v580
  %v3253 = vunpack.c.h.b16 %v580
  %v3254 = vunpack.c.l.b16 %v581
  %v3255 = vunpack.c.h.b16 %v581
  %v3256 = vunpack.c.l.b16 %v582
  %v3257 = vunpack.c.h.b16 %v582
  %v3258 = vunpack.c.l.b16 %v583
  %v3259 = vunpack.c.h.b16 %v583
  %v3260 = vunpack.c.l.b16 %v584
  %v3261 = vunpack.c.h.b16 %v584
  %v3262 = vunpack.c.l.b16 %v585
  %v3263 = vunpack.c.h.b16 %v585
  %v3264 = vunpack.c.l.b16 %v586
  %v3265 = vunpack.c.h.b16 %v586
  %v3266 = vunpack.c.l.b16 %v587
  %v3267 = vunpack.c.h.b16 %v587
  %v3268 = vunpack.c.l.b16 %v588
  %v3269 = vunpack.c.h.b16 %v588
  %v3270 = vunpack.c.l.b16 %v589
  %v3271 = vunpack.c.h.b16 %v589
  %v3272 = vunpack.c.l.b16 %v590
  %v3273 = vunpack.c.h.b16 %v590
  %v3274 = vunpack.c.l.b16 %v591
  %v3275 = vunpack.c.h.b16 %v591
  %v3276 = vunpack.c.l.b16 %v592
  %v3277 = vunpack.c.h.b16 %v592
  %v3278 = vunpack.c.l.b16 %v593
  %v3279 = vunpack.c.h.b16 %v593
  %v3280 = vunpack.c.l.b16 %v594
  %v3281 = vunpack.c.h.b16 %v594
  %v3282 = vunpack.c.l.b16 %v595
  %v3283 = vunpack.c.h.b16 %v595
  %v3284 = vunpack.c.l.b16 %v596
  %v3285 = vunpack.c.h.b16 %v596
  %v3286 = vunpack.c.l.b16 %v597
  %v3287 = vunpack.c.h.b16 %v597
  %v3288 = vunpack.c.l.b16 %v598
  %v3289 = vunpack.c.h.b16 %v598
  %v3290 = vunpack.c.l.b16 %v599
  %v3291 = vunpack.c.h.b16 %v599
  %v3292 = vunpack.c.l.b16 %v600
  %v3293 = vunpack.c.h.b16 %v600
  %v3294 = vunpack.c.l.b16 %v601
  %v3295 = vunpack.c.h.b16 %v601
  %v3296 = vunpack.c.l.b16 %v602
  %v3297 = vunpack.c.h.b16 %v602
  %v3298 = vunpack.c.l.b16 %v603
  %v3299 = vunpack.c.h.b16 %v603
  %v3300 = vunpack.c.l.b16 %v604
  %v3301 = vunpack.c.h.b16 %v604
  %v3302 = vunpack.c.l.b16 %v605
  %v3303 = vunpack.c.h.b16 %v605
  %v3304 = vunpack.c.l.b16 %v606
  %v3305 = vunpack.c.h.b16 %v606
  %v3306 = vunpack.c.l.b16 %v607
  %v3307 = vunpack.c.h.b16 %v607
  %v3308 = vunpack.c.l.b16 %v608
  %v3309 = vunpack.c.h.b16 %v608
  %v3310 = vunpack.c.l.b16 %v609
  %v3311 = vunpack.c.h.b16 %v609
  %v3312 = vunpack.c.l.b16 %v610
  %v3313 = vunpack.c.h.b16 %v610
  %v3314 = vunpack.c.l.b16 %v611
  %v3315 = vunpack.c.h.b16 %v611
  %v3316 = vunpack.c.l.b16 %v612
  %v3317 = vunpack.c.h.b16 %v612
  %v3318 = vunpack.c.l.b16 %v613
  %v3319 = vunpack.c.h.b16 %v613
  %v3320 = vunpack.c.l.b16 %v614
  %v3321 = vunpack.c.h.b16 %v614
  %v3322 = vunpack.c.l.b16 %v615
  %v3323 = vunpack.c.h.b16 %v615
  %v3324 = vunpack.c.l.b16 %v616
  %v3325 = vunpack.c.h.b16 %v616
  %v3326 = vunpack.c.l.b16 %v617
  %v3327 = vunpack.c.h.b16 %v617
  %v3328 = vunpack.c.l.b16 %v618
  %v3329 = vunpack.c.h.b16 %v618
  %v3330 = vunpack.c.l.b16 %v619
  %v3331 = vunpack.c.h.b16 %v619
  %v3332 = vunpack.c.l.b16 %v620
  %v3333 = vunpack.c.h.b16 %v620
  %v3334 = vunpack.c.l.b16 %v621
  %v3335 = vunpack.c.h.b16 %v621
  %v3336 = vunpack.c.l.b16 %v622
  %v3337 = vunpack.c.h.b16 %v622
  %v3338 = vunpack.c.l.b16 %v623
  %v3339 = vunpack.c.h.b16 %v623
  %v3340 = vunpack.c.l.b16 %v624
  %v3341 = vunpack.c.h.b16 %v624
  %v3342 = vunpack.c.l.b16 %v625
  %v3343 = vunpack.c.h.b16 %v625
  %v3344 = vunpack.c.l.b16 %v626
  %v3345 = vunpack.c.h.b16 %v626
  %v3346 = vunpack.c.l.b16 %v627
  %v3347 = vunpack.c.h.b16 %v627
  %v3348 = vunpack.c.l.b16 %v628
  %v3349 = vunpack.c.h.b16 %v628
  %v3350 = vunpack.c.l.b16 %v629
  %v3351 = vunpack.c.h.b16 %v629
  %v3352 = vunpack.c.l.b16 %v630
  %v3353 = vunpack.c.h.b16 %v630
  %v3354 = vunpack.c.l.b16 %v631
  %v3355 = vunpack.c.h.b16 %v631
  %v3356 = vunpack.c.l.b16 %v632
  %v3357 = vunpack.c.h.b16 %v632
  %v3358 = vunpack.c.l.b16 %v633
  %v3359 = vunpack.c.h.b16 %v633
  %v3360 = vunpack.c.l.b16 %v634
  %v3361 = vunpack.c.h.b16 %v634
  %v3362 = vunpack.c.l.b16 %v635
  %v3363 = vunpack.c.h.b16 %v635
  %v3364 = vunpack.c.l.b16 %v636
  %v3365 = vunpack.c.h.b16 %v636
  %v3366 = vunpack.c.l.b16 %v637
  %v3367 = vunpack.c.h.b16 %v637
  %v3368 = vunpack.c.l.b16 %v638
  %v3369 = vunpack.c.h.b16 %v638
  %v3370 = vunpack.c.l.b16 %v639
  %v3371 = vunpack.c.h.b16 %v639
  %v3372 = vunpack.c.l.b16 %v640
  %v3373 = vunpack.c.h.b16 %v640
  %v3374 = vunpack.c.l.b16 %v641
  %v3375 = vunpack.c.h.b16 %v641
  %v3376 = vunpack.c.l.b16 %v642
  %v3377 = vunpack.c.h.b16 %v642
  %v3378 = vunpack.c.l.b16 %v643
  %v3379 = vunpack.c.h.b16 %v643
  %v3380 = vunpack.c.l.b16 %v644
  %v3381 = vunpack.c.h.b16 %v644
  %v3382 = vunpack.c.l.b16 %v645
  %v3383 = vunpack.c.h.b16 %v645
  %v3384 = vunpack.c.l.b16 %v646
  %v3385 = vunpack.c.h.b16 %v646
  %v3386 = vunpack.c.l.b16 %v647
  %v3387 = vunpack.c.h.b16 %v647
  %v3388 = vunpack.c.l.b16 %v648
  %v3389 = vunpack.c.h.b16 %v648
  %v3390 = vunpack.c.l.b16 %v649
  %v3391 = vunpack.c.h.b16 %v649
  %v3392 = vunpack.c.l.b16 %v650
  %v3393 = vunpack.c.h.b16 %v650
  %v3394 = vunpack.c.l.b16 %v651
  %v3395 = vunpack.c.h.b16 %v651
  %v3396 = vunpack.c.l.b16 %v652
  %v3397 = vunpack.c.h.b16 %v652
  %v3398 = vunpack.c.l.b16 %v653
  %v3399 = vunpack.c.h.b16 %v653
  %v3400 = vunpack.c.l.b16 %v654
  %v3401 = vunpack.c.h.b16 %v654
  %v3402 = vunpack.c.l.b16 %v655
  %v3403 = vunpack.c.h.b16 %v655
  %v3404 = vunpack.c.l.b16 %v656
  %v3405 = vunpack.c.h.b16 %v656
  %v3406 = vunpack.c.l.b16 %v657
  %v3407 = vunpack.c.h.b16 %v657
  %v3408 = vunpack.c.l.b16 %v658
  %v3409 = vunpack.c.h.b16 %v658
  %v3410 = vunpack.c.l.b16 %v659
  %v3411 = vunpack.c.h.b16 %v659
  %v3412 = vunpack.c.l.b16 %v660
  %v3413 = vunpack.c.h.b16 %v660
  %v3414 = vunpack.c.l.b16 %v661
  %v3415 = vunpack.c.h.b16 %v661
  %v3416 = vunpack.c.l.b16 %v662
  %v3417 = vunpack.c.h.b16 %v662
  %v3418 = vunpack.c.l.b16 %v663
  %v3419 = vunpack.c.h.b16 %v663
  %v3420 = vunpack.c.l.b16 %v664
  %v3421 = vunpack.c.h.b16 %v664
  %v3422 = vunpack.c.l.b16 %v665
  %v3423 = vunpack.c.h.b16 %v665
  %v3424 = vunpack.c.l.b16 %v666
  %v3425 = vunpack.c.h.b16 %v666
  %v3426 = vunpack.c.l.b16 %v667
  %v3427 = vunpack.c.h.b16 %v667
  %v3428 = vunpack.c.l.b16 %v668
  %v3429 = vunpack.c.h.b16 %v668
  %v3430 = vunpack.c.l.b16 %v669
  %v3431 = vunpack.c.h.b16 %v669
  %v3432 = vunpack.c.l.b16 %v670
  %v3433 = vunpack.c.h.b16 %v670
  %v3434 = vunpack.c.l.b16 %v671
  %v3435 = vunpack.c.h.b16 %v671
  %v3436 = vunpack.c.l.b16 %v672
  %v3437 = vunpack.c.h.b16 %v672
  %v3438 = vunpack.c.l.b16 %v673
  %v3439 = vunpack.c.h.b16 %v673
  %v3440 = vunpack.c.l.b16 %v674
  %v3441 = vunpack.c.h.b16 %v674
  %v3442 = vunpack.c.l.b16 %v675
  %v3443 = vunpack.c.h.b16 %v675
  %v3444 = vunpack.c.l.b16 %v676
  %v3445 = vunpack.c.h.b16 %v676
  %v3446 = vunpack.c.l.b16 %v677
  %v3447 = vunpack.c.h.b16 %v677
  %v3448 = vunpack.c.l.b16 %v678
  %v3449 = vunpack.c.h.b16 %v678
  %v3450 = vunpack.c.l.b16 %v679
  %v3451 = vunpack.c.h.b16 %v679
  %v3452 = vunpack.c.l.b16 %v680
  %v3453 = vunpack.c.h.b16 %v680
  %v3454 = vunpack.c.l.b16 %v681
  %v3455 = vunpack.c.h.b16 %v681
  %v3456 = vunpack.c.l.b16 %v682
  %v3457 = vunpack.c.h.b16 %v682
  %v3458 = vunpack.c.l.b16 %v683
  %v3459 = vunpack.c.h.b16 %v683
  %v3460 = vunpack.c.l.b16 %v684
  %v3461 = vunpack.c.h.b16 %v684
  %v3462 = vunpack.c.l.b16 %v685
  %v3463 = vunpack.c.h.b16 %v685
  %v3464 = vunpack.c.l.b16 %v686
  %v3465 = vunpack.c.h.b16 %v686
  %v3466 = vunpack.c.l.b16 %v687
  %v3467 = vunpack.c.h.b16 %v687
  %v3468 = vunpack.c.l.b16 %v688
  %v3469 = vunpack.c.h.b16 %v688
  %v3470 = vunpack.c.l.b16 %v689
  %v3471 = vunpack.c.h.b16 %v689
  %v3472 = vunpack.c.l.b16 %v690
  %v3473 = vunpack.c.h.b16 %v690
  %v3474 = vunpack.c.l.b16 %v691
  %v3475 = vunpack.c.h.b16 %v691
  %v3476 = vunpack.c.l.b16 %v692
  %v3477 = vunpack.c.h.b16 %v692
  %v3478 = vunpack.c.l.b16 %v693
  %v3479 = vunpack.c.h.b16 %v693
  %v3480 = vunpack.c.l.b16 %v694
  %v3481 = vunpack.c.h.b16 %v694
  %v3482 = vunpack.c.l.b16 %v695
  %v3483 = vunpack.c.h.b16 %v695
  %v3484 = vunpack.c.l.b16 %v696
  %v3485 = vunpack.c.h.b16 %v696
  %v3486 = vunpack.c.l.b16 %v697
  %v3487 = vunpack.c.h.b16 %v697
  %v3488 = vunpack.c.l.b16 %v698
  %v3489 = vunpack.c.h.b16 %v698
  %v3490 = vunpack.c.l.b16 %v699
  %v3491 = vunpack.c.h.b16 %v699
  %v3492 = vunpack.c.l.b16 %v700
  %v3493 = vunpack.c.h.b16 %v700
  %v3494 = vunpack.c.l.b16 %v701
  %v3495 = vunpack.c.h.b16 %v701
  %v3496 = vunpack.c.l.b16 %v702
  %v3497 = vunpack.c.h.b16 %v702
  %v3498 = vunpack.c.l.b16 %v703
  %v3499 = vunpack.c.h.b16 %v703
  %v3500 = vunpack.c.l.b16 %v704
  %v3501 = vunpack.c.h.b16 %v704
  %v3502 = vunpack.c.l.b16 %v705
  %v3503 = vunpack.c.h.b16 %v705
  %v3504 = vunpack.c.l.b16 %v706
  %v3505 = vunpack.c.h.b16 %v706
  %v3506 = vunpack.c.l.b16 %v707
  %v3507 = vunpack.c.h.b16 %v707
  %v3508 = vunpack.c.l.b16 %v708
  %v3509 = vunpack.c.h.b16 %v708
  %v3510 = vunpack.c.l.b16 %v709
  %v3511 = vunpack.c.h.b16 %v709
  %v3512 = vunpack.c.l.b16 %v710
  %v3513 = vunpack.c.h.b16 %v710
  %v3514 = vunpack.c.l.b16 %v711
  %v3515 = vunpack.c.h.b16 %v711
  %v3516 = vunpack.c.l.b16 %v712
  %v3517 = vunpack.c.h.b16 %v712
  %v3518 = vunpack.c.l.b16 %v713
  %v3519 = vunpack.c.h.b16 %v713
  %v3520 = vunpack.c.l.b16 %v714
  %v3521 = vunpack.c.h.b16 %v714
  %v3522 = vunpack.c.l.b16 %v715
  %v3523 = vunpack.c.h.b16 %v715
  %v3524 = vunpack.c.l.b16 %v716
  %v3525 = vunpack.c.h.b16 %v716
  %v3526 = vunpack.c.l.b16 %v717
  %v3527 = vunpack.c.h.b16 %v717
  %v3528 = vunpack.c.l.b16 %v718
  %v3529 = vunpack.c.h.b16 %v718
  %v3530 = vunpack.c.l.b16 %v719
  %v3531 = vunpack.c.h.b16 %v719
  %v3532 = vunpack.c.l.b16 %v720
  %v3533 = vunpack.c.h.b16 %v720
  %v3534 = vunpack.c.l.b16 %v721
  %v3535 = vunpack.c.h.b16 %v721
  %v3536 = vunpack.c.l.b16 %v722
  %v3537 = vunpack.c.h.b16 %v722
  %v3538 = vunpack.c.l.b16 %v723
  %v3539 = vunpack.c.h.b16 %v723
  %v3540 = vunpack.c.l.b16 %v724
  %v3541 = vunpack.c.h.b16 %v724
  %v3542 = vunpack.c.l.b16 %v725
  %v3543 = vunpack.c.h.b16 %v725
  %v3544 = vunpack.c.l.b16 %v726
  %v3545 = vunpack.c.h.b16 %v726
  %v3546 = vunpack.c.l.b16 %v727
  %v3547 = vunpack.c.h.b16 %v727
  %v3548 = vunpack.c.l.b16 %v728
  %v3549 = vunpack.c.h.b16 %v728
  %v3550 = vunpack.c.l.b16 %v729
  %v3551 = vunpack.c.h.b16 %v729
  %v3552 = vunpack.c.l.b16 %v730
  %v3553 = vunpack.c.h.b16 %v730
  %v3554 = vunpack.c.l.b16 %v731
  %v3555 = vunpack.c.h.b16 %v731
  %v3556 = vunpack.c.l.b16 %v732
  %v3557 = vunpack.c.h.b16 %v732
  %v3558 = vunpack.c.l.b16 %v733
  %v3559 = vunpack.c.h.b16 %v733
  %v3560 = vunpack.c.l.b16 %v734
  %v3561 = vunpack.c.h.b16 %v734
  %v3562 = vunpack.c.l.b16 %v735
  %v3563 = vunpack.c.h.b16 %v735
  %v3564 = vunpack.c.l.b16 %v736
  %v3565 = vunpack.c.h.b16 %v736
  %v3566 = vunpack.c.l.b16 %v737
  %v3567 = vunpack.c.h.b16 %v737
  %v3568 = vunpack.c.l.b16 %v738
  %v3569 = vunpack.c.h.b16 %v738
  %v3570 = vunpack.c.l.b16 %v739
  %v3571 = vunpack.c.h.b16 %v739
  %v3572 = vunpack.c.l.b16 %v740
  %v3573 = vunpack.c.h.b16 %v740
  %v3574 = vunpack.c.l.b16 %v741
  %v3575 = vunpack.c.h.b16 %v741
  %v3576 = vunpack.c.l.b16 %v742
  %v3577 = vunpack.c.h.b16 %v742
  %v3578 = vunpack.c.l.b16 %v743
  %v3579 = vunpack.c.h.b16 %v743
  %v3580 = vunpack.c.l.b16 %v744
  %v3581 = vunpack.c.h.b16 %v744
  %v3582 = vunpack.c.l.b16 %v745
  %v3583 = vunpack.c.h.b16 %v745
  %v3584 = vunpack.c.l.b16 %v746
  %v3585 = vunpack.c.h.b16 %v746
  %v3586 = vunpack.c.l.b16 %v747
  %v3587 = vunpack.c.h.b16 %v747
  %v3588 = vunpack.c.l.b16 %v748
  %v3589 = vunpack.c.h.b16 %v748
  %v3590 = vunpack.c.l.b16 %v749
  %v3591 = vunpack.c.h.b16 %v749
  %v3592 = vunpack.c.l.b16 %v750
  %v3593 = vunpack.c.h.b16 %v750
  %v3594 = vunpack.c.l.b16 %v751
  %v3595 = vunpack.c.h.b16 %v751
  %v3596 = vunpack.c.l.b16 %v752
  %v3597 = vunpack.c.h.b16 %v752
  %v3598 = vunpack.c.l.b16 %v753
  %v3599 = vunpack.c.h.b16 %v753
  %v3600 = vunpack.c.l.b16 %v754
  %v3601 = vunpack.c.h.b16 %v754
  %v3602 = vunpack.c.l.b16 %v755
  %v3603 = vunpack.c.h.b16 %v755
  %v3604 = vunpack.c.l.b16 %v756
  %v3605 = vunpack.c.h.b16 %v756
  %v3606 = vunpack.c.l.b16 %v757
  %v3607 = vunpack.c.h.b16 %v757
  %v3608 = vunpack.c.l.b16 %v758
  %v3609 = vunpack.c.h.b16 %v758
  %v3610 = vunpack.c.l.b16 %v759
  %v3611 = vunpack.c.h.b16 %v759
  %v3612 = vunpack.c.l.b16 %v760
  %v3613 = vunpack.c.h.b16 %v760
  %v3614 = vunpack.c.l.b16 %v761
  %v3615 = vunpack.c.h.b16 %v761
  %v3616 = vunpack.c.l.b16 %v762
  %v3617 = vunpack.c.h.b16 %v762
  %v3618 = vunpack.c.l.b16 %v763
  %v3619 = vunpack.c.h.b16 %v763
  %v3620 = vunpack.c.l.b16 %v764
  %v3621 = vunpack.c.h.b16 %v764
  %v3622 = vunpack.c.l.b16 %v765
  %v3623 = vunpack.c.h.b16 %v765
  %v3624 = vunpack.c.l.b16 %v766
  %v3625 = vunpack.c.h.b16 %v766
  %v3626 = vunpack.c.l.b16 %v767
  %v3627 = vunpack.c.h.b16 %v767
  %v3628 = vunpack.c.l.b16 %v768
  %v3629 = vunpack.c.h.b16 %v768
  %v3630 = vunpack.c.l.b16 %v769
  %v3631 = vunpack.c.h.b16 %v769
  %v3632 = vunpack.c.l.b16 %v770
  %v3633 = vunpack.c.h.b16 %v770
  %v3634 = vunpack.c.l.b16 %v771
  %v3635 = vunpack.c.h.b16 %v771
  %v3636 = vunpack.c.l.b16 %v772
  %v3637 = vunpack.c.h.b16 %v772
  %v3638 = vunpack.c.l.b16 %v773
  %v3639 = vunpack.c.h.b16 %v773
  %v3640 = vunpack.c.l.b16 %v774
  %v3641 = vunpack.c.h.b16 %v774
  %v3642 = vunpack.c.l.b16 %v775
  %v3643 = vunpack.c.h.b16 %v775
  %v3644 = vunpack.c.l.b16 %v776
  %v3645 = vunpack.c.h.b16 %v776
  %v3646 = vunpack.c.l.b16 %v777
  %v3647 = vunpack.c.h.b16 %v777
  %v3648 = vunpack.c.l.b16 %v778
  %v3649 = vunpack.c.h.b16 %v778
  %v3650 = vunpack.c.l.b16 %v779
  %v3651 = vunpack.c.h.b16 %v779
  %v3652 = vunpack.c.l.b16 %v780
  %v3653 = vunpack.c.h.b16 %v780
  %v3654 = vunpack.c.l.b16 %v781
  %v3655 = vunpack.c.h.b16 %v781
  %v3656 = vunpack.c.l.b16 %v782
  %v3657 = vunpack.c.h.b16 %v782
  %v3658 = vunpack.c.l.b16 %v783
  %v3659 = vunpack.c.h.b16 %v783
  %v3660 = vunpack.c.l.b16 %v784
  %v3661 = vunpack.c.h.b16 %v784
  %v3662 = vunpack.c.l.b16 %v785
  %v3663 = vunpack.c.h.b16 %v785
  %v3664 = vunpack.c.l.b16 %v786
  %v3665 = vunpack.c.h.b16 %v786
  %v3666 = vunpack.c.l.b16 %v787
  %v3667 = vunpack.c.h.b16 %v787
  %v3668 = vunpack.c.l.b16 %v788
  %v3669 = vunpack.c.h.b16 %v788
  %v3670 = vunpack.c.l.b16 %v789
  %v3671 = vunpack.c.h.b16 %v789
  %v3672 = vunpack.c.l.b16 %v790
  %v3673 = vunpack.c.h.b16 %v790
  %v3674 = vunpack.c.l.b16 %v791
  %v3675 = vunpack.c.h.b16 %v791
  %v3676 = vunpack.c.l.b16 %v792
  %v3677 = vunpack.c.h.b16 %v792
  %v3678 = vunpack.c.l.b16 %v793
  %v3679 = vunpack.c.h.b16 %v793
  %v3680 = vunpack.c.l.b16 %v794
  %v3681 = vunpack.c.h.b16 %v794
  %v3682 = vunpack.c.l.b16 %v795
  %v3683 = vunpack.c.h.b16 %v795
  %v3684 = vunpack.c.l.b16 %v796
  %v3685 = vunpack.c.h.b16 %v796
  %v3686 = vunpack.c.l.b16 %v797
  %v3687 = vunpack.c.h.b16 %v797
  %v3688 = vunpack.c.l.b16 %v798
  %v3689 = vunpack.c.h.b16 %v798
  %v3690 = vunpack.c.l.b16 %v799
  %v3691 = vunpack.c.h.b16 %v799
  %v3692 = vunpack.c.l.b16 %v800
  %v3693 = vunpack.c.h.b16 %v800
  %v3694 = vunpack.c.l.b16 %v801
  %v3695 = vunpack.c.h.b16 %v801
  %v3696 = vunpack.c.l.b16 %v802
  %v3697 = vunpack.c.h.b16 %v802
  %v3698 = vunpack.c.l.b16 %v803
  %v3699 = vunpack.c.h.b16 %v803
  %v3700 = vunpack.c.l.b16 %v804
  %v3701 = vunpack.c.h.b16 %v804
  %v3702 = vunpack.c.l.b16 %v805
  %v3703 = vunpack.c.h.b16 %v805
  %v3704 = vunpack.c.l.b16 %v806
  %v3705 = vunpack.c.h.b16 %v806
  %v3706 = vunpack.c.l.b16 %v807
  %v3707 = vunpack.c.h.b16 %v807
  %v3708 = vunpack.c.l.b16 %v808
  %v3709 = vunpack.c.h.b16 %v808
  %v3710 = vunpack.c.l.b16 %v809
  %v3711 = vunpack.c.h.b16 %v809
  %v3712 = vunpack.c.l.b16 %v810
  %v3713 = vunpack.c.h.b16 %v810
  %v3714 = vunpack.c.l.b16 %v811
  %v3715 = vunpack.c.h.b16 %v811
  %v3716 = vunpack.c.l.b16 %v812
  %v3717 = vunpack.c.h.b16 %v812
  %v3718 = vunpack.c.l.b16 %v813
  %v3719 = vunpack.c.h.b16 %v813
  %v3720 = vunpack.c.l.b16 %v814
  %v3721 = vunpack.c.h.b16 %v814
  %v3722 = vunpack.c.l.b16 %v815
  %v3723 = vunpack.c.h.b16 %v815
  %v3724 = vunpack.c.l.b16 %v816
  %v3725 = vunpack.c.h.b16 %v816
  %v3726 = vunpack.c.l.b16 %v817
  %v3727 = vunpack.c.h.b16 %v817
  %v3728 = vunpack.c.l.b16 %v818
  %v3729 = vunpack.c.h.b16 %v818
  %v3730 = vunpack.c.l.b16 %v819
  %v3731 = vunpack.c.h.b16 %v819
  %v3732 = vunpack.c.l.b16 %v820
  %v3733 = vunpack.c.h.b16 %v820
  %v3734 = vunpack.c.l.b16 %v821
  %v3735 = vunpack.c.h.b16 %v821
  %v3736 = vunpack.c.l.b16 %v822
  %v3737 = vunpack.c.h.b16 %v822
  %v3738 = vunpack.c.l.b16 %v823
  %v3739 = vunpack.c.h.b16 %v823
  %v3740 = vunpack.c.l.b16 %v824
  %v3741 = vunpack.c.h.b16 %v824
  %v3742 = vunpack.c.l.b16 %v825
  %v3743 = vunpack.c.h.b16 %v825
  %v3744 = vunpack.c.l.b16 %v826
  %v3745 = vunpack.c.h.b16 %v826
  %v3746 = vunpack.c.l.b16 %v827
  %v3747 = vunpack.c.h.b16 %v827
  %v3748 = vunpack.c.l.b16 %v828
  %v3749 = vunpack.c.h.b16 %v828
  %v3750 = vunpack.c.l.b16 %v829
  %v3751 = vunpack.c.h.b16 %v829
  %v3752 = vunpack.c.l.b16 %v830
  %v3753 = vunpack.c.h.b16 %v830
  %v3754 = vunpack.c.l.b16 %v831
  %v3755 = vunpack.c.h.b16 %v831
  %v3756 = vunpack.c.l.b16 %v832
  %v3757 = vunpack.c.h.b16 %v832
  %v3758 = vunpack.c.l.b16 %v833
  %v3759 = vunpack.c.h.b16 %v833
  %v3760 = vunpack.c.l.b16 %v834
  %v3761 = vunpack.c.h.b16 %v834
  %v3762 = vunpack.c.l.b16 %v835
  %v3763 = vunpack.c.h.b16 %v835
  %v3764 = vunpack.c.l.b16 %v836
  %v3765 = vunpack.c.h.b16 %v836
  %v3766 = vunpack.c.l.b16 %v837
  %v3767 = vunpack.c.h.b16 %v837
  %v3768 = vunpack.c.l.b16 %v838
  %v3769 = vunpack.c.h.b16 %v838
  %v3770 = vunpack.c.l.b16 %v839
  %v3771 = vunpack.c.h.b16 %v839
  %v3772 = vunpack.c.l.b16 %v840
  %v3773 = vunpack.c.h.b16 %v840
  %v3774 = vunpack.c.l.b16 %v841
  %v3775 = vunpack.c.h.b16 %v841
  %v3776 = vunpack.c.l.b16 %v842
  %v3777 = vunpack.c.h.b16 %v842
  %v3778 = vunpack.c.l.b16 %v843
  %v3779 = vunpack.c.h.b16 %v843
  %v3780 = vunpack.c.l.b16 %v844
  %v3781 = vunpack.c.h.b16 %v844
  %v3782 = vunpack.c.l.b16 %v845
  %v3783 = vunpack.c.h.b16 %v845
  %v3784 = vunpack.c.l.b16 %v846
  %v3785 = vunpack.c.h.b16 %v846
  %v3786 = vunpack.c.l.b16 %v847
  %v3787 = vunpack.c.h.b16 %v847
  %v3788 = vunpack.c.l.b16 %v848
  %v3789 = vunpack.c.h.b16 %v848
  %v3790 = vunpack.c.l.b16 %v849
  %v3791 = vunpack.c.h.b16 %v849
  %v3792 = vunpack.c.l.b16 %v850
  %v3793 = vunpack.c.h.b16 %v850
  %v3794 = vunpack.c.l.b16 %v851
  %v3795 = vunpack.c.h.b16 %v851
  %v3796 = vunpack.c.l.b16 %v852
  %v3797 = vunpack.c.h.b16 %v852
  %v3798 = vunpack.c.l.b16 %v853
  %v3799 = vunpack.c.h.b16 %v853
  %v3800 = vunpack.c.l.b16 %v854
  %v3801 = vunpack.c.h.b16 %v854
  %v3802 = vunpack.c.l.b16 %v855
  %v3803 = vunpack.c.h.b16 %v855
  %v3804 = vunpack.c.l.b16 %v856
  %v3805 = vunpack.c.h.b16 %v856
  %v3806 = vunpack.c.l.b16 %v857
  %v3807 = vunpack.c.h.b16 %v857
  %v3808 = vunpack.c.l.b16 %v858
  %v3809 = vunpack.c.h.b16 %v858
  %v3810 = vunpack.c.l.b16 %v859
  %v3811 = vunpack.c.h.b16 %v859
  %v3812 = vunpack.c.l.b16 %v860
  %v3813 = vunpack.c.h.b16 %v860
  %v3814 = vunpack.c.l.b16 %v861
  %v3815 = vunpack.c.h.b16 %v861
  %v3816 = vunpack.c.l.b16 %v862
  %v3817 = vunpack.c.h.b16 %v862
  %v3818 = vunpack.c.l.b16 %v863
  %v3819 = vunpack.c.h.b16 %v863
  %v3820 = vunpack.c.l.b16 %v864
  %v3821 = vunpack.c.h.b16 %v864
  %v3822 = vunpack.c.l.b16 %v865
  %v3823 = vunpack.c.h.b16 %v865
  %v3824 = vunpack.c.l.b16 %v866
  %v3825 = vunpack.c.h.b16 %v866
  %v3826 = vunpack.c.l.b16 %v867
  %v3827 = vunpack.c.h.b16 %v867
  %v3828 = vunpack.c.l.b16 %v868
  %v3829 = vunpack.c.h.b16 %v868
  %v3830 = vunpack.c.l.b16 %v869
  %v3831 = vunpack.c.h.b16 %v869
  %v3832 = vunpack.c.l.b16 %v870
  %v3833 = vunpack.c.h.b16 %v870
  %v3834 = vunpack.c.l.b16 %v871
  %v3835 = vunpack.c.h.b16 %v871
  %v3836 = vunpack.c.l.b16 %v872
  %v3837 = vunpack.c.h.b16 %v872
  %v3838 = vunpack.c.l.b16 %v873
  %v3839 = vunpack.c.h.b16 %v873
  %v3840 = vunpack.c.l.b16 %v874
  %v3841 = vunpack.c.h.b16 %v874
  %v3842 = vunpack.c.l.b16 %v875
  %v3843 = vunpack.c.h.b16 %v875
  %v3844 = vunpack.c.l.b16 %v876
  %v3845 = vunpack.c.h.b16 %v876
  %v3846 = vunpack.c.l.b16 %v877
  %v3847 = vunpack.c.h.b16 %v877
  %v3848 = vunpack.c.l.b16 %v878
  %v3849 = vunpack.c.h.b16 %v878
  %v3850 = vunpack.c.l.b16 %v879
  %v3851 = vunpack.c.h.b16 %v879
  %v3852 = vunpack.c.l.b16 %v880
  %v3853 = vunpack.c.h.b16 %v880
  %v3854 = vunpack.c.l.b16 %v881
  %v3855 = vunpack.c.h.b16 %v881
  %v3856 = vunpack.c.l.b16 %v882
  %v3857 = vunpack.c.h.b16 %v882
  %v3858 = vunpack.c.l.b16 %v883
  %v3859 = vunpack.c.h.b16 %v883
  %v3860 = vunpack.c.l.b16 %v884
  %v3861 = vunpack.c.h.b16 %v884
  %v3862 = vunpack.c.l.b16 %v885
  %v3863 = vunpack.c.h.b16 %v885
  %v3864 = vunpack.c.l.b16 %v886
  %v3865 = vunpack.c.h.b16 %v886
  %v3866 = vunpack.c.l.b16 %v887
  %v3867 = vunpack.c.h.b16 %v887
  %v3868 = vunpack.c.l.b16 %v888
  %v3869 = vunpack.c.h.b16 %v888
  %v3870 = vunpack.c.l.b16 %v889
  %v3871 = vunpack.c.h.b16 %v889
  %v3872 = vunpack.c.l.b16 %v890
  %v3873 = vunpack.c.h.b16 %v890
  %v3874 = vunpack.c.l.b16 %v891
  %v3875 = vunpack.c.h.b16 %v891
  %v3876 = vunpack.c.l.b16 %v892
  %v3877 = vunpack.c.h.b16 %v892
  %v3878 = vunpack.c.l.b16 %v893
  %v3879 = vunpack.c.h.b16 %v893
  %v3880 = vunpack.c.l.b16 %v894
  %v3881 = vunpack.c.h.b16 %v894
  %v3882 = vunpack.c.l.b16 %v895
  %v3883 = vunpack.c.h.b16 %v895
  %v3884 = vunpack.c.l.b16 %v896
  %v3885 = vunpack.c.h.b16 %v896
  %v3886 = vunpack.c.l.b16 %v897
  %v3887 = vunpack.c.h.b16 %v897
  %v3888 = vunpack.c.l.b16 %v898
  %v3889 = vunpack.c.h.b16 %v898
  %v3890 = vunpack.c.l.b16 %v899
  %v3891 = vunpack.c.h.b16 %v899
  %v3892 = vunpack.c.l.b16 %v900
  %v3893 = vunpack.c.h.b16 %v900
  %v3894 = vunpack.c.l.b16 %v901
  %v3895 = vunpack.c.h.b16 %v901
  %v3896 = vunpack.c.l.b16 %v902
  %v3897 = vunpack.c.h.b16 %v902
  %v3898 = vunpack.c.l.b16 %v903
  %v3899 = vunpack.c.h.b16 %v903
  %v3900 = vunpack.c.l.b16 %v904
  %v3901 = vunpack.c.h.b16 %v904
  %v3902 = vunpack.c.l.b16 %v905
  %v3903 = vunpack.c.h.b16 %v905
  %v3904 = vunpack.c.l.b16 %v906
  %v3905 = vunpack.c.h.b16 %v906
  %v3906 = vunpack.c.l.b16 %v907
  %v3907 = vunpack.c.h.b16 %v907
  %v3908 = vunpack.c.l.b16 %v908
  %v3909 = vunpack.c.h.b16 %v908
  %v3910 = vunpack.c.l.b16 %v909
  %v3911 = vunpack.c.h.b16 %v909
  %v3912 = vunpack.c.l.b16 %v910
  %v3913 = vunpack.c.h.b16 %v910
  %v3914 = vunpack.c.l.b16 %v911
  %v3915 = vunpack.c.h.b16 %v911
  %v3916 = vunpack.c.l.b16 %v912
  %v3917 = vunpack.c.h.b16 %v912
  %v3918 = vunpack.c.l.b16 %v913
  %v3919 = vunpack.c.h.b16 %v913
  %v3920 = vunpack.c.l.b16 %v914
  %v3921 = vunpack.c.h.b16 %v914
  %v3922 = vunpack.c.l.b16 %v915
  %v3923 = vunpack.c.h.b16 %v915
  %v3924 = vunpack.c.l.b16 %v916
  %v3925 = vunpack.c.h.b16 %v916
  %v3926 = vunpack.c.l.b16 %v917
  %v3927 = vunpack.c.h.b16 %v917
  %v3928 = vunpack.c.l.b16 %v918
  %v3929 = vunpack.c.h.b16 %v918
  %v3930 = vunpack.c.l.b16 %v919
  %v3931 = vunpack.c.h.b16 %v919
  %v3932 = vunpack.c.l.b16 %v920
  %v3933 = vunpack.c.h.b16 %v920
  %v3934 = vunpack.c.l.b16 %v921
  %v3935 = vunpack.c.h.b16 %v921
  %v3936 = vunpack.c.l.b16 %v922
  %v3937 = vunpack.c.h.b16 %v922
  %v3938 = vunpack.c.l.b16 %v923
  %v3939 = vunpack.c.h.b16 %v923
  %v3940 = vunpack.c.l.b16 %v924
  %v3941 = vunpack.c.h.b16 %v924
  %v3942 = vunpack.c.l.b16 %v925
  %v3943 = vunpack.c.h.b16 %v925
  %v3944 = vunpack.c.l.b16 %v926
  %v3945 = vunpack.c.h.b16 %v926
  %v3946 = vunpack.c.l.b16 %v927
  %v3947 = vunpack.c.h.b16 %v927
  %v3948 = vunpack.c.l.b16 %v928
  %v3949 = vunpack.c.h.b16 %v928
  %v3950 = vunpack.c.l.b16 %v929
  %v3951 = vunpack.c.h.b16 %v929
  %v3952 = vunpack.c.l.b16 %v930
  %v3953 = vunpack.c.h.b16 %v930
  %v3954 = vunpack.c.l.b16 %v931
  %v3955 = vunpack.c.h.b16 %v931
  %v3956 = vunpack.c.l.b16 %v932
  %v3957 = vunpack.c.h.b16 %v932
  %v3958 = vunpack.c.l.b16 %v933
  %v3959 = vunpack.c.h.b16 %v933
  %v3960 = vunpack.c.l.b16 %v934
  %v3961 = vunpack.c.h.b16 %v934
  %v3962 = vunpack.c.l.b16 %v935
  %v3963 = vunpack.c.h.b16 %v935
  %v3964 = vunpack.c.l.b16 %v936
  %v3965 = vunpack.c.h.b16 %v936
  %v3966 = vunpack.c.l.b16 %v937
  %v3967 = vunpack.c.h.b16 %v937
  %v3968 = vunpack.c.l.b16 %v938
  %v3969 = vunpack.c.h.b16 %v938
  %v3970 = vunpack.c.l.b16 %v939
  %v3971 = vunpack.c.h.b16 %v939
  %v3972 = vunpack.c.l.b16 %v940
  %v3973 = vunpack.c.h.b16 %v940
  %v3974 = vunpack.c.l.b16 %v941
  %v3975 = vunpack.c.h.b16 %v941
  %v3976 = vunpack.c.l.b16 %v942
  %v3977 = vunpack.c.h.b16 %v942
  %v3978 = vunpack.c.l.b16 %v943
  %v3979 = vunpack.c.h.b16 %v943
  %v3980 = vunpack.c.l.b16 %v944
  %v3981 = vunpack.c.h.b16 %v944
  %v3982 = vunpack.c.l.b16 %v945
  %v3983 = vunpack.c.h.b16 %v945
  %v3984 = vunpack.c.l.b16 %v946
  %v3985 = vunpack.c.h.b16 %v946
  %v3986 = vunpack.c.l.b16 %v947
  %v3987 = vunpack.c.h.b16 %v947
  %v3988 = vunpack.c.l.b16 %v948
  %v3989 = vunpack.c.h.b16 %v948
  %v3990 = vunpack.c.l.b16 %v949
  %v3991 = vunpack.c.h.b16 %v949
  %v3992 = vunpack.c.l.b16 %v950
  %v3993 = vunpack.c.h.b16 %v950
  %v3994 = vunpack.c.l.b16 %v951
  %v3995 = vunpack.c.h.b16 %v951
  %v3996 = vunpack.c.l.b16 %v952
  %v3997 = vunpack.c.h.b16 %v952
  %v3998 = vunpack.c.l.b16 %v953
  %v3999 = vunpack.c.h.b16 %v953
  %v4000 = vunpack.c.l.b16 %v954
  %v4001 = vunpack.c.h.b16 %v954
  %v4002 = vunpack.c.l.b16 %v955
  %v4003 = vunpack.c.h.b16 %v955
  %v4004 = vunpack.c.l.b16 %v956
  %v4005 = vunpack.c.h.b16 %v956
  %v4006 = vunpack.c.l.b16 %v957
  %v4007 = vunpack.c.h.b16 %v957
  %v4008 = vunpack.c.l.b16 %v958
  %v4009 = vunpack.c.h.b16 %v958
  %v4010 = vunpack.c.l.b16 %v959
  %v4011 = vunpack.c.h.b16 %v959
  %v4012 = vunpack.c.l.b16 %v960
  %v4013 = vunpack.c.h.b16 %v960
  %v4014 = vunpack.c.l.b16 %v961
  %v4015 = vunpack.c.h.b16 %v961
  %v4016 = vunpack.c.l.b16 %v962
  %v4017 = vunpack.c.h.b16 %v962
  %v4018 = vunpack.c.l.b16 %v963
  %v4019 = vunpack.c.h.b16 %v963
  %v4020 = vunpack.c.l.b16 %v964
  %v4021 = vunpack.c.h.b16 %v964
  %v4022 = vunpack.c.l.b16 %v965
  %v4023 = vunpack.c.h.b16 %v965
  %v4024 = vunpack.c.l.b16 %v966
  %v4025 = vunpack.c.h.b16 %v966
  %v4026 = vunpack.c.l.b16 %v967
  %v4027 = vunpack.c.h.b16 %v967
  %v4028 = vunpack.c.l.b16 %v968
  %v4029 = vunpack.c.h.b16 %v968
  %v4030 = vunpack.c.l.b16 %v969
  %v4031 = vunpack.c.h.b16 %v969
  %v4032 = vunpack.c.l.b16 %v970
  %v4033 = vunpack.c.h.b16 %v970
  %v4034 = vunpack.c.l.b16 %v971
  %v4035 = vunpack.c.h.b16 %v971
  %v4036 = vunpack.c.l.b16 %v972
  %v4037 = vunpack.c.h.b16 %v972
  %v4038 = vunpack.c.l.b16 %v973
  %v4039 = vunpack.c.h.b16 %v973
  %v4040 = vunpack.c.l.b16 %v974
  %v4041 = vunpack.c.h.b16 %v974
  %v4042 = vunpack.c.l.b16 %v975
  %v4043 = vunpack.c.h.b16 %v975
  %v4044 = vunpack.c.l.b16 %v976
  %v4045 = vunpack.c.h.b16 %v976
  %v4046 = vunpack.c.l.b16 %v977
  %v4047 = vunpack.c.h.b16 %v977
  %v4048 = vunpack.c.l.b16 %v978
  %v4049 = vunpack.c.h.b16 %v978
  %v4050 = vunpack.c.l.b16 %v979
  %v4051 = vunpack.c.h.b16 %v979
  %v4052 = vunpack.c.l.b16 %v980
  %v4053 = vunpack.c.h.b16 %v980
  %v4054 = vunpack.c.l.b16 %v981
  %v4055 = vunpack.c.h.b16 %v981
  %v4056 = vunpack.c.l.b16 %v982
  %v4057 = vunpack.c.h.b16 %v982
  %v4058 = vunpack.c.l.b16 %v983
  %v4059 = vunpack.c.h.b16 %v983
  %v4060 = vunpack.c.l.b16 %v984
  %v4061 = vunpack.c.h.b16 %v984
  %v4062 = vunpack.c.l.b16 %v985
  %v4063 = vunpack.c.h.b16 %v985
  %v4064 = vunpack.c.l.b16 %v986
  %v4065 = vunpack.c.h.b16 %v986
  %v4066 = vunpack.c.l.b16 %v987
  %v4067 = vunpack.c.h.b16 %v987
  %v4068 = vunpack.c.l.b16 %v988
  %v4069 = vunpack.c.h.b16 %v988
  %v4070 = vunpack.c.l.b16 %v989
  %v4071 = vunpack.c.h.b16 %v989
  %v4072 = vunpack.c.l.b16 %v990
  %v4073 = vunpack.c.h.b16 %v990
  %v4074 = vunpack.c.l.b16 %v991
  %v4075 = vunpack.c.h.b16 %v991
  %v4076 = vunpack.c.l.b16 %v992
  %v4077 = vunpack.c.h.b16 %v992
  %v4078 = vunpack.c.l.b16 %v993
  %v4079 = vunpack.c.h.b16 %v993
  %v4080 = vunpack.c.l.b16 %v994
  %v4081 = vunpack.c.h.b16 %v994
  %v4082 = vunpack.c.l.b16 %v995
  %v4083 = vunpack.c.h.b16 %v995
  %v4084 = vunpack.c.l.b16 %v996
  %v4085 = vunpack.c.h.b16 %v996
  %v4086 = vunpack.c.l.b16 %v997
  %v4087 = vunpack.c.h.b16 %v997
  %v4088 = vunpack.c.l.b16 %v998
  %v4089 = vunpack.c.h.b16 %v998
  %v4090 = vunpack.c.l.b16 %v999
  %v4091 = vunpack.c.h.b16 %v999
  %v4092 = vunpack.c.l.b16 %v1000
  %v4093 = vunpack.c.h.b16 %v1000
  %v4094 = vunpack.c.l.b16 %v1001
  %v4095 = vunpack.c.h.b16 %v1001
  %v4096 = vunpack.c.l.b16 %v1002
  %v4097 = vunpack.c.h.b16 %v1002
  %v4098 = vunpack.c.l.b16 %v1003
  %v4099 = vunpack.c.h.b16 %v1003
  %v4100 = vunpack.c.l.b16 %v1004
  %v4101 = vunpack.c.h.b16 %v1004
  %v4102 = vunpack.c.l.b16 %v1005
  %v4103 = vunpack.c.h.b16 %v1005
  %v4104 = vunpack.c.l.b16 %v1006
  %v4105 = vunpack.c.h.b16 %v1006
  %v4106 = vunpack.c.l.b16 %v1007
  %v4107 = vunpack.c.h.b16 %v1007
  %v4108 = vunpack.c.l.b16 %v1008
  %v4109 = vunpack.c.h.b16 %v1008
  %v4110 = vunpack.c.l.b16 %v1009
  %v4111 = vunpack.c.h.b16 %v1009
  %v4112 = vunpack.c.l.b16 %v1010
  %v4113 = vunpack.c.h.b16 %v1010
  %v4114 = vunpack.c.l.b16 %v1011
  %v4115 = vunpack.c.h.b16 %v1011
  %v4116 = vunpack.c.l.b16 %v1012
  %v4117 = vunpack.c.h.b16 %v1012
  %v4118 = vunpack.c.l.b16 %v1013
  %v4119 = vunpack.c.h.b16 %v1013
  %v4120 = vunpack.c.l.b16 %v1014
  %v4121 = vunpack.c.h.b16 %v1014
  %v4122 = vunpack.c.l.b16 %v1015
  %v4123 = vunpack.c.h.b16 %v1015
  %v4124 = vunpack.c.l.b16 %v1016
  %v4125 = vunpack.c.h.b16 %v1016
  %v4126 = vunpack.c.l.b16 %v1017
  %v4127 = vunpack.c.h.b16 %v1017
  %v4128 = vunpack.c.l.b16 %v1018
  %v4129 = vunpack.c.h.b16 %v1018
  %v4130 = vunpack.c.l.b16 %v1019
  %v4131 = vunpack.c.h.b16 %v1019
  %v4132 = vunpack.c.l.b16 %v1020
  %v4133 = vunpack.c.h.b16 %v1020
  %v4134 = vunpack.c.l.b16 %v1021
  %v4135 = vunpack.c.h.b16 %v1021
  %v4136 = vunpack.c.l.b16 %v1022
  %v4137 = vunpack.c.h.b16 %v1022
  %v4138 = vunpack.c.l.b16 %v1023
  %v4139 = vunpack.c.h.b16 %v1023
  %v4140 = vunpack.c.l.b16 %v1024
  %v4141 = vunpack.c.h.b16 %v1024
  %v4142 = vunpack.c.l.b16 %v1025
  %v4143 = vunpack.c.h.b16 %v1025
  %v4144 = vunpack.c.l.b16 %v1026
  %v4145 = vunpack.c.h.b16 %v1026
  %v4146 = vunpack.c.l.b16 %v1027
  %v4147 = vunpack.c.h.b16 %v1027
  %v4148 = vunpack.c.l.b16 %v1028
  %v4149 = vunpack.c.h.b16 %v1028
  %v4150 = vunpack.c.l.b16 %v1029
  %v4151 = vunpack.c.h.b16 %v1029
  %v4152 = vunpack.c.l.b16 %v1030
  %v4153 = vunpack.c.h.b16 %v1030
  %v4154 = vunpack.c.l.b16 %v1031
  %v4155 = vunpack.c.h.b16 %v1031
  %v4156 = vunpack.c.l.b16 %v1032
  %v4157 = vunpack.c.h.b16 %v1032
  %v4158 = vunpack.c.l.b16 %v1033
  %v4159 = vunpack.c.h.b16 %v1033
  %v4160 = vunpack.c.l.b16 %v1034
  %v4161 = vunpack.c.h.b16 %v1034
  %v4162 = vunpack.c.l.b16 %v1035
  %v4163 = vunpack.c.h.b16 %v1035
  %v4164 = vunpack.c.l.b16 %v1036
  %v4165 = vunpack.c.h.b16 %v1036
  %v4166 = vunpack.c.l.b16 %v1037
  %v4167 = vunpack.c.h.b16 %v1037
  %v4168 = vunpack.c.l.b16 %v1038
  %v4169 = vunpack.c.h.b16 %v1038
  %v4170 = vunpack.c.l.b16 %v1039
  %v4171 = vunpack.c.h.b16 %v1039
  %v4172 = vunpack.c.l.b16 %v1040
  %v4173 = vunpack.c.h.b16 %v1040
  %v4174 = vunpack.c.l.b16 %v1041
  %v4175 = vunpack.c.h.b16 %v1041
  %v4176 = vunpack.c.l.b16 %v1042
  %v4177 = vunpack.c.h.b16 %v1042
  %v4178 = vunpack.c.l.b16 %v1043
  %v4179 = vunpack.c.h.b16 %v1043
  %v4180 = vunpack.c.l.b16 %v1044
  %v4181 = vunpack.c.h.b16 %v1044
  %v4182 = vunpack.c.l.b16 %v1045
  %v4183 = vunpack.c.h.b16 %v1045
  %v4184 = vunpack.c.l.b16 %v1046
  %v4185 = vunpack.c.h.b16 %v1046
  %v4186 = vunpack.c.l.b16 %v1047
  %v4187 = vunpack.c.h.b16 %v1047
  %v4188 = vunpack.c.l.b16 %v1048
  %v4189 = vunpack.c.h.b16 %v1048
  %v4190 = vunpack.c.l.b16 %v1049
  %v4191 = vunpack.c.h.b16 %v1049
  %v4192 = vunpack.c.l.b16 %v1050
  %v4193 = vunpack.c.h.b16 %v1050
  %v4194 = vunpack.c.l.b16 %v1051
  %v4195 = vunpack.c.h.b16 %v1051
  %v4196 = vpack.c.b16 %v2152, %v2148
  %v4197 = vpack.c.b16 %v2153, %v2149
  %v4198 = vpack.c.b16 %v2154, %v2150
  %v4199 = vpack.c.b16 %v2155, %v2151
  %v4200 = vpack.c.b16 %v2160, %v2156
  %v4201 = vpack.c.b16 %v2161, %v2157
  %v4202 = vpack.c.b16 %v2162, %v2158
  %v4203 = vpack.c.b16 %v2163, %v2159
  %v4204 = vpack.c.b16 %v2168, %v2164
  %v4205 = vpack.c.b16 %v2169, %v2165
  %v4206 = vpack.c.b16 %v2170, %v2166
  %v4207 = vpack.c.b16 %v2171, %v2167
  %v4208 = vpack.c.b16 %v2176, %v2172
  %v4209 = vpack.c.b16 %v2177, %v2173
  %v4210 = vpack.c.b16 %v2178, %v2174
  %v4211 = vpack.c.b16 %v2179, %v2175
  %v4212 = vpack.c.b16 %v2184, %v2180
  %v4213 = vpack.c.b16 %v2185, %v2181
  %v4214 = vpack.c.b16 %v2186, %v2182
  %v4215 = vpack.c.b16 %v2187, %v2183
  %v4216 = vpack.c.b16 %v2192, %v2188
  %v4217 = vpack.c.b16 %v2193, %v2189
  %v4218 = vpack.c.b16 %v2194, %v2190
  %v4219 = vpack.c.b16 %v2195, %v2191
  %v4220 = vpack.c.b16 %v2200, %v2196
  %v4221 = vpack.c.b16 %v2201, %v2197
  %v4222 = vpack.c.b16 %v2202, %v2198
  %v4223 = vpack.c.b16 %v2203, %v2199
  %v4224 = vpack.c.b16 %v2208, %v2204
  %v4225 = vpack.c.b16 %v2209, %v2205
  %v4226 = vpack.c.b16 %v2210, %v2206
  %v4227 = vpack.c.b16 %v2211, %v2207
  %v4228 = vpack.c.b16 %v2216, %v2212
  %v4229 = vpack.c.b16 %v2217, %v2213
  %v4230 = vpack.c.b16 %v2218, %v2214
  %v4231 = vpack.c.b16 %v2219, %v2215
  %v4232 = vpack.c.b16 %v2224, %v2220
  %v4233 = vpack.c.b16 %v2225, %v2221
  %v4234 = vpack.c.b16 %v2226, %v2222
  %v4235 = vpack.c.b16 %v2227, %v2223
  %v4236 = vpack.c.b16 %v2232, %v2228
  %v4237 = vpack.c.b16 %v2233, %v2229
  %v4238 = vpack.c.b16 %v2234, %v2230
  %v4239 = vpack.c.b16 %v2235, %v2231
  %v4240 = vpack.c.b16 %v2240, %v2236
  %v4241 = vpack.c.b16 %v2241, %v2237
  %v4242 = vpack.c.b16 %v2242, %v2238
  %v4243 = vpack.c.b16 %v2243, %v2239
  %v4244 = vpack.c.b16 %v2248, %v2244
  %v4245 = vpack.c.b16 %v2249, %v2245
  %v4246 = vpack.c.b16 %v2250, %v2246
  %v4247 = vpack.c.b16 %v2251, %v2247
  %v4248 = vpack.c.b16 %v2256, %v2252
  %v4249 = vpack.c.b16 %v2257, %v2253
  %v4250 = vpack.c.b16 %v2258, %v2254
  %v4251 = vpack.c.b16 %v2259, %v2255
  %v4252 = vpack.c.b16 %v2264, %v2260
  %v4253 = vpack.c.b16 %v2265, %v2261
  %v4254 = vpack.c.b16 %v2266, %v2262
  %v4255 = vpack.c.b16 %v2267, %v2263
  %v4256 = vpack.c.b16 %v2272, %v2268
  %v4257 = vpack.c.b16 %v2273, %v2269
  %v4258 = vpack.c.b16 %v2274, %v2270
  %v4259 = vpack.c.b16 %v2275, %v2271
  %v4260 = vpack.c.b16 %v2280, %v2276
  %v4261 = vpack.c.b16 %v2281, %v2277
  %v4262 = vpack.c.b16 %v2282, %v2278
  %v4263 = vpack.c.b16 %v2283, %v2279
  %v4264 = vpack.c.b16 %v2288, %v2284
  %v4265 = vpack.c.b16 %v2289, %v2285
  %v4266 = vpack.c.b16 %v2290, %v2286
  %v4267 = vpack.c.b16 %v2291, %v2287
  %v4268 = vpack.c.b16 %v2296, %v2292
  %v4269 = vpack.c.b16 %v2297, %v2293
  %v4270 = vpack.c.b16 %v2298, %v2294
  %v4271 = vpack.c.b16 %v2299, %v2295
  %v4272 = vpack.c.b16 %v2304, %v2300
  %v4273 = vpack.c.b16 %v2305, %v2301
  %v4274 = vpack.c.b16 %v2306, %v2302
  %v4275 = vpack.c.b16 %v2307, %v2303
  %v4276 = vpack.c.b16 %v2312, %v2308
  %v4277 = vpack.c.b16 %v2313, %v2309
  %v4278 = vpack.c.b16 %v2314, %v2310
  %v4279 = vpack.c.b16 %v2315, %v2311
  %v4280 = vpack.c.b16 %v2320, %v2316
  %v4281 = vpack.c.b16 %v2321, %v2317
  %v4282 = vpack.c.b16 %v2322, %v2318
  %v4283 = vpack.c.b16 %v2323, %v2319
  %v4284 = vpack.c.b16 %v2328, %v2324
  %v4285 = vpack.c.b16 %v2329, %v2325
  %v4286 = vpack.c.b16 %v2330, %v2326
  %v4287 = vpack.c.b16 %v2331, %v2327
  %v4288 = vpack.c.b16 %v2336, %v2332
  %v4289 = vpack.c.b16 %v2337, %v2333
  %v4290 = vpack.c.b16 %v2338, %v2334
  %v4291 = vpack.c.b16 %v2339, %v2335
  %v4292 = vpack.c.b16 %v2344, %v2340
  %v4293 = vpack.c.b16 %v2345, %v2341
  %v4294 = vpack.c.b16 %v2346, %v2342
  %v4295 = vpack.c.b16 %v2347, %v2343
  %v4296 = vpack.c.b16 %v2352, %v2348
  %v4297 = vpack.c.b16 %v2353, %v2349
  %v4298 = vpack.c.b16 %v2354, %v2350
  %v4299 = vpack.c.b16 %v2355, %v2351
  %v4300 = vpack.c.b16 %v2360, %v2356
  %v4301 = vpack.c.b16 %v2361, %v2357
  %v4302 = vpack.c.b16 %v2362, %v2358
  %v4303 = vpack.c.b16 %v2363, %v2359
  %v4304 = vpack.c.b16 %v2368, %v2364
  %v4305 = vpack.c.b16 %v2369, %v2365
  %v4306 = vpack.c.b16 %v2370, %v2366
  %v4307 = vpack.c.b16 %v2371, %v2367
  %v4308 = vpack.c.b16 %v2376, %v2372
  %v4309 = vpack.c.b16 %v2377, %v2373
  %v4310 = vpack.c.b16 %v2378, %v2374
  %v4311 = vpack.c.b16 %v2379, %v2375
  %v4312 = vpack.c.b16 %v2384, %v2380
  %v4313 = vpack.c.b16 %v2385, %v2381
  %v4314 = vpack.c.b16 %v2386, %v2382
  %v4315 = vpack.c.b16 %v2387, %v2383
  %v4316 = vpack.c.b16 %v2392, %v2388
  %v4317 = vpack.c.b16 %v2393, %v2389
  %v4318 = vpack.c.b16 %v2394, %v2390
  %v4319 = vpack.c.b16 %v2395, %v2391
  %v4320 = vpack.c.b16 %v2400, %v2396
  %v4321 = vpack.c.b16 %v2401, %v2397
  %v4322 = vpack.c.b16 %v2402, %v2398
  %v4323 = vpack.c.b16 %v2403, %v2399
  %v4324 = vpack.c.b16 %v2408, %v2404
  %v4325 = vpack.c.b16 %v2409, %v2405
  %v4326 = vpack.c.b16 %v2410, %v2406
  %v4327 = vpack.c.b16 %v2411, %v2407
  %v4328 = vpack.c.b16 %v2416, %v2412
  %v4329 = vpack.c.b16 %v2417, %v2413
  %v4330 = vpack.c.b16 %v2418, %v2414
  %v4331 = vpack.c.b16 %v2419, %v2415
  %v4332 = vpack.c.b16 %v2424, %v2420
  %v4333 = vpack.c.b16 %v2425, %v2421
  %v4334 = vpack.c.b16 %v2426, %v2422
  %v4335 = vpack.c.b16 %v2427, %v2423
  %v4336 = vpack.c.b16 %v2432, %v2428
  %v4337 = vpack.c.b16 %v2433, %v2429
  %v4338 = vpack.c.b16 %v2434, %v2430
  %v4339 = vpack.c.b16 %v2435, %v2431
  %v4340 = vpack.c.b16 %v2440, %v2436
  %v4341 = vpack.c.b16 %v2441, %v2437
  %v4342 = vpack.c.b16 %v2442, %v2438
  %v4343 = vpack.c.b16 %v2443, %v2439
  %v4344 = vpack.c.b16 %v2448, %v2444
  %v4345 = vpack.c.b16 %v2449, %v2445
  %v4346 = vpack.c.b16 %v2450, %v2446
  %v4347 = vpack.c.b16 %v2451, %v2447
  %v4348 = vpack.c.b16 %v2456, %v2452
  %v4349 = vpack.c.b16 %v2457, %v2453
  %v4350 = vpack.c.b16 %v2458, %v2454
  %v4351 = vpack.c.b16 %v2459, %v2455
  %v4352 = vpack.c.b16 %v2464, %v2460
  %v4353 = vpack.c.b16 %v2465, %v2461
  %v4354 = vpack.c.b16 %v2466, %v2462
  %v4355 = vpack.c.b16 %v2467, %v2463
  %v4356 = vpack.c.b16 %v2472, %v2468
  %v4357 = vpack.c.b16 %v2473, %v2469
  %v4358 = vpack.c.b16 %v2474, %v2470
  %v4359 = vpack.c.b16 %v2475, %v2471
  %v4360 = vpack.c.b16 %v2480, %v2476
  %v4361 = vpack.c.b16 %v2481, %v2477
  %v4362 = vpack.c.b16 %v2482, %v2478
  %v4363 = vpack.c.b16 %v2483, %v2479
  %v4364 = vpack.c.b16 %v2488, %v2484
  %v4365 = vpack.c.b16 %v2489, %v2485
  %v4366 = vpack.c.b16 %v2490, %v2486
  %v4367 = vpack.c.b16 %v2491, %v2487
  %v4368 = vpack.c.b16 %v2496, %v2492
  %v4369 = vpack.c.b16 %v2497, %v2493
  %v4370 = vpack.c.b16 %v2498, %v2494
  %v4371 = vpack.c.b16 %v2499, %v2495
  %v4372 = vpack.c.b16 %v2504, %v2500
  %v4373 = vpack.c.b16 %v2505, %v2501
  %v4374 = vpack.c.b16 %v2506, %v2502
  %v4375 = vpack.c.b16 %v2507, %v2503
  %v4376 = vpack.c.b16 %v2512, %v2508
  %v4377 = vpack.c.b16 %v2513, %v2509
  %v4378 = vpack.c.b16 %v2514, %v2510
  %v4379 = vpack.c.b16 %v2515, %v2511
  %v4380 = vpack.c.b16 %v2520, %v2516
  %v4381 = vpack.c.b16 %v2521, %v2517
  %v4382 = vpack.c.b16 %v2522, %v2518
  %v4383 = vpack.c.b16 %v2523, %v2519
  %v4384 = vpack.c.b16 %v2528, %v2524
  %v4385 = vpack.c.b16 %v2529, %v2525
  %v4386 = vpack.c.b16 %v2530, %v2526
  %v4387 = vpack.c.b16 %v2531, %v2527
  %v4388 = vpack.c.b16 %v2536, %v2532
  %v4389 = vpack.c.b16 %v2537, %v2533
  %v4390 = vpack.c.b16 %v2538, %v2534
  %v4391 = vpack.c.b16 %v2539, %v2535
  %v4392 = vpack.c.b16 %v2544, %v2540
  %v4393 = vpack.c.b16 %v2545, %v2541
  %v4394 = vpack.c.b16 %v2546, %v2542
  %v4395 = vpack.c.b16 %v2547, %v2543
  %v4396 = vpack.c.b16 %v2552, %v2548
  %v4397 = vpack.c.b16 %v2553, %v2549
  %v4398 = vpack.c.b16 %v2554, %v2550
  %v4399 = vpack.c.b16 %v2555, %v2551
  %v4400 = vpack.c.b16 %v2560, %v2556
  %v4401 = vpack.c.b16 %v2561, %v2557
  %v4402 = vpack.c.b16 %v2562, %v2558
  %v4403 = vpack.c.b16 %v2563, %v2559
  %v4404 = vpack.c.b16 %v2568, %v2564
  %v4405 = vpack.c.b16 %v2569, %v2565
  %v4406 = vpack.c.b16 %v2570, %v2566
  %v4407 = vpack.c.b16 %v2571, %v2567
  %v4408 = vpack.c.b16 %v2576, %v2572
  %v4409 = vpack.c.b16 %v2577, %v2573
  %v4410 = vpack.c.b16 %v2578, %v2574
  %v4411 = vpack.c.b16 %v2579, %v2575
  %v4412 = vpack.c.b16 %v2584, %v2580
  %v4413 = vpack.c.b16 %v2585, %v2581
  %v4414 = vpack.c.b16 %v2586, %v2582
  %v4415 = vpack.c.b16 %v2587, %v2583
  %v4416 = vpack.c.b16 %v2592, %v2588
  %v4417 = vpack.c.b16 %v2593, %v2589
  %v4418 = vpack.c.b16 %v2594, %v2590
  %v4419 = vpack.c.b16 %v2595, %v2591
  %v4420 = vpack.c.b16 %v2600, %v2596
  %v4421 = vpack.c.b16 %v2601, %v2597
  %v4422 = vpack.c.b16 %v2602, %v2598
  %v4423 = vpack.c.b16 %v2603, %v2599
  %v4424 = vpack.c.b16 %v2608, %v2604
  %v4425 = vpack.c.b16 %v2609, %v2605
  %v4426 = vpack.c.b16 %v2610, %v2606
  %v4427 = vpack.c.b16 %v2611, %v2607
  %v4428 = vpack.c.b16 %v2616, %v2612
  %v4429 = vpack.c.b16 %v2617, %v2613
  %v4430 = vpack.c.b16 %v2618, %v2614
  %v4431 = vpack.c.b16 %v2619, %v2615
  %v4432 = vpack.c.b16 %v2624, %v2620
  %v4433 = vpack.c.b16 %v2625, %v2621
  %v4434 = vpack.c.b16 %v2626, %v2622
  %v4435 = vpack.c.b16 %v2627, %v2623
  %v4436 = vpack.c.b16 %v2632, %v2628
  %v4437 = vpack.c.b16 %v2633, %v2629
  %v4438 = vpack.c.b16 %v2634, %v2630
  %v4439 = vpack.c.b16 %v2635, %v2631
  %v4440 = vpack.c.b16 %v2640, %v2636
  %v4441 = vpack.c.b16 %v2641, %v2637
  %v4442 = vpack.c.b16 %v2642, %v2638
  %v4443 = vpack.c.b16 %v2643, %v2639
  %v4444 = vpack.c.b16 %v2648, %v2644
  %v4445 = vpack.c.b16 %v2649, %v2645
  %v4446 = vpack.c.b16 %v2650, %v2646
  %v4447 = vpack.c.b16 %v2651, %v2647
  %v4448 = vpack.c.b16 %v2656, %v2652
  %v4449 = vpack.c.b16 %v2657, %v2653
  %v4450 = vpack.c.b16 %v2658, %v2654
  %v4451 = vpack.c.b16 %v2659, %v2655
  %v4452 = vpack.c.b16 %v2664, %v2660
  %v4453 = vpack.c.b16 %v2665, %v2661
  %v4454 = vpack.c.b16 %v2666, %v2662
  %v4455 = vpack.c.b16 %v2667, %v2663
  %v4456 = vpack.c.b16 %v2672, %v2668
  %v4457 = vpack.c.b16 %v2673, %v2669
  %v4458 = vpack.c.b16 %v2674, %v2670
  %v4459 = vpack.c.b16 %v2675, %v2671
  %v4460 = vpack.c.b16 %v2680, %v2676
  %v4461 = vpack.c.b16 %v2681, %v2677
  %v4462 = vpack.c.b16 %v2682, %v2678
  %v4463 = vpack.c.b16 %v2683, %v2679
  %v4464 = vpack.c.b16 %v2688, %v2684
  %v4465 = vpack.c.b16 %v2689, %v2685
  %v4466 = vpack.c.b16 %v2690, %v2686
  %v4467 = vpack.c.b16 %v2691, %v2687
  %v4468 = vpack.c.b16 %v2696, %v2692
  %v4469 = vpack.c.b16 %v2697, %v2693
  %v4470 = vpack.c.b16 %v2698, %v2694
  %v4471 = vpack.c.b16 %v2699, %v2695
  %v4472 = vpack.c.b16 %v2704, %v2700
  %v4473 = vpack.c.b16 %v2705, %v2701
  %v4474 = vpack.c.b16 %v2706, %v2702
  %v4475 = vpack.c.b16 %v2707, %v2703
  %v4476 = vpack.c.b16 %v2712, %v2708
  %v4477 = vpack.c.b16 %v2713, %v2709
  %v4478 = vpack.c.b16 %v2714, %v2710
  %v4479 = vpack.c.b16 %v2715, %v2711
  %v4480 = vpack.c.b16 %v2720, %v2716
  %v4481 = vpack.c.b16 %v2721, %v2717
  %v4482 = vpack.c.b16 %v2722, %v2718
  %v4483 = vpack.c.b16 %v2723, %v2719
  %v4484 = vpack.c.b16 %v2728, %v2724
  %v4485 = vpack.c.b16 %v2729, %v2725
  %v4486 = vpack.c.b16 %v2730, %v2726
  %v4487 = vpack.c.b16 %v2731, %v2727
  %v4488 = vpack.c.b16 %v2736, %v2732
  %v4489 = vpack.c.b16 %v2737, %v2733
  %v4490 = vpack.c.b16 %v2738, %v2734
  %v4491 = vpack.c.b16 %v2739, %v2735
  %v4492 = vpack.c.b16 %v2744, %v2740
  %v4493 = vpack.c.b16 %v2745, %v2741
  %v4494 = vpack.c.b16 %v2746, %v2742
  %v4495 = vpack.c.b16 %v2747, %v2743
  %v4496 = vpack.c.b16 %v2752, %v2748
  %v4497 = vpack.c.b16 %v2753, %v2749
  %v4498 = vpack.c.b16 %v2754, %v2750
  %v4499 = vpack.c.b16 %v2755, %v2751
  %v4500 = vpack.c.b16 %v2760, %v2756
  %v4501 = vpack.c.b16 %v2761, %v2757
  %v4502 = vpack.c.b16 %v2762, %v2758
  %v4503 = vpack.c.b16 %v2763, %v2759
  %v4504 = vpack.c.b16 %v2768, %v2764
  %v4505 = vpack.c.b16 %v2769, %v2765
  %v4506 = vpack.c.b16 %v2770, %v2766
  %v4507 = vpack.c.b16 %v2771, %v2767
  %v4508 = vpack.c.b16 %v2776, %v2772
  %v4509 = vpack.c.b16 %v2777, %v2773
  %v4510 = vpack.c.b16 %v2778, %v2774
  %v4511 = vpack.c.b16 %v2779, %v2775
  %v4512 = vpack.c.b16 %v2784, %v2780
  %v4513 = vpack.c.b16 %v2785, %v2781
  %v4514 = vpack.c.b16 %v2786, %v2782
  %v4515 = vpack.c.b16 %v2787, %v2783
  %v4516 = vpack.c.b16 %v2792, %v2788
  %v4517 = vpack.c.b16 %v2793, %v2789
  %v4518 = vpack.c.b16 %v2794, %v2790
  %v4519 = vpack.c.b16 %v2795, %v2791
  %v4520 = vpack.c.b16 %v2800, %v2796
  %v4521 = vpack.c.b16 %v2801, %v2797
  %v4522 = vpack.c.b16 %v2802, %v2798
  %v4523 = vpack.c.b16 %v2803, %v2799
  %v4524 = vpack.c.b16 %v2808, %v2804
  %v4525 = vpack.c.b16 %v2809, %v2805
  %v4526 = vpack.c.b16 %v2810, %v2806
  %v4527 = vpack.c.b16 %v2811, %v2807
  %v4528 = vpack.c.b16 %v2816, %v2812
  %v4529 = vpack.c.b16 %v2817, %v2813
  %v4530 = vpack.c.b16 %v2818, %v2814
  %v4531 = vpack.c.b16 %v2819, %v2815
  %v4532 = vpack.c.b16 %v2824, %v2820
  %v4533 = vpack.c.b16 %v2825, %v2821
  %v4534 = vpack.c.b16 %v2826, %v2822
  %v4535 = vpack.c.b16 %v2827, %v2823
  %v4536 = vpack.c.b16 %v2832, %v2828
  %v4537 = vpack.c.b16 %v2833, %v2829
  %v4538 = vpack.c.b16 %v2834, %v2830
  %v4539 = vpack.c.b16 %v2835, %v2831
  %v4540 = vpack.c.b16 %v2840, %v2836
  %v4541 = vpack.c.b16 %v2841, %v2837
  %v4542 = vpack.c.b16 %v2842, %v2838
  %v4543 = vpack.c.b16 %v2843, %v2839
  %v4544 = vpack.c.b16 %v2848, %v2844
  %v4545 = vpack.c.b16 %v2849, %v2845
  %v4546 = vpack.c.b16 %v2850, %v2846
  %v4547 = vpack.c.b16 %v2851, %v2847
  %v4548 = vpack.c.b16 %v2856, %v2852
  %v4549 = vpack.c.b16 %v2857, %v2853
  %v4550 = vpack.c.b16 %v2858, %v2854
  %v4551 = vpack.c.b16 %v2859, %v2855
  %v4552 = vpack.c.b16 %v2864, %v2860
  %v4553 = vpack.c.b16 %v2865, %v2861
  %v4554 = vpack.c.b16 %v2866, %v2862
  %v4555 = vpack.c.b16 %v2867, %v2863
  %v4556 = vpack.c.b16 %v2872, %v2868
  %v4557 = vpack.c.b16 %v2873, %v2869
  %v4558 = vpack.c.b16 %v2874, %v2870
  %v4559 = vpack.c.b16 %v2875, %v2871
  %v4560 = vpack.c.b16 %v2880, %v2876
  %v4561 = vpack.c.b16 %v2881, %v2877
  %v4562 = vpack.c.b16 %v2882, %v2878
  %v4563 = vpack.c.b16 %v2883, %v2879
  %v4564 = vpack.c.b16 %v2888, %v2884
  %v4565 = vpack.c.b16 %v2889, %v2885
  %v4566 = vpack.c.b16 %v2890, %v2886
  %v4567 = vpack.c.b16 %v2891, %v2887
  %v4568 = vpack.c.b16 %v2896, %v2892
  %v4569 = vpack.c.b16 %v2897, %v2893
  %v4570 = vpack.c.b16 %v2898, %v2894
  %v4571 = vpack.c.b16 %v2899, %v2895
  %v4572 = vpack.c.b16 %v2904, %v2900
  %v4573 = vpack.c.b16 %v2905, %v2901
  %v4574 = vpack.c.b16 %v2906, %v2902
  %v4575 = vpack.c.b16 %v2907, %v2903
  %v4576 = vpack.c.b16 %v2912, %v2908
  %v4577 = vpack.c.b16 %v2913, %v2909
  %v4578 = vpack.c.b16 %v2914, %v2910
  %v4579 = vpack.c.b16 %v2915, %v2911
  %v4580 = vpack.c.b16 %v2920, %v2916
  %v4581 = vpack.c.b16 %v2921, %v2917
  %v4582 = vpack.c.b16 %v2922, %v2918
  %v4583 = vpack.c.b16 %v2923, %v2919
  %v4584 = vpack.c.b16 %v2928, %v2924
  %v4585 = vpack.c.b16 %v2929, %v2925
  %v4586 = vpack.c.b16 %v2930, %v2926
  %v4587 = vpack.c.b16 %v2931, %v2927
  %v4588 = vpack.c.b16 %v2936, %v2932
  %v4589 = vpack.c.b16 %v2937, %v2933
  %v4590 = vpack.c.b16 %v2938, %v2934
  %v4591 = vpack.c.b16 %v2939, %v2935
  %v4592 = vpack.c.b16 %v2944, %v2940
  %v4593 = vpack.c.b16 %v2945, %v2941
  %v4594 = vpack.c.b16 %v2946, %v2942
  %v4595 = vpack.c.b16 %v2947, %v2943
  %v4596 = vpack.c.b16 %v2952, %v2948
  %v4597 = vpack.c.b16 %v2953, %v2949
  %v4598 = vpack.c.b16 %v2954, %v2950
  %v4599 = vpack.c.b16 %v2955, %v2951
  %v4600 = vpack.c.b16 %v2960, %v2956
  %v4601 = vpack.c.b16 %v2961, %v2957
  %v4602 = vpack.c.b16 %v2962, %v2958
  %v4603 = vpack.c.b16 %v2963, %v2959
  %v4604 = vpack.c.b16 %v2968, %v2964
  %v4605 = vpack.c.b16 %v2969, %v2965
  %v4606 = vpack.c.b16 %v2970, %v2966
  %v4607 = vpack.c.b16 %v2971, %v2967
  %v4608 = vpack.c.b16 %v2976, %v2972
  %v4609 = vpack.c.b16 %v2977, %v2973
  %v4610 = vpack.c.b16 %v2978, %v2974
  %v4611 = vpack.c.b16 %v2979, %v2975
  %v4612 = vpack.c.b16 %v2984, %v2980
  %v4613 = vpack.c.b16 %v2985, %v2981
  %v4614 = vpack.c.b16 %v2986, %v2982
  %v4615 = vpack.c.b16 %v2987, %v2983
  %v4616 = vpack.c.b16 %v2992, %v2988
  %v4617 = vpack.c.b16 %v2993, %v2989
  %v4618 = vpack.c.b16 %v2994, %v2990
  %v4619 = vpack.c.b16 %v2995, %v2991
  %v4620 = vpack.c.b16 %v3000, %v2996
  %v4621 = vpack.c.b16 %v3001, %v2997
  %v4622 = vpack.c.b16 %v3002, %v2998
  %v4623 = vpack.c.b16 %v3003, %v2999
  %v4624 = vpack.c.b16 %v3008, %v3004
  %v4625 = vpack.c.b16 %v3009, %v3005
  %v4626 = vpack.c.b16 %v3010, %v3006
  %v4627 = vpack.c.b16 %v3011, %v3007
  %v4628 = vpack.c.b16 %v3016, %v3012
  %v4629 = vpack.c.b16 %v3017, %v3013
  %v4630 = vpack.c.b16 %v3018, %v3014
  %v4631 = vpack.c.b16 %v3019, %v3015
  %v4632 = vpack.c.b16 %v3024, %v3020
  %v4633 = vpack.c.b16 %v3025, %v3021
  %v4634 = vpack.c.b16 %v3026, %v3022
  %v4635 = vpack.c.b16 %v3027, %v3023
  %v4636 = vpack.c.b16 %v3032, %v3028
  %v4637 = vpack.c.b16 %v3033, %v3029
  %v4638 = vpack.c.b16 %v3034, %v3030
  %v4639 = vpack.c.b16 %v3035, %v3031
  %v4640 = vpack.c.b16 %v3040, %v3036
  %v4641 = vpack.c.b16 %v3041, %v3037
  %v4642 = vpack.c.b16 %v3042, %v3038
  %v4643 = vpack.c.b16 %v3043, %v3039
  %v4644 = vpack.c.b16 %v3048, %v3044
  %v4645 = vpack.c.b16 %v3049, %v3045
  %v4646 = vpack.c.b16 %v3050, %v3046
  %v4647 = vpack.c.b16 %v3051, %v3047
  %v4648 = vpack.c.b16 %v3056, %v3052
  %v4649 = vpack.c.b16 %v3057, %v3053
  %v4650 = vpack.c.b16 %v3058, %v3054
  %v4651 = vpack.c.b16 %v3059, %v3055
  %v4652 = vpack.c.b16 %v3064, %v3060
  %v4653 = vpack.c.b16 %v3065, %v3061
  %v4654 = vpack.c.b16 %v3066, %v3062
  %v4655 = vpack.c.b16 %v3067, %v3063
  %v4656 = vpack.c.b16 %v3072, %v3068
  %v4657 = vpack.c.b16 %v3073, %v3069
  %v4658 = vpack.c.b16 %v3074, %v3070
  %v4659 = vpack.c.b16 %v3075, %v3071
  %v4660 = vpack.c.b16 %v3080, %v3076
  %v4661 = vpack.c.b16 %v3081, %v3077
  %v4662 = vpack.c.b16 %v3082, %v3078
  %v4663 = vpack.c.b16 %v3083, %v3079
  %v4664 = vpack.c.b16 %v3088, %v3084
  %v4665 = vpack.c.b16 %v3089, %v3085
  %v4666 = vpack.c.b16 %v3090, %v3086
  %v4667 = vpack.c.b16 %v3091, %v3087
  %v4668 = vpack.c.b16 %v3096, %v3092
  %v4669 = vpack.c.b16 %v3097, %v3093
  %v4670 = vpack.c.b16 %v3098, %v3094
  %v4671 = vpack.c.b16 %v3099, %v3095
  %v4672 = vpack.c.b16 %v3104, %v3100
  %v4673 = vpack.c.b16 %v3105, %v3101
  %v4674 = vpack.c.b16 %v3106, %v3102
  %v4675 = vpack.c.b16 %v3107, %v3103
  %v4676 = vpack.c.b16 %v3112, %v3108
  %v4677 = vpack.c.b16 %v3113, %v3109
  %v4678 = vpack.c.b16 %v3114, %v3110
  %v4679 = vpack.c.b16 %v3115, %v3111
  %v4680 = vpack.c.b16 %v3120, %v3116
  %v4681 = vpack.c.b16 %v3121, %v3117
  %v4682 = vpack.c.b16 %v3122, %v3118
  %v4683 = vpack.c.b16 %v3123, %v3119
  %v4684 = vpack.c.b16 %v3128, %v3124
  %v4685 = vpack.c.b16 %v3129, %v3125
  %v4686 = vpack.c.b16 %v3130, %v3126
  %v4687 = vpack.c.b16 %v3131, %v3127
  %v4688 = vpack.c.b16 %v3136, %v3132
  %v4689 = vpack.c.b16 %v3137, %v3133
  %v4690 = vpack.c.b16 %v3138, %v3134
  %v4691 = vpack.c.b16 %v3139, %v3135
  %v4692 = vpack.c.b16 %v3144, %v3140
  %v4693 = vpack.c.b16 %v3145, %v3141
  %v4694 = vpack.c.b16 %v3146, %v3142
  %v4695 = vpack.c.b16 %v3147, %v3143
  %v4696 = vpack.c.b16 %v3152, %v3148
  %v4697 = vpack.c.b16 %v3153, %v3149
  %v4698 = vpack.c.b16 %v3154, %v3150
  %v4699 = vpack.c.b16 %v3155, %v3151
  %v4700 = vpack.c.b16 %v3160, %v3156
  %v4701 = vpack.c.b16 %v3161, %v3157
  %v4702 = vpack.c.b16 %v3162, %v3158
  %v4703 = vpack.c.b16 %v3163, %v3159
  %v4704 = vpack.c.b16 %v3168, %v3164
  %v4705 = vpack.c.b16 %v3169, %v3165
  %v4706 = vpack.c.b16 %v3170, %v3166
  %v4707 = vpack.c.b16 %v3171, %v3167
  %v4708 = vpack.c.b16 %v3176, %v3172
  %v4709 = vpack.c.b16 %v3177, %v3173
  %v4710 = vpack.c.b16 %v3178, %v3174
  %v4711 = vpack.c.b16 %v3179, %v3175
  %v4712 = vpack.c.b16 %v3184, %v3180
  %v4713 = vpack.c.b16 %v3185, %v3181
  %v4714 = vpack.c.b16 %v3186, %v3182
  %v4715 = vpack.c.b16 %v3187, %v3183
  %v4716 = vpack.c.b16 %v3192, %v3188
  %v4717 = vpack.c.b16 %v3193, %v3189
  %v4718 = vpack.c.b16 %v3194, %v3190
  %v4719 = vpack.c.b16 %v3195, %v3191
  %v4720 = vpack.c.b16 %v3200, %v3196
  %v4721 = vpack.c.b16 %v3201, %v3197
  %v4722 = vpack.c.b16 %v3202, %v3198
  %v4723 = vpack.c.b16 %v3203, %v3199
  %v4724 = vpack.c.b16 %v3208, %v3204
  %v4725 = vpack.c.b16 %v3209, %v3205
  %v4726 = vpack.c.b16 %v3210, %v3206
  %v4727 = vpack.c.b16 %v3211, %v3207
  %v4728 = vpack.c.b16 %v3216, %v3212
  %v4729 = vpack.c.b16 %v3217, %v3213
  %v4730 = vpack.c.b16 %v3218, %v3214
  %v4731 = vpack.c.b16 %v3219, %v3215
  %v4732 = vpack.c.b16 %v3224, %v3220
  %v4733 = vpack.c.b16 %v3225, %v3221
  %v4734 = vpack.c.b16 %v3226, %v3222
  %v4735 = vpack.c.b16 %v3227, %v3223
  %v4736 = vpack.c.b16 %v3232, %v3228
  %v4737 = vpack.c.b16 %v3233, %v3229
  %v4738 = vpack.c.b16 %v3234, %v3230
  %v4739 = vpack.c.b16 %v3235, %v3231
  %v4740 = vpack.c.b16 %v3240, %v3236
  %v4741 = vpack.c.b16 %v3241, %v3237
  %v4742 = vpack.c.b16 %v3242, %v3238
  %v4743 = vpack.c.b16 %v3243, %v3239
  %v4744 = vpack.c.b16 %v3248, %v3244
  %v4745 = vpack.c.b16 %v3249, %v3245
  %v4746 = vpack.c.b16 %v3250, %v3246
  %v4747 = vpack.c.b16 %v3251, %v3247
  %v4748 = vpack.c.b16 %v3256, %v3252
  %v4749 = vpack.c.b16 %v3257, %v3253
  %v4750 = vpack.c.b16 %v3258, %v3254
  %v4751 = vpack.c.b16 %v3259, %v3255
  %v4752 = vpack.c.b16 %v3264, %v3260
  %v4753 = vpack.c.b16 %v3265, %v3261
  %v4754 = vpack.c.b16 %v3266, %v3262
  %v4755 = vpack.c.b16 %v3267, %v3263
  %v4756 = vpack.c.b16 %v3272, %v3268
  %v4757 = vpack.c.b16 %v3273, %v3269
  %v4758 = vpack.c.b16 %v3274, %v3270
  %v4759 = vpack.c.b16 %v3275, %v3271
  %v4760 = vpack.c.b16 %v3280, %v3276
  %v4761 = vpack.c.b16 %v3281, %v3277
  %v4762 = vpack.c.b16 %v3282, %v3278
  %v4763 = vpack.c.b16 %v3283, %v3279
  %v4764 = vpack.c.b16 %v3288, %v3284
  %v4765 = vpack.c.b16 %v3289, %v3285
  %v4766 = vpack.c.b16 %v3290, %v3286
  %v4767 = vpack.c.b16 %v3291, %v3287
  %v4768 = vpack.c.b16 %v3296, %v3292
  %v4769 = vpack.c.b16 %v3297, %v3293
  %v4770 = vpack.c.b16 %v3298, %v3294
  %v4771 = vpack.c.b16 %v3299, %v3295
  %v4772 = vpack.c.b16 %v3304, %v3300
  %v4773 = vpack.c.b16 %v3305, %v3301
  %v4774 = vpack.c.b16 %v3306, %v3302
  %v4775 = vpack.c.b16 %v3307, %v3303
  %v4776 = vpack.c.b16 %v3312, %v3308
  %v4777 = vpack.c.b16 %v3313, %v3309
  %v4778 = vpack.c.b16 %v3314, %v3310
  %v4779 = vpack.c.b16 %v3315, %v3311
  %v4780 = vpack.c.b16 %v3320, %v3316
  %v4781 = vpack.c.b16 %v3321, %v3317
  %v4782 = vpack.c.b16 %v3322, %v3318
  %v4783 = vpack.c.b16 %v3323, %v3319
  %v4784 = vpack.c.b16 %v3328, %v3324
  %v4785 = vpack.c.b16 %v3329, %v3325
  %v4786 = vpack.c.b16 %v3330, %v3326
  %v4787 = vpack.c.b16 %v3331, %v3327
  %v4788 = vpack.c.b16 %v3336, %v3332
  %v4789 = vpack.c.b16 %v3337, %v3333
  %v4790 = vpack.c.b16 %v3338, %v3334
  %v4791 = vpack.c.b16 %v3339, %v3335
  %v4792 = vpack.c.b16 %v3344, %v3340
  %v4793 = vpack.c.b16 %v3345, %v3341
  %v4794 = vpack.c.b16 %v3346, %v3342
  %v4795 = vpack.c.b16 %v3347, %v3343
  %v4796 = vpack.c.b16 %v3352, %v3348
  %v4797 = vpack.c.b16 %v3353, %v3349
  %v4798 = vpack.c.b16 %v3354, %v3350
  %v4799 = vpack.c.b16 %v3355, %v3351
  %v4800 = vpack.c.b16 %v3360, %v3356
  %v4801 = vpack.c.b16 %v3361, %v3357
  %v4802 = vpack.c.b16 %v3362, %v3358
  %v4803 = vpack.c.b16 %v3363, %v3359
  %v4804 = vpack.c.b16 %v3368, %v3364
  %v4805 = vpack.c.b16 %v3369, %v3365
  %v4806 = vpack.c.b16 %v3370, %v3366
  %v4807 = vpack.c.b16 %v3371, %v3367
  %v4808 = vpack.c.b16 %v3376, %v3372
  %v4809 = vpack.c.b16 %v3377, %v3373
  %v4810 = vpack.c.b16 %v3378, %v3374
  %v4811 = vpack.c.b16 %v3379, %v3375
  %v4812 = vpack.c.b16 %v3384, %v3380
  %v4813 = vpack.c.b16 %v3385, %v3381
  %v4814 = vpack.c.b16 %v3386, %v3382
  %v4815 = vpack.c.b16 %v3387, %v3383
  %v4816 = vpack.c.b16 %v3392, %v3388
  %v4817 = vpack.c.b16 %v3393, %v3389
  %v4818 = vpack.c.b16 %v3394, %v3390
  %v4819 = vpack.c.b16 %v3395, %v3391
  %v4820 = vpack.c.b16 %v3400, %v3396
  %v4821 = vpack.c.b16 %v3401, %v3397
  %v4822 = vpack.c.b16 %v3402, %v3398
  %v4823 = vpack.c.b16 %v3403, %v3399
  %v4824 = vpack.c.b16 %v3408, %v3404
  %v4825 = vpack.c.b16 %v3409, %v3405
  %v4826 = vpack.c.b16 %v3410, %v3406
  %v4827 = vpack.c.b16 %v3411, %v3407
  %v4828 = vpack.c.b16 %v3416, %v3412
  %v4829 = vpack.c.b16 %v3417, %v3413
  %v4830 = vpack.c.b16 %v3418, %v3414
  %v4831 = vpack.c.b16 %v3419, %v3415
  %v4832 = vpack.c.b16 %v3424, %v3420
  %v4833 = vpack.c.b16 %v3425, %v3421
  %v4834 = vpack.c.b16 %v3426, %v3422
  %v4835 = vpack.c.b16 %v3427, %v3423
  %v4836 = vpack.c.b16 %v3432, %v3428
  %v4837 = vpack.c.b16 %v3433, %v3429
  %v4838 = vpack.c.b16 %v3434, %v3430
  %v4839 = vpack.c.b16 %v3435, %v3431
  %v4840 = vpack.c.b16 %v3440, %v3436
  %v4841 = vpack.c.b16 %v3441, %v3437
  %v4842 = vpack.c.b16 %v3442, %v3438
  %v4843 = vpack.c.b16 %v3443, %v3439
  %v4844 = vpack.c.b16 %v3448, %v3444
  %v4845 = vpack.c.b16 %v3449, %v3445
  %v4846 = vpack.c.b16 %v3450, %v3446
  %v4847 = vpack.c.b16 %v3451, %v3447
  %v4848 = vpack.c.b16 %v3456, %v3452
  %v4849 = vpack.c.b16 %v3457, %v3453
  %v4850 = vpack.c.b16 %v3458, %v3454
  %v4851 = vpack.c.b16 %v3459, %v3455
  %v4852 = vpack.c.b16 %v3464, %v3460
  %v4853 = vpack.c.b16 %v3465, %v3461
  %v4854 = vpack.c.b16 %v3466, %v3462
  %v4855 = vpack.c.b16 %v3467, %v3463
  %v4856 = vpack.c.b16 %v3472, %v3468
  %v4857 = vpack.c.b16 %v3473, %v3469
  %v4858 = vpack.c.b16 %v3474, %v3470
  %v4859 = vpack.c.b16 %v3475, %v3471
  %v4860 = vpack.c.b16 %v3480, %v3476
  %v4861 = vpack.c.b16 %v3481, %v3477
  %v4862 = vpack.c.b16 %v3482, %v3478
  %v4863 = vpack.c.b16 %v3483, %v3479
  %v4864 = vpack.c.b16 %v3488, %v3484
  %v4865 = vpack.c.b16 %v3489, %v3485
  %v4866 = vpack.c.b16 %v3490, %v3486
  %v4867 = vpack.c.b16 %v3491, %v3487
  %v4868 = vpack.c.b16 %v3496, %v3492
  %v4869 = vpack.c.b16 %v3497, %v3493
  %v4870 = vpack.c.b16 %v3498, %v3494
  %v4871 = vpack.c.b16 %v3499, %v3495
  %v4872 = vpack.c.b16 %v3504, %v3500
  %v4873 = vpack.c.b16 %v3505, %v3501
  %v4874 = vpack.c.b16 %v3506, %v3502
  %v4875 = vpack.c.b16 %v3507, %v3503
  %v4876 = vpack.c.b16 %v3512, %v3508
  %v4877 = vpack.c.b16 %v3513, %v3509
  %v4878 = vpack.c.b16 %v3514, %v3510
  %v4879 = vpack.c.b16 %v3515, %v3511
  %v4880 = vpack.c.b16 %v3520, %v3516
  %v4881 = vpack.c.b16 %v3521, %v3517
  %v4882 = vpack.c.b16 %v3522, %v3518
  %v4883 = vpack.c.b16 %v3523, %v3519
  %v4884 = vpack.c.b16 %v3528, %v3524
  %v4885 = vpack.c.b16 %v3529, %v3525
  %v4886 = vpack.c.b16 %v3530, %v3526
  %v4887 = vpack.c.b16 %v3531, %v3527
  %v4888 = vpack.c.b16 %v3536, %v3532
  %v4889 = vpack.c.b16 %v3537, %v3533
  %v4890 = vpack.c.b16 %v3538, %v3534
  %v4891 = vpack.c.b16 %v3539, %v3535
  %v4892 = vpack.c.b16 %v3544, %v3540
  %v4893 = vpack.c.b16 %v3545, %v3541
  %v4894 = vpack.c.b16 %v3546, %v3542
  %v4895 = vpack.c.b16 %v3547, %v3543
  %v4896 = vpack.c.b16 %v3552, %v3548
  %v4897 = vpack.c.b16 %v3553, %v3549
  %v4898 = vpack.c.b16 %v3554, %v3550
  %v4899 = vpack.c.b16 %v3555, %v3551
  %v4900 = vpack.c.b16 %v3560, %v3556
  %v4901 = vpack.c.b16 %v3561, %v3557
  %v4902 = vpack.c.b16 %v3562, %v3558
  %v4903 = vpack.c.b16 %v3563, %v3559
  %v4904 = vpack.c.b16 %v3568, %v3564
  %v4905 = vpack.c.b16 %v3569, %v3565
  %v4906 = vpack.c.b16 %v3570, %v3566
  %v4907 = vpack.c.b16 %v3571, %v3567
  %v4908 = vpack.c.b16 %v3576, %v3572
  %v4909 = vpack.c.b16 %v3577, %v3573
  %v4910 = vpack.c.b16 %v3578, %v3574
  %v4911 = vpack.c.b16 %v3579, %v3575
  %v4912 = vpack.c.b16 %v3584, %v3580
  %v4913 = vpack.c.b16 %v3585, %v3581
  %v4914 = vpack.c.b16 %v3586, %v3582
  %v4915 = vpack.c.b16 %v3587, %v3583
  %v4916 = vpack.c.b16 %v3592, %v3588
  %v4917 = vpack.c.b16 %v3593, %v3589
  %v4918 = vpack.c.b16 %v3594, %v3590
  %v4919 = vpack.c.b16 %v3595, %v3591
  %v4920 = vpack.c.b16 %v3600, %v3596
  %v4921 = vpack.c.b16 %v3601, %v3597
  %v4922 = vpack.c.b16 %v3602, %v3598
  %v4923 = vpack.c.b16 %v3603, %v3599
  %v4924 = vpack.c.b16 %v3608, %v3604
  %v4925 = vpack.c.b16 %v3609, %v3605
  %v4926 = vpack.c.b16 %v3610, %v3606
  %v4927 = vpack.c.b16 %v3611, %v3607
  %v4928 = vpack.c.b16 %v3616, %v3612
  %v4929 = vpack.c.b16 %v3617, %v3613
  %v4930 = vpack.c.b16 %v3618, %v3614
  %v4931 = vpack.c.b16 %v3619, %v3615
  %v4932 = vpack.c.b16 %v3624, %v3620
  %v4933 = vpack.c.b16 %v3625, %v3621
  %v4934 = vpack.c.b16 %v3626, %v3622
  %v4935 = vpack.c.b16 %v3627, %v3623
  %v4936 = vpack.c.b16 %v3632, %v3628
  %v4937 = vpack.c.b16 %v3633, %v3629
  %v4938 = vpack.c.b16 %v3634, %v3630
  %v4939 = vpack.c.b16 %v3635, %v3631
  %v4940 = vpack.c.b16 %v3640, %v3636
  %v4941 = vpack.c.b16 %v3641, %v3637
  %v4942 = vpack.c.b16 %v3642, %v3638
  %v4943 = vpack.c.b16 %v3643, %v3639
  %v4944 = vpack.c.b16 %v3648, %v3644
  %v4945 = vpack.c.b16 %v3649, %v3645
  %v4946 = vpack.c.b16 %v3650, %v3646
  %v4947 = vpack.c.b16 %v3651, %v3647
  %v4948 = vpack.c.b16 %v3656, %v3652
  %v4949 = vpack.c.b16 %v3657, %v3653
  %v4950 = vpack.c.b16 %v3658, %v3654
  %v4951 = vpack.c.b16 %v3659, %v3655
  %v4952 = vpack.c.b16 %v3664, %v3660
  %v4953 = vpack.c.b16 %v3665, %v3661
  %v4954 = vpack.c.b16 %v3666, %v3662
  %v4955 = vpack.c.b16 %v3667, %v3663
  %v4956 = vpack.c.b16 %v3672, %v3668
  %v4957 = vpack.c.b16 %v3673, %v3669
  %v4958 = vpack.c.b16 %v3674, %v3670
  %v4959 = vpack.c.b16 %v3675, %v3671
  %v4960 = vpack.c.b16 %v3680, %v3676
  %v4961 = vpack.c.b16 %v3681, %v3677
  %v4962 = vpack.c.b16 %v3682, %v3678
  %v4963 = vpack.c.b16 %v3683, %v3679
  %v4964 = vpack.c.b16 %v3688, %v3684
  %v4965 = vpack.c.b16 %v3689, %v3685
  %v4966 = vpack.c.b16 %v3690, %v3686
  %v4967 = vpack.c.b16 %v3691, %v3687
  %v4968 = vpack.c.b16 %v3696, %v3692
  %v4969 = vpack.c.b16 %v3697, %v3693
  %v4970 = vpack.c.b16 %v3698, %v3694
  %v4971 = vpack.c.b16 %v3699, %v3695
  %v4972 = vpack.c.b16 %v3704, %v3700
  %v4973 = vpack.c.b16 %v3705, %v3701
  %v4974 = vpack.c.b16 %v3706, %v3702
  %v4975 = vpack.c.b16 %v3707, %v3703
  %v4976 = vpack.c.b16 %v3712, %v3708
  %v4977 = vpack.c.b16 %v3713, %v3709
  %v4978 = vpack.c.b16 %v3714, %v3710
  %v4979 = vpack.c.b16 %v3715, %v3711
  %v4980 = vpack.c.b16 %v3720, %v3716
  %v4981 = vpack.c.b16 %v3721, %v3717
  %v4982 = vpack.c.b16 %v3722, %v3718
  %v4983 = vpack.c.b16 %v3723, %v3719
  %v4984 = vpack.c.b16 %v3728, %v3724
  %v4985 = vpack.c.b16 %v3729, %v3725
  %v4986 = vpack.c.b16 %v3730, %v3726
  %v4987 = vpack.c.b16 %v3731, %v3727
  %v4988 = vpack.c.b16 %v3736, %v3732
  %v4989 = vpack.c.b16 %v3737, %v3733
  %v4990 = vpack.c.b16 %v3738, %v3734
  %v4991 = vpack.c.b16 %v3739, %v3735
  %v4992 = vpack.c.b16 %v3744, %v3740
  %v4993 = vpack.c.b16 %v3745, %v3741
  %v4994 = vpack.c.b16 %v3746, %v3742
  %v4995 = vpack.c.b16 %v3747, %v3743
  %v4996 = vpack.c.b16 %v3752, %v3748
  %v4997 = vpack.c.b16 %v3753, %v3749
  %v4998 = vpack.c.b16 %v3754, %v3750
  %v4999 = vpack.c.b16 %v3755, %v3751
  %v5000 = vpack.c.b16 %v3760, %v3756
  %v5001 = vpack.c.b16 %v3761, %v3757
  %v5002 = vpack.c.b16 %v3762, %v3758
  %v5003 = vpack.c.b16 %v3763, %v3759
  %v5004 = vpack.c.b16 %v3768, %v3764
  %v5005 = vpack.c.b16 %v3769, %v3765
  %v5006 = vpack.c.b16 %v3770, %v3766
  %v5007 = vpack.c.b16 %v3771, %v3767
  %v5008 = vpack.c.b16 %v3776, %v3772
  %v5009 = vpack.c.b16 %v3777, %v3773
  %v5010 = vpack.c.b16 %v3778, %v3774
  %v5011 = vpack.c.b16 %v3779, %v3775
  %v5012 = vpack.c.b16 %v3784, %v3780
  %v5013 = vpack.c.b16 %v3785, %v3781
  %v5014 = vpack.c.b16 %v3786, %v3782
  %v5015 = vpack.c.b16 %v3787, %v3783
  %v5016 = vpack.c.b16 %v3792, %v3788
  %v5017 = vpack.c.b16 %v3793, %v3789
  %v5018 = vpack.c.b16 %v3794, %v3790
  %v5019 = vpack.c.b16 %v3795, %v3791
  %v5020 = vpack.c.b16 %v3800, %v3796
  %v5021 = vpack.c.b16 %v3801, %v3797
  %v5022 = vpack.c.b16 %v3802, %v3798
  %v5023 = vpack.c.b16 %v3803, %v3799
  %v5024 = vpack.c.b16 %v3808, %v3804
  %v5025 = vpack.c.b16 %v3809, %v3805
  %v5026 = vpack.c.b16 %v3810, %v3806
  %v5027 = vpack.c.b16 %v3811, %v3807
  %v5028 = vpack.c.b16 %v3816, %v3812
  %v5029 = vpack.c.b16 %v3817, %v3813
  %v5030 = vpack.c.b16 %v3818, %v3814
  %v5031 = vpack.c.b16 %v3819, %v3815
  %v5032 = vpack.c.b16 %v3824, %v3820
  %v5033 = vpack.c.b16 %v3825, %v3821
  %v5034 = vpack.c.b16 %v3826, %v3822
  %v5035 = vpack.c.b16 %v3827, %v3823
  %v5036 = vpack.c.b16 %v3832, %v3828
  %v5037 = vpack.c.b16 %v3833, %v3829
  %v5038 = vpack.c.b16 %v3834, %v3830
  %v5039 = vpack.c.b16 %v3835, %v3831
  %v5040 = vpack.c.b16 %v3840, %v3836
  %v5041 = vpack.c.b16 %v3841, %v3837
  %v5042 = vpack.c.b16 %v3842, %v3838
  %v5043 = vpack.c.b16 %v3843, %v3839
  %v5044 = vpack.c.b16 %v3848, %v3844
  %v5045 = vpack.c.b16 %v3849, %v3845
  %v5046 = vpack.c.b16 %v3850, %v3846
  %v5047 = vpack.c.b16 %v3851, %v3847
  %v5048 = vpack.c.b16 %v3856, %v3852
  %v5049 = vpack.c.b16 %v3857, %v3853
  %v5050 = vpack.c.b16 %v3858, %v3854
  %v5051 = vpack.c.b16 %v3859, %v3855
  %v5052 = vpack.c.b16 %v3864, %v3860
  %v5053 = vpack.c.b16 %v3865, %v3861
  %v5054 = vpack.c.b16 %v3866, %v3862
  %v5055 = vpack.c.b16 %v3867, %v3863
  %v5056 = vpack.c.b16 %v3872, %v3868
  %v5057 = vpack.c.b16 %v3873, %v3869
  %v5058 = vpack.c.b16 %v3874, %v3870
  %v5059 = vpack.c.b16 %v3875, %v3871
  %v5060 = vpack.c.b16 %v3880, %v3876
  %v5061 = vpack.c.b16 %v3881, %v3877
  %v5062 = vpack.c.b16 %v3882, %v3878
  %v5063 = vpack.c.b16 %v3883, %v3879
  %v5064 = vpack.c.b16 %v3888, %v3884
  %v5065 = vpack.c.b16 %v3889, %v3885
  %v5066 = vpack.c.b16 %v3890, %v3886
  %v5067 = vpack.c.b16 %v3891, %v3887
  %v5068 = vpack.c.b16 %v3896, %v3892
  %v5069 = vpack.c.b16 %v3897, %v3893
  %v5070 = vpack.c.b16 %v3898, %v3894
  %v5071 = vpack.c.b16 %v3899, %v3895
  %v5072 = vpack.c.b16 %v3904, %v3900
  %v5073 = vpack.c.b16 %v3905, %v3901
  %v5074 = vpack.c.b16 %v3906, %v3902
  %v5075 = vpack.c.b16 %v3907, %v3903
  %v5076 = vpack.c.b16 %v3912, %v3908
  %v5077 = vpack.c.b16 %v3913, %v3909
  %v5078 = vpack.c.b16 %v3914, %v3910
  %v5079 = vpack.c.b16 %v3915, %v3911
  %v5080 = vpack.c.b16 %v3920, %v3916
  %v5081 = vpack.c.b16 %v3921, %v3917
  %v5082 = vpack.c.b16 %v3922, %v3918
  %v5083 = vpack.c.b16 %v3923, %v3919
  %v5084 = vpack.c.b16 %v3928, %v3924
  %v5085 = vpack.c.b16 %v3929, %v3925
  %v5086 = vpack.c.b16 %v3930, %v3926
  %v5087 = vpack.c.b16 %v3931, %v3927
  %v5088 = vpack.c.b16 %v3936, %v3932
  %v5089 = vpack.c.b16 %v3937, %v3933
  %v5090 = vpack.c.b16 %v3938, %v3934
  %v5091 = vpack.c.b16 %v3939, %v3935
  %v5092 = vpack.c.b16 %v3944, %v3940
  %v5093 = vpack.c.b16 %v3945, %v3941
  %v5094 = vpack.c.b16 %v3946, %v3942
  %v5095 = vpack.c.b16 %v3947, %v3943
  %v5096 = vpack.c.b16 %v3952, %v3948
  %v5097 = vpack.c.b16 %v3953, %v3949
  %v5098 = vpack.c.b16 %v3954, %v3950
  %v5099 = vpack.c.b16 %v3955, %v3951
  %v5100 = vpack.c.b16 %v3960, %v3956
  %v5101 = vpack.c.b16 %v3961, %v3957
  %v5102 = vpack.c.b16 %v3962, %v3958
  %v5103 = vpack.c.b16 %v3963, %v3959
  %v5104 = vpack.c.b16 %v3968, %v3964
  %v5105 = vpack.c.b16 %v3969, %v3965
  %v5106 = vpack.c.b16 %v3970, %v3966
  %v5107 = vpack.c.b16 %v3971, %v3967
  %v5108 = vpack.c.b16 %v3976, %v3972
  %v5109 = vpack.c.b16 %v3977, %v3973
  %v5110 = vpack.c.b16 %v3978, %v3974
  %v5111 = vpack.c.b16 %v3979, %v3975
  %v5112 = vpack.c.b16 %v3984, %v3980
  %v5113 = vpack.c.b16 %v3985, %v3981
  %v5114 = vpack.c.b16 %v3986, %v3982
  %v5115 = vpack.c.b16 %v3987, %v3983
  %v5116 = vpack.c.b16 %v3992, %v3988
  %v5117 = vpack.c.b16 %v3993, %v3989
  %v5118 = vpack.c.b16 %v3994, %v3990
  %v5119 = vpack.c.b16 %v3995, %v3991
  %v5120 = vpack.c.b16 %v4000, %v3996
  %v5121 = vpack.c.b16 %v4001, %v3997
  %v5122 = vpack.c.b16 %v4002, %v3998
  %v5123 = vpack.c.b16 %v4003, %v3999
  %v5124 = vpack.c.b16 %v4008, %v4004
  %v5125 = vpack.c.b16 %v4009, %v4005
  %v5126 = vpack.c.b16 %v4010, %v4006
  %v5127 = vpack.c.b16 %v4011, %v4007
  %v5128 = vpack.c.b16 %v4016, %v4012
  %v5129 = vpack.c.b16 %v4017, %v4013
  %v5130 = vpack.c.b16 %v4018, %v4014
  %v5131 = vpack.c.b16 %v4019, %v4015
  %v5132 = vpack.c.b16 %v4024, %v4020
  %v5133 = vpack.c.b16 %v4025, %v4021
  %v5134 = vpack.c.b16 %v4026, %v4022
  %v5135 = vpack.c.b16 %v4027, %v4023
  %v5136 = vpack.c.b16 %v4032, %v4028
  %v5137 = vpack.c.b16 %v4033, %v4029
  %v5138 = vpack.c.b16 %v4034, %v4030
  %v5139 = vpack.c.b16 %v4035, %v4031
  %v5140 = vpack.c.b16 %v4040, %v4036
  %v5141 = vpack.c.b16 %v4041, %v4037
  %v5142 = vpack.c.b16 %v4042, %v4038
  %v5143 = vpack.c.b16 %v4043, %v4039
  %v5144 = vpack.c.b16 %v4048, %v4044
  %v5145 = vpack.c.b16 %v4049, %v4045
  %v5146 = vpack.c.b16 %v4050, %v4046
  %v5147 = vpack.c.b16 %v4051, %v4047
  %v5148 = vpack.c.b16 %v4056, %v4052
  %v5149 = vpack.c.b16 %v4057, %v4053
  %v5150 = vpack.c.b16 %v4058, %v4054
  %v5151 = vpack.c.b16 %v4059, %v4055
  %v5152 = vpack.c.b16 %v4064, %v4060
  %v5153 = vpack.c.b16 %v4065, %v4061
  %v5154 = vpack.c.b16 %v4066, %v4062
  %v5155 = vpack.c.b16 %v4067, %v4063
  %v5156 = vpack.c.b16 %v4072, %v4068
  %v5157 = vpack.c.b16 %v4073, %v4069
  %v5158 = vpack.c.b16 %v4074, %v4070
  %v5159 = vpack.c.b16 %v4075, %v4071
  %v5160 = vpack.c.b16 %v4080, %v4076
  %v5161 = vpack.c.b16 %v4081, %v4077
  %v5162 = vpack.c.b16 %v4082, %v4078
  %v5163 = vpack.c.b16 %v4083, %v4079
  %v5164 = vpack.c.b16 %v4088, %v4084
  %v5165 = vpack.c.b16 %v4089, %v4085
  %v5166 = vpack.c.b16 %v4090, %v4086
  %v5167 = vpack.c.b16 %v4091, %v4087
  %v5168 = vpack.c.b16 %v4096, %v4092
  %v5169 = vpack.c.b16 %v4097, %v4093
  %v5170 = vpack.c.b16 %v4098, %v4094
  %v5171 = vpack.c.b16 %v4099, %v4095
  %v5172 = vpack.c.b16 %v4104, %v4100
  %v5173 = vpack.c.b16 %v4105, %v4101
  %v5174 = vpack.c.b16 %v4106, %v4102
  %v5175 = vpack.c.b16 %v4107, %v4103
  %v5176 = vpack.c.b16 %v4112, %v4108
  %v5177 = vpack.c.b16 %v4113, %v4109
  %v5178 = vpack.c.b16 %v4114, %v4110
  %v5179 = vpack.c.b16 %v4115, %v4111
  %v5180 = vpack.c.b16 %v4120, %v4116
  %v5181 = vpack.c.b16 %v4121, %v4117
  %v5182 = vpack.c.b16 %v4122, %v4118
  %v5183 = vpack.c.b16 %v4123, %v4119
  %v5184 = vpack.c.b16 %v4128, %v4124
  %v5185 = vpack.c.b16 %v4129, %v4125
  %v5186 = vpack.c.b16 %v4130, %v4126
  %v5187 = vpack.c.b16 %v4131, %v4127
  %v5188 = vpack.c.b16 %v4136, %v4132
  %v5189 = vpack.c.b16 %v4137, %v4133
  %v5190 = vpack.c.b16 %v4138, %v4134
  %v5191 = vpack.c.b16 %v4139, %v4135
  %v5192 = vpack.c.b16 %v4144, %v4140
  %v5193 = vpack.c.b16 %v4145, %v4141
  %v5194 = vpack.c.b16 %v4146, %v4142
  %v5195 = vpack.c.b16 %v4147, %v4143
  %v5196 = vpack.c.b16 %v4152, %v4148
  %v5197 = vpack.c.b16 %v4153, %v4149
  %v5198 = vpack.c.b16 %v4154, %v4150
  %v5199 = vpack.c.b16 %v4155, %v4151
  %v5200 = vpack.c.b16 %v4160, %v4156
  %v5201 = vpack.c.b16 %v4161, %v4157
  %v5202 = vpack.c.b16 %v4162, %v4158
  %v5203 = vpack.c.b16 %v4163, %v4159
  %v5204 = vpack.c.b16 %v4168, %v4164
  %v5205 = vpack.c.b16 %v4169, %v4165
  %v5206 = vpack.c.b16 %v4170, %v4166
  %v5207 = vpack.c.b16 %v4171, %v4167
  %v5208 = vpack.c.b16 %v4176, %v4172
  %v5209 = vpack.c.b16 %v4177, %v4173
  %v5210 = vpack.c.b16 %v4178, %v4174
  %v5211 = vpack.c.b16 %v4179, %v4175
  %v5212 = vpack.c.b16 %v4184, %v4180
  %v5213 = vpack.c.b16 %v4185, %v4181
  %v5214 = vpack.c.b16 %v4186, %v4182
  %v5215 = vpack.c.b16 %v4187, %v4183
  %v5216 = vpack.c.b16 %v4192, %v4188
  %v5217 = vpack.c.b16 %v4193, %v4189
  %v5218 = vpack.c.b16 %v4194, %v4190
  %v5219 = vpack.c.b16 %v4195, %v4191
  %6244 = vmatpush.bf16.msra.mxu0 %v4224
  %6245 = vmatpush.bf16.msra.mxu0 %v4220
  %6246 = vmatpush.bf16.msra.mxu0 %v4216
  %6247 = vmatpush.bf16.msra.mxu0 %v4212
  %6248 = vmatpush.bf16.msra.mxu0 %v4208
  %6249 = vmatpush.bf16.msra.mxu0 %v4204
  %6250 = vmatpush.bf16.msra.mxu0 %v4200
  %6251 = vmatpush.bf16.msra.mxu0 %v4196
  %6252 = vmatmul.bf16.gmra.mxu0 %v1054
  %v6253 = vpop.f32.mrf.mxu0
  %v6254 = vadd.f32 0.0, %v6253
  %v6255 = vpop.f32.mrf.mxu0
  %6256 = vdwg.mxu0
  %6257 = vmatpush.bf16.msra.mxu0 %v4256
  %6258 = vmatpush.bf16.msra.mxu0 %v4252
  %6259 = vmatpush.bf16.msra.mxu0 %v4248
  %6260 = vmatpush.bf16.msra.mxu0 %v4244
  %6261 = vmatpush.bf16.msra.mxu0 %v4240
  %6262 = vmatpush.bf16.msra.mxu0 %v4236
  %6263 = vmatpush.bf16.msra.mxu0 %v4232
  %6264 = vmatpush.bf16.msra.mxu0 %v4228
  %6265 = vmatmul.bf16.gmra.mxu0 %v1055
  %v6266 = vpop.f32.mrf.mxu0
  %v6267 = vadd.f32 %v6254, %v6266
  %v6268 = vpop.f32.mrf.mxu0
  %6269 = vdwg.mxu0
  %6270 = vmatpush.bf16.msra.mxu0 %v4288
  %6271 = vmatpush.bf16.msra.mxu0 %v4284
  %6272 = vmatpush.bf16.msra.mxu0 %v4280
  %6273 = vmatpush.bf16.msra.mxu0 %v4276
  %6274 = vmatpush.bf16.msra.mxu0 %v4272
  %6275 = vmatpush.bf16.msra.mxu0 %v4268
  %6276 = vmatpush.bf16.msra.mxu0 %v4264
  %6277 = vmatpush.bf16.msra.mxu0 %v4260
  %6278 = vmatmul.bf16.gmra.mxu0 %v1056
  %v6279 = vpop.f32.mrf.mxu0
  %v6280 = vadd.f32 %v6267, %v6279
  %v6281 = vpop.f32.mrf.mxu0
  %6282 = vdwg.mxu0
  %6283 = vmatpush.bf16.msra.mxu0 %v4320
  %6284 = vmatpush.bf16.msra.mxu0 %v4316
  %6285 = vmatpush.bf16.msra.mxu0 %v4312
  %6286 = vmatpush.bf16.msra.mxu0 %v4308
  %6287 = vmatpush.bf16.msra.mxu0 %v4304
  %6288 = vmatpush.bf16.msra.mxu0 %v4300
  %6289 = vmatpush.bf16.msra.mxu0 %v4296
  %6290 = vmatpush.bf16.msra.mxu0 %v4292
  %6291 = vmatmul.bf16.gmra.mxu0 %v1057
  %v6292 = vpop.f32.mrf.mxu0
  %v6293 = vadd.f32 %v6280, %v6292
  %v6294 = vpop.f32.mrf.mxu0
  %6295 = vdwg.mxu0
  %6296 = vmatpush.bf16.msra.mxu0 %v4352
  %6297 = vmatpush.bf16.msra.mxu0 %v4348
  %6298 = vmatpush.bf16.msra.mxu0 %v4344
  %6299 = vmatpush.bf16.msra.mxu0 %v4340
  %6300 = vmatpush.bf16.msra.mxu0 %v4336
  %6301 = vmatpush.bf16.msra.mxu0 %v4332
  %6302 = vmatpush.bf16.msra.mxu0 %v4328
  %6303 = vmatpush.bf16.msra.mxu0 %v4324
  %6304 = vmatmul.bf16.gmra.mxu0 %v1058
  %v6305 = vpop.f32.mrf.mxu0
  %v6306 = vadd.f32 %v6293, %v6305
  %v6307 = vpop.f32.mrf.mxu0
  %6308 = vdwg.mxu0
  %6309 = vmatpush.bf16.msra.mxu0 %v4384
  %6310 = vmatpush.bf16.msra.mxu0 %v4380
  %6311 = vmatpush.bf16.msra.mxu0 %v4376
  %6312 = vmatpush.bf16.msra.mxu0 %v4372
  %6313 = vmatpush.bf16.msra.mxu0 %v4368
  %6314 = vmatpush.bf16.msra.mxu0 %v4364
  %6315 = vmatpush.bf16.msra.mxu0 %v4360
  %6316 = vmatpush.bf16.msra.mxu0 %v4356
  %6317 = vmatmul.bf16.gmra.mxu0 %v1059
  %v6318 = vpop.f32.mrf.mxu0
  %v6319 = vadd.f32 %v6306, %v6318
  %v6320 = vpop.f32.mrf.mxu0
  %6321 = vdwg.mxu0
  %6322 = vmatpush.bf16.msra.mxu0 %v4416
  %6323 = vmatpush.bf16.msra.mxu0 %v4412
  %6324 = vmatpush.bf16.msra.mxu0 %v4408
  %6325 = vmatpush.bf16.msra.mxu0 %v4404
  %6326 = vmatpush.bf16.msra.mxu0 %v4400
  %6327 = vmatpush.bf16.msra.mxu0 %v4396
  %6328 = vmatpush.bf16.msra.mxu0 %v4392
  %6329 = vmatpush.bf16.msra.mxu0 %v4388
  %6330 = vmatmul.bf16.gmra.mxu0 %v1060
  %v6331 = vpop.f32.mrf.mxu0
  %v6332 = vadd.f32 %v6319, %v6331
  %v6333 = vpop.f32.mrf.mxu0
  %6334 = vdwg.mxu0
  %6335 = vmatpush.bf16.msra.mxu0 %v4448
  %6336 = vmatpush.bf16.msra.mxu0 %v4444
  %6337 = vmatpush.bf16.msra.mxu0 %v4440
  %6338 = vmatpush.bf16.msra.mxu0 %v4436
  %6339 = vmatpush.bf16.msra.mxu0 %v4432
  %6340 = vmatpush.bf16.msra.mxu0 %v4428
  %6341 = vmatpush.bf16.msra.mxu0 %v4424
  %6342 = vmatpush.bf16.msra.mxu0 %v4420
  %6343 = vmatmul.bf16.gmra.mxu0 %v1061
  %v6344 = vpop.f32.mrf.mxu0
  %v6345 = vadd.f32 %v6332, %v6344
  %v6346 = vpop.f32.mrf.mxu0
  %6347 = vdwg.mxu0
  %6348 = vmatpush.bf16.msra.mxu0 %v4480
  %6349 = vmatpush.bf16.msra.mxu0 %v4476
  %6350 = vmatpush.bf16.msra.mxu0 %v4472
  %6351 = vmatpush.bf16.msra.mxu0 %v4468
  %6352 = vmatpush.bf16.msra.mxu0 %v4464
  %6353 = vmatpush.bf16.msra.mxu0 %v4460
  %6354 = vmatpush.bf16.msra.mxu0 %v4456
  %6355 = vmatpush.bf16.msra.mxu0 %v4452
  %6356 = vmatmul.bf16.gmra.mxu0 %v1064
  %v6357 = vpop.f32.mrf.mxu0
  %v6358 = vadd.f32 %v6345, %v6357
  %v6359 = vpop.f32.mrf.mxu0
  %6360 = vdwg.mxu0
  %6361 = vmatpush.bf16.msra.mxu0 %v4512
  %6362 = vmatpush.bf16.msra.mxu0 %v4508
  %6363 = vmatpush.bf16.msra.mxu0 %v4504
  %6364 = vmatpush.bf16.msra.mxu0 %v4500
  %6365 = vmatpush.bf16.msra.mxu0 %v4496
  %6366 = vmatpush.bf16.msra.mxu0 %v4492
  %6367 = vmatpush.bf16.msra.mxu0 %v4488
  %6368 = vmatpush.bf16.msra.mxu0 %v4484
  %6369 = vmatmul.bf16.gmra.mxu0 %v1065
  %v6370 = vpop.f32.mrf.mxu0
  %v6371 = vadd.f32 %v6358, %v6370
  %v6372 = vpop.f32.mrf.mxu0
  %6373 = vdwg.mxu0
  %6374 = vmatpush.bf16.msra.mxu0 %v4544
  %6375 = vmatpush.bf16.msra.mxu0 %v4540
  %6376 = vmatpush.bf16.msra.mxu0 %v4536
  %6377 = vmatpush.bf16.msra.mxu0 %v4532
  %6378 = vmatpush.bf16.msra.mxu0 %v4528
  %6379 = vmatpush.bf16.msra.mxu0 %v4524
  %6380 = vmatpush.bf16.msra.mxu0 %v4520
  %6381 = vmatpush.bf16.msra.mxu0 %v4516
  %6382 = vmatmul.bf16.gmra.mxu0 %v1066
  %v6383 = vpop.f32.mrf.mxu0
  %v6384 = vadd.f32 %v6371, %v6383
  %v6385 = vpop.f32.mrf.mxu0
  %6386 = vdwg.mxu0
  %6387 = vmatpush.bf16.msra.mxu0 %v4576
  %6388 = vmatpush.bf16.msra.mxu0 %v4572
  %6389 = vmatpush.bf16.msra.mxu0 %v4568
  %6390 = vmatpush.bf16.msra.mxu0 %v4564
  %6391 = vmatpush.bf16.msra.mxu0 %v4560
  %6392 = vmatpush.bf16.msra.mxu0 %v4556
  %6393 = vmatpush.bf16.msra.mxu0 %v4552
  %6394 = vmatpush.bf16.msra.mxu0 %v4548
  %6395 = vmatmul.bf16.gmra.mxu0 %v1067
  %v6396 = vpop.f32.mrf.mxu0
  %v6397 = vadd.f32 %v6384, %v6396
  %v6398 = vpop.f32.mrf.mxu0
  %6399 = vdwg.mxu0
  %6400 = vmatpush.bf16.msra.mxu0 %v4608
  %6401 = vmatpush.bf16.msra.mxu0 %v4604
  %6402 = vmatpush.bf16.msra.mxu0 %v4600
  %6403 = vmatpush.bf16.msra.mxu0 %v4596
  %6404 = vmatpush.bf16.msra.mxu0 %v4592
  %6405 = vmatpush.bf16.msra.mxu0 %v4588
  %6406 = vmatpush.bf16.msra.mxu0 %v4584
  %6407 = vmatpush.bf16.msra.mxu0 %v4580
  %6408 = vmatmul.bf16.gmra.mxu0 %v1068
  %v6409 = vpop.f32.mrf.mxu0
  %v6410 = vadd.f32 %v6397, %v6409
  %v6411 = vpop.f32.mrf.mxu0
  %6412 = vdwg.mxu0
  %6413 = vmatpush.bf16.msra.mxu0 %v4640
  %6414 = vmatpush.bf16.msra.mxu0 %v4636
  %6415 = vmatpush.bf16.msra.mxu0 %v4632
  %6416 = vmatpush.bf16.msra.mxu0 %v4628
  %6417 = vmatpush.bf16.msra.mxu0 %v4624
  %6418 = vmatpush.bf16.msra.mxu0 %v4620
  %6419 = vmatpush.bf16.msra.mxu0 %v4616
  %6420 = vmatpush.bf16.msra.mxu0 %v4612
  %6421 = vmatmul.bf16.gmra.mxu0 %v1069
  %v6422 = vpop.f32.mrf.mxu0
  %v6423 = vadd.f32 %v6410, %v6422
  %v6424 = vpop.f32.mrf.mxu0
  %6425 = vdwg.mxu0
  %6426 = vmatpush.bf16.msra.mxu0 %v4672
  %6427 = vmatpush.bf16.msra.mxu0 %v4668
  %6428 = vmatpush.bf16.msra.mxu0 %v4664
  %6429 = vmatpush.bf16.msra.mxu0 %v4660
  %6430 = vmatpush.bf16.msra.mxu0 %v4656
  %6431 = vmatpush.bf16.msra.mxu0 %v4652
  %6432 = vmatpush.bf16.msra.mxu0 %v4648
  %6433 = vmatpush.bf16.msra.mxu0 %v4644
  %6434 = vmatmul.bf16.gmra.mxu0 %v1070
  %v6435 = vpop.f32.mrf.mxu0
  %v6436 = vadd.f32 %v6423, %v6435
  %v6437 = vpop.f32.mrf.mxu0
  %6438 = vdwg.mxu0
  %6439 = vmatpush.bf16.msra.mxu0 %v4704
  %6440 = vmatpush.bf16.msra.mxu0 %v4700
  %6441 = vmatpush.bf16.msra.mxu0 %v4696
  %6442 = vmatpush.bf16.msra.mxu0 %v4692
  %6443 = vmatpush.bf16.msra.mxu0 %v4688
  %6444 = vmatpush.bf16.msra.mxu0 %v4684
  %6445 = vmatpush.bf16.msra.mxu0 %v4680
  %6446 = vmatpush.bf16.msra.mxu0 %v4676
  %6447 = vmatmul.bf16.gmra.mxu0 %v1071
  %v6448 = vpop.f32.mrf.mxu0
  %v6449 = vadd.f32 %v6436, %v6448
  %v6450 = vpop.f32.mrf.mxu0
  %6451 = vdwg.mxu0
  %6452 = vmatpush.bf16.msra.mxu0 %v4736
  %6453 = vmatpush.bf16.msra.mxu0 %v4732
  %6454 = vmatpush.bf16.msra.mxu0 %v4728
  %6455 = vmatpush.bf16.msra.mxu0 %v4724
  %6456 = vmatpush.bf16.msra.mxu0 %v4720
  %6457 = vmatpush.bf16.msra.mxu0 %v4716
  %6458 = vmatpush.bf16.msra.mxu0 %v4712
  %6459 = vmatpush.bf16.msra.mxu0 %v4708
  %6460 = vmatmul.bf16.gmra.mxu0 %v1074
  %v6461 = vpop.f32.mrf.mxu0
  %v6462 = vadd.f32 %v6449, %v6461
  %v6463 = vpop.f32.mrf.mxu0
  %6464 = vdwg.mxu0
  %6465 = vmatpush.bf16.msra.mxu0 %v4768
  %6466 = vmatpush.bf16.msra.mxu0 %v4764
  %6467 = vmatpush.bf16.msra.mxu0 %v4760
  %6468 = vmatpush.bf16.msra.mxu0 %v4756
  %6469 = vmatpush.bf16.msra.mxu0 %v4752
  %6470 = vmatpush.bf16.msra.mxu0 %v4748
  %6471 = vmatpush.bf16.msra.mxu0 %v4744
  %6472 = vmatpush.bf16.msra.mxu0 %v4740
  %6473 = vmatmul.bf16.gmra.mxu0 %v1075
  %v6474 = vpop.f32.mrf.mxu0
  %v6475 = vadd.f32 %v6462, %v6474
  %v6476 = vpop.f32.mrf.mxu0
  %6477 = vdwg.mxu0
  %6478 = vmatpush.bf16.msra.mxu0 %v4800
  %6479 = vmatpush.bf16.msra.mxu0 %v4796
  %6480 = vmatpush.bf16.msra.mxu0 %v4792
  %6481 = vmatpush.bf16.msra.mxu0 %v4788
  %6482 = vmatpush.bf16.msra.mxu0 %v4784
  %6483 = vmatpush.bf16.msra.mxu0 %v4780
  %6484 = vmatpush.bf16.msra.mxu0 %v4776
  %6485 = vmatpush.bf16.msra.mxu0 %v4772
  %6486 = vmatmul.bf16.gmra.mxu0 %v1076
  %v6487 = vpop.f32.mrf.mxu0
  %v6488 = vadd.f32 %v6475, %v6487
  %v6489 = vpop.f32.mrf.mxu0
  %6490 = vdwg.mxu0
  %6491 = vmatpush.bf16.msra.mxu0 %v4832
  %6492 = vmatpush.bf16.msra.mxu0 %v4828
  %6493 = vmatpush.bf16.msra.mxu0 %v4824
  %6494 = vmatpush.bf16.msra.mxu0 %v4820
  %6495 = vmatpush.bf16.msra.mxu0 %v4816
  %6496 = vmatpush.bf16.msra.mxu0 %v4812
  %6497 = vmatpush.bf16.msra.mxu0 %v4808
  %6498 = vmatpush.bf16.msra.mxu0 %v4804
  %6499 = vmatmul.bf16.gmra.mxu0 %v1077
  %v6500 = vpop.f32.mrf.mxu0
  %v6501 = vadd.f32 %v6488, %v6500
  %v6502 = vpop.f32.mrf.mxu0
  %6503 = vdwg.mxu0
  %6504 = vmatpush.bf16.msra.mxu0 %v4864
  %6505 = vmatpush.bf16.msra.mxu0 %v4860
  %6506 = vmatpush.bf16.msra.mxu0 %v4856
  %6507 = vmatpush.bf16.msra.mxu0 %v4852
  %6508 = vmatpush.bf16.msra.mxu0 %v4848
  %6509 = vmatpush.bf16.msra.mxu0 %v4844
  %6510 = vmatpush.bf16.msra.mxu0 %v4840
  %6511 = vmatpush.bf16.msra.mxu0 %v4836
  %6512 = vmatmul.bf16.gmra.mxu0 %v1078
  %v6513 = vpop.f32.mrf.mxu0
  %v6514 = vadd.f32 %v6501, %v6513
  %v6515 = vpop.f32.mrf.mxu0
  %6516 = vdwg.mxu0
  %6517 = vmatpush.bf16.msra.mxu0 %v4896
  %6518 = vmatpush.bf16.msra.mxu0 %v4892
  %6519 = vmatpush.bf16.msra.mxu0 %v4888
  %6520 = vmatpush.bf16.msra.mxu0 %v4884
  %6521 = vmatpush.bf16.msra.mxu0 %v4880
  %6522 = vmatpush.bf16.msra.mxu0 %v4876
  %6523 = vmatpush.bf16.msra.mxu0 %v4872
  %6524 = vmatpush.bf16.msra.mxu0 %v4868
  %6525 = vmatmul.bf16.gmra.mxu0 %v1079
  %v6526 = vpop.f32.mrf.mxu0
  %v6527 = vadd.f32 %v6514, %v6526
  %v6528 = vpop.f32.mrf.mxu0
  %6529 = vdwg.mxu0
  %6530 = vmatpush.bf16.msra.mxu0 %v4928
  %6531 = vmatpush.bf16.msra.mxu0 %v4924
  %6532 = vmatpush.bf16.msra.mxu0 %v4920
  %6533 = vmatpush.bf16.msra.mxu0 %v4916
  %6534 = vmatpush.bf16.msra.mxu0 %v4912
  %6535 = vmatpush.bf16.msra.mxu0 %v4908
  %6536 = vmatpush.bf16.msra.mxu0 %v4904
  %6537 = vmatpush.bf16.msra.mxu0 %v4900
  %6538 = vmatmul.bf16.gmra.mxu0 %v1080
  %v6539 = vpop.f32.mrf.mxu0
  %v6540 = vadd.f32 %v6527, %v6539
  %v6541 = vpop.f32.mrf.mxu0
  %6542 = vdwg.mxu0
  %6543 = vmatpush.bf16.msra.mxu0 %v4960
  %6544 = vmatpush.bf16.msra.mxu0 %v4956
  %6545 = vmatpush.bf16.msra.mxu0 %v4952
  %6546 = vmatpush.bf16.msra.mxu0 %v4948
  %6547 = vmatpush.bf16.msra.mxu0 %v4944
  %6548 = vmatpush.bf16.msra.mxu0 %v4940
  %6549 = vmatpush.bf16.msra.mxu0 %v4936
  %6550 = vmatpush.bf16.msra.mxu0 %v4932
  %6551 = vmatmul.bf16.gmra.mxu0 %v1081
  %v6552 = vpop.f32.mrf.mxu0
  %v6553 = vadd.f32 %v6540, %v6552
  %v6554 = vpop.f32.mrf.mxu0
  %6555 = vdwg.mxu0
  %6556 = vmatpush.bf16.msra.mxu0 %v4992
  %6557 = vmatpush.bf16.msra.mxu0 %v4988
  %6558 = vmatpush.bf16.msra.mxu0 %v4984
  %6559 = vmatpush.bf16.msra.mxu0 %v4980
  %6560 = vmatpush.bf16.msra.mxu0 %v4976
  %6561 = vmatpush.bf16.msra.mxu0 %v4972
  %6562 = vmatpush.bf16.msra.mxu0 %v4968
  %6563 = vmatpush.bf16.msra.mxu0 %v4964
  %6564 = vmatmul.bf16.gmra.mxu0 %v1084
  %v6565 = vpop.f32.mrf.mxu0
  %v6566 = vadd.f32 %v6553, %v6565
  %v6567 = vpop.f32.mrf.mxu0
  %6568 = vdwg.mxu0
  %6569 = vmatpush.bf16.msra.mxu0 %v5024
  %6570 = vmatpush.bf16.msra.mxu0 %v5020
  %6571 = vmatpush.bf16.msra.mxu0 %v5016
  %6572 = vmatpush.bf16.msra.mxu0 %v5012
  %6573 = vmatpush.bf16.msra.mxu0 %v5008
  %6574 = vmatpush.bf16.msra.mxu0 %v5004
  %6575 = vmatpush.bf16.msra.mxu0 %v5000
  %6576 = vmatpush.bf16.msra.mxu0 %v4996
  %6577 = vmatmul.bf16.gmra.mxu0 %v1085
  %v6578 = vpop.f32.mrf.mxu0
  %v6579 = vadd.f32 %v6566, %v6578
  %v6580 = vpop.f32.mrf.mxu0
  %6581 = vdwg.mxu0
  %6582 = vmatpush.bf16.msra.mxu0 %v5056
  %6583 = vmatpush.bf16.msra.mxu0 %v5052
  %6584 = vmatpush.bf16.msra.mxu0 %v5048
  %6585 = vmatpush.bf16.msra.mxu0 %v5044
  %6586 = vmatpush.bf16.msra.mxu0 %v5040
  %6587 = vmatpush.bf16.msra.mxu0 %v5036
  %6588 = vmatpush.bf16.msra.mxu0 %v5032
  %6589 = vmatpush.bf16.msra.mxu0 %v5028
  %6590 = vmatmul.bf16.gmra.mxu0 %v1086
  %v6591 = vpop.f32.mrf.mxu0
  %v6592 = vadd.f32 %v6579, %v6591
  %v6593 = vpop.f32.mrf.mxu0
  %6594 = vdwg.mxu0
  %6595 = vmatpush.bf16.msra.mxu0 %v5088
  %6596 = vmatpush.bf16.msra.mxu0 %v5084
  %6597 = vmatpush.bf16.msra.mxu0 %v5080
  %6598 = vmatpush.bf16.msra.mxu0 %v5076
  %6599 = vmatpush.bf16.msra.mxu0 %v5072
  %6600 = vmatpush.bf16.msra.mxu0 %v5068
  %6601 = vmatpush.bf16.msra.mxu0 %v5064
  %6602 = vmatpush.bf16.msra.mxu0 %v5060
  %6603 = vmatmul.bf16.gmra.mxu0 %v1087
  %v6604 = vpop.f32.mrf.mxu0
  %v6605 = vadd.f32 %v6592, %v6604
  %v6606 = vpop.f32.mrf.mxu0
  %6607 = vdwg.mxu0
  %6608 = vmatpush.bf16.msra.mxu0 %v5120
  %6609 = vmatpush.bf16.msra.mxu0 %v5116
  %6610 = vmatpush.bf16.msra.mxu0 %v5112
  %6611 = vmatpush.bf16.msra.mxu0 %v5108
  %6612 = vmatpush.bf16.msra.mxu0 %v5104
  %6613 = vmatpush.bf16.msra.mxu0 %v5100
  %6614 = vmatpush.bf16.msra.mxu0 %v5096
  %6615 = vmatpush.bf16.msra.mxu0 %v5092
  %6616 = vmatmul.bf16.gmra.mxu0 %v1088
  %v6617 = vpop.f32.mrf.mxu0
  %v6618 = vadd.f32 %v6605, %v6617
  %v6619 = vpop.f32.mrf.mxu0
  %6620 = vdwg.mxu0
  %6621 = vmatpush.bf16.msra.mxu0 %v5152
  %6622 = vmatpush.bf16.msra.mxu0 %v5148
  %6623 = vmatpush.bf16.msra.mxu0 %v5144
  %6624 = vmatpush.bf16.msra.mxu0 %v5140
  %6625 = vmatpush.bf16.msra.mxu0 %v5136
  %6626 = vmatpush.bf16.msra.mxu0 %v5132
  %6627 = vmatpush.bf16.msra.mxu0 %v5128
  %6628 = vmatpush.bf16.msra.mxu0 %v5124
  %6629 = vmatmul.bf16.gmra.mxu0 %v1089
  %v6630 = vpop.f32.mrf.mxu0
  %v6631 = vadd.f32 %v6618, %v6630
  %v6632 = vpop.f32.mrf.mxu0
  %6633 = vdwg.mxu0
  %6634 = vmatpush.bf16.msra.mxu0 %v5184
  %6635 = vmatpush.bf16.msra.mxu0 %v5180
  %6636 = vmatpush.bf16.msra.mxu0 %v5176
  %6637 = vmatpush.bf16.msra.mxu0 %v5172
  %6638 = vmatpush.bf16.msra.mxu0 %v5168
  %6639 = vmatpush.bf16.msra.mxu0 %v5164
  %6640 = vmatpush.bf16.msra.mxu0 %v5160
  %6641 = vmatpush.bf16.msra.mxu0 %v5156
  %6642 = vmatmul.bf16.gmra.mxu0 %v1090
  %v6643 = vpop.f32.mrf.mxu0
  %v6644 = vadd.f32 %v6631, %v6643
  %v6645 = vpop.f32.mrf.mxu0
  %6646 = vdwg.mxu0
  %6647 = vmatpush.bf16.msra.mxu0 %v5216
  %6648 = vmatpush.bf16.msra.mxu0 %v5212
  %6649 = vmatpush.bf16.msra.mxu0 %v5208
  %6650 = vmatpush.bf16.msra.mxu0 %v5204
  %6651 = vmatpush.bf16.msra.mxu0 %v5200
  %6652 = vmatpush.bf16.msra.mxu0 %v5196
  %6653 = vmatpush.bf16.msra.mxu0 %v5192
  %6654 = vmatpush.bf16.msra.mxu0 %v5188
  %6655 = vmatmul.bf16.gmra.mxu0 %v1091
  %v6656 = vpop.f32.mrf.mxu0
  %v6657 = vadd.f32 %v6644, %v6656
  %v6658 = vpop.f32.mrf.mxu0
  %6659 = vdwg.mxu0
  %6660 = vmatpush.bf16.msra.mxu0 %v4225
  %6661 = vmatpush.bf16.msra.mxu0 %v4221
  %6662 = vmatpush.bf16.msra.mxu0 %v4217
  %6663 = vmatpush.bf16.msra.mxu0 %v4213
  %6664 = vmatpush.bf16.msra.mxu0 %v4209
  %6665 = vmatpush.bf16.msra.mxu0 %v4205
  %6666 = vmatpush.bf16.msra.mxu0 %v4201
  %6667 = vmatpush.bf16.msra.mxu0 %v4197
  %6668 = vmatmul.bf16.gmra.mxu0 %v1054
  %v6669 = vpop.f32.mrf.mxu0
  %v6670 = vadd.f32 0.0, %v6669
  %v6671 = vpop.f32.mrf.mxu0
  %6672 = vdwg.mxu0
  %6673 = vmatpush.bf16.msra.mxu0 %v4257
  %6674 = vmatpush.bf16.msra.mxu0 %v4253
  %6675 = vmatpush.bf16.msra.mxu0 %v4249
  %6676 = vmatpush.bf16.msra.mxu0 %v4245
  %6677 = vmatpush.bf16.msra.mxu0 %v4241
  %6678 = vmatpush.bf16.msra.mxu0 %v4237
  %6679 = vmatpush.bf16.msra.mxu0 %v4233
  %6680 = vmatpush.bf16.msra.mxu0 %v4229
  %6681 = vmatmul.bf16.gmra.mxu0 %v1055
  %v6682 = vpop.f32.mrf.mxu0
  %v6683 = vadd.f32 %v6670, %v6682
  %v6684 = vpop.f32.mrf.mxu0
  %6685 = vdwg.mxu0
  %6686 = vmatpush.bf16.msra.mxu0 %v4289
  %6687 = vmatpush.bf16.msra.mxu0 %v4285
  %6688 = vmatpush.bf16.msra.mxu0 %v4281
  %6689 = vmatpush.bf16.msra.mxu0 %v4277
  %6690 = vmatpush.bf16.msra.mxu0 %v4273
  %6691 = vmatpush.bf16.msra.mxu0 %v4269
  %6692 = vmatpush.bf16.msra.mxu0 %v4265
  %6693 = vmatpush.bf16.msra.mxu0 %v4261
  %6694 = vmatmul.bf16.gmra.mxu0 %v1056
  %v6695 = vpop.f32.mrf.mxu0
  %v6696 = vadd.f32 %v6683, %v6695
  %v6697 = vpop.f32.mrf.mxu0
  %6698 = vdwg.mxu0
  %6699 = vmatpush.bf16.msra.mxu0 %v4321
  %6700 = vmatpush.bf16.msra.mxu0 %v4317
  %6701 = vmatpush.bf16.msra.mxu0 %v4313
  %6702 = vmatpush.bf16.msra.mxu0 %v4309
  %6703 = vmatpush.bf16.msra.mxu0 %v4305
  %6704 = vmatpush.bf16.msra.mxu0 %v4301
  %6705 = vmatpush.bf16.msra.mxu0 %v4297
  %6706 = vmatpush.bf16.msra.mxu0 %v4293
  %6707 = vmatmul.bf16.gmra.mxu0 %v1057
  %v6708 = vpop.f32.mrf.mxu0
  %v6709 = vadd.f32 %v6696, %v6708
  %v6710 = vpop.f32.mrf.mxu0
  %6711 = vdwg.mxu0
  %6712 = vmatpush.bf16.msra.mxu0 %v4353
  %6713 = vmatpush.bf16.msra.mxu0 %v4349
  %6714 = vmatpush.bf16.msra.mxu0 %v4345
  %6715 = vmatpush.bf16.msra.mxu0 %v4341
  %6716 = vmatpush.bf16.msra.mxu0 %v4337
  %6717 = vmatpush.bf16.msra.mxu0 %v4333
  %6718 = vmatpush.bf16.msra.mxu0 %v4329
  %6719 = vmatpush.bf16.msra.mxu0 %v4325
  %6720 = vmatmul.bf16.gmra.mxu0 %v1058
  %v6721 = vpop.f32.mrf.mxu0
  %v6722 = vadd.f32 %v6709, %v6721
  %v6723 = vpop.f32.mrf.mxu0
  %6724 = vdwg.mxu0
  %6725 = vmatpush.bf16.msra.mxu0 %v4385
  %6726 = vmatpush.bf16.msra.mxu0 %v4381
  %6727 = vmatpush.bf16.msra.mxu0 %v4377
  %6728 = vmatpush.bf16.msra.mxu0 %v4373
  %6729 = vmatpush.bf16.msra.mxu0 %v4369
  %6730 = vmatpush.bf16.msra.mxu0 %v4365
  %6731 = vmatpush.bf16.msra.mxu0 %v4361
  %6732 = vmatpush.bf16.msra.mxu0 %v4357
  %6733 = vmatmul.bf16.gmra.mxu0 %v1059
  %v6734 = vpop.f32.mrf.mxu0
  %v6735 = vadd.f32 %v6722, %v6734
  %v6736 = vpop.f32.mrf.mxu0
  %6737 = vdwg.mxu0
  %6738 = vmatpush.bf16.msra.mxu0 %v4417
  %6739 = vmatpush.bf16.msra.mxu0 %v4413
  %6740 = vmatpush.bf16.msra.mxu0 %v4409
  %6741 = vmatpush.bf16.msra.mxu0 %v4405
  %6742 = vmatpush.bf16.msra.mxu0 %v4401
  %6743 = vmatpush.bf16.msra.mxu0 %v4397
  %6744 = vmatpush.bf16.msra.mxu0 %v4393
  %6745 = vmatpush.bf16.msra.mxu0 %v4389
  %6746 = vmatmul.bf16.gmra.mxu0 %v1060
  %v6747 = vpop.f32.mrf.mxu0
  %v6748 = vadd.f32 %v6735, %v6747
  %v6749 = vpop.f32.mrf.mxu0
  %6750 = vdwg.mxu0
  %6751 = vmatpush.bf16.msra.mxu0 %v4449
  %6752 = vmatpush.bf16.msra.mxu0 %v4445
  %6753 = vmatpush.bf16.msra.mxu0 %v4441
  %6754 = vmatpush.bf16.msra.mxu0 %v4437
  %6755 = vmatpush.bf16.msra.mxu0 %v4433
  %6756 = vmatpush.bf16.msra.mxu0 %v4429
  %6757 = vmatpush.bf16.msra.mxu0 %v4425
  %6758 = vmatpush.bf16.msra.mxu0 %v4421
  %6759 = vmatmul.bf16.gmra.mxu0 %v1061
  %v6760 = vpop.f32.mrf.mxu0
  %v6761 = vadd.f32 %v6748, %v6760
  %v6762 = vpop.f32.mrf.mxu0
  %6763 = vdwg.mxu0
  %6764 = vmatpush.bf16.msra.mxu0 %v4481
  %6765 = vmatpush.bf16.msra.mxu0 %v4477
  %6766 = vmatpush.bf16.msra.mxu0 %v4473
  %6767 = vmatpush.bf16.msra.mxu0 %v4469
  %6768 = vmatpush.bf16.msra.mxu0 %v4465
  %6769 = vmatpush.bf16.msra.mxu0 %v4461
  %6770 = vmatpush.bf16.msra.mxu0 %v4457
  %6771 = vmatpush.bf16.msra.mxu0 %v4453
  %6772 = vmatmul.bf16.gmra.mxu0 %v1064
  %v6773 = vpop.f32.mrf.mxu0
  %v6774 = vadd.f32 %v6761, %v6773
  %v6775 = vpop.f32.mrf.mxu0
  %6776 = vdwg.mxu0
  %6777 = vmatpush.bf16.msra.mxu0 %v4513
  %6778 = vmatpush.bf16.msra.mxu0 %v4509
  %6779 = vmatpush.bf16.msra.mxu0 %v4505
  %6780 = vmatpush.bf16.msra.mxu0 %v4501
  %6781 = vmatpush.bf16.msra.mxu0 %v4497
  %6782 = vmatpush.bf16.msra.mxu0 %v4493
  %6783 = vmatpush.bf16.msra.mxu0 %v4489
  %6784 = vmatpush.bf16.msra.mxu0 %v4485
  %6785 = vmatmul.bf16.gmra.mxu0 %v1065
  %v6786 = vpop.f32.mrf.mxu0
  %v6787 = vadd.f32 %v6774, %v6786
  %v6788 = vpop.f32.mrf.mxu0
  %6789 = vdwg.mxu0
  %6790 = vmatpush.bf16.msra.mxu0 %v4545
  %6791 = vmatpush.bf16.msra.mxu0 %v4541
  %6792 = vmatpush.bf16.msra.mxu0 %v4537
  %6793 = vmatpush.bf16.msra.mxu0 %v4533
  %6794 = vmatpush.bf16.msra.mxu0 %v4529
  %6795 = vmatpush.bf16.msra.mxu0 %v4525
  %6796 = vmatpush.bf16.msra.mxu0 %v4521
  %6797 = vmatpush.bf16.msra.mxu0 %v4517
  %6798 = vmatmul.bf16.gmra.mxu0 %v1066
  %v6799 = vpop.f32.mrf.mxu0
  %v6800 = vadd.f32 %v6787, %v6799
  %v6801 = vpop.f32.mrf.mxu0
  %6802 = vdwg.mxu0
  %6803 = vmatpush.bf16.msra.mxu0 %v4577
  %6804 = vmatpush.bf16.msra.mxu0 %v4573
  %6805 = vmatpush.bf16.msra.mxu0 %v4569
  %6806 = vmatpush.bf16.msra.mxu0 %v4565
  %6807 = vmatpush.bf16.msra.mxu0 %v4561
  %6808 = vmatpush.bf16.msra.mxu0 %v4557
  %6809 = vmatpush.bf16.msra.mxu0 %v4553
  %6810 = vmatpush.bf16.msra.mxu0 %v4549
  %6811 = vmatmul.bf16.gmra.mxu0 %v1067
  %v6812 = vpop.f32.mrf.mxu0
  %v6813 = vadd.f32 %v6800, %v6812
  %v6814 = vpop.f32.mrf.mxu0
  %6815 = vdwg.mxu0
  %6816 = vmatpush.bf16.msra.mxu0 %v4609
  %6817 = vmatpush.bf16.msra.mxu0 %v4605
  %6818 = vmatpush.bf16.msra.mxu0 %v4601
  %6819 = vmatpush.bf16.msra.mxu0 %v4597
  %6820 = vmatpush.bf16.msra.mxu0 %v4593
  %6821 = vmatpush.bf16.msra.mxu0 %v4589
  %6822 = vmatpush.bf16.msra.mxu0 %v4585
  %6823 = vmatpush.bf16.msra.mxu0 %v4581
  %6824 = vmatmul.bf16.gmra.mxu0 %v1068
  %v6825 = vpop.f32.mrf.mxu0
  %v6826 = vadd.f32 %v6813, %v6825
  %v6827 = vpop.f32.mrf.mxu0
  %6828 = vdwg.mxu0
  %6829 = vmatpush.bf16.msra.mxu0 %v4641
  %6830 = vmatpush.bf16.msra.mxu0 %v4637
  %6831 = vmatpush.bf16.msra.mxu0 %v4633
  %6832 = vmatpush.bf16.msra.mxu0 %v4629
  %6833 = vmatpush.bf16.msra.mxu0 %v4625
  %6834 = vmatpush.bf16.msra.mxu0 %v4621
  %6835 = vmatpush.bf16.msra.mxu0 %v4617
  %6836 = vmatpush.bf16.msra.mxu0 %v4613
  %6837 = vmatmul.bf16.gmra.mxu0 %v1069
  %v6838 = vpop.f32.mrf.mxu0
  %v6839 = vadd.f32 %v6826, %v6838
  %v6840 = vpop.f32.mrf.mxu0
  %6841 = vdwg.mxu0
  %6842 = vmatpush.bf16.msra.mxu0 %v4673
  %6843 = vmatpush.bf16.msra.mxu0 %v4669
  %6844 = vmatpush.bf16.msra.mxu0 %v4665
  %6845 = vmatpush.bf16.msra.mxu0 %v4661
  %6846 = vmatpush.bf16.msra.mxu0 %v4657
  %6847 = vmatpush.bf16.msra.mxu0 %v4653
  %6848 = vmatpush.bf16.msra.mxu0 %v4649
  %6849 = vmatpush.bf16.msra.mxu0 %v4645
  %6850 = vmatmul.bf16.gmra.mxu0 %v1070
  %v6851 = vpop.f32.mrf.mxu0
  %v6852 = vadd.f32 %v6839, %v6851
  %v6853 = vpop.f32.mrf.mxu0
  %6854 = vdwg.mxu0
  %6855 = vmatpush.bf16.msra.mxu0 %v4705
  %6856 = vmatpush.bf16.msra.mxu0 %v4701
  %6857 = vmatpush.bf16.msra.mxu0 %v4697
  %6858 = vmatpush.bf16.msra.mxu0 %v4693
  %6859 = vmatpush.bf16.msra.mxu0 %v4689
  %6860 = vmatpush.bf16.msra.mxu0 %v4685
  %6861 = vmatpush.bf16.msra.mxu0 %v4681
  %6862 = vmatpush.bf16.msra.mxu0 %v4677
  %6863 = vmatmul.bf16.gmra.mxu0 %v1071
  %v6864 = vpop.f32.mrf.mxu0
  %v6865 = vadd.f32 %v6852, %v6864
  %v6866 = vpop.f32.mrf.mxu0
  %6867 = vdwg.mxu0
  %6868 = vmatpush.bf16.msra.mxu0 %v4737
  %6869 = vmatpush.bf16.msra.mxu0 %v4733
  %6870 = vmatpush.bf16.msra.mxu0 %v4729
  %6871 = vmatpush.bf16.msra.mxu0 %v4725
  %6872 = vmatpush.bf16.msra.mxu0 %v4721
  %6873 = vmatpush.bf16.msra.mxu0 %v4717
  %6874 = vmatpush.bf16.msra.mxu0 %v4713
  %6875 = vmatpush.bf16.msra.mxu0 %v4709
  %6876 = vmatmul.bf16.gmra.mxu0 %v1074
  %v6877 = vpop.f32.mrf.mxu0
  %v6878 = vadd.f32 %v6865, %v6877
  %v6879 = vpop.f32.mrf.mxu0
  %6880 = vdwg.mxu0
  %6881 = vmatpush.bf16.msra.mxu0 %v4769
  %6882 = vmatpush.bf16.msra.mxu0 %v4765
  %6883 = vmatpush.bf16.msra.mxu0 %v4761
  %6884 = vmatpush.bf16.msra.mxu0 %v4757
  %6885 = vmatpush.bf16.msra.mxu0 %v4753
  %6886 = vmatpush.bf16.msra.mxu0 %v4749
  %6887 = vmatpush.bf16.msra.mxu0 %v4745
  %6888 = vmatpush.bf16.msra.mxu0 %v4741
  %6889 = vmatmul.bf16.gmra.mxu0 %v1075
  %v6890 = vpop.f32.mrf.mxu0
  %v6891 = vadd.f32 %v6878, %v6890
  %v6892 = vpop.f32.mrf.mxu0
  %6893 = vdwg.mxu0
  %6894 = vmatpush.bf16.msra.mxu0 %v4801
  %6895 = vmatpush.bf16.msra.mxu0 %v4797
  %6896 = vmatpush.bf16.msra.mxu0 %v4793
  %6897 = vmatpush.bf16.msra.mxu0 %v4789
  %6898 = vmatpush.bf16.msra.mxu0 %v4785
  %6899 = vmatpush.bf16.msra.mxu0 %v4781
  %6900 = vmatpush.bf16.msra.mxu0 %v4777
  %6901 = vmatpush.bf16.msra.mxu0 %v4773
  %6902 = vmatmul.bf16.gmra.mxu0 %v1076
  %v6903 = vpop.f32.mrf.mxu0
  %v6904 = vadd.f32 %v6891, %v6903
  %v6905 = vpop.f32.mrf.mxu0
  %6906 = vdwg.mxu0
  %6907 = vmatpush.bf16.msra.mxu0 %v4833
  %6908 = vmatpush.bf16.msra.mxu0 %v4829
  %6909 = vmatpush.bf16.msra.mxu0 %v4825
  %6910 = vmatpush.bf16.msra.mxu0 %v4821
  %6911 = vmatpush.bf16.msra.mxu0 %v4817
  %6912 = vmatpush.bf16.msra.mxu0 %v4813
  %6913 = vmatpush.bf16.msra.mxu0 %v4809
  %6914 = vmatpush.bf16.msra.mxu0 %v4805
  %6915 = vmatmul.bf16.gmra.mxu0 %v1077
  %v6916 = vpop.f32.mrf.mxu0
  %v6917 = vadd.f32 %v6904, %v6916
  %v6918 = vpop.f32.mrf.mxu0
  %6919 = vdwg.mxu0
  %6920 = vmatpush.bf16.msra.mxu0 %v4865
  %6921 = vmatpush.bf16.msra.mxu0 %v4861
  %6922 = vmatpush.bf16.msra.mxu0 %v4857
  %6923 = vmatpush.bf16.msra.mxu0 %v4853
  %6924 = vmatpush.bf16.msra.mxu0 %v4849
  %6925 = vmatpush.bf16.msra.mxu0 %v4845
  %6926 = vmatpush.bf16.msra.mxu0 %v4841
  %6927 = vmatpush.bf16.msra.mxu0 %v4837
  %6928 = vmatmul.bf16.gmra.mxu0 %v1078
  %v6929 = vpop.f32.mrf.mxu0
  %v6930 = vadd.f32 %v6917, %v6929
  %v6931 = vpop.f32.mrf.mxu0
  %6932 = vdwg.mxu0
  %6933 = vmatpush.bf16.msra.mxu0 %v4897
  %6934 = vmatpush.bf16.msra.mxu0 %v4893
  %6935 = vmatpush.bf16.msra.mxu0 %v4889
  %6936 = vmatpush.bf16.msra.mxu0 %v4885
  %6937 = vmatpush.bf16.msra.mxu0 %v4881
  %6938 = vmatpush.bf16.msra.mxu0 %v4877
  %6939 = vmatpush.bf16.msra.mxu0 %v4873
  %6940 = vmatpush.bf16.msra.mxu0 %v4869
  %6941 = vmatmul.bf16.gmra.mxu0 %v1079
  %v6942 = vpop.f32.mrf.mxu0
  %v6943 = vadd.f32 %v6930, %v6942
  %v6944 = vpop.f32.mrf.mxu0
  %6945 = vdwg.mxu0
  %6946 = vmatpush.bf16.msra.mxu0 %v4929
  %6947 = vmatpush.bf16.msra.mxu0 %v4925
  %6948 = vmatpush.bf16.msra.mxu0 %v4921
  %6949 = vmatpush.bf16.msra.mxu0 %v4917
  %6950 = vmatpush.bf16.msra.mxu0 %v4913
  %6951 = vmatpush.bf16.msra.mxu0 %v4909
  %6952 = vmatpush.bf16.msra.mxu0 %v4905
  %6953 = vmatpush.bf16.msra.mxu0 %v4901
  %6954 = vmatmul.bf16.gmra.mxu0 %v1080
  %v6955 = vpop.f32.mrf.mxu0
  %v6956 = vadd.f32 %v6943, %v6955
  %v6957 = vpop.f32.mrf.mxu0
  %6958 = vdwg.mxu0
  %6959 = vmatpush.bf16.msra.mxu0 %v4961
  %6960 = vmatpush.bf16.msra.mxu0 %v4957
  %6961 = vmatpush.bf16.msra.mxu0 %v4953
  %6962 = vmatpush.bf16.msra.mxu0 %v4949
  %6963 = vmatpush.bf16.msra.mxu0 %v4945
  %6964 = vmatpush.bf16.msra.mxu0 %v4941
  %6965 = vmatpush.bf16.msra.mxu0 %v4937
  %6966 = vmatpush.bf16.msra.mxu0 %v4933
  %6967 = vmatmul.bf16.gmra.mxu0 %v1081
  %v6968 = vpop.f32.mrf.mxu0
  %v6969 = vadd.f32 %v6956, %v6968
  %v6970 = vpop.f32.mrf.mxu0
  %6971 = vdwg.mxu0
  %6972 = vmatpush.bf16.msra.mxu0 %v4993
  %6973 = vmatpush.bf16.msra.mxu0 %v4989
  %6974 = vmatpush.bf16.msra.mxu0 %v4985
  %6975 = vmatpush.bf16.msra.mxu0 %v4981
  %6976 = vmatpush.bf16.msra.mxu0 %v4977
  %6977 = vmatpush.bf16.msra.mxu0 %v4973
  %6978 = vmatpush.bf16.msra.mxu0 %v4969
  %6979 = vmatpush.bf16.msra.mxu0 %v4965
  %6980 = vmatmul.bf16.gmra.mxu0 %v1084
  %v6981 = vpop.f32.mrf.mxu0
  %v6982 = vadd.f32 %v6969, %v6981
  %v6983 = vpop.f32.mrf.mxu0
  %6984 = vdwg.mxu0
  %6985 = vmatpush.bf16.msra.mxu0 %v5025
  %6986 = vmatpush.bf16.msra.mxu0 %v5021
  %6987 = vmatpush.bf16.msra.mxu0 %v5017
  %6988 = vmatpush.bf16.msra.mxu0 %v5013
  %6989 = vmatpush.bf16.msra.mxu0 %v5009
  %6990 = vmatpush.bf16.msra.mxu0 %v5005
  %6991 = vmatpush.bf16.msra.mxu0 %v5001
  %6992 = vmatpush.bf16.msra.mxu0 %v4997
  %6993 = vmatmul.bf16.gmra.mxu0 %v1085
  %v6994 = vpop.f32.mrf.mxu0
  %v6995 = vadd.f32 %v6982, %v6994
  %v6996 = vpop.f32.mrf.mxu0
  %6997 = vdwg.mxu0
  %6998 = vmatpush.bf16.msra.mxu0 %v5057
  %6999 = vmatpush.bf16.msra.mxu0 %v5053
  %7000 = vmatpush.bf16.msra.mxu0 %v5049
  %7001 = vmatpush.bf16.msra.mxu0 %v5045
  %7002 = vmatpush.bf16.msra.mxu0 %v5041
  %7003 = vmatpush.bf16.msra.mxu0 %v5037
  %7004 = vmatpush.bf16.msra.mxu0 %v5033
  %7005 = vmatpush.bf16.msra.mxu0 %v5029
  %7006 = vmatmul.bf16.gmra.mxu0 %v1086
  %v7007 = vpop.f32.mrf.mxu0
  %v7008 = vadd.f32 %v6995, %v7007
  %v7009 = vpop.f32.mrf.mxu0
  %7010 = vdwg.mxu0
  %7011 = vmatpush.bf16.msra.mxu0 %v5089
  %7012 = vmatpush.bf16.msra.mxu0 %v5085
  %7013 = vmatpush.bf16.msra.mxu0 %v5081
  %7014 = vmatpush.bf16.msra.mxu0 %v5077
  %7015 = vmatpush.bf16.msra.mxu0 %v5073
  %7016 = vmatpush.bf16.msra.mxu0 %v5069
  %7017 = vmatpush.bf16.msra.mxu0 %v5065
  %7018 = vmatpush.bf16.msra.mxu0 %v5061
  %7019 = vmatmul.bf16.gmra.mxu0 %v1087
  %v7020 = vpop.f32.mrf.mxu0
  %v7021 = vadd.f32 %v7008, %v7020
  %v7022 = vpop.f32.mrf.mxu0
  %7023 = vdwg.mxu0
  %7024 = vmatpush.bf16.msra.mxu0 %v5121
  %7025 = vmatpush.bf16.msra.mxu0 %v5117
  %7026 = vmatpush.bf16.msra.mxu0 %v5113
  %7027 = vmatpush.bf16.msra.mxu0 %v5109
  %7028 = vmatpush.bf16.msra.mxu0 %v5105
  %7029 = vmatpush.bf16.msra.mxu0 %v5101
  %7030 = vmatpush.bf16.msra.mxu0 %v5097
  %7031 = vmatpush.bf16.msra.mxu0 %v5093
  %7032 = vmatmul.bf16.gmra.mxu0 %v1088
  %v7033 = vpop.f32.mrf.mxu0
  %v7034 = vadd.f32 %v7021, %v7033
  %v7035 = vpop.f32.mrf.mxu0
  %7036 = vdwg.mxu0
  %7037 = vmatpush.bf16.msra.mxu0 %v5153
  %7038 = vmatpush.bf16.msra.mxu0 %v5149
  %7039 = vmatpush.bf16.msra.mxu0 %v5145
  %7040 = vmatpush.bf16.msra.mxu0 %v5141
  %7041 = vmatpush.bf16.msra.mxu0 %v5137
  %7042 = vmatpush.bf16.msra.mxu0 %v5133
  %7043 = vmatpush.bf16.msra.mxu0 %v5129
  %7044 = vmatpush.bf16.msra.mxu0 %v5125
  %7045 = vmatmul.bf16.gmra.mxu0 %v1089
  %v7046 = vpop.f32.mrf.mxu0
  %v7047 = vadd.f32 %v7034, %v7046
  %v7048 = vpop.f32.mrf.mxu0
  %7049 = vdwg.mxu0
  %7050 = vmatpush.bf16.msra.mxu0 %v5185
  %7051 = vmatpush.bf16.msra.mxu0 %v5181
  %7052 = vmatpush.bf16.msra.mxu0 %v5177
  %7053 = vmatpush.bf16.msra.mxu0 %v5173
  %7054 = vmatpush.bf16.msra.mxu0 %v5169
  %7055 = vmatpush.bf16.msra.mxu0 %v5165
  %7056 = vmatpush.bf16.msra.mxu0 %v5161
  %7057 = vmatpush.bf16.msra.mxu0 %v5157
  %7058 = vmatmul.bf16.gmra.mxu0 %v1090
  %v7059 = vpop.f32.mrf.mxu0
  %v7060 = vadd.f32 %v7047, %v7059
  %v7061 = vpop.f32.mrf.mxu0
  %7062 = vdwg.mxu0
  %7063 = vmatpush.bf16.msra.mxu0 %v5217
  %7064 = vmatpush.bf16.msra.mxu0 %v5213
  %7065 = vmatpush.bf16.msra.mxu0 %v5209
  %7066 = vmatpush.bf16.msra.mxu0 %v5205
  %7067 = vmatpush.bf16.msra.mxu0 %v5201
  %7068 = vmatpush.bf16.msra.mxu0 %v5197
  %7069 = vmatpush.bf16.msra.mxu0 %v5193
  %7070 = vmatpush.bf16.msra.mxu0 %v5189
  %7071 = vmatmul.bf16.gmra.mxu0 %v1091
  %v7072 = vpop.f32.mrf.mxu0
  %v7073 = vadd.f32 %v7060, %v7072
  %v7074 = vpop.f32.mrf.mxu0
  %7075 = vdwg.mxu0
  %7076 = vmatpush.bf16.msra.mxu0 %v4226
  %7077 = vmatpush.bf16.msra.mxu0 %v4222
  %7078 = vmatpush.bf16.msra.mxu0 %v4218
  %7079 = vmatpush.bf16.msra.mxu0 %v4214
  %7080 = vmatpush.bf16.msra.mxu0 %v4210
  %7081 = vmatpush.bf16.msra.mxu0 %v4206
  %7082 = vmatpush.bf16.msra.mxu0 %v4202
  %7083 = vmatpush.bf16.msra.mxu0 %v4198
  %7084 = vmatmul.bf16.gmra.mxu0 %v1054
  %v7085 = vpop.f32.mrf.mxu0
  %v7086 = vadd.f32 0.0, %v7085
  %v7087 = vpop.f32.mrf.mxu0
  %7088 = vdwg.mxu0
  %7089 = vmatpush.bf16.msra.mxu0 %v4258
  %7090 = vmatpush.bf16.msra.mxu0 %v4254
  %7091 = vmatpush.bf16.msra.mxu0 %v4250
  %7092 = vmatpush.bf16.msra.mxu0 %v4246
  %7093 = vmatpush.bf16.msra.mxu0 %v4242
  %7094 = vmatpush.bf16.msra.mxu0 %v4238
  %7095 = vmatpush.bf16.msra.mxu0 %v4234
  %7096 = vmatpush.bf16.msra.mxu0 %v4230
  %7097 = vmatmul.bf16.gmra.mxu0 %v1055
  %v7098 = vpop.f32.mrf.mxu0
  %v7099 = vadd.f32 %v7086, %v7098
  %v7100 = vpop.f32.mrf.mxu0
  %7101 = vdwg.mxu0
  %7102 = vmatpush.bf16.msra.mxu0 %v4290
  %7103 = vmatpush.bf16.msra.mxu0 %v4286
  %7104 = vmatpush.bf16.msra.mxu0 %v4282
  %7105 = vmatpush.bf16.msra.mxu0 %v4278
  %7106 = vmatpush.bf16.msra.mxu0 %v4274
  %7107 = vmatpush.bf16.msra.mxu0 %v4270
  %7108 = vmatpush.bf16.msra.mxu0 %v4266
  %7109 = vmatpush.bf16.msra.mxu0 %v4262
  %7110 = vmatmul.bf16.gmra.mxu0 %v1056
  %v7111 = vpop.f32.mrf.mxu0
  %v7112 = vadd.f32 %v7099, %v7111
  %v7113 = vpop.f32.mrf.mxu0
  %7114 = vdwg.mxu0
  %7115 = vmatpush.bf16.msra.mxu0 %v4322
  %7116 = vmatpush.bf16.msra.mxu0 %v4318
  %7117 = vmatpush.bf16.msra.mxu0 %v4314
  %7118 = vmatpush.bf16.msra.mxu0 %v4310
  %7119 = vmatpush.bf16.msra.mxu0 %v4306
  %7120 = vmatpush.bf16.msra.mxu0 %v4302
  %7121 = vmatpush.bf16.msra.mxu0 %v4298
  %7122 = vmatpush.bf16.msra.mxu0 %v4294
  %7123 = vmatmul.bf16.gmra.mxu0 %v1057
  %v7124 = vpop.f32.mrf.mxu0
  %v7125 = vadd.f32 %v7112, %v7124
  %v7126 = vpop.f32.mrf.mxu0
  %7127 = vdwg.mxu0
  %7128 = vmatpush.bf16.msra.mxu0 %v4354
  %7129 = vmatpush.bf16.msra.mxu0 %v4350
  %7130 = vmatpush.bf16.msra.mxu0 %v4346
  %7131 = vmatpush.bf16.msra.mxu0 %v4342
  %7132 = vmatpush.bf16.msra.mxu0 %v4338
  %7133 = vmatpush.bf16.msra.mxu0 %v4334
  %7134 = vmatpush.bf16.msra.mxu0 %v4330
  %7135 = vmatpush.bf16.msra.mxu0 %v4326
  %7136 = vmatmul.bf16.gmra.mxu0 %v1058
  %v7137 = vpop.f32.mrf.mxu0
  %v7138 = vadd.f32 %v7125, %v7137
  %v7139 = vpop.f32.mrf.mxu0
  %7140 = vdwg.mxu0
  %7141 = vmatpush.bf16.msra.mxu0 %v4386
  %7142 = vmatpush.bf16.msra.mxu0 %v4382
  %7143 = vmatpush.bf16.msra.mxu0 %v4378
  %7144 = vmatpush.bf16.msra.mxu0 %v4374
  %7145 = vmatpush.bf16.msra.mxu0 %v4370
  %7146 = vmatpush.bf16.msra.mxu0 %v4366
  %7147 = vmatpush.bf16.msra.mxu0 %v4362
  %7148 = vmatpush.bf16.msra.mxu0 %v4358
  %7149 = vmatmul.bf16.gmra.mxu0 %v1059
  %v7150 = vpop.f32.mrf.mxu0
  %v7151 = vadd.f32 %v7138, %v7150
  %v7152 = vpop.f32.mrf.mxu0
  %7153 = vdwg.mxu0
  %7154 = vmatpush.bf16.msra.mxu0 %v4418
  %7155 = vmatpush.bf16.msra.mxu0 %v4414
  %7156 = vmatpush.bf16.msra.mxu0 %v4410
  %7157 = vmatpush.bf16.msra.mxu0 %v4406
  %7158 = vmatpush.bf16.msra.mxu0 %v4402
  %7159 = vmatpush.bf16.msra.mxu0 %v4398
  %7160 = vmatpush.bf16.msra.mxu0 %v4394
  %7161 = vmatpush.bf16.msra.mxu0 %v4390
  %7162 = vmatmul.bf16.gmra.mxu0 %v1060
  %v7163 = vpop.f32.mrf.mxu0
  %v7164 = vadd.f32 %v7151, %v7163
  %v7165 = vpop.f32.mrf.mxu0
  %7166 = vdwg.mxu0
  %7167 = vmatpush.bf16.msra.mxu0 %v4450
  %7168 = vmatpush.bf16.msra.mxu0 %v4446
  %7169 = vmatpush.bf16.msra.mxu0 %v4442
  %7170 = vmatpush.bf16.msra.mxu0 %v4438
  %7171 = vmatpush.bf16.msra.mxu0 %v4434
  %7172 = vmatpush.bf16.msra.mxu0 %v4430
  %7173 = vmatpush.bf16.msra.mxu0 %v4426
  %7174 = vmatpush.bf16.msra.mxu0 %v4422
  %7175 = vmatmul.bf16.gmra.mxu0 %v1061
  %v7176 = vpop.f32.mrf.mxu0
  %v7177 = vadd.f32 %v7164, %v7176
  %v7178 = vpop.f32.mrf.mxu0
  %7179 = vdwg.mxu0
  %7180 = vmatpush.bf16.msra.mxu0 %v4482
  %7181 = vmatpush.bf16.msra.mxu0 %v4478
  %7182 = vmatpush.bf16.msra.mxu0 %v4474
  %7183 = vmatpush.bf16.msra.mxu0 %v4470
  %7184 = vmatpush.bf16.msra.mxu0 %v4466
  %7185 = vmatpush.bf16.msra.mxu0 %v4462
  %7186 = vmatpush.bf16.msra.mxu0 %v4458
  %7187 = vmatpush.bf16.msra.mxu0 %v4454
  %7188 = vmatmul.bf16.gmra.mxu0 %v1064
  %v7189 = vpop.f32.mrf.mxu0
  %v7190 = vadd.f32 %v7177, %v7189
  %v7191 = vpop.f32.mrf.mxu0
  %7192 = vdwg.mxu0
  %7193 = vmatpush.bf16.msra.mxu0 %v4514
  %7194 = vmatpush.bf16.msra.mxu0 %v4510
  %7195 = vmatpush.bf16.msra.mxu0 %v4506
  %7196 = vmatpush.bf16.msra.mxu0 %v4502
  %7197 = vmatpush.bf16.msra.mxu0 %v4498
  %7198 = vmatpush.bf16.msra.mxu0 %v4494
  %7199 = vmatpush.bf16.msra.mxu0 %v4490
  %7200 = vmatpush.bf16.msra.mxu0 %v4486
  %7201 = vmatmul.bf16.gmra.mxu0 %v1065
  %v7202 = vpop.f32.mrf.mxu0
  %v7203 = vadd.f32 %v7190, %v7202
  %v7204 = vpop.f32.mrf.mxu0
  %7205 = vdwg.mxu0
  %7206 = vmatpush.bf16.msra.mxu0 %v4546
  %7207 = vmatpush.bf16.msra.mxu0 %v4542
  %7208 = vmatpush.bf16.msra.mxu0 %v4538
  %7209 = vmatpush.bf16.msra.mxu0 %v4534
  %7210 = vmatpush.bf16.msra.mxu0 %v4530
  %7211 = vmatpush.bf16.msra.mxu0 %v4526
  %7212 = vmatpush.bf16.msra.mxu0 %v4522
  %7213 = vmatpush.bf16.msra.mxu0 %v4518
  %7214 = vmatmul.bf16.gmra.mxu0 %v1066
  %v7215 = vpop.f32.mrf.mxu0
  %v7216 = vadd.f32 %v7203, %v7215
  %v7217 = vpop.f32.mrf.mxu0
  %7218 = vdwg.mxu0
  %7219 = vmatpush.bf16.msra.mxu0 %v4578
  %7220 = vmatpush.bf16.msra.mxu0 %v4574
  %7221 = vmatpush.bf16.msra.mxu0 %v4570
  %7222 = vmatpush.bf16.msra.mxu0 %v4566
  %7223 = vmatpush.bf16.msra.mxu0 %v4562
  %7224 = vmatpush.bf16.msra.mxu0 %v4558
  %7225 = vmatpush.bf16.msra.mxu0 %v4554
  %7226 = vmatpush.bf16.msra.mxu0 %v4550
  %7227 = vmatmul.bf16.gmra.mxu0 %v1067
  %v7228 = vpop.f32.mrf.mxu0
  %v7229 = vadd.f32 %v7216, %v7228
  %v7230 = vpop.f32.mrf.mxu0
  %7231 = vdwg.mxu0
  %7232 = vmatpush.bf16.msra.mxu0 %v4610
  %7233 = vmatpush.bf16.msra.mxu0 %v4606
  %7234 = vmatpush.bf16.msra.mxu0 %v4602
  %7235 = vmatpush.bf16.msra.mxu0 %v4598
  %7236 = vmatpush.bf16.msra.mxu0 %v4594
  %7237 = vmatpush.bf16.msra.mxu0 %v4590
  %7238 = vmatpush.bf16.msra.mxu0 %v4586
  %7239 = vmatpush.bf16.msra.mxu0 %v4582
  %7240 = vmatmul.bf16.gmra.mxu0 %v1068
  %v7241 = vpop.f32.mrf.mxu0
  %v7242 = vadd.f32 %v7229, %v7241
  %v7243 = vpop.f32.mrf.mxu0
  %7244 = vdwg.mxu0
  %7245 = vmatpush.bf16.msra.mxu0 %v4642
  %7246 = vmatpush.bf16.msra.mxu0 %v4638
  %7247 = vmatpush.bf16.msra.mxu0 %v4634
  %7248 = vmatpush.bf16.msra.mxu0 %v4630
  %7249 = vmatpush.bf16.msra.mxu0 %v4626
  %7250 = vmatpush.bf16.msra.mxu0 %v4622
  %7251 = vmatpush.bf16.msra.mxu0 %v4618
  %7252 = vmatpush.bf16.msra.mxu0 %v4614
  %7253 = vmatmul.bf16.gmra.mxu0 %v1069
  %v7254 = vpop.f32.mrf.mxu0
  %v7255 = vadd.f32 %v7242, %v7254
  %v7256 = vpop.f32.mrf.mxu0
  %7257 = vdwg.mxu0
  %7258 = vmatpush.bf16.msra.mxu0 %v4674
  %7259 = vmatpush.bf16.msra.mxu0 %v4670
  %7260 = vmatpush.bf16.msra.mxu0 %v4666
  %7261 = vmatpush.bf16.msra.mxu0 %v4662
  %7262 = vmatpush.bf16.msra.mxu0 %v4658
  %7263 = vmatpush.bf16.msra.mxu0 %v4654
  %7264 = vmatpush.bf16.msra.mxu0 %v4650
  %7265 = vmatpush.bf16.msra.mxu0 %v4646
  %7266 = vmatmul.bf16.gmra.mxu0 %v1070
  %v7267 = vpop.f32.mrf.mxu0
  %v7268 = vadd.f32 %v7255, %v7267
  %v7269 = vpop.f32.mrf.mxu0
  %7270 = vdwg.mxu0
  %7271 = vmatpush.bf16.msra.mxu0 %v4706
  %7272 = vmatpush.bf16.msra.mxu0 %v4702
  %7273 = vmatpush.bf16.msra.mxu0 %v4698
  %7274 = vmatpush.bf16.msra.mxu0 %v4694
  %7275 = vmatpush.bf16.msra.mxu0 %v4690
  %7276 = vmatpush.bf16.msra.mxu0 %v4686
  %7277 = vmatpush.bf16.msra.mxu0 %v4682
  %7278 = vmatpush.bf16.msra.mxu0 %v4678
  %7279 = vmatmul.bf16.gmra.mxu0 %v1071
  %v7280 = vpop.f32.mrf.mxu0
  %v7281 = vadd.f32 %v7268, %v7280
  %v7282 = vpop.f32.mrf.mxu0
  %7283 = vdwg.mxu0
  %7284 = vmatpush.bf16.msra.mxu0 %v4738
  %7285 = vmatpush.bf16.msra.mxu0 %v4734
  %7286 = vmatpush.bf16.msra.mxu0 %v4730
  %7287 = vmatpush.bf16.msra.mxu0 %v4726
  %7288 = vmatpush.bf16.msra.mxu0 %v4722
  %7289 = vmatpush.bf16.msra.mxu0 %v4718
  %7290 = vmatpush.bf16.msra.mxu0 %v4714
  %7291 = vmatpush.bf16.msra.mxu0 %v4710
  %7292 = vmatmul.bf16.gmra.mxu0 %v1074
  %v7293 = vpop.f32.mrf.mxu0
  %v7294 = vadd.f32 %v7281, %v7293
  %v7295 = vpop.f32.mrf.mxu0
  %7296 = vdwg.mxu0
  %7297 = vmatpush.bf16.msra.mxu0 %v4770
  %7298 = vmatpush.bf16.msra.mxu0 %v4766
  %7299 = vmatpush.bf16.msra.mxu0 %v4762
  %7300 = vmatpush.bf16.msra.mxu0 %v4758
  %7301 = vmatpush.bf16.msra.mxu0 %v4754
  %7302 = vmatpush.bf16.msra.mxu0 %v4750
  %7303 = vmatpush.bf16.msra.mxu0 %v4746
  %7304 = vmatpush.bf16.msra.mxu0 %v4742
  %7305 = vmatmul.bf16.gmra.mxu0 %v1075
  %v7306 = vpop.f32.mrf.mxu0
  %v7307 = vadd.f32 %v7294, %v7306
  %v7308 = vpop.f32.mrf.mxu0
  %7309 = vdwg.mxu0
  %7310 = vmatpush.bf16.msra.mxu0 %v4802
  %7311 = vmatpush.bf16.msra.mxu0 %v4798
  %7312 = vmatpush.bf16.msra.mxu0 %v4794
  %7313 = vmatpush.bf16.msra.mxu0 %v4790
  %7314 = vmatpush.bf16.msra.mxu0 %v4786
  %7315 = vmatpush.bf16.msra.mxu0 %v4782
  %7316 = vmatpush.bf16.msra.mxu0 %v4778
  %7317 = vmatpush.bf16.msra.mxu0 %v4774
  %7318 = vmatmul.bf16.gmra.mxu0 %v1076
  %v7319 = vpop.f32.mrf.mxu0
  %v7320 = vadd.f32 %v7307, %v7319
  %v7321 = vpop.f32.mrf.mxu0
  %7322 = vdwg.mxu0
  %7323 = vmatpush.bf16.msra.mxu0 %v4834
  %7324 = vmatpush.bf16.msra.mxu0 %v4830
  %7325 = vmatpush.bf16.msra.mxu0 %v4826
  %7326 = vmatpush.bf16.msra.mxu0 %v4822
  %7327 = vmatpush.bf16.msra.mxu0 %v4818
  %7328 = vmatpush.bf16.msra.mxu0 %v4814
  %7329 = vmatpush.bf16.msra.mxu0 %v4810
  %7330 = vmatpush.bf16.msra.mxu0 %v4806
  %7331 = vmatmul.bf16.gmra.mxu0 %v1077
  %v7332 = vpop.f32.mrf.mxu0
  %v7333 = vadd.f32 %v7320, %v7332
  %v7334 = vpop.f32.mrf.mxu0
  %7335 = vdwg.mxu0
  %7336 = vmatpush.bf16.msra.mxu0 %v4866
  %7337 = vmatpush.bf16.msra.mxu0 %v4862
  %7338 = vmatpush.bf16.msra.mxu0 %v4858
  %7339 = vmatpush.bf16.msra.mxu0 %v4854
  %7340 = vmatpush.bf16.msra.mxu0 %v4850
  %7341 = vmatpush.bf16.msra.mxu0 %v4846
  %7342 = vmatpush.bf16.msra.mxu0 %v4842
  %7343 = vmatpush.bf16.msra.mxu0 %v4838
  %7344 = vmatmul.bf16.gmra.mxu0 %v1078
  %v7345 = vpop.f32.mrf.mxu0
  %v7346 = vadd.f32 %v7333, %v7345
  %v7347 = vpop.f32.mrf.mxu0
  %7348 = vdwg.mxu0
  %7349 = vmatpush.bf16.msra.mxu0 %v4898
  %7350 = vmatpush.bf16.msra.mxu0 %v4894
  %7351 = vmatpush.bf16.msra.mxu0 %v4890
  %7352 = vmatpush.bf16.msra.mxu0 %v4886
  %7353 = vmatpush.bf16.msra.mxu0 %v4882
  %7354 = vmatpush.bf16.msra.mxu0 %v4878
  %7355 = vmatpush.bf16.msra.mxu0 %v4874
  %7356 = vmatpush.bf16.msra.mxu0 %v4870
  %7357 = vmatmul.bf16.gmra.mxu0 %v1079
  %v7358 = vpop.f32.mrf.mxu0
  %v7359 = vadd.f32 %v7346, %v7358
  %v7360 = vpop.f32.mrf.mxu0
  %7361 = vdwg.mxu0
  %7362 = vmatpush.bf16.msra.mxu0 %v4930
  %7363 = vmatpush.bf16.msra.mxu0 %v4926
  %7364 = vmatpush.bf16.msra.mxu0 %v4922
  %7365 = vmatpush.bf16.msra.mxu0 %v4918
  %7366 = vmatpush.bf16.msra.mxu0 %v4914
  %7367 = vmatpush.bf16.msra.mxu0 %v4910
  %7368 = vmatpush.bf16.msra.mxu0 %v4906
  %7369 = vmatpush.bf16.msra.mxu0 %v4902
  %7370 = vmatmul.bf16.gmra.mxu0 %v1080
  %v7371 = vpop.f32.mrf.mxu0
  %v7372 = vadd.f32 %v7359, %v7371
  %v7373 = vpop.f32.mrf.mxu0
  %7374 = vdwg.mxu0
  %7375 = vmatpush.bf16.msra.mxu0 %v4962
  %7376 = vmatpush.bf16.msra.mxu0 %v4958
  %7377 = vmatpush.bf16.msra.mxu0 %v4954
  %7378 = vmatpush.bf16.msra.mxu0 %v4950
  %7379 = vmatpush.bf16.msra.mxu0 %v4946
  %7380 = vmatpush.bf16.msra.mxu0 %v4942
  %7381 = vmatpush.bf16.msra.mxu0 %v4938
  %7382 = vmatpush.bf16.msra.mxu0 %v4934
  %7383 = vmatmul.bf16.gmra.mxu0 %v1081
  %v7384 = vpop.f32.mrf.mxu0
  %v7385 = vadd.f32 %v7372, %v7384
  %v7386 = vpop.f32.mrf.mxu0
  %7387 = vdwg.mxu0
  %7388 = vmatpush.bf16.msra.mxu0 %v4994
  %7389 = vmatpush.bf16.msra.mxu0 %v4990
  %7390 = vmatpush.bf16.msra.mxu0 %v4986
  %7391 = vmatpush.bf16.msra.mxu0 %v4982
  %7392 = vmatpush.bf16.msra.mxu0 %v4978
  %7393 = vmatpush.bf16.msra.mxu0 %v4974
  %7394 = vmatpush.bf16.msra.mxu0 %v4970
  %7395 = vmatpush.bf16.msra.mxu0 %v4966
  %7396 = vmatmul.bf16.gmra.mxu0 %v1084
  %v7397 = vpop.f32.mrf.mxu0
  %v7398 = vadd.f32 %v7385, %v7397
  %v7399 = vpop.f32.mrf.mxu0
  %7400 = vdwg.mxu0
  %7401 = vmatpush.bf16.msra.mxu0 %v5026
  %7402 = vmatpush.bf16.msra.mxu0 %v5022
  %7403 = vmatpush.bf16.msra.mxu0 %v5018
  %7404 = vmatpush.bf16.msra.mxu0 %v5014
  %7405 = vmatpush.bf16.msra.mxu0 %v5010
  %7406 = vmatpush.bf16.msra.mxu0 %v5006
  %7407 = vmatpush.bf16.msra.mxu0 %v5002
  %7408 = vmatpush.bf16.msra.mxu0 %v4998
  %7409 = vmatmul.bf16.gmra.mxu0 %v1085
  %v7410 = vpop.f32.mrf.mxu0
  %v7411 = vadd.f32 %v7398, %v7410
  %v7412 = vpop.f32.mrf.mxu0
  %7413 = vdwg.mxu0
  %7414 = vmatpush.bf16.msra.mxu0 %v5058
  %7415 = vmatpush.bf16.msra.mxu0 %v5054
  %7416 = vmatpush.bf16.msra.mxu0 %v5050
  %7417 = vmatpush.bf16.msra.mxu0 %v5046
  %7418 = vmatpush.bf16.msra.mxu0 %v5042
  %7419 = vmatpush.bf16.msra.mxu0 %v5038
  %7420 = vmatpush.bf16.msra.mxu0 %v5034
  %7421 = vmatpush.bf16.msra.mxu0 %v5030
  %7422 = vmatmul.bf16.gmra.mxu0 %v1086
  %v7423 = vpop.f32.mrf.mxu0
  %v7424 = vadd.f32 %v7411, %v7423
  %v7425 = vpop.f32.mrf.mxu0
  %7426 = vdwg.mxu0
  %7427 = vmatpush.bf16.msra.mxu0 %v5090
  %7428 = vmatpush.bf16.msra.mxu0 %v5086
  %7429 = vmatpush.bf16.msra.mxu0 %v5082
  %7430 = vmatpush.bf16.msra.mxu0 %v5078
  %7431 = vmatpush.bf16.msra.mxu0 %v5074
  %7432 = vmatpush.bf16.msra.mxu0 %v5070
  %7433 = vmatpush.bf16.msra.mxu0 %v5066
  %7434 = vmatpush.bf16.msra.mxu0 %v5062
  %7435 = vmatmul.bf16.gmra.mxu0 %v1087
  %v7436 = vpop.f32.mrf.mxu0
  %v7437 = vadd.f32 %v7424, %v7436
  %v7438 = vpop.f32.mrf.mxu0
  %7439 = vdwg.mxu0
  %7440 = vmatpush.bf16.msra.mxu0 %v5122
  %7441 = vmatpush.bf16.msra.mxu0 %v5118
  %7442 = vmatpush.bf16.msra.mxu0 %v5114
  %7443 = vmatpush.bf16.msra.mxu0 %v5110
  %7444 = vmatpush.bf16.msra.mxu0 %v5106
  %7445 = vmatpush.bf16.msra.mxu0 %v5102
  %7446 = vmatpush.bf16.msra.mxu0 %v5098
  %7447 = vmatpush.bf16.msra.mxu0 %v5094
  %7448 = vmatmul.bf16.gmra.mxu0 %v1088
  %v7449 = vpop.f32.mrf.mxu0
  %v7450 = vadd.f32 %v7437, %v7449
  %v7451 = vpop.f32.mrf.mxu0
  %7452 = vdwg.mxu0
  %7453 = vmatpush.bf16.msra.mxu0 %v5154
  %7454 = vmatpush.bf16.msra.mxu0 %v5150
  %7455 = vmatpush.bf16.msra.mxu0 %v5146
  %7456 = vmatpush.bf16.msra.mxu0 %v5142
  %7457 = vmatpush.bf16.msra.mxu0 %v5138
  %7458 = vmatpush.bf16.msra.mxu0 %v5134
  %7459 = vmatpush.bf16.msra.mxu0 %v5130
  %7460 = vmatpush.bf16.msra.mxu0 %v5126
  %7461 = vmatmul.bf16.gmra.mxu0 %v1089
  %v7462 = vpop.f32.mrf.mxu0
  %v7463 = vadd.f32 %v7450, %v7462
  %v7464 = vpop.f32.mrf.mxu0
  %7465 = vdwg.mxu0
  %7466 = vmatpush.bf16.msra.mxu0 %v5186
  %7467 = vmatpush.bf16.msra.mxu0 %v5182
  %7468 = vmatpush.bf16.msra.mxu0 %v5178
  %7469 = vmatpush.bf16.msra.mxu0 %v5174
  %7470 = vmatpush.bf16.msra.mxu0 %v5170
  %7471 = vmatpush.bf16.msra.mxu0 %v5166
  %7472 = vmatpush.bf16.msra.mxu0 %v5162
  %7473 = vmatpush.bf16.msra.mxu0 %v5158
  %7474 = vmatmul.bf16.gmra.mxu0 %v1090
  %v7475 = vpop.f32.mrf.mxu0
  %v7476 = vadd.f32 %v7463, %v7475
  %v7477 = vpop.f32.mrf.mxu0
  %7478 = vdwg.mxu0
  %7479 = vmatpush.bf16.msra.mxu0 %v5218
  %7480 = vmatpush.bf16.msra.mxu0 %v5214
  %7481 = vmatpush.bf16.msra.mxu0 %v5210
  %7482 = vmatpush.bf16.msra.mxu0 %v5206
  %7483 = vmatpush.bf16.msra.mxu0 %v5202
  %7484 = vmatpush.bf16.msra.mxu0 %v5198
  %7485 = vmatpush.bf16.msra.mxu0 %v5194
  %7486 = vmatpush.bf16.msra.mxu0 %v5190
  %7487 = vmatmul.bf16.gmra.mxu0 %v1091
  %v7488 = vpop.f32.mrf.mxu0
  %v7489 = vadd.f32 %v7476, %v7488
  %v7490 = vpop.f32.mrf.mxu0
  %7491 = vdwg.mxu0
  %7492 = vmatpush.bf16.msra.mxu0 %v4227
  %7493 = vmatpush.bf16.msra.mxu0 %v4223
  %7494 = vmatpush.bf16.msra.mxu0 %v4219
  %7495 = vmatpush.bf16.msra.mxu0 %v4215
  %7496 = vmatpush.bf16.msra.mxu0 %v4211
  %7497 = vmatpush.bf16.msra.mxu0 %v4207
  %7498 = vmatpush.bf16.msra.mxu0 %v4203
  %7499 = vmatpush.bf16.msra.mxu0 %v4199
  %7500 = vmatmul.bf16.gmra.mxu0 %v1054
  %v7501 = vpop.f32.mrf.mxu0
  %v7502 = vadd.f32 0.0, %v7501
  %v7503 = vpop.f32.mrf.mxu0
  %7504 = vdwg.mxu0
  %7505 = vmatpush.bf16.msra.mxu0 %v4259
  %7506 = vmatpush.bf16.msra.mxu0 %v4255
  %7507 = vmatpush.bf16.msra.mxu0 %v4251
  %7508 = vmatpush.bf16.msra.mxu0 %v4247
  %7509 = vmatpush.bf16.msra.mxu0 %v4243
  %7510 = vmatpush.bf16.msra.mxu0 %v4239
  %7511 = vmatpush.bf16.msra.mxu0 %v4235
  %7512 = vmatpush.bf16.msra.mxu0 %v4231
  %7513 = vmatmul.bf16.gmra.mxu0 %v1055
  %v7514 = vpop.f32.mrf.mxu0
  %v7515 = vadd.f32 %v7502, %v7514
  %v7516 = vpop.f32.mrf.mxu0
  %7517 = vdwg.mxu0
  %7518 = vmatpush.bf16.msra.mxu0 %v4291
  %7519 = vmatpush.bf16.msra.mxu0 %v4287
  %7520 = vmatpush.bf16.msra.mxu0 %v4283
  %7521 = vmatpush.bf16.msra.mxu0 %v4279
  %7522 = vmatpush.bf16.msra.mxu0 %v4275
  %7523 = vmatpush.bf16.msra.mxu0 %v4271
  %7524 = vmatpush.bf16.msra.mxu0 %v4267
  %7525 = vmatpush.bf16.msra.mxu0 %v4263
  %7526 = vmatmul.bf16.gmra.mxu0 %v1056
  %v7527 = vpop.f32.mrf.mxu0
  %v7528 = vadd.f32 %v7515, %v7527
  %v7529 = vpop.f32.mrf.mxu0
  %7530 = vdwg.mxu0
  %7531 = vmatpush.bf16.msra.mxu0 %v4323
  %7532 = vmatpush.bf16.msra.mxu0 %v4319
  %7533 = vmatpush.bf16.msra.mxu0 %v4315
  %7534 = vmatpush.bf16.msra.mxu0 %v4311
  %7535 = vmatpush.bf16.msra.mxu0 %v4307
  %7536 = vmatpush.bf16.msra.mxu0 %v4303
  %7537 = vmatpush.bf16.msra.mxu0 %v4299
  %7538 = vmatpush.bf16.msra.mxu0 %v4295
  %7539 = vmatmul.bf16.gmra.mxu0 %v1057
  %v7540 = vpop.f32.mrf.mxu0
  %v7541 = vadd.f32 %v7528, %v7540
  %v7542 = vpop.f32.mrf.mxu0
  %7543 = vdwg.mxu0
  %7544 = vmatpush.bf16.msra.mxu0 %v4355
  %7545 = vmatpush.bf16.msra.mxu0 %v4351
  %7546 = vmatpush.bf16.msra.mxu0 %v4347
  %7547 = vmatpush.bf16.msra.mxu0 %v4343
  %7548 = vmatpush.bf16.msra.mxu0 %v4339
  %7549 = vmatpush.bf16.msra.mxu0 %v4335
  %7550 = vmatpush.bf16.msra.mxu0 %v4331
  %7551 = vmatpush.bf16.msra.mxu0 %v4327
  %7552 = vmatmul.bf16.gmra.mxu0 %v1058
  %v7553 = vpop.f32.mrf.mxu0
  %v7554 = vadd.f32 %v7541, %v7553
  %v7555 = vpop.f32.mrf.mxu0
  %7556 = vdwg.mxu0
  %7557 = vmatpush.bf16.msra.mxu0 %v4387
  %7558 = vmatpush.bf16.msra.mxu0 %v4383
  %7559 = vmatpush.bf16.msra.mxu0 %v4379
  %7560 = vmatpush.bf16.msra.mxu0 %v4375
  %7561 = vmatpush.bf16.msra.mxu0 %v4371
  %7562 = vmatpush.bf16.msra.mxu0 %v4367
  %7563 = vmatpush.bf16.msra.mxu0 %v4363
  %7564 = vmatpush.bf16.msra.mxu0 %v4359
  %7565 = vmatmul.bf16.gmra.mxu0 %v1059
  %v7566 = vpop.f32.mrf.mxu0
  %v7567 = vadd.f32 %v7554, %v7566
  %v7568 = vpop.f32.mrf.mxu0
  %7569 = vdwg.mxu0
  %7570 = vmatpush.bf16.msra.mxu0 %v4419
  %7571 = vmatpush.bf16.msra.mxu0 %v4415
  %7572 = vmatpush.bf16.msra.mxu0 %v4411
  %7573 = vmatpush.bf16.msra.mxu0 %v4407
  %7574 = vmatpush.bf16.msra.mxu0 %v4403
  %7575 = vmatpush.bf16.msra.mxu0 %v4399
  %7576 = vmatpush.bf16.msra.mxu0 %v4395
  %7577 = vmatpush.bf16.msra.mxu0 %v4391
  %7578 = vmatmul.bf16.gmra.mxu0 %v1060
  %v7579 = vpop.f32.mrf.mxu0
  %v7580 = vadd.f32 %v7567, %v7579
  %v7581 = vpop.f32.mrf.mxu0
  %7582 = vdwg.mxu0
  %7583 = vmatpush.bf16.msra.mxu0 %v4451
  %7584 = vmatpush.bf16.msra.mxu0 %v4447
  %7585 = vmatpush.bf16.msra.mxu0 %v4443
  %7586 = vmatpush.bf16.msra.mxu0 %v4439
  %7587 = vmatpush.bf16.msra.mxu0 %v4435
  %7588 = vmatpush.bf16.msra.mxu0 %v4431
  %7589 = vmatpush.bf16.msra.mxu0 %v4427
  %7590 = vmatpush.bf16.msra.mxu0 %v4423
  %7591 = vmatmul.bf16.gmra.mxu0 %v1061
  %v7592 = vpop.f32.mrf.mxu0
  %v7593 = vadd.f32 %v7580, %v7592
  %v7594 = vpop.f32.mrf.mxu0
  %7595 = vdwg.mxu0
  %7596 = vmatpush.bf16.msra.mxu0 %v4483
  %7597 = vmatpush.bf16.msra.mxu0 %v4479
  %7598 = vmatpush.bf16.msra.mxu0 %v4475
  %7599 = vmatpush.bf16.msra.mxu0 %v4471
  %7600 = vmatpush.bf16.msra.mxu0 %v4467
  %7601 = vmatpush.bf16.msra.mxu0 %v4463
  %7602 = vmatpush.bf16.msra.mxu0 %v4459
  %7603 = vmatpush.bf16.msra.mxu0 %v4455
  %7604 = vmatmul.bf16.gmra.mxu0 %v1064
  %v7605 = vpop.f32.mrf.mxu0
  %v7606 = vadd.f32 %v7593, %v7605
  %v7607 = vpop.f32.mrf.mxu0
  %7608 = vdwg.mxu0
  %7609 = vmatpush.bf16.msra.mxu0 %v4515
  %7610 = vmatpush.bf16.msra.mxu0 %v4511
  %7611 = vmatpush.bf16.msra.mxu0 %v4507
  %7612 = vmatpush.bf16.msra.mxu0 %v4503
  %7613 = vmatpush.bf16.msra.mxu0 %v4499
  %7614 = vmatpush.bf16.msra.mxu0 %v4495
  %7615 = vmatpush.bf16.msra.mxu0 %v4491
  %7616 = vmatpush.bf16.msra.mxu0 %v4487
  %7617 = vmatmul.bf16.gmra.mxu0 %v1065
  %v7618 = vpop.f32.mrf.mxu0
  %v7619 = vadd.f32 %v7606, %v7618
  %v7620 = vpop.f32.mrf.mxu0
  %7621 = vdwg.mxu0
  %7622 = vmatpush.bf16.msra.mxu0 %v4547
  %7623 = vmatpush.bf16.msra.mxu0 %v4543
  %7624 = vmatpush.bf16.msra.mxu0 %v4539
  %7625 = vmatpush.bf16.msra.mxu0 %v4535
  %7626 = vmatpush.bf16.msra.mxu0 %v4531
  %7627 = vmatpush.bf16.msra.mxu0 %v4527
  %7628 = vmatpush.bf16.msra.mxu0 %v4523
  %7629 = vmatpush.bf16.msra.mxu0 %v4519
  %7630 = vmatmul.bf16.gmra.mxu0 %v1066
  %v7631 = vpop.f32.mrf.mxu0
  %v7632 = vadd.f32 %v7619, %v7631
  %v7633 = vpop.f32.mrf.mxu0
  %7634 = vdwg.mxu0
  %7635 = vmatpush.bf16.msra.mxu0 %v4579
  %7636 = vmatpush.bf16.msra.mxu0 %v4575
  %7637 = vmatpush.bf16.msra.mxu0 %v4571
  %7638 = vmatpush.bf16.msra.mxu0 %v4567
  %7639 = vmatpush.bf16.msra.mxu0 %v4563
  %7640 = vmatpush.bf16.msra.mxu0 %v4559
  %7641 = vmatpush.bf16.msra.mxu0 %v4555
  %7642 = vmatpush.bf16.msra.mxu0 %v4551
  %7643 = vmatmul.bf16.gmra.mxu0 %v1067
  %v7644 = vpop.f32.mrf.mxu0
  %v7645 = vadd.f32 %v7632, %v7644
  %v7646 = vpop.f32.mrf.mxu0
  %7647 = vdwg.mxu0
  %7648 = vmatpush.bf16.msra.mxu0 %v4611
  %7649 = vmatpush.bf16.msra.mxu0 %v4607
  %7650 = vmatpush.bf16.msra.mxu0 %v4603
  %7651 = vmatpush.bf16.msra.mxu0 %v4599
  %7652 = vmatpush.bf16.msra.mxu0 %v4595
  %7653 = vmatpush.bf16.msra.mxu0 %v4591
  %7654 = vmatpush.bf16.msra.mxu0 %v4587
  %7655 = vmatpush.bf16.msra.mxu0 %v4583
  %7656 = vmatmul.bf16.gmra.mxu0 %v1068
  %v7657 = vpop.f32.mrf.mxu0
  %v7658 = vadd.f32 %v7645, %v7657
  %v7659 = vpop.f32.mrf.mxu0
  %7660 = vdwg.mxu0
  %7661 = vmatpush.bf16.msra.mxu0 %v4643
  %7662 = vmatpush.bf16.msra.mxu0 %v4639
  %7663 = vmatpush.bf16.msra.mxu0 %v4635
  %7664 = vmatpush.bf16.msra.mxu0 %v4631
  %7665 = vmatpush.bf16.msra.mxu0 %v4627
  %7666 = vmatpush.bf16.msra.mxu0 %v4623
  %7667 = vmatpush.bf16.msra.mxu0 %v4619
  %7668 = vmatpush.bf16.msra.mxu0 %v4615
  %7669 = vmatmul.bf16.gmra.mxu0 %v1069
  %v7670 = vpop.f32.mrf.mxu0
  %v7671 = vadd.f32 %v7658, %v7670
  %v7672 = vpop.f32.mrf.mxu0
  %7673 = vdwg.mxu0
  %7674 = vmatpush.bf16.msra.mxu0 %v4675
  %7675 = vmatpush.bf16.msra.mxu0 %v4671
  %7676 = vmatpush.bf16.msra.mxu0 %v4667
  %7677 = vmatpush.bf16.msra.mxu0 %v4663
  %7678 = vmatpush.bf16.msra.mxu0 %v4659
  %7679 = vmatpush.bf16.msra.mxu0 %v4655
  %7680 = vmatpush.bf16.msra.mxu0 %v4651
  %7681 = vmatpush.bf16.msra.mxu0 %v4647
  %7682 = vmatmul.bf16.gmra.mxu0 %v1070
  %v7683 = vpop.f32.mrf.mxu0
  %v7684 = vadd.f32 %v7671, %v7683
  %v7685 = vpop.f32.mrf.mxu0
  %7686 = vdwg.mxu0
  %7687 = vmatpush.bf16.msra.mxu0 %v4707
  %7688 = vmatpush.bf16.msra.mxu0 %v4703
  %7689 = vmatpush.bf16.msra.mxu0 %v4699
  %7690 = vmatpush.bf16.msra.mxu0 %v4695
  %7691 = vmatpush.bf16.msra.mxu0 %v4691
  %7692 = vmatpush.bf16.msra.mxu0 %v4687
  %7693 = vmatpush.bf16.msra.mxu0 %v4683
  %7694 = vmatpush.bf16.msra.mxu0 %v4679
  %7695 = vmatmul.bf16.gmra.mxu0 %v1071
  %v7696 = vpop.f32.mrf.mxu0
  %v7697 = vadd.f32 %v7684, %v7696
  %v7698 = vpop.f32.mrf.mxu0
  %7699 = vdwg.mxu0
  %7700 = vmatpush.bf16.msra.mxu0 %v4739
  %7701 = vmatpush.bf16.msra.mxu0 %v4735
  %7702 = vmatpush.bf16.msra.mxu0 %v4731
  %7703 = vmatpush.bf16.msra.mxu0 %v4727
  %7704 = vmatpush.bf16.msra.mxu0 %v4723
  %7705 = vmatpush.bf16.msra.mxu0 %v4719
  %7706 = vmatpush.bf16.msra.mxu0 %v4715
  %7707 = vmatpush.bf16.msra.mxu0 %v4711
  %7708 = vmatmul.bf16.gmra.mxu0 %v1074
  %v7709 = vpop.f32.mrf.mxu0
  %v7710 = vadd.f32 %v7697, %v7709
  %v7711 = vpop.f32.mrf.mxu0
  %7712 = vdwg.mxu0
  %7713 = vmatpush.bf16.msra.mxu0 %v4771
  %7714 = vmatpush.bf16.msra.mxu0 %v4767
  %7715 = vmatpush.bf16.msra.mxu0 %v4763
  %7716 = vmatpush.bf16.msra.mxu0 %v4759
  %7717 = vmatpush.bf16.msra.mxu0 %v4755
  %7718 = vmatpush.bf16.msra.mxu0 %v4751
  %7719 = vmatpush.bf16.msra.mxu0 %v4747
  %7720 = vmatpush.bf16.msra.mxu0 %v4743
  %7721 = vmatmul.bf16.gmra.mxu0 %v1075
  %v7722 = vpop.f32.mrf.mxu0
  %v7723 = vadd.f32 %v7710, %v7722
  %v7724 = vpop.f32.mrf.mxu0
  %7725 = vdwg.mxu0
  %7726 = vmatpush.bf16.msra.mxu0 %v4803
  %7727 = vmatpush.bf16.msra.mxu0 %v4799
  %7728 = vmatpush.bf16.msra.mxu0 %v4795
  %7729 = vmatpush.bf16.msra.mxu0 %v4791
  %7730 = vmatpush.bf16.msra.mxu0 %v4787
  %7731 = vmatpush.bf16.msra.mxu0 %v4783
  %7732 = vmatpush.bf16.msra.mxu0 %v4779
  %7733 = vmatpush.bf16.msra.mxu0 %v4775
  %7734 = vmatmul.bf16.gmra.mxu0 %v1076
  %v7735 = vpop.f32.mrf.mxu0
  %v7736 = vadd.f32 %v7723, %v7735
  %v7737 = vpop.f32.mrf.mxu0
  %7738 = vdwg.mxu0
  %7739 = vmatpush.bf16.msra.mxu0 %v4835
  %7740 = vmatpush.bf16.msra.mxu0 %v4831
  %7741 = vmatpush.bf16.msra.mxu0 %v4827
  %7742 = vmatpush.bf16.msra.mxu0 %v4823
  %7743 = vmatpush.bf16.msra.mxu0 %v4819
  %7744 = vmatpush.bf16.msra.mxu0 %v4815
  %7745 = vmatpush.bf16.msra.mxu0 %v4811
  %7746 = vmatpush.bf16.msra.mxu0 %v4807
  %7747 = vmatmul.bf16.gmra.mxu0 %v1077
  %v7748 = vpop.f32.mrf.mxu0
  %v7749 = vadd.f32 %v7736, %v7748
  %v7750 = vpop.f32.mrf.mxu0
  %7751 = vdwg.mxu0
  %7752 = vmatpush.bf16.msra.mxu0 %v4867
  %7753 = vmatpush.bf16.msra.mxu0 %v4863
  %7754 = vmatpush.bf16.msra.mxu0 %v4859
  %7755 = vmatpush.bf16.msra.mxu0 %v4855
  %7756 = vmatpush.bf16.msra.mxu0 %v4851
  %7757 = vmatpush.bf16.msra.mxu0 %v4847
  %7758 = vmatpush.bf16.msra.mxu0 %v4843
  %7759 = vmatpush.bf16.msra.mxu0 %v4839
  %7760 = vmatmul.bf16.gmra.mxu0 %v1078
  %v7761 = vpop.f32.mrf.mxu0
  %v7762 = vadd.f32 %v7749, %v7761
  %v7763 = vpop.f32.mrf.mxu0
  %7764 = vdwg.mxu0
  %7765 = vmatpush.bf16.msra.mxu0 %v4899
  %7766 = vmatpush.bf16.msra.mxu0 %v4895
  %7767 = vmatpush.bf16.msra.mxu0 %v4891
  %7768 = vmatpush.bf16.msra.mxu0 %v4887
  %7769 = vmatpush.bf16.msra.mxu0 %v4883
  %7770 = vmatpush.bf16.msra.mxu0 %v4879
  %7771 = vmatpush.bf16.msra.mxu0 %v4875
  %7772 = vmatpush.bf16.msra.mxu0 %v4871
  %7773 = vmatmul.bf16.gmra.mxu0 %v1079
  %v7774 = vpop.f32.mrf.mxu0
  %v7775 = vadd.f32 %v7762, %v7774
  %v7776 = vpop.f32.mrf.mxu0
  %7777 = vdwg.mxu0
  %7778 = vmatpush.bf16.msra.mxu0 %v4931
  %7779 = vmatpush.bf16.msra.mxu0 %v4927
  %7780 = vmatpush.bf16.msra.mxu0 %v4923
  %7781 = vmatpush.bf16.msra.mxu0 %v4919
  %7782 = vmatpush.bf16.msra.mxu0 %v4915
  %7783 = vmatpush.bf16.msra.mxu0 %v4911
  %7784 = vmatpush.bf16.msra.mxu0 %v4907
  %7785 = vmatpush.bf16.msra.mxu0 %v4903
  %7786 = vmatmul.bf16.gmra.mxu0 %v1080
  %v7787 = vpop.f32.mrf.mxu0
  %v7788 = vadd.f32 %v7775, %v7787
  %v7789 = vpop.f32.mrf.mxu0
  %7790 = vdwg.mxu0
  %7791 = vmatpush.bf16.msra.mxu0 %v4963
  %7792 = vmatpush.bf16.msra.mxu0 %v4959
  %7793 = vmatpush.bf16.msra.mxu0 %v4955
  %7794 = vmatpush.bf16.msra.mxu0 %v4951
  %7795 = vmatpush.bf16.msra.mxu0 %v4947
  %7796 = vmatpush.bf16.msra.mxu0 %v4943
  %7797 = vmatpush.bf16.msra.mxu0 %v4939
  %7798 = vmatpush.bf16.msra.mxu0 %v4935
  %7799 = vmatmul.bf16.gmra.mxu0 %v1081
  %v7800 = vpop.f32.mrf.mxu0
  %v7801 = vadd.f32 %v7788, %v7800
  %v7802 = vpop.f32.mrf.mxu0
  %7803 = vdwg.mxu0
  %7804 = vmatpush.bf16.msra.mxu0 %v4995
  %7805 = vmatpush.bf16.msra.mxu0 %v4991
  %7806 = vmatpush.bf16.msra.mxu0 %v4987
  %7807 = vmatpush.bf16.msra.mxu0 %v4983
  %7808 = vmatpush.bf16.msra.mxu0 %v4979
  %7809 = vmatpush.bf16.msra.mxu0 %v4975
  %7810 = vmatpush.bf16.msra.mxu0 %v4971
  %7811 = vmatpush.bf16.msra.mxu0 %v4967
  %7812 = vmatmul.bf16.gmra.mxu0 %v1084
  %v7813 = vpop.f32.mrf.mxu0
  %v7814 = vadd.f32 %v7801, %v7813
  %v7815 = vpop.f32.mrf.mxu0
  %7816 = vdwg.mxu0
  %7817 = vmatpush.bf16.msra.mxu0 %v5027
  %7818 = vmatpush.bf16.msra.mxu0 %v5023
  %7819 = vmatpush.bf16.msra.mxu0 %v5019
  %7820 = vmatpush.bf16.msra.mxu0 %v5015
  %7821 = vmatpush.bf16.msra.mxu0 %v5011
  %7822 = vmatpush.bf16.msra.mxu0 %v5007
  %7823 = vmatpush.bf16.msra.mxu0 %v5003
  %7824 = vmatpush.bf16.msra.mxu0 %v4999
  %7825 = vmatmul.bf16.gmra.mxu0 %v1085
  %v7826 = vpop.f32.mrf.mxu0
  %v7827 = vadd.f32 %v7814, %v7826
  %v7828 = vpop.f32.mrf.mxu0
  %7829 = vdwg.mxu0
  %7830 = vmatpush.bf16.msra.mxu0 %v5059
  %7831 = vmatpush.bf16.msra.mxu0 %v5055
  %7832 = vmatpush.bf16.msra.mxu0 %v5051
  %7833 = vmatpush.bf16.msra.mxu0 %v5047
  %7834 = vmatpush.bf16.msra.mxu0 %v5043
  %7835 = vmatpush.bf16.msra.mxu0 %v5039
  %7836 = vmatpush.bf16.msra.mxu0 %v5035
  %7837 = vmatpush.bf16.msra.mxu0 %v5031
  %7838 = vmatmul.bf16.gmra.mxu0 %v1086
  %v7839 = vpop.f32.mrf.mxu0
  %v7840 = vadd.f32 %v7827, %v7839
  %v7841 = vpop.f32.mrf.mxu0
  %7842 = vdwg.mxu0
  %7843 = vmatpush.bf16.msra.mxu0 %v5091
  %7844 = vmatpush.bf16.msra.mxu0 %v5087
  %7845 = vmatpush.bf16.msra.mxu0 %v5083
  %7846 = vmatpush.bf16.msra.mxu0 %v5079
  %7847 = vmatpush.bf16.msra.mxu0 %v5075
  %7848 = vmatpush.bf16.msra.mxu0 %v5071
  %7849 = vmatpush.bf16.msra.mxu0 %v5067
  %7850 = vmatpush.bf16.msra.mxu0 %v5063
  %7851 = vmatmul.bf16.gmra.mxu0 %v1087
  %v7852 = vpop.f32.mrf.mxu0
  %v7853 = vadd.f32 %v7840, %v7852
  %v7854 = vpop.f32.mrf.mxu0
  %7855 = vdwg.mxu0
  %7856 = vmatpush.bf16.msra.mxu0 %v5123
  %7857 = vmatpush.bf16.msra.mxu0 %v5119
  %7858 = vmatpush.bf16.msra.mxu0 %v5115
  %7859 = vmatpush.bf16.msra.mxu0 %v5111
  %7860 = vmatpush.bf16.msra.mxu0 %v5107
  %7861 = vmatpush.bf16.msra.mxu0 %v5103
  %7862 = vmatpush.bf16.msra.mxu0 %v5099
  %7863 = vmatpush.bf16.msra.mxu0 %v5095
  %7864 = vmatmul.bf16.gmra.mxu0 %v1088
  %v7865 = vpop.f32.mrf.mxu0
  %v7866 = vadd.f32 %v7853, %v7865
  %v7867 = vpop.f32.mrf.mxu0
  %7868 = vdwg.mxu0
  %7869 = vmatpush.bf16.msra.mxu0 %v5155
  %7870 = vmatpush.bf16.msra.mxu0 %v5151
  %7871 = vmatpush.bf16.msra.mxu0 %v5147
  %7872 = vmatpush.bf16.msra.mxu0 %v5143
  %7873 = vmatpush.bf16.msra.mxu0 %v5139
  %7874 = vmatpush.bf16.msra.mxu0 %v5135
  %7875 = vmatpush.bf16.msra.mxu0 %v5131
  %7876 = vmatpush.bf16.msra.mxu0 %v5127
  %7877 = vmatmul.bf16.gmra.mxu0 %v1089
  %v7878 = vpop.f32.mrf.mxu0
  %v7879 = vadd.f32 %v7866, %v7878
  %v7880 = vpop.f32.mrf.mxu0
  %7881 = vdwg.mxu0
  %7882 = vmatpush.bf16.msra.mxu0 %v5187
  %7883 = vmatpush.bf16.msra.mxu0 %v5183
  %7884 = vmatpush.bf16.msra.mxu0 %v5179
  %7885 = vmatpush.bf16.msra.mxu0 %v5175
  %7886 = vmatpush.bf16.msra.mxu0 %v5171
  %7887 = vmatpush.bf16.msra.mxu0 %v5167
  %7888 = vmatpush.bf16.msra.mxu0 %v5163
  %7889 = vmatpush.bf16.msra.mxu0 %v5159
  %7890 = vmatmul.bf16.gmra.mxu0 %v1090
  %v7891 = vpop.f32.mrf.mxu0
  %v7892 = vadd.f32 %v7879, %v7891
  %v7893 = vpop.f32.mrf.mxu0
  %7894 = vdwg.mxu0
  %7895 = vmatpush.bf16.msra.mxu0 %v5219
  %7896 = vmatpush.bf16.msra.mxu0 %v5215
  %7897 = vmatpush.bf16.msra.mxu0 %v5211
  %7898 = vmatpush.bf16.msra.mxu0 %v5207
  %7899 = vmatpush.bf16.msra.mxu0 %v5203
  %7900 = vmatpush.bf16.msra.mxu0 %v5199
  %7901 = vmatpush.bf16.msra.mxu0 %v5195
  %7902 = vmatpush.bf16.msra.mxu0 %v5191
  %7903 = vmatmul.bf16.gmra.mxu0 %v1091
  %v7904 = vpop.f32.mrf.mxu0
  %v7905 = vadd.f32 %v7892, %v7904
  %v7906 = vpop.f32.mrf.mxu0
  %7907 = vdwg.mxu0
  %v7908 = vpack.c.bf16 %v7073, %v6657
  %v7909 = vpack.c.bf16 %v7905, %v7489
  %v7912 = vrot.slane %v7908, 3
  %v7913 = vrot.slane %v7909, 6
  %v7914 = vrot.slane %v7909, 1
  %vm7915 = vcmask 1040384
  %v7918 = vsel %vm7915, %v7908, %v7912
  %vm7919 = vcmask 1042434
  %v7922 = vsel %vm7919, %v7913, %v7914
  %vm7923 = vcmask 1041408
  %v7924 = vsel %vm7923, %v7918, %v7922
  %7926 = vst [vmem:[%s2] sm:$0xf] %v7924
  %v7927 = vld [vmem:[%s3] sm:$0xf]
  %v7928 = vsel %vm7923, %v6657, 0.0
  %v7929 = vrot.slane %v7928, 4
  %v7930 = vadd.f32 %v7928, %v7929
  %v7931 = vrot.slane %v7930, 2
  %v7932 = vadd.f32 %v7930, %v7931
  %v7933 = vrot.slane %v7932, 1
  %v7934 = vadd.f32 %v7932, %v7933
  %v7935 = vsel %vm7923, %v7073, 0.0
  %v7936 = vrot.slane %v7935, 4
  %v7937 = vadd.f32 %v7935, %v7936
  %v7938 = vrot.slane %v7937, 2
  %v7939 = vadd.f32 %v7937, %v7938
  %v7940 = vrot.slane %v7939, 1
  %v7941 = vadd.f32 %v7939, %v7940
  %v7942 = vsel %vm7923, %v7489, 0.0
  %v7943 = vrot.slane %v7942, 4
  %v7944 = vadd.f32 %v7942, %v7943
  %v7945 = vrot.slane %v7944, 2
  %v7946 = vadd.f32 %v7944, %v7945
  %v7947 = vrot.slane %v7946, 1
  %v7948 = vadd.f32 %v7946, %v7947
  %v7949 = vsel %vm7923, %v7905, 0.0
  %v7950 = vrot.slane %v7949, 4
  %v7951 = vadd.f32 %v7949, %v7950
  %v7952 = vrot.slane %v7951, 2
  %v7953 = vadd.f32 %v7951, %v7952
  %v7954 = vrot.slane %v7953, 1
  %v7955 = vadd.f32 %v7953, %v7954
  %v7960 = vrot.slane %v7941, 7
  %v7961 = vrot.slane %v7948, 6
  %v7962 = vrot.slane %v7955, 5
  %v7963 = vsel %vm7915, %v7934, %v7960
  %v7964 = vsel %vm7919, %v7961, %v7962
  %v7965 = vsel %vm7923, %v7963, %v7964
  %v7967 = vadd.f32 %v7927, %v7965
  %v7968 = vlaneseq
  %vm7969 = vcmp.ge.s32.totalorder %v7968, 0
  %vm7970 = vcmp.lt.s32.totalorder %v7968, 512
  %vm7971 = vmand %vm7969, %vm7970
  %7972 = vst.msk [vmem:[%s3] sm:$0xf] %vm7971, %v7967
  %v7973 = vld [vmem:[%s4] sm:$0xf]
  %v7974 = vmul.f32 %v6657, %v6657
  %v7975 = vmul.f32 %v7073, %v7073
  %v7976 = vmul.f32 %v7489, %v7489
  %v7977 = vmul.f32 %v7905, %v7905
  %v7978 = vsel %vm7923, %v7974, 0.0
  %v7979 = vrot.slane %v7978, 4
  %v7980 = vadd.f32 %v7978, %v7979
  %v7981 = vrot.slane %v7980, 2
  %v7982 = vadd.f32 %v7980, %v7981
  %v7983 = vrot.slane %v7982, 1
  %v7984 = vadd.f32 %v7982, %v7983
  %v7985 = vsel %vm7923, %v7975, 0.0
  %v7986 = vrot.slane %v7985, 4
  %v7987 = vadd.f32 %v7985, %v7986
  %v7988 = vrot.slane %v7987, 2
  %v7989 = vadd.f32 %v7987, %v7988
  %v7990 = vrot.slane %v7989, 1
  %v7991 = vadd.f32 %v7989, %v7990
  %v7992 = vsel %vm7923, %v7976, 0.0
  %v7993 = vrot.slane %v7992, 4
  %v7994 = vadd.f32 %v7992, %v7993
  %v7995 = vrot.slane %v7994, 2
  %v7996 = vadd.f32 %v7994, %v7995
  %v7997 = vrot.slane %v7996, 1
  %v7998 = vadd.f32 %v7996, %v7997
  %v7999 = vsel %vm7923, %v7977, 0.0
  %v8000 = vrot.slane %v7999, 4
  %v8001 = vadd.f32 %v7999, %v8000
  %v8002 = vrot.slane %v8001, 2
  %v8003 = vadd.f32 %v8001, %v8002
  %v8004 = vrot.slane %v8003, 1
  %v8005 = vadd.f32 %v8003, %v8004
  %v8010 = vrot.slane %v7991, 7
  %v8011 = vrot.slane %v7998, 6
  %v8012 = vrot.slane %v8005, 5
  %v8013 = vsel %vm7915, %v7984, %v8010
  %v8014 = vsel %vm7919, %v8011, %v8012
  %v8015 = vsel %vm7923, %v8013, %v8014
  %v8017 = vadd.f32 %v7973, %v8015
  %8018 = vst.msk [vmem:[%s4] sm:$0xf] %vm7971, %v8017
  // Predicated region
  $region14: #{discriminator_forward.13} parent=0 // pred_check
    _
  $region15: #{discriminator_forward.13} parent=0 // pred_check_branch
    %8020 = sbr.rel (0) target = $region17
  $region16: #{discriminator_forward.13} parent=0 // pred_region
    _
  $region17: #{discriminator_forward.13} parent=0 // pred_fallthru
    _
  // Predicated region
  $region18: #{discriminator_forward.13} parent=0 // pred_check
    _
  $region19: #{discriminator_forward.13} parent=0 // pred_check_branch
    %8022 = sbr.rel (0) target = $region21
  $region20: #{discriminator_forward.13} parent=0 // pred_region
    _
  $region21: #{discriminator_forward.13} parent=0 // pred_fallthru
    _
  // Predicated region
  $region22: #{discriminator_forward.13} parent=0 // pred_check
    _
  $region23: #{discriminator_forward.13} parent=0 // pred_check_branch
    %8024 = sbr.rel (0) target = $region25
  $region24: #{discriminator_forward.13} parent=0 // pred_region
    _
  $region25: #{discriminator_forward.13} parent=0 // pred_fallthru
    _
  // Predicated region
  $region26: #{discriminator_forward.13} parent=0 // pred_check
    _
  $region27: #{discriminator_forward.13} parent=0 // pred_check_branch
    %8026 = sbr.rel (0) target = $region29
  $region28: #{discriminator_forward.13} parent=0 // pred_region
    _
  $region29: #{discriminator_forward.13} parent=0 // pred_fallthru
    _
  // Predicated region
  $region30: #{discriminator_forward.13} parent=0 // pred_check
    _
  $region31: #{discriminator_forward.13} parent=0 // pred_check_branch
    %8028 = sbr.rel (0) target = $region33
  $region32: #{discriminator_forward.13} parent=0 // pred_region
    _
  $region33: #{discriminator_forward.13} parent=0 // pred_fallthru
    _
  // Predicated region
  $region34: #{discriminator_forward.13} parent=0 // pred_check
    _
  $region35: #{discriminator_forward.13} parent=0 // pred_check_branch
    %8030 = sbr.rel (0) target = $region37
  $region36: #{discriminator_forward.13} parent=0 // pred_region
    _
  $region37: #{discriminator_forward.13} parent=0 // pred_fallthru
    _

</llo_original>
